<compile_context>
chip_gen: v7x
topology: tpu7x:2x2x1
jax: 0.10.0
libtpu: 0.0.40
codegen_flags: <defaults>
</compile_context>

<pallas_src>
import jax
import jax.numpy as jnp
from jax.experimental import pallas as pl
from jax.experimental.pallas import tpu as pltpu

INPUT_NUM = 3072
HIDDEN1 = 2000
HIDDEN2 = 1000
HIDDEN3 = 500
OUTPUT_NUM = 10

LANE = 128  # TPU lane width (last dim)


def _round_up(x, m):
    return ((x + m - 1) // m) * m


# Padded (TPU-friendly) feature sizes — fixed once, at parameter-init time.
KP = _round_up(INPUT_NUM, LANE)      # 3072 (already aligned)
H1P = _round_up(HIDDEN1, LANE)       # 2048
H2P = _round_up(HIDDEN2, LANE)       # 1024
H3P = _round_up(HIDDEN3, LANE)       # 512
OUTP = _round_up(OUTPUT_NUM, LANE)   # 128

TN1 = 1024                           # layer-1 N tile (full K = 3072)
N_BLOCKS1 = H1P // TN1               # 2 grid steps (keep at 2 per review)


# --------------------------------------------------------------------------
# Kernels
# --------------------------------------------------------------------------
def layer1_kernel(x_ref, w1_ref, s1_ref, b1_ref, h1_ref):
    """relu(x @ W1 + b1) for one 1024-wide N tile of W1.

    Grid axis 0 ('parallel') iterates / core-shards the two W1 tiles: each
    step streams one contiguous (3072, 1024) int8 slab, dequantizes to bf16
    for the MXU, and writes its bf16 h1 half.
    """
    x_bf16 = x_ref[...].astype(jnp.bfloat16)          # cast in-kernel (no wrapper op)
    w_bf16 = w1_ref[0].astype(jnp.bfloat16)           # int8 -> bf16 dequant (values exact)
    acc = jnp.dot(x_bf16, w_bf16, preferred_element_type=jnp.float32)
    h1 = jnp.maximum(acc * s1_ref[...] + b1_ref[...], 0.0)   # per-col scale + bias, f32
    h1_ref[...] = h1.astype(h1_ref.dtype)


def layers_2_3_4_kernel(h1_ref, w2_ref, s2_ref, b2_ref,
                        w3_ref, s3_ref, b3_ref,
                        w4_ref, s4_ref, b4_ref, o_ref):
    """fc2+ReLU -> fc3+ReLU -> fc4, everything resident in VMEM (gridless)."""
    h2 = jnp.dot(h1_ref[...], w2_ref[...].astype(jnp.bfloat16),
                 preferred_element_type=jnp.float32)
    h2 = jnp.maximum(h2 * s2_ref[...] + b2_ref[...], 0.0).astype(jnp.bfloat16)

    h3 = jnp.dot(h2, w3_ref[...].astype(jnp.bfloat16),
                 preferred_element_type=jnp.float32)
    h3 = jnp.maximum(h3 * s3_ref[...] + b3_ref[...], 0.0).astype(jnp.bfloat16)

    y = jnp.dot(h3, w4_ref[...].astype(jnp.bfloat16),
                preferred_element_type=jnp.float32)
    o_ref[...] = y * s4_ref[...] + b4_ref[...]        # final logits, f32, no ReLU


# --------------------------------------------------------------------------
# Wrapper (mirror of NeuralNet.forward)
# --------------------------------------------------------------------------
def neural_net_forward(params, x):
    """params are pre-padded / pre-quantized (see init_linear_params)."""
    (w1, s1, b1), (w2, s2, b2), (w3, s3, b3), (w4, s4, b4) = params
    M, K = x.shape
    assert K == INPUT_NUM

    # ---- Layer 1: stream W1 over a 2-step 'parallel' grid --------------
    flops_1 = 2 * M * KP * H1P
    bytes_1 = M * KP * 4 + KP * H1P * 1 + 2 * H1P * 4 + M * H1P * 2
    h1 = pl.pallas_call(
        layer1_kernel,
        out_shape=jax.ShapeDtypeStruct((M, H1P), jnp.bfloat16),
        grid_spec=pltpu.PrefetchScalarGridSpec(
            num_scalar_prefetch=0,
            grid=(N_BLOCKS1,),
            in_specs=[
                pl.BlockSpec((M, KP), lambda j: (0, 0)),           # x (fetched once)
                pl.BlockSpec((1, KP, TN1), lambda j: (j, 0, 0)),   # contiguous W1 tile
                pl.BlockSpec((1, TN1), lambda j: (0, j)),          # scale1 tile
                pl.BlockSpec((1, TN1), lambda j: (0, j)),          # b1 tile
            ],
            out_specs=pl.BlockSpec((M, TN1), lambda j: (0, j)),
        ),
        compiler_params=pltpu.CompilerParams(
            # Independent N tiles -> shard across both TensorCores on v7x.
            dimension_semantics=("parallel",),
            # ~12.5 MiB live set (2x 3 MiB int8 W1 tile + 6 MiB bf16 dequant
            # temp + activations); 32 MiB lifts v5e's 16 MiB scoped default.
            vmem_limit_bytes=32 * 1024 * 1024,
        ),
        cost_estimate=pl.CostEstimate(
            flops=flops_1, transcendentals=0, bytes_accessed=bytes_1),
    )(x, w1, s1, b1)

    # ---- Layers 2..4: tiny, everything VMEM-resident, no grid ----------
    flops_2 = 2 * M * (H1P * H2P + H2P * H3P + H3P * OUTP)
    bytes_2 = (M * H1P * 2 + (H1P * H2P + H2P * H3P + H3P * OUTP)
               + 2 * 4 * (H2P + H3P + OUTP) + M * OUTP * 4)
    out_p = pl.pallas_call(
        layers_2_3_4_kernel,
        out_shape=jax.ShapeDtypeStruct((M, OUTP), jnp.float32),
        compiler_params=pltpu.CompilerParams(
            vmem_limit_bytes=28 * 1024 * 1024),
        cost_estimate=pl.CostEstimate(
            flops=flops_2, transcendentals=0, bytes_accessed=bytes_2),
    )(h1, w2, s2, b2, w3, s3, b3, w4, s4, b4)

    return out_p[:, :OUTPUT_NUM]


# --------------------------------------------------------------------------
# Parameter init (PyTorch nn.Linear default init) + int8 quantization
# --------------------------------------------------------------------------
def init_linear_params(key, fan_in, fan_out, fan_in_p, fan_out_p):
    """U(-1/sqrt(fan_in), +1/sqrt(fan_in)) weights/bias, stored transposed
    (in, out), zero-padded ONCE to TPU-friendly dims, and quantized to int8
    with per-output-channel symmetric scales (weight streaming is the entire
    HBM cost of this MLP).  Padded rows/cols are zero -> exact real outputs.
    """
    kw, kb = jax.random.split(key)
    bound = 1.0 / jnp.sqrt(jnp.float32(fan_in))
    w = jax.random.uniform(kw, (fan_in, fan_out), jnp.float32,
                           minval=-bound, maxval=bound)
    b = jax.random.uniform(kb, (fan_out,), jnp.float32,
                           minval=-bound, maxval=bound)
    w_p = jnp.pad(w, ((0, fan_in_p - fan_in), (0, fan_out_p - fan_out)))
    b_p = jnp.pad(b, (0, fan_out_p - fan_out)).reshape(1, fan_out_p)

    amax = jnp.max(jnp.abs(w_p), axis=0, keepdims=True)        # (1, out_p)
    scale = jnp.maximum(amax, 1e-8) / 127.0
    w_q = jnp.clip(jnp.round(w_p / scale), -127.0, 127.0).astype(jnp.int8)
    return w_q, scale.astype(jnp.float32), b_p.astype(jnp.float32)


# --------------------------------------------------------------------------
# Plain-JAX reference mirroring the kernel numerics (int8 weights, bf16
# activations, f32 accumulation / scale / bias).
# --------------------------------------------------------------------------
def reference_forward(params, x):
    (w1q, s1, b1), (w2q, s2, b2), (w3q, s3, b3), (w4q, s4, b4) = params
    w1_full = w1q.transpose(1, 0, 2).reshape(KP, H1P)   # undo the tile reshape
    h = x.astype(jnp.bfloat16)
    layers = ((w1_full, s1, b1, True), (w2q, s2, b2, True),
              (w3q, s3, b3, True), (w4q, s4, b4, False))
    for wq, s, b, relu in layers:
        acc = jnp.dot(h, wq.astype(jnp.bfloat16),
                      preferred_element_type=jnp.float32) * s + b
        h = jnp.maximum(acc, 0.0).astype(jnp.bfloat16) if relu else acc
    return h[:, :OUTPUT_NUM]


if __name__ == "__main__":
    key = jax.random.PRNGKey(0)
    k_x, k1, k2, k3, k4 = jax.random.split(key, 5)

    batch = 8
    x = jax.random.normal(k_x, (batch, INPUT_NUM), jnp.float32)

    w1q, s1, b1 = init_linear_params(k1, INPUT_NUM, HIDDEN1, KP, H1P)
    # Store W1 as (N_BLOCKS1, KP, TN1) so each streamed tile is contiguous.
    w1q = w1q.reshape(KP, N_BLOCKS1, TN1).transpose(1, 0, 2)

    params = (
        (w1q, s1, b1),
        init_linear_params(k2, HIDDEN1, HIDDEN2, H1P, H2P),
        init_linear_params(k3, HIDDEN2, HIDDEN3, H2P, H3P),
        init_linear_params(k4, HIDDEN3, OUTPUT_NUM, H3P, OUTP),
    )

    fwd = jax.jit(neural_net_forward)
    y = jax.block_until_ready(fwd(params, x))

    ref = reference_forward(params, x)
    assert y.shape == (batch, OUTPUT_NUM), y.shape
    assert jnp.allclose(y, ref, atol=2e-2, rtol=2e-2), "mismatch vs reference"

    print("KERNEL_OK")
</pallas_src>

<mosaic_0001>
module attributes {stable_mosaic.version = 11 : i64} {
  func.func @layers_2_3_4_kernel(%arg0: memref<8x2048xbf16, #tpu.memory_space<vmem>>, %arg1: memref<2048x1024xi8, #tpu.memory_space<vmem>>, %arg2: memref<1x1024xf32, #tpu.memory_space<vmem>>, %arg3: memref<1x1024xf32, #tpu.memory_space<vmem>>, %arg4: memref<1024x512xi8, #tpu.memory_space<vmem>>, %arg5: memref<1x512xf32, #tpu.memory_space<vmem>>, %arg6: memref<1x512xf32, #tpu.memory_space<vmem>>, %arg7: memref<512x128xi8, #tpu.memory_space<vmem>>, %arg8: memref<1x128xf32, #tpu.memory_space<vmem>>, %arg9: memref<1x128xf32, #tpu.memory_space<vmem>>, %arg10: memref<8x128xf32, #tpu.memory_space<vmem>>) attributes {dimension_semantics = [], scalar_prefetch = 0 : i64, scratch_operands = 0 : i64, tpu.core_type = #tpu.core_type<tc>} {
    %c0 = arith.constant 0 : index
    %c0_0 = arith.constant 0 : index
    %0 = vector.load %arg0[%c0, %c0_0] : memref<8x2048xbf16, #tpu.memory_space<vmem>>, vector<8x2048xbf16>
    %c0_1 = arith.constant 0 : index
    %c0_2 = arith.constant 0 : index
    %1 = vector.load %arg1[%c0_1, %c0_2] : memref<2048x1024xi8, #tpu.memory_space<vmem>>, vector<2048x1024xi8>
    %2 = arith.sitofp %1 : vector<2048x1024xi8> to vector<2048x1024xbf16>
    %cst = arith.constant dense<0.000000e+00> : vector<8x1024xf32>
    %3 = tpu.matmul %0, %2, %cst {dimension_numbers = #tpu.dot_dimension_numbers<[1], [0], [0], [1], [0, 0, 1, 1], [], []>} : vector<8x2048xbf16>, vector<2048x1024xbf16>, vector<8x1024xf32> -> vector<8x1024xf32>
    %c0_3 = arith.constant 0 : index
    %c0_4 = arith.constant 0 : index
    %4 = vector.load %arg2[%c0_3, %c0_4] : memref<1x1024xf32, #tpu.memory_space<vmem>>, vector<1x1024xf32>
    %5 = vector.broadcast %4 : vector<1x1024xf32> to vector<8x1024xf32>
    %6 = arith.mulf %3, %5 : vector<8x1024xf32>
    %c0_5 = arith.constant 0 : index
    %c0_6 = arith.constant 0 : index
    %7 = vector.load %arg3[%c0_5, %c0_6] : memref<1x1024xf32, #tpu.memory_space<vmem>>, vector<1x1024xf32>
    %8 = vector.broadcast %7 : vector<1x1024xf32> to vector<8x1024xf32>
    %9 = arith.addf %6, %8 : vector<8x1024xf32>
    %cst_7 = arith.constant 0.000000e+00 : f32
    %10 = vector.broadcast %cst_7 : f32 to vector<8x1024xf32>
    %11 = arith.maximumf %9, %10 : vector<8x1024xf32>
    %12 = arith.truncf %11 : vector<8x1024xf32> to vector<8x1024xbf16>
    %c0_8 = arith.constant 0 : index
    %c0_9 = arith.constant 0 : index
    %13 = vector.load %arg4[%c0_8, %c0_9] : memref<1024x512xi8, #tpu.memory_space<vmem>>, vector<1024x512xi8>
    %14 = arith.sitofp %13 : vector<1024x512xi8> to vector<1024x512xbf16>
    %cst_10 = arith.constant dense<0.000000e+00> : vector<8x512xf32>
    %15 = tpu.matmul %12, %14, %cst_10 {dimension_numbers = #tpu.dot_dimension_numbers<[1], [0], [0], [1], [0, 0, 1, 1], [], []>} : vector<8x1024xbf16>, vector<1024x512xbf16>, vector<8x512xf32> -> vector<8x512xf32>
    %c0_11 = arith.constant 0 : index
    %c0_12 = arith.constant 0 : index
    %16 = vector.load %arg5[%c0_11, %c0_12] : memref<1x512xf32, #tpu.memory_space<vmem>>, vector<1x512xf32>
    %17 = vector.broadcast %16 : vector<1x512xf32> to vector<8x512xf32>
    %18 = arith.mulf %15, %17 : vector<8x512xf32>
    %c0_13 = arith.constant 0 : index
    %c0_14 = arith.constant 0 : index
    %19 = vector.load %arg6[%c0_13, %c0_14] : memref<1x512xf32, #tpu.memory_space<vmem>>, vector<1x512xf32>
    %20 = vector.broadcast %19 : vector<1x512xf32> to vector<8x512xf32>
    %21 = arith.addf %18, %20 : vector<8x512xf32>
    %cst_15 = arith.constant 0.000000e+00 : f32
    %22 = vector.broadcast %cst_15 : f32 to vector<8x512xf32>
    %23 = arith.maximumf %21, %22 : vector<8x512xf32>
    %24 = arith.truncf %23 : vector<8x512xf32> to vector<8x512xbf16>
    %c0_16 = arith.constant 0 : index
    %c0_17 = arith.constant 0 : index
    %25 = vector.load %arg7[%c0_16, %c0_17] : memref<512x128xi8, #tpu.memory_space<vmem>>, vector<512x128xi8>
    %26 = arith.sitofp %25 : vector<512x128xi8> to vector<512x128xbf16>
    %cst_18 = arith.constant dense<0.000000e+00> : vector<8x128xf32>
    %27 = tpu.matmul %24, %26, %cst_18 {dimension_numbers = #tpu.dot_dimension_numbers<[1], [0], [0], [1], [0, 0, 1, 1], [], []>} : vector<8x512xbf16>, vector<512x128xbf16>, vector<8x128xf32> -> vector<8x128xf32>
    %c0_19 = arith.constant 0 : index
    %c0_20 = arith.constant 0 : index
    %28 = vector.load %arg8[%c0_19, %c0_20] : memref<1x128xf32, #tpu.memory_space<vmem>>, vector<1x128xf32>
    %29 = vector.broadcast %28 : vector<1x128xf32> to vector<8x128xf32>
    %30 = arith.mulf %27, %29 : vector<8x128xf32>
    %c0_21 = arith.constant 0 : index
    %c0_22 = arith.constant 0 : index
    %31 = vector.load %arg9[%c0_21, %c0_22] : memref<1x128xf32, #tpu.memory_space<vmem>>, vector<1x128xf32>
    %32 = vector.broadcast %31 : vector<1x128xf32> to vector<8x128xf32>
    %33 = arith.addf %30, %32 : vector<8x128xf32>
    %c0_23 = arith.constant 0 : index
    %c0_24 = arith.constant 0 : index
    %34 = vector.load %arg10[%c0_23, %c0_24] : memref<8x128xf32, #tpu.memory_space<vmem>>, vector<8x128xf32>
    tpu.vector_store %arg10[%c0_23, %c0_24], %33 {strides = array<i32>} : memref<8x128xf32, #tpu.memory_space<vmem>>, vector<8x128xf32>,
    return
  }
}

module attributes {stable_mosaic.version = 11 : i64} {
  func.func @layer1_kernel(%arg0: i32, %arg1: memref<8x3072xf32, #tpu.memory_space<vmem>>, %arg2: memref<1x3072x1024xi8, #tpu.memory_space<vmem>>, %arg3: memref<1x1024xf32, #tpu.memory_space<vmem>>, %arg4: memref<1x1024xf32, #tpu.memory_space<vmem>>, %arg5: memref<8x1024xbf16, #tpu.memory_space<vmem>>) attributes {dimension_semantics = [#tpu.dimension_semantics<parallel>], iteration_bounds = array<i64: 2>, scalar_prefetch = 0 : i64, scratch_operands = 0 : i64, tpu.core_type = #tpu.core_type<tc>, window_params = [{pipeline_mode = #tpu.pipeline_mode<synchronous>, transform_indices = @transform_0, window_bounds = array<i64: 8, 3072>}, {transform_indices = @transform_1, window_bounds = array<i64: 1, 3072, 1024>}, {transform_indices = @transform_2, window_bounds = array<i64: 1, 1024>}, {transform_indices = @transform_3, window_bounds = array<i64: 1, 1024>}, {transform_indices = @transform_4, window_bounds = array<i64: 8, 1024>}]} {
    %c0 = arith.constant 0 : index
    %c0_0 = arith.constant 0 : index
    %0 = vector.load %arg1[%c0, %c0_0] : memref<8x3072xf32, #tpu.memory_space<vmem>>, vector<8x3072xf32>
    %1 = arith.truncf %0 : vector<8x3072xf32> to vector<8x3072xbf16>
    %c0_1 = arith.constant 0 : index
    %c0_2 = arith.constant 0 : index
    %c0_3 = arith.constant 0 : index
    %2 = vector.load %arg2[%c0_1, %c0_2, %c0_3] : memref<1x3072x1024xi8, #tpu.memory_space<vmem>>, vector<1x3072x1024xi8>
    %3 = vector.shape_cast %2 : vector<1x3072x1024xi8> to vector<3072x1024xi8>
    %4 = arith.sitofp %3 : vector<3072x1024xi8> to vector<3072x1024xbf16>
    %cst = arith.constant dense<0.000000e+00> : vector<8x1024xf32>
    %5 = tpu.matmul %1, %4, %cst {dimension_numbers = #tpu.dot_dimension_numbers<[1], [0], [0], [1], [0, 0, 1, 1], [], []>} : vector<8x3072xbf16>, vector<3072x1024xbf16>, vector<8x1024xf32> -> vector<8x1024xf32>
    %c0_4 = arith.constant 0 : index
    %c0_5 = arith.constant 0 : index
    %6 = vector.load %arg3[%c0_4, %c0_5] : memref<1x1024xf32, #tpu.memory_space<vmem>>, vector<1x1024xf32>
    %7 = vector.broadcast %6 : vector<1x1024xf32> to vector<8x1024xf32>
    %8 = arith.mulf %5, %7 : vector<8x1024xf32>
    %c0_6 = arith.constant 0 : index
    %c0_7 = arith.constant 0 : index
    %9 = vector.load %arg4[%c0_6, %c0_7] : memref<1x1024xf32, #tpu.memory_space<vmem>>, vector<1x1024xf32>
    %10 = vector.broadcast %9 : vector<1x1024xf32> to vector<8x1024xf32>
    %11 = arith.addf %8, %10 : vector<8x1024xf32>
    %cst_8 = arith.constant 0.000000e+00 : f32
    %12 = vector.broadcast %cst_8 : f32 to vector<8x1024xf32>
    %13 = arith.maximumf %11, %12 : vector<8x1024xf32>
    %14 = arith.truncf %13 : vector<8x1024xf32> to vector<8x1024xbf16>
    %c0_9 = arith.constant 0 : index
    %c0_10 = arith.constant 0 : index
    %15 = vector.load %arg5[%c0_9, %c0_10] : memref<8x1024xbf16, #tpu.memory_space<vmem>>, vector<8x1024xbf16>
    tpu.vector_store %arg5[%c0_9, %c0_10], %14 {strides = array<i32>} : memref<8x1024xbf16, #tpu.memory_space<vmem>>, vector<8x1024xbf16>,
    return
  }
  func.func @transform_0(%arg0: i32) -> (i32, i32) {
    %c0_i32 = arith.constant 0 : i32
    %c0_i32_0 = arith.constant 0 : i32
    %c0_i32_1 = arith.constant 0 : i32
    return %c0_i32, %c0_i32_0 : i32, i32
  }
  func.func @transform_1(%arg0: i32) -> (i32, i32, i32) {
    %c0_i32 = arith.constant 0 : i32
    %c0_i32_0 = arith.constant 0 : i32
    %c0_i32_1 = arith.constant 0 : i32
    return %arg0, %c0_i32, %c0_i32_0 : i32, i32, i32
  }
  func.func @transform_2(%arg0: i32) -> (i32, i32) {
    %c0_i32 = arith.constant 0 : i32
    %c0_i32_0 = arith.constant 0 : i32
    return %c0_i32, %arg0 : i32, i32
  }
  func.func @transform_3(%arg0: i32) -> (i32, i32) {
    %c0_i32 = arith.constant 0 : i32
    %c0_i32_0 = arith.constant 0 : i32
    return %c0_i32, %arg0 : i32, i32
  }
  func.func @transform_4(%arg0: i32) -> (i32, i32) {
    %c0_i32 = arith.constant 0 : i32
    %c0_i32_0 = arith.constant 0 : i32
    return %c0_i32, %arg0 : i32, i32
  }
}

</mosaic_0001>

<llo_original>
// kernel: neural_net_forward.3
$region0: #{neural_net_forward.3}
  #allocation0 [shape = 'u32[]', space=smem, size = 0x4, offset = 0x4, fixed_abs, tag = 'smem constant byte address 0x4 - core index']
  #allocation1 [shape = 'u32[144,128]{1,0:T(1,128)}', space=vmem, size = 0x12000, scoped, tag = 'internal scratch']
  %s0 = inlined_call_operand.vmem [shape: bf16[8,2048], index: 0, kind: input, shape index: {}]
  %s1 = inlined_call_operand.vmem [shape: s8[2048,1024], index: 1, kind: input, shape index: {}]
  %s2 = inlined_call_operand.vmem [shape: f32[1,1024], index: 2, kind: input, shape index: {}]
  %s3 = inlined_call_operand.vmem [shape: f32[1,1024], index: 3, kind: input, shape index: {}]
  %s4 = inlined_call_operand.vmem [shape: s8[1024,512], index: 4, kind: input, shape index: {}]
  %s5 = inlined_call_operand.vmem [shape: f32[1,512], index: 5, kind: input, shape index: {}]
  %s6 = inlined_call_operand.vmem [shape: f32[1,512], index: 6, kind: input, shape index: {}]
  %s7 = inlined_call_operand.vmem [shape: s8[512,128], index: 7, kind: input, shape index: {}]
  %s8 = inlined_call_operand.vmem [shape: f32[1,128], index: 8, kind: input, shape index: {}]
  %s9 = inlined_call_operand.vmem [shape: f32[1,128], index: 9, kind: input, shape index: {}]
  %s10 = inlined_call_operand.hbm [shape: f32[8,128], index: 10, kind: output, shape index: {}]
  %s11 = sld [smem:[#allocation0]]
  $region50: #{neural_net_forward.3} parent=0
    _
  %s13 = ssub.s32 1, %s11
  %s14 = scalar_select 0, %s13, %s11
  $region1: #{neural_net_forward.3} parent=0
    #allocation2 [shape = 'u8[4096]{0}', space=vmem, size = 0x1000, scoped, tag = 'output window, operand 0, single buffered']
    #allocation3 [shape = 's32[1]{0}', space=sflag, size = 0x4, scoped, tag = 'scoped memory for neural_net_forward.3']
    %15 = vsyncpa [#allocation3], 0
    // Predicated region
    $region2: #{neural_net_forward.3} parent=1 // pred_check
      _
    $region3: #{neural_net_forward.3} parent=1 // pred_check_branch
      %17 = sbr.rel (0) target = $region5
    $region4: #{neural_net_forward.3} parent=1 // pred_region
      _
    $region5: #{neural_net_forward.3} parent=1 // pred_fallthru
      _
    // Predicated region
    $region6: #{neural_net_forward.3} parent=1 // pred_check
      _
    $region7: #{neural_net_forward.3} parent=1 // pred_check_branch
      %19 = sbr.rel (0) target = $region9
    $region8: #{neural_net_forward.3} parent=1 // pred_region
      _
    $region9: #{neural_net_forward.3} parent=1 // pred_fallthru
      _
    // Predicated region
    $region10: #{neural_net_forward.3} parent=1 // pred_check
      _
    $region11: #{neural_net_forward.3} parent=1 // pred_check_branch
      %21 = sbr.rel (0) target = $region13
    $region12: #{neural_net_forward.3} parent=1 // pred_region
      _
    $region13: #{neural_net_forward.3} parent=1 // pred_fallthru
      _
    // Predicated region
    $region14: #{neural_net_forward.3} parent=1 // pred_check
      _
    $region15: #{neural_net_forward.3} parent=1 // pred_check_branch
      %23 = sbr.rel (0) target = $region17
    $region16: #{neural_net_forward.3} parent=1 // pred_region
      _
    $region17: #{neural_net_forward.3} parent=1 // pred_fallthru
      _
    // Predicated region
    $region18: #{neural_net_forward.3} parent=1 // pred_check
      _
    $region19: #{neural_net_forward.3} parent=1 // pred_check_branch
      %25 = sbr.rel (0) target = $region21
    $region20: #{neural_net_forward.3} parent=1 // pred_region
      _
    $region21: #{neural_net_forward.3} parent=1 // pred_fallthru
      _
    // Predicated region
    $region22: #{neural_net_forward.3} parent=1 // pred_check
      _
    $region23: #{neural_net_forward.3} parent=1 // pred_check_branch
      %27 = sbr.rel (0) target = $region25
    $region24: #{neural_net_forward.3} parent=1 // pred_region
      _
    $region25: #{neural_net_forward.3} parent=1 // pred_fallthru
      _
    // Predicated region
    $region26: #{neural_net_forward.3} parent=1 // pred_check
      _
    $region27: #{neural_net_forward.3} parent=1 // pred_check_branch
      %29 = sbr.rel (0) target = $region29
    $region28: #{neural_net_forward.3} parent=1 // pred_region
      _
    $region29: #{neural_net_forward.3} parent=1 // pred_fallthru
      _
    // Predicated region
    $region30: #{neural_net_forward.3} parent=1 // pred_check
      _
    $region31: #{neural_net_forward.3} parent=1 // pred_check_branch
      %31 = sbr.rel (0) target = $region33
    $region32: #{neural_net_forward.3} parent=1 // pred_region
      _
    $region33: #{neural_net_forward.3} parent=1 // pred_fallthru
      _
    // Predicated region
    $region34: #{neural_net_forward.3} parent=1 // pred_check
      _
    $region35: #{neural_net_forward.3} parent=1 // pred_check_branch
      %33 = sbr.rel (0) target = $region37
    $region36: #{neural_net_forward.3} parent=1 // pred_region
      _
    $region37: #{neural_net_forward.3} parent=1 // pred_fallthru
      _
    // Predicated region
    $region38: #{neural_net_forward.3} parent=1 // pred_check
      _
    $region39: #{neural_net_forward.3} parent=1 // pred_check_branch
      %35 = sbr.rel (0) target = $region41
    $region40: #{neural_net_forward.3} parent=1 // pred_region
      _
    $region41: #{neural_net_forward.3} parent=1 // pred_fallthru
      _
    %v37 = vld [vmem:[%s0] sm:$0xff]
    %v38 = vld [vmem:[%s0 + $0x8] sm:$0xff]
    %v39 = vld [vmem:[%s0 + $0x10] sm:$0xff]
    %v40 = vld [vmem:[%s0 + $0x18] sm:$0xff]
    %v41 = vld [vmem:[%s0 + $0x20] sm:$0xff]
    %v42 = vld [vmem:[%s0 + $0x28] sm:$0xff]
    %v43 = vld [vmem:[%s0 + $0x30] sm:$0xff]
    %v44 = vld [vmem:[%s0 + $0x38] sm:$0xff]
    %v45 = vld [vmem:[%s1] sm:$0xff]
    %v46 = vld [vmem:[%s1 + $0x8] sm:$0xff]
    %v47 = vld [vmem:[%s1 + $0x10] sm:$0xff]
    %v48 = vld [vmem:[%s1 + $0x18] sm:$0xff]
    %v49 = vld [vmem:[%s1 + $0x20] sm:$0xff]
    %v50 = vld [vmem:[%s1 + $0x28] sm:$0xff]
    %v51 = vld [vmem:[%s1 + $0x30] sm:$0xff]
    %v52 = vld [vmem:[%s1 + $0x38] sm:$0xff]
    %v53 = vld [vmem:[%s1 + $0x40] sm:$0xff]
    %v54 = vld [vmem:[%s1 + $0x48] sm:$0xff]
    %v55 = vld [vmem:[%s1 + $0x50] sm:$0xff]
    %v56 = vld [vmem:[%s1 + $0x58] sm:$0xff]
    %v57 = vld [vmem:[%s1 + $0x60] sm:$0xff]
    %v58 = vld [vmem:[%s1 + $0x68] sm:$0xff]
    %v59 = vld [vmem:[%s1 + $0x70] sm:$0xff]
    %v60 = vld [vmem:[%s1 + $0x78] sm:$0xff]
    %v61 = vld [vmem:[%s1 + $0x80] sm:$0xff]
    %v62 = vld [vmem:[%s1 + $0x88] sm:$0xff]
    %v63 = vld [vmem:[%s1 + $0x90] sm:$0xff]
    %v64 = vld [vmem:[%s1 + $0x98] sm:$0xff]
    %v65 = vld [vmem:[%s1 + $0xa0] sm:$0xff]
    %v66 = vld [vmem:[%s1 + $0xa8] sm:$0xff]
    %v67 = vld [vmem:[%s1 + $0xb0] sm:$0xff]
    %v68 = vld [vmem:[%s1 + $0xb8] sm:$0xff]
    %v69 = vld [vmem:[%s1 + $0xc0] sm:$0xff]
    %v70 = vld [vmem:[%s1 + $0xc8] sm:$0xff]
    %v71 = vld [vmem:[%s1 + $0xd0] sm:$0xff]
    %v72 = vld [vmem:[%s1 + $0xd8] sm:$0xff]
    %v73 = vld [vmem:[%s1 + $0xe0] sm:$0xff]
    %v74 = vld [vmem:[%s1 + $0xe8] sm:$0xff]
    %v75 = vld [vmem:[%s1 + $0xf0] sm:$0xff]
    %v76 = vld [vmem:[%s1 + $0xf8] sm:$0xff]
    %v77 = vld [vmem:[%s1 + $0x100] sm:$0xff]
    %v78 = vld [vmem:[%s1 + $0x108] sm:$0xff]
    %v79 = vld [vmem:[%s1 + $0x110] sm:$0xff]
    %v80 = vld [vmem:[%s1 + $0x118] sm:$0xff]
    %v81 = vld [vmem:[%s1 + $0x120] sm:$0xff]
    %v82 = vld [vmem:[%s1 + $0x128] sm:$0xff]
    %v83 = vld [vmem:[%s1 + $0x130] sm:$0xff]
    %v84 = vld [vmem:[%s1 + $0x138] sm:$0xff]
    %v85 = vld [vmem:[%s1 + $0x140] sm:$0xff]
    %v86 = vld [vmem:[%s1 + $0x148] sm:$0xff]
    %v87 = vld [vmem:[%s1 + $0x150] sm:$0xff]
    %v88 = vld [vmem:[%s1 + $0x158] sm:$0xff]
    %v89 = vld [vmem:[%s1 + $0x160] sm:$0xff]
    %v90 = vld [vmem:[%s1 + $0x168] sm:$0xff]
    %v91 = vld [vmem:[%s1 + $0x170] sm:$0xff]
    %v92 = vld [vmem:[%s1 + $0x178] sm:$0xff]
    %v93 = vld [vmem:[%s1 + $0x180] sm:$0xff]
    %v94 = vld [vmem:[%s1 + $0x188] sm:$0xff]
    %v95 = vld [vmem:[%s1 + $0x190] sm:$0xff]
    %v96 = vld [vmem:[%s1 + $0x198] sm:$0xff]
    %v97 = vld [vmem:[%s1 + $0x1a0] sm:$0xff]
    %v98 = vld [vmem:[%s1 + $0x1a8] sm:$0xff]
    %v99 = vld [vmem:[%s1 + $0x1b0] sm:$0xff]
    %v100 = vld [vmem:[%s1 + $0x1b8] sm:$0xff]
    %v101 = vld [vmem:[%s1 + $0x1c0] sm:$0xff]
    %v102 = vld [vmem:[%s1 + $0x1c8] sm:$0xff]
    %v103 = vld [vmem:[%s1 + $0x1d0] sm:$0xff]
    %v104 = vld [vmem:[%s1 + $0x1d8] sm:$0xff]
    %v105 = vld [vmem:[%s1 + $0x1e0] sm:$0xff]
    %v106 = vld [vmem:[%s1 + $0x1e8] sm:$0xff]
    %v107 = vld [vmem:[%s1 + $0x1f0] sm:$0xff]
    %v108 = vld [vmem:[%s1 + $0x1f8] sm:$0xff]
    %v109 = vld [vmem:[%s1 + $0x200] sm:$0xff]
    %v110 = vld [vmem:[%s1 + $0x208] sm:$0xff]
    %v111 = vld [vmem:[%s1 + $0x210] sm:$0xff]
    %v112 = vld [vmem:[%s1 + $0x218] sm:$0xff]
    %v113 = vld [vmem:[%s1 + $0x220] sm:$0xff]
    %v114 = vld [vmem:[%s1 + $0x228] sm:$0xff]
    %v115 = vld [vmem:[%s1 + $0x230] sm:$0xff]
    %v116 = vld [vmem:[%s1 + $0x238] sm:$0xff]
    %v117 = vld [vmem:[%s1 + $0x240] sm:$0xff]
    %v118 = vld [vmem:[%s1 + $0x248] sm:$0xff]
    %v119 = vld [vmem:[%s1 + $0x250] sm:$0xff]
    %v120 = vld [vmem:[%s1 + $0x258] sm:$0xff]
    %v121 = vld [vmem:[%s1 + $0x260] sm:$0xff]
    %v122 = vld [vmem:[%s1 + $0x268] sm:$0xff]
    %v123 = vld [vmem:[%s1 + $0x270] sm:$0xff]
    %v124 = vld [vmem:[%s1 + $0x278] sm:$0xff]
    %v125 = vld [vmem:[%s1 + $0x280] sm:$0xff]
    %v126 = vld [vmem:[%s1 + $0x288] sm:$0xff]
    %v127 = vld [vmem:[%s1 + $0x290] sm:$0xff]
    %v128 = vld [vmem:[%s1 + $0x298] sm:$0xff]
    %v129 = vld [vmem:[%s1 + $0x2a0] sm:$0xff]
    %v130 = vld [vmem:[%s1 + $0x2a8] sm:$0xff]
    %v131 = vld [vmem:[%s1 + $0x2b0] sm:$0xff]
    %v132 = vld [vmem:[%s1 + $0x2b8] sm:$0xff]
    %v133 = vld [vmem:[%s1 + $0x2c0] sm:$0xff]
    %v134 = vld [vmem:[%s1 + $0x2c8] sm:$0xff]
    %v135 = vld [vmem:[%s1 + $0x2d0] sm:$0xff]
    %v136 = vld [vmem:[%s1 + $0x2d8] sm:$0xff]
    %v137 = vld [vmem:[%s1 + $0x2e0] sm:$0xff]
    %v138 = vld [vmem:[%s1 + $0x2e8] sm:$0xff]
    %v139 = vld [vmem:[%s1 + $0x2f0] sm:$0xff]
    %v140 = vld [vmem:[%s1 + $0x2f8] sm:$0xff]
    %v141 = vld [vmem:[%s1 + $0x300] sm:$0xff]
    %v142 = vld [vmem:[%s1 + $0x308] sm:$0xff]
    %v143 = vld [vmem:[%s1 + $0x310] sm:$0xff]
    %v144 = vld [vmem:[%s1 + $0x318] sm:$0xff]
    %v145 = vld [vmem:[%s1 + $0x320] sm:$0xff]
    %v146 = vld [vmem:[%s1 + $0x328] sm:$0xff]
    %v147 = vld [vmem:[%s1 + $0x330] sm:$0xff]
    %v148 = vld [vmem:[%s1 + $0x338] sm:$0xff]
    %v149 = vld [vmem:[%s1 + $0x340] sm:$0xff]
    %v150 = vld [vmem:[%s1 + $0x348] sm:$0xff]
    %v151 = vld [vmem:[%s1 + $0x350] sm:$0xff]
    %v152 = vld [vmem:[%s1 + $0x358] sm:$0xff]
    %v153 = vld [vmem:[%s1 + $0x360] sm:$0xff]
    %v154 = vld [vmem:[%s1 + $0x368] sm:$0xff]
    %v155 = vld [vmem:[%s1 + $0x370] sm:$0xff]
    %v156 = vld [vmem:[%s1 + $0x378] sm:$0xff]
    %v157 = vld [vmem:[%s1 + $0x380] sm:$0xff]
    %v158 = vld [vmem:[%s1 + $0x388] sm:$0xff]
    %v159 = vld [vmem:[%s1 + $0x390] sm:$0xff]
    %v160 = vld [vmem:[%s1 + $0x398] sm:$0xff]
    %v161 = vld [vmem:[%s1 + $0x3a0] sm:$0xff]
    %v162 = vld [vmem:[%s1 + $0x3a8] sm:$0xff]
    %v163 = vld [vmem:[%s1 + $0x3b0] sm:$0xff]
    %v164 = vld [vmem:[%s1 + $0x3b8] sm:$0xff]
    %v165 = vld [vmem:[%s1 + $0x3c0] sm:$0xff]
    %v166 = vld [vmem:[%s1 + $0x3c8] sm:$0xff]
    %v167 = vld [vmem:[%s1 + $0x3d0] sm:$0xff]
    %v168 = vld [vmem:[%s1 + $0x3d8] sm:$0xff]
    %v169 = vld [vmem:[%s1 + $0x3e0] sm:$0xff]
    %v170 = vld [vmem:[%s1 + $0x3e8] sm:$0xff]
    %v171 = vld [vmem:[%s1 + $0x3f0] sm:$0xff]
    %v172 = vld [vmem:[%s1 + $0x3f8] sm:$0xff]
    %v173 = vld [vmem:[%s1 + $0x400] sm:$0xff]
    %v174 = vld [vmem:[%s1 + $0x408] sm:$0xff]
    %v175 = vld [vmem:[%s1 + $0x410] sm:$0xff]
    %v176 = vld [vmem:[%s1 + $0x418] sm:$0xff]
    %v177 = vld [vmem:[%s1 + $0x420] sm:$0xff]
    %v178 = vld [vmem:[%s1 + $0x428] sm:$0xff]
    %v179 = vld [vmem:[%s1 + $0x430] sm:$0xff]
    %v180 = vld [vmem:[%s1 + $0x438] sm:$0xff]
    %v181 = vld [vmem:[%s1 + $0x440] sm:$0xff]
    %v182 = vld [vmem:[%s1 + $0x448] sm:$0xff]
    %v183 = vld [vmem:[%s1 + $0x450] sm:$0xff]
    %v184 = vld [vmem:[%s1 + $0x458] sm:$0xff]
    %v185 = vld [vmem:[%s1 + $0x460] sm:$0xff]
    %v186 = vld [vmem:[%s1 + $0x468] sm:$0xff]
    %v187 = vld [vmem:[%s1 + $0x470] sm:$0xff]
    %v188 = vld [vmem:[%s1 + $0x478] sm:$0xff]
    %v189 = vld [vmem:[%s1 + $0x480] sm:$0xff]
    %v190 = vld [vmem:[%s1 + $0x488] sm:$0xff]
    %v191 = vld [vmem:[%s1 + $0x490] sm:$0xff]
    %v192 = vld [vmem:[%s1 + $0x498] sm:$0xff]
    %v193 = vld [vmem:[%s1 + $0x4a0] sm:$0xff]
    %v194 = vld [vmem:[%s1 + $0x4a8] sm:$0xff]
    %v195 = vld [vmem:[%s1 + $0x4b0] sm:$0xff]
    %v196 = vld [vmem:[%s1 + $0x4b8] sm:$0xff]
    %v197 = vld [vmem:[%s1 + $0x4c0] sm:$0xff]
    %v198 = vld [vmem:[%s1 + $0x4c8] sm:$0xff]
    %v199 = vld [vmem:[%s1 + $0x4d0] sm:$0xff]
    %v200 = vld [vmem:[%s1 + $0x4d8] sm:$0xff]
    %v201 = vld [vmem:[%s1 + $0x4e0] sm:$0xff]
    %v202 = vld [vmem:[%s1 + $0x4e8] sm:$0xff]
    %v203 = vld [vmem:[%s1 + $0x4f0] sm:$0xff]
    %v204 = vld [vmem:[%s1 + $0x4f8] sm:$0xff]
    %v205 = vld [vmem:[%s1 + $0x500] sm:$0xff]
    %v206 = vld [vmem:[%s1 + $0x508] sm:$0xff]
    %v207 = vld [vmem:[%s1 + $0x510] sm:$0xff]
    %v208 = vld [vmem:[%s1 + $0x518] sm:$0xff]
    %v209 = vld [vmem:[%s1 + $0x520] sm:$0xff]
    %v210 = vld [vmem:[%s1 + $0x528] sm:$0xff]
    %v211 = vld [vmem:[%s1 + $0x530] sm:$0xff]
    %v212 = vld [vmem:[%s1 + $0x538] sm:$0xff]
    %v213 = vld [vmem:[%s1 + $0x540] sm:$0xff]
    %v214 = vld [vmem:[%s1 + $0x548] sm:$0xff]
    %v215 = vld [vmem:[%s1 + $0x550] sm:$0xff]
    %v216 = vld [vmem:[%s1 + $0x558] sm:$0xff]
    %v217 = vld [vmem:[%s1 + $0x560] sm:$0xff]
    %v218 = vld [vmem:[%s1 + $0x568] sm:$0xff]
    %v219 = vld [vmem:[%s1 + $0x570] sm:$0xff]
    %v220 = vld [vmem:[%s1 + $0x578] sm:$0xff]
    %v221 = vld [vmem:[%s1 + $0x580] sm:$0xff]
    %v222 = vld [vmem:[%s1 + $0x588] sm:$0xff]
    %v223 = vld [vmem:[%s1 + $0x590] sm:$0xff]
    %v224 = vld [vmem:[%s1 + $0x598] sm:$0xff]
    %v225 = vld [vmem:[%s1 + $0x5a0] sm:$0xff]
    %v226 = vld [vmem:[%s1 + $0x5a8] sm:$0xff]
    %v227 = vld [vmem:[%s1 + $0x5b0] sm:$0xff]
    %v228 = vld [vmem:[%s1 + $0x5b8] sm:$0xff]
    %v229 = vld [vmem:[%s1 + $0x5c0] sm:$0xff]
    %v230 = vld [vmem:[%s1 + $0x5c8] sm:$0xff]
    %v231 = vld [vmem:[%s1 + $0x5d0] sm:$0xff]
    %v232 = vld [vmem:[%s1 + $0x5d8] sm:$0xff]
    %v233 = vld [vmem:[%s1 + $0x5e0] sm:$0xff]
    %v234 = vld [vmem:[%s1 + $0x5e8] sm:$0xff]
    %v235 = vld [vmem:[%s1 + $0x5f0] sm:$0xff]
    %v236 = vld [vmem:[%s1 + $0x5f8] sm:$0xff]
    %v237 = vld [vmem:[%s1 + $0x600] sm:$0xff]
    %v238 = vld [vmem:[%s1 + $0x608] sm:$0xff]
    %v239 = vld [vmem:[%s1 + $0x610] sm:$0xff]
    %v240 = vld [vmem:[%s1 + $0x618] sm:$0xff]
    %v241 = vld [vmem:[%s1 + $0x620] sm:$0xff]
    %v242 = vld [vmem:[%s1 + $0x628] sm:$0xff]
    %v243 = vld [vmem:[%s1 + $0x630] sm:$0xff]
    %v244 = vld [vmem:[%s1 + $0x638] sm:$0xff]
    %v245 = vld [vmem:[%s1 + $0x640] sm:$0xff]
    %v246 = vld [vmem:[%s1 + $0x648] sm:$0xff]
    %v247 = vld [vmem:[%s1 + $0x650] sm:$0xff]
    %v248 = vld [vmem:[%s1 + $0x658] sm:$0xff]
    %v249 = vld [vmem:[%s1 + $0x660] sm:$0xff]
    %v250 = vld [vmem:[%s1 + $0x668] sm:$0xff]
    %v251 = vld [vmem:[%s1 + $0x670] sm:$0xff]
    %v252 = vld [vmem:[%s1 + $0x678] sm:$0xff]
    %v253 = vld [vmem:[%s1 + $0x680] sm:$0xff]
    %v254 = vld [vmem:[%s1 + $0x688] sm:$0xff]
    %v255 = vld [vmem:[%s1 + $0x690] sm:$0xff]
    %v256 = vld [vmem:[%s1 + $0x698] sm:$0xff]
    %v257 = vld [vmem:[%s1 + $0x6a0] sm:$0xff]
    %v258 = vld [vmem:[%s1 + $0x6a8] sm:$0xff]
    %v259 = vld [vmem:[%s1 + $0x6b0] sm:$0xff]
    %v260 = vld [vmem:[%s1 + $0x6b8] sm:$0xff]
    %v261 = vld [vmem:[%s1 + $0x6c0] sm:$0xff]
    %v262 = vld [vmem:[%s1 + $0x6c8] sm:$0xff]
    %v263 = vld [vmem:[%s1 + $0x6d0] sm:$0xff]
    %v264 = vld [vmem:[%s1 + $0x6d8] sm:$0xff]
    %v265 = vld [vmem:[%s1 + $0x6e0] sm:$0xff]
    %v266 = vld [vmem:[%s1 + $0x6e8] sm:$0xff]
    %v267 = vld [vmem:[%s1 + $0x6f0] sm:$0xff]
    %v268 = vld [vmem:[%s1 + $0x6f8] sm:$0xff]
    %v269 = vld [vmem:[%s1 + $0x700] sm:$0xff]
    %v270 = vld [vmem:[%s1 + $0x708] sm:$0xff]
    %v271 = vld [vmem:[%s1 + $0x710] sm:$0xff]
    %v272 = vld [vmem:[%s1 + $0x718] sm:$0xff]
    %v273 = vld [vmem:[%s1 + $0x720] sm:$0xff]
    %v274 = vld [vmem:[%s1 + $0x728] sm:$0xff]
    %v275 = vld [vmem:[%s1 + $0x730] sm:$0xff]
    %v276 = vld [vmem:[%s1 + $0x738] sm:$0xff]
    %v277 = vld [vmem:[%s1 + $0x740] sm:$0xff]
    %v278 = vld [vmem:[%s1 + $0x748] sm:$0xff]
    %v279 = vld [vmem:[%s1 + $0x750] sm:$0xff]
    %v280 = vld [vmem:[%s1 + $0x758] sm:$0xff]
    %v281 = vld [vmem:[%s1 + $0x760] sm:$0xff]
    %v282 = vld [vmem:[%s1 + $0x768] sm:$0xff]
    %v283 = vld [vmem:[%s1 + $0x770] sm:$0xff]
    %v284 = vld [vmem:[%s1 + $0x778] sm:$0xff]
    %v285 = vld [vmem:[%s1 + $0x780] sm:$0xff]
    %v286 = vld [vmem:[%s1 + $0x788] sm:$0xff]
    %v287 = vld [vmem:[%s1 + $0x790] sm:$0xff]
    %v288 = vld [vmem:[%s1 + $0x798] sm:$0xff]
    %v289 = vld [vmem:[%s1 + $0x7a0] sm:$0xff]
    %v290 = vld [vmem:[%s1 + $0x7a8] sm:$0xff]
    %v291 = vld [vmem:[%s1 + $0x7b0] sm:$0xff]
    %v292 = vld [vmem:[%s1 + $0x7b8] sm:$0xff]
    %v293 = vld [vmem:[%s1 + $0x7c0] sm:$0xff]
    %v294 = vld [vmem:[%s1 + $0x7c8] sm:$0xff]
    %v295 = vld [vmem:[%s1 + $0x7d0] sm:$0xff]
    %v296 = vld [vmem:[%s1 + $0x7d8] sm:$0xff]
    %v297 = vld [vmem:[%s1 + $0x7e0] sm:$0xff]
    %v298 = vld [vmem:[%s1 + $0x7e8] sm:$0xff]
    %v299 = vld [vmem:[%s1 + $0x7f0] sm:$0xff]
    %v300 = vld [vmem:[%s1 + $0x7f8] sm:$0xff]
    %v301 = vld [vmem:[%s1 + $0x800] sm:$0xff]
    %v302 = vld [vmem:[%s1 + $0x808] sm:$0xff]
    %v303 = vld [vmem:[%s1 + $0x810] sm:$0xff]
    %v304 = vld [vmem:[%s1 + $0x818] sm:$0xff]
    %v305 = vld [vmem:[%s1 + $0x820] sm:$0xff]
    %v306 = vld [vmem:[%s1 + $0x828] sm:$0xff]
    %v307 = vld [vmem:[%s1 + $0x830] sm:$0xff]
    %v308 = vld [vmem:[%s1 + $0x838] sm:$0xff]
    %v309 = vld [vmem:[%s1 + $0x840] sm:$0xff]
    %v310 = vld [vmem:[%s1 + $0x848] sm:$0xff]
    %v311 = vld [vmem:[%s1 + $0x850] sm:$0xff]
    %v312 = vld [vmem:[%s1 + $0x858] sm:$0xff]
    %v313 = vld [vmem:[%s1 + $0x860] sm:$0xff]
    %v314 = vld [vmem:[%s1 + $0x868] sm:$0xff]
    %v315 = vld [vmem:[%s1 + $0x870] sm:$0xff]
    %v316 = vld [vmem:[%s1 + $0x878] sm:$0xff]
    %v317 = vld [vmem:[%s1 + $0x880] sm:$0xff]
    %v318 = vld [vmem:[%s1 + $0x888] sm:$0xff]
    %v319 = vld [vmem:[%s1 + $0x890] sm:$0xff]
    %v320 = vld [vmem:[%s1 + $0x898] sm:$0xff]
    %v321 = vld [vmem:[%s1 + $0x8a0] sm:$0xff]
    %v322 = vld [vmem:[%s1 + $0x8a8] sm:$0xff]
    %v323 = vld [vmem:[%s1 + $0x8b0] sm:$0xff]
    %v324 = vld [vmem:[%s1 + $0x8b8] sm:$0xff]
    %v325 = vld [vmem:[%s1 + $0x8c0] sm:$0xff]
    %v326 = vld [vmem:[%s1 + $0x8c8] sm:$0xff]
    %v327 = vld [vmem:[%s1 + $0x8d0] sm:$0xff]
    %v328 = vld [vmem:[%s1 + $0x8d8] sm:$0xff]
    %v329 = vld [vmem:[%s1 + $0x8e0] sm:$0xff]
    %v330 = vld [vmem:[%s1 + $0x8e8] sm:$0xff]
    %v331 = vld [vmem:[%s1 + $0x8f0] sm:$0xff]
    %v332 = vld [vmem:[%s1 + $0x8f8] sm:$0xff]
    %v333 = vld [vmem:[%s1 + $0x900] sm:$0xff]
    %v334 = vld [vmem:[%s1 + $0x908] sm:$0xff]
    %v335 = vld [vmem:[%s1 + $0x910] sm:$0xff]
    %v336 = vld [vmem:[%s1 + $0x918] sm:$0xff]
    %v337 = vld [vmem:[%s1 + $0x920] sm:$0xff]
    %v338 = vld [vmem:[%s1 + $0x928] sm:$0xff]
    %v339 = vld [vmem:[%s1 + $0x930] sm:$0xff]
    %v340 = vld [vmem:[%s1 + $0x938] sm:$0xff]
    %v341 = vld [vmem:[%s1 + $0x940] sm:$0xff]
    %v342 = vld [vmem:[%s1 + $0x948] sm:$0xff]
    %v343 = vld [vmem:[%s1 + $0x950] sm:$0xff]
    %v344 = vld [vmem:[%s1 + $0x958] sm:$0xff]
    %v345 = vld [vmem:[%s1 + $0x960] sm:$0xff]
    %v346 = vld [vmem:[%s1 + $0x968] sm:$0xff]
    %v347 = vld [vmem:[%s1 + $0x970] sm:$0xff]
    %v348 = vld [vmem:[%s1 + $0x978] sm:$0xff]
    %v349 = vld [vmem:[%s1 + $0x980] sm:$0xff]
    %v350 = vld [vmem:[%s1 + $0x988] sm:$0xff]
    %v351 = vld [vmem:[%s1 + $0x990] sm:$0xff]
    %v352 = vld [vmem:[%s1 + $0x998] sm:$0xff]
    %v353 = vld [vmem:[%s1 + $0x9a0] sm:$0xff]
    %v354 = vld [vmem:[%s1 + $0x9a8] sm:$0xff]
    %v355 = vld [vmem:[%s1 + $0x9b0] sm:$0xff]
    %v356 = vld [vmem:[%s1 + $0x9b8] sm:$0xff]
    %v357 = vld [vmem:[%s1 + $0x9c0] sm:$0xff]
    %v358 = vld [vmem:[%s1 + $0x9c8] sm:$0xff]
    %v359 = vld [vmem:[%s1 + $0x9d0] sm:$0xff]
    %v360 = vld [vmem:[%s1 + $0x9d8] sm:$0xff]
    %v361 = vld [vmem:[%s1 + $0x9e0] sm:$0xff]
    %v362 = vld [vmem:[%s1 + $0x9e8] sm:$0xff]
    %v363 = vld [vmem:[%s1 + $0x9f0] sm:$0xff]
    %v364 = vld [vmem:[%s1 + $0x9f8] sm:$0xff]
    %v365 = vld [vmem:[%s1 + $0xa00] sm:$0xff]
    %v366 = vld [vmem:[%s1 + $0xa08] sm:$0xff]
    %v367 = vld [vmem:[%s1 + $0xa10] sm:$0xff]
    %v368 = vld [vmem:[%s1 + $0xa18] sm:$0xff]
    %v369 = vld [vmem:[%s1 + $0xa20] sm:$0xff]
    %v370 = vld [vmem:[%s1 + $0xa28] sm:$0xff]
    %v371 = vld [vmem:[%s1 + $0xa30] sm:$0xff]
    %v372 = vld [vmem:[%s1 + $0xa38] sm:$0xff]
    %v373 = vld [vmem:[%s1 + $0xa40] sm:$0xff]
    %v374 = vld [vmem:[%s1 + $0xa48] sm:$0xff]
    %v375 = vld [vmem:[%s1 + $0xa50] sm:$0xff]
    %v376 = vld [vmem:[%s1 + $0xa58] sm:$0xff]
    %v377 = vld [vmem:[%s1 + $0xa60] sm:$0xff]
    %v378 = vld [vmem:[%s1 + $0xa68] sm:$0xff]
    %v379 = vld [vmem:[%s1 + $0xa70] sm:$0xff]
    %v380 = vld [vmem:[%s1 + $0xa78] sm:$0xff]
    %v381 = vld [vmem:[%s1 + $0xa80] sm:$0xff]
    %v382 = vld [vmem:[%s1 + $0xa88] sm:$0xff]
    %v383 = vld [vmem:[%s1 + $0xa90] sm:$0xff]
    %v384 = vld [vmem:[%s1 + $0xa98] sm:$0xff]
    %v385 = vld [vmem:[%s1 + $0xaa0] sm:$0xff]
    %v386 = vld [vmem:[%s1 + $0xaa8] sm:$0xff]
    %v387 = vld [vmem:[%s1 + $0xab0] sm:$0xff]
    %v388 = vld [vmem:[%s1 + $0xab8] sm:$0xff]
    %v389 = vld [vmem:[%s1 + $0xac0] sm:$0xff]
    %v390 = vld [vmem:[%s1 + $0xac8] sm:$0xff]
    %v391 = vld [vmem:[%s1 + $0xad0] sm:$0xff]
    %v392 = vld [vmem:[%s1 + $0xad8] sm:$0xff]
    %v393 = vld [vmem:[%s1 + $0xae0] sm:$0xff]
    %v394 = vld [vmem:[%s1 + $0xae8] sm:$0xff]
    %v395 = vld [vmem:[%s1 + $0xaf0] sm:$0xff]
    %v396 = vld [vmem:[%s1 + $0xaf8] sm:$0xff]
    %v397 = vld [vmem:[%s1 + $0xb00] sm:$0xff]
    %v398 = vld [vmem:[%s1 + $0xb08] sm:$0xff]
    %v399 = vld [vmem:[%s1 + $0xb10] sm:$0xff]
    %v400 = vld [vmem:[%s1 + $0xb18] sm:$0xff]
    %v401 = vld [vmem:[%s1 + $0xb20] sm:$0xff]
    %v402 = vld [vmem:[%s1 + $0xb28] sm:$0xff]
    %v403 = vld [vmem:[%s1 + $0xb30] sm:$0xff]
    %v404 = vld [vmem:[%s1 + $0xb38] sm:$0xff]
    %v405 = vld [vmem:[%s1 + $0xb40] sm:$0xff]
    %v406 = vld [vmem:[%s1 + $0xb48] sm:$0xff]
    %v407 = vld [vmem:[%s1 + $0xb50] sm:$0xff]
    %v408 = vld [vmem:[%s1 + $0xb58] sm:$0xff]
    %v409 = vld [vmem:[%s1 + $0xb60] sm:$0xff]
    %v410 = vld [vmem:[%s1 + $0xb68] sm:$0xff]
    %v411 = vld [vmem:[%s1 + $0xb70] sm:$0xff]
    %v412 = vld [vmem:[%s1 + $0xb78] sm:$0xff]
    %v413 = vld [vmem:[%s1 + $0xb80] sm:$0xff]
    %v414 = vld [vmem:[%s1 + $0xb88] sm:$0xff]
    %v415 = vld [vmem:[%s1 + $0xb90] sm:$0xff]
    %v416 = vld [vmem:[%s1 + $0xb98] sm:$0xff]
    %v417 = vld [vmem:[%s1 + $0xba0] sm:$0xff]
    %v418 = vld [vmem:[%s1 + $0xba8] sm:$0xff]
    %v419 = vld [vmem:[%s1 + $0xbb0] sm:$0xff]
    %v420 = vld [vmem:[%s1 + $0xbb8] sm:$0xff]
    %v421 = vld [vmem:[%s1 + $0xbc0] sm:$0xff]
    %v422 = vld [vmem:[%s1 + $0xbc8] sm:$0xff]
    %v423 = vld [vmem:[%s1 + $0xbd0] sm:$0xff]
    %v424 = vld [vmem:[%s1 + $0xbd8] sm:$0xff]
    %v425 = vld [vmem:[%s1 + $0xbe0] sm:$0xff]
    %v426 = vld [vmem:[%s1 + $0xbe8] sm:$0xff]
    %v427 = vld [vmem:[%s1 + $0xbf0] sm:$0xff]
    %v428 = vld [vmem:[%s1 + $0xbf8] sm:$0xff]
    %v429 = vld [vmem:[%s1 + $0xc00] sm:$0xff]
    %v430 = vld [vmem:[%s1 + $0xc08] sm:$0xff]
    %v431 = vld [vmem:[%s1 + $0xc10] sm:$0xff]
    %v432 = vld [vmem:[%s1 + $0xc18] sm:$0xff]
    %v433 = vld [vmem:[%s1 + $0xc20] sm:$0xff]
    %v434 = vld [vmem:[%s1 + $0xc28] sm:$0xff]
    %v435 = vld [vmem:[%s1 + $0xc30] sm:$0xff]
    %v436 = vld [vmem:[%s1 + $0xc38] sm:$0xff]
    %v437 = vld [vmem:[%s1 + $0xc40] sm:$0xff]
    %v438 = vld [vmem:[%s1 + $0xc48] sm:$0xff]
    %v439 = vld [vmem:[%s1 + $0xc50] sm:$0xff]
    %v440 = vld [vmem:[%s1 + $0xc58] sm:$0xff]
    %v441 = vld [vmem:[%s1 + $0xc60] sm:$0xff]
    %v442 = vld [vmem:[%s1 + $0xc68] sm:$0xff]
    %v443 = vld [vmem:[%s1 + $0xc70] sm:$0xff]
    %v444 = vld [vmem:[%s1 + $0xc78] sm:$0xff]
    %v445 = vld [vmem:[%s1 + $0xc80] sm:$0xff]
    %v446 = vld [vmem:[%s1 + $0xc88] sm:$0xff]
    %v447 = vld [vmem:[%s1 + $0xc90] sm:$0xff]
    %v448 = vld [vmem:[%s1 + $0xc98] sm:$0xff]
    %v449 = vld [vmem:[%s1 + $0xca0] sm:$0xff]
    %v450 = vld [vmem:[%s1 + $0xca8] sm:$0xff]
    %v451 = vld [vmem:[%s1 + $0xcb0] sm:$0xff]
    %v452 = vld [vmem:[%s1 + $0xcb8] sm:$0xff]
    %v453 = vld [vmem:[%s1 + $0xcc0] sm:$0xff]
    %v454 = vld [vmem:[%s1 + $0xcc8] sm:$0xff]
    %v455 = vld [vmem:[%s1 + $0xcd0] sm:$0xff]
    %v456 = vld [vmem:[%s1 + $0xcd8] sm:$0xff]
    %v457 = vld [vmem:[%s1 + $0xce0] sm:$0xff]
    %v458 = vld [vmem:[%s1 + $0xce8] sm:$0xff]
    %v459 = vld [vmem:[%s1 + $0xcf0] sm:$0xff]
    %v460 = vld [vmem:[%s1 + $0xcf8] sm:$0xff]
    %v461 = vld [vmem:[%s1 + $0xd00] sm:$0xff]
    %v462 = vld [vmem:[%s1 + $0xd08] sm:$0xff]
    %v463 = vld [vmem:[%s1 + $0xd10] sm:$0xff]
    %v464 = vld [vmem:[%s1 + $0xd18] sm:$0xff]
    %v465 = vld [vmem:[%s1 + $0xd20] sm:$0xff]
    %v466 = vld [vmem:[%s1 + $0xd28] sm:$0xff]
    %v467 = vld [vmem:[%s1 + $0xd30] sm:$0xff]
    %v468 = vld [vmem:[%s1 + $0xd38] sm:$0xff]
    %v469 = vld [vmem:[%s1 + $0xd40] sm:$0xff]
    %v470 = vld [vmem:[%s1 + $0xd48] sm:$0xff]
    %v471 = vld [vmem:[%s1 + $0xd50] sm:$0xff]
    %v472 = vld [vmem:[%s1 + $0xd58] sm:$0xff]
    %v473 = vld [vmem:[%s1 + $0xd60] sm:$0xff]
    %v474 = vld [vmem:[%s1 + $0xd68] sm:$0xff]
    %v475 = vld [vmem:[%s1 + $0xd70] sm:$0xff]
    %v476 = vld [vmem:[%s1 + $0xd78] sm:$0xff]
    %v477 = vld [vmem:[%s1 + $0xd80] sm:$0xff]
    %v478 = vld [vmem:[%s1 + $0xd88] sm:$0xff]
    %v479 = vld [vmem:[%s1 + $0xd90] sm:$0xff]
    %v480 = vld [vmem:[%s1 + $0xd98] sm:$0xff]
    %v481 = vld [vmem:[%s1 + $0xda0] sm:$0xff]
    %v482 = vld [vmem:[%s1 + $0xda8] sm:$0xff]
    %v483 = vld [vmem:[%s1 + $0xdb0] sm:$0xff]
    %v484 = vld [vmem:[%s1 + $0xdb8] sm:$0xff]
    %v485 = vld [vmem:[%s1 + $0xdc0] sm:$0xff]
    %v486 = vld [vmem:[%s1 + $0xdc8] sm:$0xff]
    %v487 = vld [vmem:[%s1 + $0xdd0] sm:$0xff]
    %v488 = vld [vmem:[%s1 + $0xdd8] sm:$0xff]
    %v489 = vld [vmem:[%s1 + $0xde0] sm:$0xff]
    %v490 = vld [vmem:[%s1 + $0xde8] sm:$0xff]
    %v491 = vld [vmem:[%s1 + $0xdf0] sm:$0xff]
    %v492 = vld [vmem:[%s1 + $0xdf8] sm:$0xff]
    %v493 = vld [vmem:[%s1 + $0xe00] sm:$0xff]
    %v494 = vld [vmem:[%s1 + $0xe08] sm:$0xff]
    %v495 = vld [vmem:[%s1 + $0xe10] sm:$0xff]
    %v496 = vld [vmem:[%s1 + $0xe18] sm:$0xff]
    %v497 = vld [vmem:[%s1 + $0xe20] sm:$0xff]
    %v498 = vld [vmem:[%s1 + $0xe28] sm:$0xff]
    %v499 = vld [vmem:[%s1 + $0xe30] sm:$0xff]
    %v500 = vld [vmem:[%s1 + $0xe38] sm:$0xff]
    %v501 = vld [vmem:[%s1 + $0xe40] sm:$0xff]
    %v502 = vld [vmem:[%s1 + $0xe48] sm:$0xff]
    %v503 = vld [vmem:[%s1 + $0xe50] sm:$0xff]
    %v504 = vld [vmem:[%s1 + $0xe58] sm:$0xff]
    %v505 = vld [vmem:[%s1 + $0xe60] sm:$0xff]
    %v506 = vld [vmem:[%s1 + $0xe68] sm:$0xff]
    %v507 = vld [vmem:[%s1 + $0xe70] sm:$0xff]
    %v508 = vld [vmem:[%s1 + $0xe78] sm:$0xff]
    %v509 = vld [vmem:[%s1 + $0xe80] sm:$0xff]
    %v510 = vld [vmem:[%s1 + $0xe88] sm:$0xff]
    %v511 = vld [vmem:[%s1 + $0xe90] sm:$0xff]
    %v512 = vld [vmem:[%s1 + $0xe98] sm:$0xff]
    %v513 = vld [vmem:[%s1 + $0xea0] sm:$0xff]
    %v514 = vld [vmem:[%s1 + $0xea8] sm:$0xff]
    %v515 = vld [vmem:[%s1 + $0xeb0] sm:$0xff]
    %v516 = vld [vmem:[%s1 + $0xeb8] sm:$0xff]
    %v517 = vld [vmem:[%s1 + $0xec0] sm:$0xff]
    %v518 = vld [vmem:[%s1 + $0xec8] sm:$0xff]
    %v519 = vld [vmem:[%s1 + $0xed0] sm:$0xff]
    %v520 = vld [vmem:[%s1 + $0xed8] sm:$0xff]
    %v521 = vld [vmem:[%s1 + $0xee0] sm:$0xff]
    %v522 = vld [vmem:[%s1 + $0xee8] sm:$0xff]
    %v523 = vld [vmem:[%s1 + $0xef0] sm:$0xff]
    %v524 = vld [vmem:[%s1 + $0xef8] sm:$0xff]
    %v525 = vld [vmem:[%s1 + $0xf00] sm:$0xff]
    %v526 = vld [vmem:[%s1 + $0xf08] sm:$0xff]
    %v527 = vld [vmem:[%s1 + $0xf10] sm:$0xff]
    %v528 = vld [vmem:[%s1 + $0xf18] sm:$0xff]
    %v529 = vld [vmem:[%s1 + $0xf20] sm:$0xff]
    %v530 = vld [vmem:[%s1 + $0xf28] sm:$0xff]
    %v531 = vld [vmem:[%s1 + $0xf30] sm:$0xff]
    %v532 = vld [vmem:[%s1 + $0xf38] sm:$0xff]
    %v533 = vld [vmem:[%s1 + $0xf40] sm:$0xff]
    %v534 = vld [vmem:[%s1 + $0xf48] sm:$0xff]
    %v535 = vld [vmem:[%s1 + $0xf50] sm:$0xff]
    %v536 = vld [vmem:[%s1 + $0xf58] sm:$0xff]
    %v537 = vld [vmem:[%s1 + $0xf60] sm:$0xff]
    %v538 = vld [vmem:[%s1 + $0xf68] sm:$0xff]
    %v539 = vld [vmem:[%s1 + $0xf70] sm:$0xff]
    %v540 = vld [vmem:[%s1 + $0xf78] sm:$0xff]
    %v541 = vld [vmem:[%s1 + $0xf80] sm:$0xff]
    %v542 = vld [vmem:[%s1 + $0xf88] sm:$0xff]
    %v543 = vld [vmem:[%s1 + $0xf90] sm:$0xff]
    %v544 = vld [vmem:[%s1 + $0xf98] sm:$0xff]
    %v545 = vld [vmem:[%s1 + $0xfa0] sm:$0xff]
    %v546 = vld [vmem:[%s1 + $0xfa8] sm:$0xff]
    %v547 = vld [vmem:[%s1 + $0xfb0] sm:$0xff]
    %v548 = vld [vmem:[%s1 + $0xfb8] sm:$0xff]
    %v549 = vld [vmem:[%s1 + $0xfc0] sm:$0xff]
    %v550 = vld [vmem:[%s1 + $0xfc8] sm:$0xff]
    %v551 = vld [vmem:[%s1 + $0xfd0] sm:$0xff]
    %v552 = vld [vmem:[%s1 + $0xfd8] sm:$0xff]
    %v553 = vld [vmem:[%s1 + $0xfe0] sm:$0xff]
    %v554 = vld [vmem:[%s1 + $0xfe8] sm:$0xff]
    %v555 = vld [vmem:[%s1 + $0xff0] sm:$0xff]
    %v556 = vld [vmem:[%s1 + $0xff8] sm:$0xff]
    %v557 = vunpack.c.l.s8.bf16 %v45
    %v558 = vunpack.c.l.s8.bf16 %v46
    %v559 = vunpack.c.l.s8.bf16 %v47
    %v560 = vunpack.c.l.s8.bf16 %v48
    %v561 = vunpack.c.l.s8.bf16 %v49
    %v562 = vunpack.c.l.s8.bf16 %v50
    %v563 = vunpack.c.l.s8.bf16 %v51
    %v564 = vunpack.c.l.s8.bf16 %v52
    %v565 = vunpack.c.h.s8.bf16 %v45
    %v566 = vunpack.c.h.s8.bf16 %v46
    %v567 = vunpack.c.h.s8.bf16 %v47
    %v568 = vunpack.c.h.s8.bf16 %v48
    %v569 = vunpack.c.h.s8.bf16 %v49
    %v570 = vunpack.c.h.s8.bf16 %v50
    %v571 = vunpack.c.h.s8.bf16 %v51
    %v572 = vunpack.c.h.s8.bf16 %v52
    %v573 = vunpack.c.l.s8.bf16 %v53
    %v574 = vunpack.c.l.s8.bf16 %v54
    %v575 = vunpack.c.l.s8.bf16 %v55
    %v576 = vunpack.c.l.s8.bf16 %v56
    %v577 = vunpack.c.l.s8.bf16 %v57
    %v578 = vunpack.c.l.s8.bf16 %v58
    %v579 = vunpack.c.l.s8.bf16 %v59
    %v580 = vunpack.c.l.s8.bf16 %v60
    %v581 = vunpack.c.h.s8.bf16 %v53
    %v582 = vunpack.c.h.s8.bf16 %v54
    %v583 = vunpack.c.h.s8.bf16 %v55
    %v584 = vunpack.c.h.s8.bf16 %v56
    %v585 = vunpack.c.h.s8.bf16 %v57
    %v586 = vunpack.c.h.s8.bf16 %v58
    %v587 = vunpack.c.h.s8.bf16 %v59
    %v588 = vunpack.c.h.s8.bf16 %v60
    %v589 = vunpack.c.l.s8.bf16 %v61
    %v590 = vunpack.c.l.s8.bf16 %v62
    %v591 = vunpack.c.l.s8.bf16 %v63
    %v592 = vunpack.c.l.s8.bf16 %v64
    %v593 = vunpack.c.l.s8.bf16 %v65
    %v594 = vunpack.c.l.s8.bf16 %v66
    %v595 = vunpack.c.l.s8.bf16 %v67
    %v596 = vunpack.c.l.s8.bf16 %v68
    %v597 = vunpack.c.h.s8.bf16 %v61
    %v598 = vunpack.c.h.s8.bf16 %v62
    %v599 = vunpack.c.h.s8.bf16 %v63
    %v600 = vunpack.c.h.s8.bf16 %v64
    %v601 = vunpack.c.h.s8.bf16 %v65
    %v602 = vunpack.c.h.s8.bf16 %v66
    %v603 = vunpack.c.h.s8.bf16 %v67
    %v604 = vunpack.c.h.s8.bf16 %v68
    %v605 = vunpack.c.l.s8.bf16 %v69
    %v606 = vunpack.c.l.s8.bf16 %v70
    %v607 = vunpack.c.l.s8.bf16 %v71
    %v608 = vunpack.c.l.s8.bf16 %v72
    %v609 = vunpack.c.l.s8.bf16 %v73
    %v610 = vunpack.c.l.s8.bf16 %v74
    %v611 = vunpack.c.l.s8.bf16 %v75
    %v612 = vunpack.c.l.s8.bf16 %v76
    %v613 = vunpack.c.h.s8.bf16 %v69
    %v614 = vunpack.c.h.s8.bf16 %v70
    %v615 = vunpack.c.h.s8.bf16 %v71
    %v616 = vunpack.c.h.s8.bf16 %v72
    %v617 = vunpack.c.h.s8.bf16 %v73
    %v618 = vunpack.c.h.s8.bf16 %v74
    %v619 = vunpack.c.h.s8.bf16 %v75
    %v620 = vunpack.c.h.s8.bf16 %v76
    %v621 = vunpack.c.l.s8.bf16 %v77
    %v622 = vunpack.c.l.s8.bf16 %v78
    %v623 = vunpack.c.l.s8.bf16 %v79
    %v624 = vunpack.c.l.s8.bf16 %v80
    %v625 = vunpack.c.l.s8.bf16 %v81
    %v626 = vunpack.c.l.s8.bf16 %v82
    %v627 = vunpack.c.l.s8.bf16 %v83
    %v628 = vunpack.c.l.s8.bf16 %v84
    %v629 = vunpack.c.h.s8.bf16 %v77
    %v630 = vunpack.c.h.s8.bf16 %v78
    %v631 = vunpack.c.h.s8.bf16 %v79
    %v632 = vunpack.c.h.s8.bf16 %v80
    %v633 = vunpack.c.h.s8.bf16 %v81
    %v634 = vunpack.c.h.s8.bf16 %v82
    %v635 = vunpack.c.h.s8.bf16 %v83
    %v636 = vunpack.c.h.s8.bf16 %v84
    %v637 = vunpack.c.l.s8.bf16 %v85
    %v638 = vunpack.c.l.s8.bf16 %v86
    %v639 = vunpack.c.l.s8.bf16 %v87
    %v640 = vunpack.c.l.s8.bf16 %v88
    %v641 = vunpack.c.l.s8.bf16 %v89
    %v642 = vunpack.c.l.s8.bf16 %v90
    %v643 = vunpack.c.l.s8.bf16 %v91
    %v644 = vunpack.c.l.s8.bf16 %v92
    %v645 = vunpack.c.h.s8.bf16 %v85
    %v646 = vunpack.c.h.s8.bf16 %v86
    %v647 = vunpack.c.h.s8.bf16 %v87
    %v648 = vunpack.c.h.s8.bf16 %v88
    %v649 = vunpack.c.h.s8.bf16 %v89
    %v650 = vunpack.c.h.s8.bf16 %v90
    %v651 = vunpack.c.h.s8.bf16 %v91
    %v652 = vunpack.c.h.s8.bf16 %v92
    %v653 = vunpack.c.l.s8.bf16 %v93
    %v654 = vunpack.c.l.s8.bf16 %v94
    %v655 = vunpack.c.l.s8.bf16 %v95
    %v656 = vunpack.c.l.s8.bf16 %v96
    %v657 = vunpack.c.l.s8.bf16 %v97
    %v658 = vunpack.c.l.s8.bf16 %v98
    %v659 = vunpack.c.l.s8.bf16 %v99
    %v660 = vunpack.c.l.s8.bf16 %v100
    %v661 = vunpack.c.h.s8.bf16 %v93
    %v662 = vunpack.c.h.s8.bf16 %v94
    %v663 = vunpack.c.h.s8.bf16 %v95
    %v664 = vunpack.c.h.s8.bf16 %v96
    %v665 = vunpack.c.h.s8.bf16 %v97
    %v666 = vunpack.c.h.s8.bf16 %v98
    %v667 = vunpack.c.h.s8.bf16 %v99
    %v668 = vunpack.c.h.s8.bf16 %v100
    %v669 = vunpack.c.l.s8.bf16 %v101
    %v670 = vunpack.c.l.s8.bf16 %v102
    %v671 = vunpack.c.l.s8.bf16 %v103
    %v672 = vunpack.c.l.s8.bf16 %v104
    %v673 = vunpack.c.l.s8.bf16 %v105
    %v674 = vunpack.c.l.s8.bf16 %v106
    %v675 = vunpack.c.l.s8.bf16 %v107
    %v676 = vunpack.c.l.s8.bf16 %v108
    %v677 = vunpack.c.h.s8.bf16 %v101
    %v678 = vunpack.c.h.s8.bf16 %v102
    %v679 = vunpack.c.h.s8.bf16 %v103
    %v680 = vunpack.c.h.s8.bf16 %v104
    %v681 = vunpack.c.h.s8.bf16 %v105
    %v682 = vunpack.c.h.s8.bf16 %v106
    %v683 = vunpack.c.h.s8.bf16 %v107
    %v684 = vunpack.c.h.s8.bf16 %v108
    %v685 = vunpack.c.l.s8.bf16 %v109
    %v686 = vunpack.c.l.s8.bf16 %v110
    %v687 = vunpack.c.l.s8.bf16 %v111
    %v688 = vunpack.c.l.s8.bf16 %v112
    %v689 = vunpack.c.l.s8.bf16 %v113
    %v690 = vunpack.c.l.s8.bf16 %v114
    %v691 = vunpack.c.l.s8.bf16 %v115
    %v692 = vunpack.c.l.s8.bf16 %v116
    %v693 = vunpack.c.h.s8.bf16 %v109
    %v694 = vunpack.c.h.s8.bf16 %v110
    %v695 = vunpack.c.h.s8.bf16 %v111
    %v696 = vunpack.c.h.s8.bf16 %v112
    %v697 = vunpack.c.h.s8.bf16 %v113
    %v698 = vunpack.c.h.s8.bf16 %v114
    %v699 = vunpack.c.h.s8.bf16 %v115
    %v700 = vunpack.c.h.s8.bf16 %v116
    %v701 = vunpack.c.l.s8.bf16 %v117
    %v702 = vunpack.c.l.s8.bf16 %v118
    %v703 = vunpack.c.l.s8.bf16 %v119
    %v704 = vunpack.c.l.s8.bf16 %v120
    %v705 = vunpack.c.l.s8.bf16 %v121
    %v706 = vunpack.c.l.s8.bf16 %v122
    %v707 = vunpack.c.l.s8.bf16 %v123
    %v708 = vunpack.c.l.s8.bf16 %v124
    %v709 = vunpack.c.h.s8.bf16 %v117
    %v710 = vunpack.c.h.s8.bf16 %v118
    %v711 = vunpack.c.h.s8.bf16 %v119
    %v712 = vunpack.c.h.s8.bf16 %v120
    %v713 = vunpack.c.h.s8.bf16 %v121
    %v714 = vunpack.c.h.s8.bf16 %v122
    %v715 = vunpack.c.h.s8.bf16 %v123
    %v716 = vunpack.c.h.s8.bf16 %v124
    %v717 = vunpack.c.l.s8.bf16 %v125
    %v718 = vunpack.c.l.s8.bf16 %v126
    %v719 = vunpack.c.l.s8.bf16 %v127
    %v720 = vunpack.c.l.s8.bf16 %v128
    %v721 = vunpack.c.l.s8.bf16 %v129
    %v722 = vunpack.c.l.s8.bf16 %v130
    %v723 = vunpack.c.l.s8.bf16 %v131
    %v724 = vunpack.c.l.s8.bf16 %v132
    %v725 = vunpack.c.h.s8.bf16 %v125
    %v726 = vunpack.c.h.s8.bf16 %v126
    %v727 = vunpack.c.h.s8.bf16 %v127
    %v728 = vunpack.c.h.s8.bf16 %v128
    %v729 = vunpack.c.h.s8.bf16 %v129
    %v730 = vunpack.c.h.s8.bf16 %v130
    %v731 = vunpack.c.h.s8.bf16 %v131
    %v732 = vunpack.c.h.s8.bf16 %v132
    %v733 = vunpack.c.l.s8.bf16 %v133
    %v734 = vunpack.c.l.s8.bf16 %v134
    %v735 = vunpack.c.l.s8.bf16 %v135
    %v736 = vunpack.c.l.s8.bf16 %v136
    %v737 = vunpack.c.l.s8.bf16 %v137
    %v738 = vunpack.c.l.s8.bf16 %v138
    %v739 = vunpack.c.l.s8.bf16 %v139
    %v740 = vunpack.c.l.s8.bf16 %v140
    %v741 = vunpack.c.h.s8.bf16 %v133
    %v742 = vunpack.c.h.s8.bf16 %v134
    %v743 = vunpack.c.h.s8.bf16 %v135
    %v744 = vunpack.c.h.s8.bf16 %v136
    %v745 = vunpack.c.h.s8.bf16 %v137
    %v746 = vunpack.c.h.s8.bf16 %v138
    %v747 = vunpack.c.h.s8.bf16 %v139
    %v748 = vunpack.c.h.s8.bf16 %v140
    %v749 = vunpack.c.l.s8.bf16 %v141
    %v750 = vunpack.c.l.s8.bf16 %v142
    %v751 = vunpack.c.l.s8.bf16 %v143
    %v752 = vunpack.c.l.s8.bf16 %v144
    %v753 = vunpack.c.l.s8.bf16 %v145
    %v754 = vunpack.c.l.s8.bf16 %v146
    %v755 = vunpack.c.l.s8.bf16 %v147
    %v756 = vunpack.c.l.s8.bf16 %v148
    %v757 = vunpack.c.h.s8.bf16 %v141
    %v758 = vunpack.c.h.s8.bf16 %v142
    %v759 = vunpack.c.h.s8.bf16 %v143
    %v760 = vunpack.c.h.s8.bf16 %v144
    %v761 = vunpack.c.h.s8.bf16 %v145
    %v762 = vunpack.c.h.s8.bf16 %v146
    %v763 = vunpack.c.h.s8.bf16 %v147
    %v764 = vunpack.c.h.s8.bf16 %v148
    %v765 = vunpack.c.l.s8.bf16 %v149
    %v766 = vunpack.c.l.s8.bf16 %v150
    %v767 = vunpack.c.l.s8.bf16 %v151
    %v768 = vunpack.c.l.s8.bf16 %v152
    %v769 = vunpack.c.l.s8.bf16 %v153
    %v770 = vunpack.c.l.s8.bf16 %v154
    %v771 = vunpack.c.l.s8.bf16 %v155
    %v772 = vunpack.c.l.s8.bf16 %v156
    %v773 = vunpack.c.h.s8.bf16 %v149
    %v774 = vunpack.c.h.s8.bf16 %v150
    %v775 = vunpack.c.h.s8.bf16 %v151
    %v776 = vunpack.c.h.s8.bf16 %v152
    %v777 = vunpack.c.h.s8.bf16 %v153
    %v778 = vunpack.c.h.s8.bf16 %v154
    %v779 = vunpack.c.h.s8.bf16 %v155
    %v780 = vunpack.c.h.s8.bf16 %v156
    %v781 = vunpack.c.l.s8.bf16 %v157
    %v782 = vunpack.c.l.s8.bf16 %v158
    %v783 = vunpack.c.l.s8.bf16 %v159
    %v784 = vunpack.c.l.s8.bf16 %v160
    %v785 = vunpack.c.l.s8.bf16 %v161
    %v786 = vunpack.c.l.s8.bf16 %v162
    %v787 = vunpack.c.l.s8.bf16 %v163
    %v788 = vunpack.c.l.s8.bf16 %v164
    %v789 = vunpack.c.h.s8.bf16 %v157
    %v790 = vunpack.c.h.s8.bf16 %v158
    %v791 = vunpack.c.h.s8.bf16 %v159
    %v792 = vunpack.c.h.s8.bf16 %v160
    %v793 = vunpack.c.h.s8.bf16 %v161
    %v794 = vunpack.c.h.s8.bf16 %v162
    %v795 = vunpack.c.h.s8.bf16 %v163
    %v796 = vunpack.c.h.s8.bf16 %v164
    %v797 = vunpack.c.l.s8.bf16 %v165
    %v798 = vunpack.c.l.s8.bf16 %v166
    %v799 = vunpack.c.l.s8.bf16 %v167
    %v800 = vunpack.c.l.s8.bf16 %v168
    %v801 = vunpack.c.l.s8.bf16 %v169
    %v802 = vunpack.c.l.s8.bf16 %v170
    %v803 = vunpack.c.l.s8.bf16 %v171
    %v804 = vunpack.c.l.s8.bf16 %v172
    %v805 = vunpack.c.h.s8.bf16 %v165
    %v806 = vunpack.c.h.s8.bf16 %v166
    %v807 = vunpack.c.h.s8.bf16 %v167
    %v808 = vunpack.c.h.s8.bf16 %v168
    %v809 = vunpack.c.h.s8.bf16 %v169
    %v810 = vunpack.c.h.s8.bf16 %v170
    %v811 = vunpack.c.h.s8.bf16 %v171
    %v812 = vunpack.c.h.s8.bf16 %v172
    %v813 = vunpack.c.l.s8.bf16 %v173
    %v814 = vunpack.c.l.s8.bf16 %v174
    %v815 = vunpack.c.l.s8.bf16 %v175
    %v816 = vunpack.c.l.s8.bf16 %v176
    %v817 = vunpack.c.l.s8.bf16 %v177
    %v818 = vunpack.c.l.s8.bf16 %v178
    %v819 = vunpack.c.l.s8.bf16 %v179
    %v820 = vunpack.c.l.s8.bf16 %v180
    %v821 = vunpack.c.h.s8.bf16 %v173
    %v822 = vunpack.c.h.s8.bf16 %v174
    %v823 = vunpack.c.h.s8.bf16 %v175
    %v824 = vunpack.c.h.s8.bf16 %v176
    %v825 = vunpack.c.h.s8.bf16 %v177
    %v826 = vunpack.c.h.s8.bf16 %v178
    %v827 = vunpack.c.h.s8.bf16 %v179
    %v828 = vunpack.c.h.s8.bf16 %v180
    %v829 = vunpack.c.l.s8.bf16 %v181
    %v830 = vunpack.c.l.s8.bf16 %v182
    %v831 = vunpack.c.l.s8.bf16 %v183
    %v832 = vunpack.c.l.s8.bf16 %v184
    %v833 = vunpack.c.l.s8.bf16 %v185
    %v834 = vunpack.c.l.s8.bf16 %v186
    %v835 = vunpack.c.l.s8.bf16 %v187
    %v836 = vunpack.c.l.s8.bf16 %v188
    %v837 = vunpack.c.h.s8.bf16 %v181
    %v838 = vunpack.c.h.s8.bf16 %v182
    %v839 = vunpack.c.h.s8.bf16 %v183
    %v840 = vunpack.c.h.s8.bf16 %v184
    %v841 = vunpack.c.h.s8.bf16 %v185
    %v842 = vunpack.c.h.s8.bf16 %v186
    %v843 = vunpack.c.h.s8.bf16 %v187
    %v844 = vunpack.c.h.s8.bf16 %v188
    %v845 = vunpack.c.l.s8.bf16 %v189
    %v846 = vunpack.c.l.s8.bf16 %v190
    %v847 = vunpack.c.l.s8.bf16 %v191
    %v848 = vunpack.c.l.s8.bf16 %v192
    %v849 = vunpack.c.l.s8.bf16 %v193
    %v850 = vunpack.c.l.s8.bf16 %v194
    %v851 = vunpack.c.l.s8.bf16 %v195
    %v852 = vunpack.c.l.s8.bf16 %v196
    %v853 = vunpack.c.h.s8.bf16 %v189
    %v854 = vunpack.c.h.s8.bf16 %v190
    %v855 = vunpack.c.h.s8.bf16 %v191
    %v856 = vunpack.c.h.s8.bf16 %v192
    %v857 = vunpack.c.h.s8.bf16 %v193
    %v858 = vunpack.c.h.s8.bf16 %v194
    %v859 = vunpack.c.h.s8.bf16 %v195
    %v860 = vunpack.c.h.s8.bf16 %v196
    %v861 = vunpack.c.l.s8.bf16 %v197
    %v862 = vunpack.c.l.s8.bf16 %v198
    %v863 = vunpack.c.l.s8.bf16 %v199
    %v864 = vunpack.c.l.s8.bf16 %v200
    %v865 = vunpack.c.l.s8.bf16 %v201
    %v866 = vunpack.c.l.s8.bf16 %v202
    %v867 = vunpack.c.l.s8.bf16 %v203
    %v868 = vunpack.c.l.s8.bf16 %v204
    %v869 = vunpack.c.h.s8.bf16 %v197
    %v870 = vunpack.c.h.s8.bf16 %v198
    %v871 = vunpack.c.h.s8.bf16 %v199
    %v872 = vunpack.c.h.s8.bf16 %v200
    %v873 = vunpack.c.h.s8.bf16 %v201
    %v874 = vunpack.c.h.s8.bf16 %v202
    %v875 = vunpack.c.h.s8.bf16 %v203
    %v876 = vunpack.c.h.s8.bf16 %v204
    %v877 = vunpack.c.l.s8.bf16 %v205
    %v878 = vunpack.c.l.s8.bf16 %v206
    %v879 = vunpack.c.l.s8.bf16 %v207
    %v880 = vunpack.c.l.s8.bf16 %v208
    %v881 = vunpack.c.l.s8.bf16 %v209
    %v882 = vunpack.c.l.s8.bf16 %v210
    %v883 = vunpack.c.l.s8.bf16 %v211
    %v884 = vunpack.c.l.s8.bf16 %v212
    %v885 = vunpack.c.h.s8.bf16 %v205
    %v886 = vunpack.c.h.s8.bf16 %v206
    %v887 = vunpack.c.h.s8.bf16 %v207
    %v888 = vunpack.c.h.s8.bf16 %v208
    %v889 = vunpack.c.h.s8.bf16 %v209
    %v890 = vunpack.c.h.s8.bf16 %v210
    %v891 = vunpack.c.h.s8.bf16 %v211
    %v892 = vunpack.c.h.s8.bf16 %v212
    %v893 = vunpack.c.l.s8.bf16 %v213
    %v894 = vunpack.c.l.s8.bf16 %v214
    %v895 = vunpack.c.l.s8.bf16 %v215
    %v896 = vunpack.c.l.s8.bf16 %v216
    %v897 = vunpack.c.l.s8.bf16 %v217
    %v898 = vunpack.c.l.s8.bf16 %v218
    %v899 = vunpack.c.l.s8.bf16 %v219
    %v900 = vunpack.c.l.s8.bf16 %v220
    %v901 = vunpack.c.h.s8.bf16 %v213
    %v902 = vunpack.c.h.s8.bf16 %v214
    %v903 = vunpack.c.h.s8.bf16 %v215
    %v904 = vunpack.c.h.s8.bf16 %v216
    %v905 = vunpack.c.h.s8.bf16 %v217
    %v906 = vunpack.c.h.s8.bf16 %v218
    %v907 = vunpack.c.h.s8.bf16 %v219
    %v908 = vunpack.c.h.s8.bf16 %v220
    %v909 = vunpack.c.l.s8.bf16 %v221
    %v910 = vunpack.c.l.s8.bf16 %v222
    %v911 = vunpack.c.l.s8.bf16 %v223
    %v912 = vunpack.c.l.s8.bf16 %v224
    %v913 = vunpack.c.l.s8.bf16 %v225
    %v914 = vunpack.c.l.s8.bf16 %v226
    %v915 = vunpack.c.l.s8.bf16 %v227
    %v916 = vunpack.c.l.s8.bf16 %v228
    %v917 = vunpack.c.h.s8.bf16 %v221
    %v918 = vunpack.c.h.s8.bf16 %v222
    %v919 = vunpack.c.h.s8.bf16 %v223
    %v920 = vunpack.c.h.s8.bf16 %v224
    %v921 = vunpack.c.h.s8.bf16 %v225
    %v922 = vunpack.c.h.s8.bf16 %v226
    %v923 = vunpack.c.h.s8.bf16 %v227
    %v924 = vunpack.c.h.s8.bf16 %v228
    %v925 = vunpack.c.l.s8.bf16 %v229
    %v926 = vunpack.c.l.s8.bf16 %v230
    %v927 = vunpack.c.l.s8.bf16 %v231
    %v928 = vunpack.c.l.s8.bf16 %v232
    %v929 = vunpack.c.l.s8.bf16 %v233
    %v930 = vunpack.c.l.s8.bf16 %v234
    %v931 = vunpack.c.l.s8.bf16 %v235
    %v932 = vunpack.c.l.s8.bf16 %v236
    %v933 = vunpack.c.h.s8.bf16 %v229
    %v934 = vunpack.c.h.s8.bf16 %v230
    %v935 = vunpack.c.h.s8.bf16 %v231
    %v936 = vunpack.c.h.s8.bf16 %v232
    %v937 = vunpack.c.h.s8.bf16 %v233
    %v938 = vunpack.c.h.s8.bf16 %v234
    %v939 = vunpack.c.h.s8.bf16 %v235
    %v940 = vunpack.c.h.s8.bf16 %v236
    %v941 = vunpack.c.l.s8.bf16 %v237
    %v942 = vunpack.c.l.s8.bf16 %v238
    %v943 = vunpack.c.l.s8.bf16 %v239
    %v944 = vunpack.c.l.s8.bf16 %v240
    %v945 = vunpack.c.l.s8.bf16 %v241
    %v946 = vunpack.c.l.s8.bf16 %v242
    %v947 = vunpack.c.l.s8.bf16 %v243
    %v948 = vunpack.c.l.s8.bf16 %v244
    %v949 = vunpack.c.h.s8.bf16 %v237
    %v950 = vunpack.c.h.s8.bf16 %v238
    %v951 = vunpack.c.h.s8.bf16 %v239
    %v952 = vunpack.c.h.s8.bf16 %v240
    %v953 = vunpack.c.h.s8.bf16 %v241
    %v954 = vunpack.c.h.s8.bf16 %v242
    %v955 = vunpack.c.h.s8.bf16 %v243
    %v956 = vunpack.c.h.s8.bf16 %v244
    %v957 = vunpack.c.l.s8.bf16 %v245
    %v958 = vunpack.c.l.s8.bf16 %v246
    %v959 = vunpack.c.l.s8.bf16 %v247
    %v960 = vunpack.c.l.s8.bf16 %v248
    %v961 = vunpack.c.l.s8.bf16 %v249
    %v962 = vunpack.c.l.s8.bf16 %v250
    %v963 = vunpack.c.l.s8.bf16 %v251
    %v964 = vunpack.c.l.s8.bf16 %v252
    %v965 = vunpack.c.h.s8.bf16 %v245
    %v966 = vunpack.c.h.s8.bf16 %v246
    %v967 = vunpack.c.h.s8.bf16 %v247
    %v968 = vunpack.c.h.s8.bf16 %v248
    %v969 = vunpack.c.h.s8.bf16 %v249
    %v970 = vunpack.c.h.s8.bf16 %v250
    %v971 = vunpack.c.h.s8.bf16 %v251
    %v972 = vunpack.c.h.s8.bf16 %v252
    %v973 = vunpack.c.l.s8.bf16 %v253
    %v974 = vunpack.c.l.s8.bf16 %v254
    %v975 = vunpack.c.l.s8.bf16 %v255
    %v976 = vunpack.c.l.s8.bf16 %v256
    %v977 = vunpack.c.l.s8.bf16 %v257
    %v978 = vunpack.c.l.s8.bf16 %v258
    %v979 = vunpack.c.l.s8.bf16 %v259
    %v980 = vunpack.c.l.s8.bf16 %v260
    %v981 = vunpack.c.h.s8.bf16 %v253
    %v982 = vunpack.c.h.s8.bf16 %v254
    %v983 = vunpack.c.h.s8.bf16 %v255
    %v984 = vunpack.c.h.s8.bf16 %v256
    %v985 = vunpack.c.h.s8.bf16 %v257
    %v986 = vunpack.c.h.s8.bf16 %v258
    %v987 = vunpack.c.h.s8.bf16 %v259
    %v988 = vunpack.c.h.s8.bf16 %v260
    %v989 = vunpack.c.l.s8.bf16 %v261
    %v990 = vunpack.c.l.s8.bf16 %v262
    %v991 = vunpack.c.l.s8.bf16 %v263
    %v992 = vunpack.c.l.s8.bf16 %v264
    %v993 = vunpack.c.l.s8.bf16 %v265
    %v994 = vunpack.c.l.s8.bf16 %v266
    %v995 = vunpack.c.l.s8.bf16 %v267
    %v996 = vunpack.c.l.s8.bf16 %v268
    %v997 = vunpack.c.h.s8.bf16 %v261
    %v998 = vunpack.c.h.s8.bf16 %v262
    %v999 = vunpack.c.h.s8.bf16 %v263
    %v1000 = vunpack.c.h.s8.bf16 %v264
    %v1001 = vunpack.c.h.s8.bf16 %v265
    %v1002 = vunpack.c.h.s8.bf16 %v266
    %v1003 = vunpack.c.h.s8.bf16 %v267
    %v1004 = vunpack.c.h.s8.bf16 %v268
    %v1005 = vunpack.c.l.s8.bf16 %v269
    %v1006 = vunpack.c.l.s8.bf16 %v270
    %v1007 = vunpack.c.l.s8.bf16 %v271
    %v1008 = vunpack.c.l.s8.bf16 %v272
    %v1009 = vunpack.c.l.s8.bf16 %v273
    %v1010 = vunpack.c.l.s8.bf16 %v274
    %v1011 = vunpack.c.l.s8.bf16 %v275
    %v1012 = vunpack.c.l.s8.bf16 %v276
    %v1013 = vunpack.c.h.s8.bf16 %v269
    %v1014 = vunpack.c.h.s8.bf16 %v270
    %v1015 = vunpack.c.h.s8.bf16 %v271
    %v1016 = vunpack.c.h.s8.bf16 %v272
    %v1017 = vunpack.c.h.s8.bf16 %v273
    %v1018 = vunpack.c.h.s8.bf16 %v274
    %v1019 = vunpack.c.h.s8.bf16 %v275
    %v1020 = vunpack.c.h.s8.bf16 %v276
    %v1021 = vunpack.c.l.s8.bf16 %v277
    %v1022 = vunpack.c.l.s8.bf16 %v278
    %v1023 = vunpack.c.l.s8.bf16 %v279
    %v1024 = vunpack.c.l.s8.bf16 %v280
    %v1025 = vunpack.c.l.s8.bf16 %v281
    %v1026 = vunpack.c.l.s8.bf16 %v282
    %v1027 = vunpack.c.l.s8.bf16 %v283
    %v1028 = vunpack.c.l.s8.bf16 %v284
    %v1029 = vunpack.c.h.s8.bf16 %v277
    %v1030 = vunpack.c.h.s8.bf16 %v278
    %v1031 = vunpack.c.h.s8.bf16 %v279
    %v1032 = vunpack.c.h.s8.bf16 %v280
    %v1033 = vunpack.c.h.s8.bf16 %v281
    %v1034 = vunpack.c.h.s8.bf16 %v282
    %v1035 = vunpack.c.h.s8.bf16 %v283
    %v1036 = vunpack.c.h.s8.bf16 %v284
    %v1037 = vunpack.c.l.s8.bf16 %v285
    %v1038 = vunpack.c.l.s8.bf16 %v286
    %v1039 = vunpack.c.l.s8.bf16 %v287
    %v1040 = vunpack.c.l.s8.bf16 %v288
    %v1041 = vunpack.c.l.s8.bf16 %v289
    %v1042 = vunpack.c.l.s8.bf16 %v290
    %v1043 = vunpack.c.l.s8.bf16 %v291
    %v1044 = vunpack.c.l.s8.bf16 %v292
    %v1045 = vunpack.c.h.s8.bf16 %v285
    %v1046 = vunpack.c.h.s8.bf16 %v286
    %v1047 = vunpack.c.h.s8.bf16 %v287
    %v1048 = vunpack.c.h.s8.bf16 %v288
    %v1049 = vunpack.c.h.s8.bf16 %v289
    %v1050 = vunpack.c.h.s8.bf16 %v290
    %v1051 = vunpack.c.h.s8.bf16 %v291
    %v1052 = vunpack.c.h.s8.bf16 %v292
    %v1053 = vunpack.c.l.s8.bf16 %v293
    %v1054 = vunpack.c.l.s8.bf16 %v294
    %v1055 = vunpack.c.l.s8.bf16 %v295
    %v1056 = vunpack.c.l.s8.bf16 %v296
    %v1057 = vunpack.c.l.s8.bf16 %v297
    %v1058 = vunpack.c.l.s8.bf16 %v298
    %v1059 = vunpack.c.l.s8.bf16 %v299
    %v1060 = vunpack.c.l.s8.bf16 %v300
    %v1061 = vunpack.c.h.s8.bf16 %v293
    %v1062 = vunpack.c.h.s8.bf16 %v294
    %v1063 = vunpack.c.h.s8.bf16 %v295
    %v1064 = vunpack.c.h.s8.bf16 %v296
    %v1065 = vunpack.c.h.s8.bf16 %v297
    %v1066 = vunpack.c.h.s8.bf16 %v298
    %v1067 = vunpack.c.h.s8.bf16 %v299
    %v1068 = vunpack.c.h.s8.bf16 %v300
    %v1069 = vunpack.c.l.s8.bf16 %v301
    %v1070 = vunpack.c.l.s8.bf16 %v302
    %v1071 = vunpack.c.l.s8.bf16 %v303
    %v1072 = vunpack.c.l.s8.bf16 %v304
    %v1073 = vunpack.c.l.s8.bf16 %v305
    %v1074 = vunpack.c.l.s8.bf16 %v306
    %v1075 = vunpack.c.l.s8.bf16 %v307
    %v1076 = vunpack.c.l.s8.bf16 %v308
    %v1077 = vunpack.c.h.s8.bf16 %v301
    %v1078 = vunpack.c.h.s8.bf16 %v302
    %v1079 = vunpack.c.h.s8.bf16 %v303
    %v1080 = vunpack.c.h.s8.bf16 %v304
    %v1081 = vunpack.c.h.s8.bf16 %v305
    %v1082 = vunpack.c.h.s8.bf16 %v306
    %v1083 = vunpack.c.h.s8.bf16 %v307
    %v1084 = vunpack.c.h.s8.bf16 %v308
    %v1085 = vunpack.c.l.s8.bf16 %v309
    %v1086 = vunpack.c.l.s8.bf16 %v310
    %v1087 = vunpack.c.l.s8.bf16 %v311
    %v1088 = vunpack.c.l.s8.bf16 %v312
    %v1089 = vunpack.c.l.s8.bf16 %v313
    %v1090 = vunpack.c.l.s8.bf16 %v314
    %v1091 = vunpack.c.l.s8.bf16 %v315
    %v1092 = vunpack.c.l.s8.bf16 %v316
    %v1093 = vunpack.c.h.s8.bf16 %v309
    %v1094 = vunpack.c.h.s8.bf16 %v310
    %v1095 = vunpack.c.h.s8.bf16 %v311
    %v1096 = vunpack.c.h.s8.bf16 %v312
    %v1097 = vunpack.c.h.s8.bf16 %v313
    %v1098 = vunpack.c.h.s8.bf16 %v314
    %v1099 = vunpack.c.h.s8.bf16 %v315
    %v1100 = vunpack.c.h.s8.bf16 %v316
    %v1101 = vunpack.c.l.s8.bf16 %v317
    %v1102 = vunpack.c.l.s8.bf16 %v318
    %v1103 = vunpack.c.l.s8.bf16 %v319
    %v1104 = vunpack.c.l.s8.bf16 %v320
    %v1105 = vunpack.c.l.s8.bf16 %v321
    %v1106 = vunpack.c.l.s8.bf16 %v322
    %v1107 = vunpack.c.l.s8.bf16 %v323
    %v1108 = vunpack.c.l.s8.bf16 %v324
    %v1109 = vunpack.c.h.s8.bf16 %v317
    %v1110 = vunpack.c.h.s8.bf16 %v318
    %v1111 = vunpack.c.h.s8.bf16 %v319
    %v1112 = vunpack.c.h.s8.bf16 %v320
    %v1113 = vunpack.c.h.s8.bf16 %v321
    %v1114 = vunpack.c.h.s8.bf16 %v322
    %v1115 = vunpack.c.h.s8.bf16 %v323
    %v1116 = vunpack.c.h.s8.bf16 %v324
    %v1117 = vunpack.c.l.s8.bf16 %v325
    %v1118 = vunpack.c.l.s8.bf16 %v326
    %v1119 = vunpack.c.l.s8.bf16 %v327
    %v1120 = vunpack.c.l.s8.bf16 %v328
    %v1121 = vunpack.c.l.s8.bf16 %v329
    %v1122 = vunpack.c.l.s8.bf16 %v330
    %v1123 = vunpack.c.l.s8.bf16 %v331
    %v1124 = vunpack.c.l.s8.bf16 %v332
    %v1125 = vunpack.c.h.s8.bf16 %v325
    %v1126 = vunpack.c.h.s8.bf16 %v326
    %v1127 = vunpack.c.h.s8.bf16 %v327
    %v1128 = vunpack.c.h.s8.bf16 %v328
    %v1129 = vunpack.c.h.s8.bf16 %v329
    %v1130 = vunpack.c.h.s8.bf16 %v330
    %v1131 = vunpack.c.h.s8.bf16 %v331
    %v1132 = vunpack.c.h.s8.bf16 %v332
    %v1133 = vunpack.c.l.s8.bf16 %v333
    %v1134 = vunpack.c.l.s8.bf16 %v334
    %v1135 = vunpack.c.l.s8.bf16 %v335
    %v1136 = vunpack.c.l.s8.bf16 %v336
    %v1137 = vunpack.c.l.s8.bf16 %v337
    %v1138 = vunpack.c.l.s8.bf16 %v338
    %v1139 = vunpack.c.l.s8.bf16 %v339
    %v1140 = vunpack.c.l.s8.bf16 %v340
    %v1141 = vunpack.c.h.s8.bf16 %v333
    %v1142 = vunpack.c.h.s8.bf16 %v334
    %v1143 = vunpack.c.h.s8.bf16 %v335
    %v1144 = vunpack.c.h.s8.bf16 %v336
    %v1145 = vunpack.c.h.s8.bf16 %v337
    %v1146 = vunpack.c.h.s8.bf16 %v338
    %v1147 = vunpack.c.h.s8.bf16 %v339
    %v1148 = vunpack.c.h.s8.bf16 %v340
    %v1149 = vunpack.c.l.s8.bf16 %v341
    %v1150 = vunpack.c.l.s8.bf16 %v342
    %v1151 = vunpack.c.l.s8.bf16 %v343
    %v1152 = vunpack.c.l.s8.bf16 %v344
    %v1153 = vunpack.c.l.s8.bf16 %v345
    %v1154 = vunpack.c.l.s8.bf16 %v346
    %v1155 = vunpack.c.l.s8.bf16 %v347
    %v1156 = vunpack.c.l.s8.bf16 %v348
    %v1157 = vunpack.c.h.s8.bf16 %v341
    %v1158 = vunpack.c.h.s8.bf16 %v342
    %v1159 = vunpack.c.h.s8.bf16 %v343
    %v1160 = vunpack.c.h.s8.bf16 %v344
    %v1161 = vunpack.c.h.s8.bf16 %v345
    %v1162 = vunpack.c.h.s8.bf16 %v346
    %v1163 = vunpack.c.h.s8.bf16 %v347
    %v1164 = vunpack.c.h.s8.bf16 %v348
    %v1165 = vunpack.c.l.s8.bf16 %v349
    %v1166 = vunpack.c.l.s8.bf16 %v350
    %v1167 = vunpack.c.l.s8.bf16 %v351
    %v1168 = vunpack.c.l.s8.bf16 %v352
    %v1169 = vunpack.c.l.s8.bf16 %v353
    %v1170 = vunpack.c.l.s8.bf16 %v354
    %v1171 = vunpack.c.l.s8.bf16 %v355
    %v1172 = vunpack.c.l.s8.bf16 %v356
    %v1173 = vunpack.c.h.s8.bf16 %v349
    %v1174 = vunpack.c.h.s8.bf16 %v350
    %v1175 = vunpack.c.h.s8.bf16 %v351
    %v1176 = vunpack.c.h.s8.bf16 %v352
    %v1177 = vunpack.c.h.s8.bf16 %v353
    %v1178 = vunpack.c.h.s8.bf16 %v354
    %v1179 = vunpack.c.h.s8.bf16 %v355
    %v1180 = vunpack.c.h.s8.bf16 %v356
    %v1181 = vunpack.c.l.s8.bf16 %v357
    %v1182 = vunpack.c.l.s8.bf16 %v358
    %v1183 = vunpack.c.l.s8.bf16 %v359
    %v1184 = vunpack.c.l.s8.bf16 %v360
    %v1185 = vunpack.c.l.s8.bf16 %v361
    %v1186 = vunpack.c.l.s8.bf16 %v362
    %v1187 = vunpack.c.l.s8.bf16 %v363
    %v1188 = vunpack.c.l.s8.bf16 %v364
    %v1189 = vunpack.c.h.s8.bf16 %v357
    %v1190 = vunpack.c.h.s8.bf16 %v358
    %v1191 = vunpack.c.h.s8.bf16 %v359
    %v1192 = vunpack.c.h.s8.bf16 %v360
    %v1193 = vunpack.c.h.s8.bf16 %v361
    %v1194 = vunpack.c.h.s8.bf16 %v362
    %v1195 = vunpack.c.h.s8.bf16 %v363
    %v1196 = vunpack.c.h.s8.bf16 %v364
    %v1197 = vunpack.c.l.s8.bf16 %v365
    %v1198 = vunpack.c.l.s8.bf16 %v366
    %v1199 = vunpack.c.l.s8.bf16 %v367
    %v1200 = vunpack.c.l.s8.bf16 %v368
    %v1201 = vunpack.c.l.s8.bf16 %v369
    %v1202 = vunpack.c.l.s8.bf16 %v370
    %v1203 = vunpack.c.l.s8.bf16 %v371
    %v1204 = vunpack.c.l.s8.bf16 %v372
    %v1205 = vunpack.c.h.s8.bf16 %v365
    %v1206 = vunpack.c.h.s8.bf16 %v366
    %v1207 = vunpack.c.h.s8.bf16 %v367
    %v1208 = vunpack.c.h.s8.bf16 %v368
    %v1209 = vunpack.c.h.s8.bf16 %v369
    %v1210 = vunpack.c.h.s8.bf16 %v370
    %v1211 = vunpack.c.h.s8.bf16 %v371
    %v1212 = vunpack.c.h.s8.bf16 %v372
    %v1213 = vunpack.c.l.s8.bf16 %v373
    %v1214 = vunpack.c.l.s8.bf16 %v374
    %v1215 = vunpack.c.l.s8.bf16 %v375
    %v1216 = vunpack.c.l.s8.bf16 %v376
    %v1217 = vunpack.c.l.s8.bf16 %v377
    %v1218 = vunpack.c.l.s8.bf16 %v378
    %v1219 = vunpack.c.l.s8.bf16 %v379
    %v1220 = vunpack.c.l.s8.bf16 %v380
    %v1221 = vunpack.c.h.s8.bf16 %v373
    %v1222 = vunpack.c.h.s8.bf16 %v374
    %v1223 = vunpack.c.h.s8.bf16 %v375
    %v1224 = vunpack.c.h.s8.bf16 %v376
    %v1225 = vunpack.c.h.s8.bf16 %v377
    %v1226 = vunpack.c.h.s8.bf16 %v378
    %v1227 = vunpack.c.h.s8.bf16 %v379
    %v1228 = vunpack.c.h.s8.bf16 %v380
    %v1229 = vunpack.c.l.s8.bf16 %v381
    %v1230 = vunpack.c.l.s8.bf16 %v382
    %v1231 = vunpack.c.l.s8.bf16 %v383
    %v1232 = vunpack.c.l.s8.bf16 %v384
    %v1233 = vunpack.c.l.s8.bf16 %v385
    %v1234 = vunpack.c.l.s8.bf16 %v386
    %v1235 = vunpack.c.l.s8.bf16 %v387
    %v1236 = vunpack.c.l.s8.bf16 %v388
    %v1237 = vunpack.c.h.s8.bf16 %v381
    %v1238 = vunpack.c.h.s8.bf16 %v382
    %v1239 = vunpack.c.h.s8.bf16 %v383
    %v1240 = vunpack.c.h.s8.bf16 %v384
    %v1241 = vunpack.c.h.s8.bf16 %v385
    %v1242 = vunpack.c.h.s8.bf16 %v386
    %v1243 = vunpack.c.h.s8.bf16 %v387
    %v1244 = vunpack.c.h.s8.bf16 %v388
    %v1245 = vunpack.c.l.s8.bf16 %v389
    %v1246 = vunpack.c.l.s8.bf16 %v390
    %v1247 = vunpack.c.l.s8.bf16 %v391
    %v1248 = vunpack.c.l.s8.bf16 %v392
    %v1249 = vunpack.c.l.s8.bf16 %v393
    %v1250 = vunpack.c.l.s8.bf16 %v394
    %v1251 = vunpack.c.l.s8.bf16 %v395
    %v1252 = vunpack.c.l.s8.bf16 %v396
    %v1253 = vunpack.c.h.s8.bf16 %v389
    %v1254 = vunpack.c.h.s8.bf16 %v390
    %v1255 = vunpack.c.h.s8.bf16 %v391
    %v1256 = vunpack.c.h.s8.bf16 %v392
    %v1257 = vunpack.c.h.s8.bf16 %v393
    %v1258 = vunpack.c.h.s8.bf16 %v394
    %v1259 = vunpack.c.h.s8.bf16 %v395
    %v1260 = vunpack.c.h.s8.bf16 %v396
    %v1261 = vunpack.c.l.s8.bf16 %v397
    %v1262 = vunpack.c.l.s8.bf16 %v398
    %v1263 = vunpack.c.l.s8.bf16 %v399
    %v1264 = vunpack.c.l.s8.bf16 %v400
    %v1265 = vunpack.c.l.s8.bf16 %v401
    %v1266 = vunpack.c.l.s8.bf16 %v402
    %v1267 = vunpack.c.l.s8.bf16 %v403
    %v1268 = vunpack.c.l.s8.bf16 %v404
    %v1269 = vunpack.c.h.s8.bf16 %v397
    %v1270 = vunpack.c.h.s8.bf16 %v398
    %v1271 = vunpack.c.h.s8.bf16 %v399
    %v1272 = vunpack.c.h.s8.bf16 %v400
    %v1273 = vunpack.c.h.s8.bf16 %v401
    %v1274 = vunpack.c.h.s8.bf16 %v402
    %v1275 = vunpack.c.h.s8.bf16 %v403
    %v1276 = vunpack.c.h.s8.bf16 %v404
    %v1277 = vunpack.c.l.s8.bf16 %v405
    %v1278 = vunpack.c.l.s8.bf16 %v406
    %v1279 = vunpack.c.l.s8.bf16 %v407
    %v1280 = vunpack.c.l.s8.bf16 %v408
    %v1281 = vunpack.c.l.s8.bf16 %v409
    %v1282 = vunpack.c.l.s8.bf16 %v410
    %v1283 = vunpack.c.l.s8.bf16 %v411
    %v1284 = vunpack.c.l.s8.bf16 %v412
    %v1285 = vunpack.c.h.s8.bf16 %v405
    %v1286 = vunpack.c.h.s8.bf16 %v406
    %v1287 = vunpack.c.h.s8.bf16 %v407
    %v1288 = vunpack.c.h.s8.bf16 %v408
    %v1289 = vunpack.c.h.s8.bf16 %v409
    %v1290 = vunpack.c.h.s8.bf16 %v410
    %v1291 = vunpack.c.h.s8.bf16 %v411
    %v1292 = vunpack.c.h.s8.bf16 %v412
    %v1293 = vunpack.c.l.s8.bf16 %v413
    %v1294 = vunpack.c.l.s8.bf16 %v414
    %v1295 = vunpack.c.l.s8.bf16 %v415
    %v1296 = vunpack.c.l.s8.bf16 %v416
    %v1297 = vunpack.c.l.s8.bf16 %v417
    %v1298 = vunpack.c.l.s8.bf16 %v418
    %v1299 = vunpack.c.l.s8.bf16 %v419
    %v1300 = vunpack.c.l.s8.bf16 %v420
    %v1301 = vunpack.c.h.s8.bf16 %v413
    %v1302 = vunpack.c.h.s8.bf16 %v414
    %v1303 = vunpack.c.h.s8.bf16 %v415
    %v1304 = vunpack.c.h.s8.bf16 %v416
    %v1305 = vunpack.c.h.s8.bf16 %v417
    %v1306 = vunpack.c.h.s8.bf16 %v418
    %v1307 = vunpack.c.h.s8.bf16 %v419
    %v1308 = vunpack.c.h.s8.bf16 %v420
    %v1309 = vunpack.c.l.s8.bf16 %v421
    %v1310 = vunpack.c.l.s8.bf16 %v422
    %v1311 = vunpack.c.l.s8.bf16 %v423
    %v1312 = vunpack.c.l.s8.bf16 %v424
    %v1313 = vunpack.c.l.s8.bf16 %v425
    %v1314 = vunpack.c.l.s8.bf16 %v426
    %v1315 = vunpack.c.l.s8.bf16 %v427
    %v1316 = vunpack.c.l.s8.bf16 %v428
    %v1317 = vunpack.c.h.s8.bf16 %v421
    %v1318 = vunpack.c.h.s8.bf16 %v422
    %v1319 = vunpack.c.h.s8.bf16 %v423
    %v1320 = vunpack.c.h.s8.bf16 %v424
    %v1321 = vunpack.c.h.s8.bf16 %v425
    %v1322 = vunpack.c.h.s8.bf16 %v426
    %v1323 = vunpack.c.h.s8.bf16 %v427
    %v1324 = vunpack.c.h.s8.bf16 %v428
    %v1325 = vunpack.c.l.s8.bf16 %v429
    %v1326 = vunpack.c.l.s8.bf16 %v430
    %v1327 = vunpack.c.l.s8.bf16 %v431
    %v1328 = vunpack.c.l.s8.bf16 %v432
    %v1329 = vunpack.c.l.s8.bf16 %v433
    %v1330 = vunpack.c.l.s8.bf16 %v434
    %v1331 = vunpack.c.l.s8.bf16 %v435
    %v1332 = vunpack.c.l.s8.bf16 %v436
    %v1333 = vunpack.c.h.s8.bf16 %v429
    %v1334 = vunpack.c.h.s8.bf16 %v430
    %v1335 = vunpack.c.h.s8.bf16 %v431
    %v1336 = vunpack.c.h.s8.bf16 %v432
    %v1337 = vunpack.c.h.s8.bf16 %v433
    %v1338 = vunpack.c.h.s8.bf16 %v434
    %v1339 = vunpack.c.h.s8.bf16 %v435
    %v1340 = vunpack.c.h.s8.bf16 %v436
    %v1341 = vunpack.c.l.s8.bf16 %v437
    %v1342 = vunpack.c.l.s8.bf16 %v438
    %v1343 = vunpack.c.l.s8.bf16 %v439
    %v1344 = vunpack.c.l.s8.bf16 %v440
    %v1345 = vunpack.c.l.s8.bf16 %v441
    %v1346 = vunpack.c.l.s8.bf16 %v442
    %v1347 = vunpack.c.l.s8.bf16 %v443
    %v1348 = vunpack.c.l.s8.bf16 %v444
    %v1349 = vunpack.c.h.s8.bf16 %v437
    %v1350 = vunpack.c.h.s8.bf16 %v438
    %v1351 = vunpack.c.h.s8.bf16 %v439
    %v1352 = vunpack.c.h.s8.bf16 %v440
    %v1353 = vunpack.c.h.s8.bf16 %v441
    %v1354 = vunpack.c.h.s8.bf16 %v442
    %v1355 = vunpack.c.h.s8.bf16 %v443
    %v1356 = vunpack.c.h.s8.bf16 %v444
    %v1357 = vunpack.c.l.s8.bf16 %v445
    %v1358 = vunpack.c.l.s8.bf16 %v446
    %v1359 = vunpack.c.l.s8.bf16 %v447
    %v1360 = vunpack.c.l.s8.bf16 %v448
    %v1361 = vunpack.c.l.s8.bf16 %v449
    %v1362 = vunpack.c.l.s8.bf16 %v450
    %v1363 = vunpack.c.l.s8.bf16 %v451
    %v1364 = vunpack.c.l.s8.bf16 %v452
    %v1365 = vunpack.c.h.s8.bf16 %v445
    %v1366 = vunpack.c.h.s8.bf16 %v446
    %v1367 = vunpack.c.h.s8.bf16 %v447
    %v1368 = vunpack.c.h.s8.bf16 %v448
    %v1369 = vunpack.c.h.s8.bf16 %v449
    %v1370 = vunpack.c.h.s8.bf16 %v450
    %v1371 = vunpack.c.h.s8.bf16 %v451
    %v1372 = vunpack.c.h.s8.bf16 %v452
    %v1373 = vunpack.c.l.s8.bf16 %v453
    %v1374 = vunpack.c.l.s8.bf16 %v454
    %v1375 = vunpack.c.l.s8.bf16 %v455
    %v1376 = vunpack.c.l.s8.bf16 %v456
    %v1377 = vunpack.c.l.s8.bf16 %v457
    %v1378 = vunpack.c.l.s8.bf16 %v458
    %v1379 = vunpack.c.l.s8.bf16 %v459
    %v1380 = vunpack.c.l.s8.bf16 %v460
    %v1381 = vunpack.c.h.s8.bf16 %v453
    %v1382 = vunpack.c.h.s8.bf16 %v454
    %v1383 = vunpack.c.h.s8.bf16 %v455
    %v1384 = vunpack.c.h.s8.bf16 %v456
    %v1385 = vunpack.c.h.s8.bf16 %v457
    %v1386 = vunpack.c.h.s8.bf16 %v458
    %v1387 = vunpack.c.h.s8.bf16 %v459
    %v1388 = vunpack.c.h.s8.bf16 %v460
    %v1389 = vunpack.c.l.s8.bf16 %v461
    %v1390 = vunpack.c.l.s8.bf16 %v462
    %v1391 = vunpack.c.l.s8.bf16 %v463
    %v1392 = vunpack.c.l.s8.bf16 %v464
    %v1393 = vunpack.c.l.s8.bf16 %v465
    %v1394 = vunpack.c.l.s8.bf16 %v466
    %v1395 = vunpack.c.l.s8.bf16 %v467
    %v1396 = vunpack.c.l.s8.bf16 %v468
    %v1397 = vunpack.c.h.s8.bf16 %v461
    %v1398 = vunpack.c.h.s8.bf16 %v462
    %v1399 = vunpack.c.h.s8.bf16 %v463
    %v1400 = vunpack.c.h.s8.bf16 %v464
    %v1401 = vunpack.c.h.s8.bf16 %v465
    %v1402 = vunpack.c.h.s8.bf16 %v466
    %v1403 = vunpack.c.h.s8.bf16 %v467
    %v1404 = vunpack.c.h.s8.bf16 %v468
    %v1405 = vunpack.c.l.s8.bf16 %v469
    %v1406 = vunpack.c.l.s8.bf16 %v470
    %v1407 = vunpack.c.l.s8.bf16 %v471
    %v1408 = vunpack.c.l.s8.bf16 %v472
    %v1409 = vunpack.c.l.s8.bf16 %v473
    %v1410 = vunpack.c.l.s8.bf16 %v474
    %v1411 = vunpack.c.l.s8.bf16 %v475
    %v1412 = vunpack.c.l.s8.bf16 %v476
    %v1413 = vunpack.c.h.s8.bf16 %v469
    %v1414 = vunpack.c.h.s8.bf16 %v470
    %v1415 = vunpack.c.h.s8.bf16 %v471
    %v1416 = vunpack.c.h.s8.bf16 %v472
    %v1417 = vunpack.c.h.s8.bf16 %v473
    %v1418 = vunpack.c.h.s8.bf16 %v474
    %v1419 = vunpack.c.h.s8.bf16 %v475
    %v1420 = vunpack.c.h.s8.bf16 %v476
    %v1421 = vunpack.c.l.s8.bf16 %v477
    %v1422 = vunpack.c.l.s8.bf16 %v478
    %v1423 = vunpack.c.l.s8.bf16 %v479
    %v1424 = vunpack.c.l.s8.bf16 %v480
    %v1425 = vunpack.c.l.s8.bf16 %v481
    %v1426 = vunpack.c.l.s8.bf16 %v482
    %v1427 = vunpack.c.l.s8.bf16 %v483
    %v1428 = vunpack.c.l.s8.bf16 %v484
    %v1429 = vunpack.c.h.s8.bf16 %v477
    %v1430 = vunpack.c.h.s8.bf16 %v478
    %v1431 = vunpack.c.h.s8.bf16 %v479
    %v1432 = vunpack.c.h.s8.bf16 %v480
    %v1433 = vunpack.c.h.s8.bf16 %v481
    %v1434 = vunpack.c.h.s8.bf16 %v482
    %v1435 = vunpack.c.h.s8.bf16 %v483
    %v1436 = vunpack.c.h.s8.bf16 %v484
    %v1437 = vunpack.c.l.s8.bf16 %v485
    %v1438 = vunpack.c.l.s8.bf16 %v486
    %v1439 = vunpack.c.l.s8.bf16 %v487
    %v1440 = vunpack.c.l.s8.bf16 %v488
    %v1441 = vunpack.c.l.s8.bf16 %v489
    %v1442 = vunpack.c.l.s8.bf16 %v490
    %v1443 = vunpack.c.l.s8.bf16 %v491
    %v1444 = vunpack.c.l.s8.bf16 %v492
    %v1445 = vunpack.c.h.s8.bf16 %v485
    %v1446 = vunpack.c.h.s8.bf16 %v486
    %v1447 = vunpack.c.h.s8.bf16 %v487
    %v1448 = vunpack.c.h.s8.bf16 %v488
    %v1449 = vunpack.c.h.s8.bf16 %v489
    %v1450 = vunpack.c.h.s8.bf16 %v490
    %v1451 = vunpack.c.h.s8.bf16 %v491
    %v1452 = vunpack.c.h.s8.bf16 %v492
    %v1453 = vunpack.c.l.s8.bf16 %v493
    %v1454 = vunpack.c.l.s8.bf16 %v494
    %v1455 = vunpack.c.l.s8.bf16 %v495
    %v1456 = vunpack.c.l.s8.bf16 %v496
    %v1457 = vunpack.c.l.s8.bf16 %v497
    %v1458 = vunpack.c.l.s8.bf16 %v498
    %v1459 = vunpack.c.l.s8.bf16 %v499
    %v1460 = vunpack.c.l.s8.bf16 %v500
    %v1461 = vunpack.c.h.s8.bf16 %v493
    %v1462 = vunpack.c.h.s8.bf16 %v494
    %v1463 = vunpack.c.h.s8.bf16 %v495
    %v1464 = vunpack.c.h.s8.bf16 %v496
    %v1465 = vunpack.c.h.s8.bf16 %v497
    %v1466 = vunpack.c.h.s8.bf16 %v498
    %v1467 = vunpack.c.h.s8.bf16 %v499
    %v1468 = vunpack.c.h.s8.bf16 %v500
    %v1469 = vunpack.c.l.s8.bf16 %v501
    %v1470 = vunpack.c.l.s8.bf16 %v502
    %v1471 = vunpack.c.l.s8.bf16 %v503
    %v1472 = vunpack.c.l.s8.bf16 %v504
    %v1473 = vunpack.c.l.s8.bf16 %v505
    %v1474 = vunpack.c.l.s8.bf16 %v506
    %v1475 = vunpack.c.l.s8.bf16 %v507
    %v1476 = vunpack.c.l.s8.bf16 %v508
    %v1477 = vunpack.c.h.s8.bf16 %v501
    %v1478 = vunpack.c.h.s8.bf16 %v502
    %v1479 = vunpack.c.h.s8.bf16 %v503
    %v1480 = vunpack.c.h.s8.bf16 %v504
    %v1481 = vunpack.c.h.s8.bf16 %v505
    %v1482 = vunpack.c.h.s8.bf16 %v506
    %v1483 = vunpack.c.h.s8.bf16 %v507
    %v1484 = vunpack.c.h.s8.bf16 %v508
    %v1485 = vunpack.c.l.s8.bf16 %v509
    %v1486 = vunpack.c.l.s8.bf16 %v510
    %v1487 = vunpack.c.l.s8.bf16 %v511
    %v1488 = vunpack.c.l.s8.bf16 %v512
    %v1489 = vunpack.c.l.s8.bf16 %v513
    %v1490 = vunpack.c.l.s8.bf16 %v514
    %v1491 = vunpack.c.l.s8.bf16 %v515
    %v1492 = vunpack.c.l.s8.bf16 %v516
    %v1493 = vunpack.c.h.s8.bf16 %v509
    %v1494 = vunpack.c.h.s8.bf16 %v510
    %v1495 = vunpack.c.h.s8.bf16 %v511
    %v1496 = vunpack.c.h.s8.bf16 %v512
    %v1497 = vunpack.c.h.s8.bf16 %v513
    %v1498 = vunpack.c.h.s8.bf16 %v514
    %v1499 = vunpack.c.h.s8.bf16 %v515
    %v1500 = vunpack.c.h.s8.bf16 %v516
    %v1501 = vunpack.c.l.s8.bf16 %v517
    %v1502 = vunpack.c.l.s8.bf16 %v518
    %v1503 = vunpack.c.l.s8.bf16 %v519
    %v1504 = vunpack.c.l.s8.bf16 %v520
    %v1505 = vunpack.c.l.s8.bf16 %v521
    %v1506 = vunpack.c.l.s8.bf16 %v522
    %v1507 = vunpack.c.l.s8.bf16 %v523
    %v1508 = vunpack.c.l.s8.bf16 %v524
    %v1509 = vunpack.c.h.s8.bf16 %v517
    %v1510 = vunpack.c.h.s8.bf16 %v518
    %v1511 = vunpack.c.h.s8.bf16 %v519
    %v1512 = vunpack.c.h.s8.bf16 %v520
    %v1513 = vunpack.c.h.s8.bf16 %v521
    %v1514 = vunpack.c.h.s8.bf16 %v522
    %v1515 = vunpack.c.h.s8.bf16 %v523
    %v1516 = vunpack.c.h.s8.bf16 %v524
    %v1517 = vunpack.c.l.s8.bf16 %v525
    %v1518 = vunpack.c.l.s8.bf16 %v526
    %v1519 = vunpack.c.l.s8.bf16 %v527
    %v1520 = vunpack.c.l.s8.bf16 %v528
    %v1521 = vunpack.c.l.s8.bf16 %v529
    %v1522 = vunpack.c.l.s8.bf16 %v530
    %v1523 = vunpack.c.l.s8.bf16 %v531
    %v1524 = vunpack.c.l.s8.bf16 %v532
    %v1525 = vunpack.c.h.s8.bf16 %v525
    %v1526 = vunpack.c.h.s8.bf16 %v526
    %v1527 = vunpack.c.h.s8.bf16 %v527
    %v1528 = vunpack.c.h.s8.bf16 %v528
    %v1529 = vunpack.c.h.s8.bf16 %v529
    %v1530 = vunpack.c.h.s8.bf16 %v530
    %v1531 = vunpack.c.h.s8.bf16 %v531
    %v1532 = vunpack.c.h.s8.bf16 %v532
    %v1533 = vunpack.c.l.s8.bf16 %v533
    %v1534 = vunpack.c.l.s8.bf16 %v534
    %v1535 = vunpack.c.l.s8.bf16 %v535
    %v1536 = vunpack.c.l.s8.bf16 %v536
    %v1537 = vunpack.c.l.s8.bf16 %v537
    %v1538 = vunpack.c.l.s8.bf16 %v538
    %v1539 = vunpack.c.l.s8.bf16 %v539
    %v1540 = vunpack.c.l.s8.bf16 %v540
    %v1541 = vunpack.c.h.s8.bf16 %v533
    %v1542 = vunpack.c.h.s8.bf16 %v534
    %v1543 = vunpack.c.h.s8.bf16 %v535
    %v1544 = vunpack.c.h.s8.bf16 %v536
    %v1545 = vunpack.c.h.s8.bf16 %v537
    %v1546 = vunpack.c.h.s8.bf16 %v538
    %v1547 = vunpack.c.h.s8.bf16 %v539
    %v1548 = vunpack.c.h.s8.bf16 %v540
    %v1549 = vunpack.c.l.s8.bf16 %v541
    %v1550 = vunpack.c.l.s8.bf16 %v542
    %v1551 = vunpack.c.l.s8.bf16 %v543
    %v1552 = vunpack.c.l.s8.bf16 %v544
    %v1553 = vunpack.c.l.s8.bf16 %v545
    %v1554 = vunpack.c.l.s8.bf16 %v546
    %v1555 = vunpack.c.l.s8.bf16 %v547
    %v1556 = vunpack.c.l.s8.bf16 %v548
    %v1557 = vunpack.c.h.s8.bf16 %v541
    %v1558 = vunpack.c.h.s8.bf16 %v542
    %v1559 = vunpack.c.h.s8.bf16 %v543
    %v1560 = vunpack.c.h.s8.bf16 %v544
    %v1561 = vunpack.c.h.s8.bf16 %v545
    %v1562 = vunpack.c.h.s8.bf16 %v546
    %v1563 = vunpack.c.h.s8.bf16 %v547
    %v1564 = vunpack.c.h.s8.bf16 %v548
    %v1565 = vunpack.c.l.s8.bf16 %v549
    %v1566 = vunpack.c.l.s8.bf16 %v550
    %v1567 = vunpack.c.l.s8.bf16 %v551
    %v1568 = vunpack.c.l.s8.bf16 %v552
    %v1569 = vunpack.c.l.s8.bf16 %v553
    %v1570 = vunpack.c.l.s8.bf16 %v554
    %v1571 = vunpack.c.l.s8.bf16 %v555
    %v1572 = vunpack.c.l.s8.bf16 %v556
    %v1573 = vunpack.c.h.s8.bf16 %v549
    %v1574 = vunpack.c.h.s8.bf16 %v550
    %v1575 = vunpack.c.h.s8.bf16 %v551
    %v1576 = vunpack.c.h.s8.bf16 %v552
    %v1577 = vunpack.c.h.s8.bf16 %v553
    %v1578 = vunpack.c.h.s8.bf16 %v554
    %v1579 = vunpack.c.h.s8.bf16 %v555
    %v1580 = vunpack.c.h.s8.bf16 %v556
    %v1589 = vunpack.c.l.b16 %v37
    %v1590 = vunpack.c.h.b16 %v37
    %v1591 = vunpack.c.l.b16 %v38
    %v1592 = vunpack.c.h.b16 %v38
    %v1593 = vunpack.c.l.b16 %v39
    %v1594 = vunpack.c.h.b16 %v39
    %v1595 = vunpack.c.l.b16 %v40
    %v1596 = vunpack.c.h.b16 %v40
    %v1597 = vunpack.c.l.b16 %v41
    %v1598 = vunpack.c.h.b16 %v41
    %v1599 = vunpack.c.l.b16 %v42
    %v1600 = vunpack.c.h.b16 %v42
    %v1601 = vunpack.c.l.b16 %v43
    %v1602 = vunpack.c.h.b16 %v43
    %v1603 = vunpack.c.l.b16 %v44
    %v1604 = vunpack.c.h.b16 %v44
    %v1605 = vpack.c.b16 %v1589, %v1589
    %v1606 = vpack.c.b16 %v1590, %v1590
    %v1607 = vpack.c.b16 %v1591, %v1591
    %v1608 = vpack.c.b16 %v1592, %v1592
    %v1609 = vpack.c.b16 %v1593, %v1593
    %v1610 = vpack.c.b16 %v1594, %v1594
    %v1611 = vpack.c.b16 %v1595, %v1595
    %v1612 = vpack.c.b16 %v1596, %v1596
    %v1613 = vpack.c.b16 %v1597, %v1597
    %v1614 = vpack.c.b16 %v1598, %v1598
    %v1615 = vpack.c.b16 %v1599, %v1599
    %v1616 = vpack.c.b16 %v1600, %v1600
    %v1617 = vpack.c.b16 %v1601, %v1601
    %v1618 = vpack.c.b16 %v1602, %v1602
    %v1619 = vpack.c.b16 %v1603, %v1603
    %v1620 = vpack.c.b16 %v1604, %v1604
    %1637 = vmatprep.subr.bf16.mxu0 %v558
    %1638 = vmatpush1.bf16.msra.mxu0 %v557
    %1639 = vmatprep.subr.bf16.mxu0 %v566
    %1640 = vmatpush1.bf16.msra.mxu0 %v565
    %1641 = vmatprep.subr.bf16.mxu0 %v574
    %1642 = vmatpush1.bf16.msra.mxu0 %v573
    %1643 = vmatprep.subr.bf16.mxu0 %v582
    %1644 = vmatpush1.bf16.msra.mxu0 %v581
    %1645 = vmatprep.subr.bf16.mxu0 %v590
    %1646 = vmatpush1.bf16.msra.mxu0 %v589
    %1647 = vmatprep.subr.bf16.mxu0 %v598
    %1648 = vmatpush1.bf16.msra.mxu0 %v597
    %1649 = vmatprep.subr.bf16.mxu0 %v606
    %1650 = vmatpush1.bf16.msra.mxu0 %v605
    %1651 = vmatprep.subr.bf16.mxu0 %v614
    %1652 = vmatpush1.bf16.msra.mxu0 %v613
    %1653 = vmatprep.subr.bf16.mxu0 %v622
    %1654 = vmatpush1.bf16.msra.mxu0 %v621
    %1655 = vmatprep.subr.bf16.mxu0 %v630
    %1656 = vmatpush1.bf16.msra.mxu0 %v629
    %1657 = vmatprep.subr.bf16.mxu0 %v638
    %1658 = vmatpush1.bf16.msra.mxu0 %v637
    %1659 = vmatprep.subr.bf16.mxu0 %v646
    %1660 = vmatpush1.bf16.msra.mxu0 %v645
    %1661 = vmatprep.subr.bf16.mxu0 %v654
    %1662 = vmatpush1.bf16.msra.mxu0 %v653
    %1663 = vmatprep.subr.bf16.mxu0 %v662
    %1664 = vmatpush1.bf16.msra.mxu0 %v661
    %1665 = vmatprep.subr.bf16.mxu0 %v670
    %1666 = vmatpush1.bf16.msra.mxu0 %v669
    %1667 = vmatprep.subr.bf16.mxu0 %v678
    %1668 = vmatpush1.bf16.msra.mxu0 %v677
    %1669 = vmatprep.mubr.bf16.mxu0 %v1606
    %1670 = vmatmul.mubr.bf16.gmra.mrb[0].mxu0 %v1605
    %v1671 = vpop.f32.mrb[0].mxu0
    %v1672 = vadd.f32 0.0, %v1671
    %v1673 = vpop.f32.mrb[0].mxu0
    %v1674 = vadd.f32 0.0, %v1673
    %v1675 = vpop.f32.mrb[0].mxu0
    %v1676 = vpop.f32.mrb[0].mxu0
    %1677 = vdwg.mxu0
    %1678 = vmatprep.subr.bf16.mxu0 %v686
    %1679 = vmatpush1.bf16.msra.mxu0 %v685
    %1680 = vmatprep.subr.bf16.mxu0 %v694
    %1681 = vmatpush1.bf16.msra.mxu0 %v693
    %1682 = vmatprep.subr.bf16.mxu0 %v702
    %1683 = vmatpush1.bf16.msra.mxu0 %v701
    %1684 = vmatprep.subr.bf16.mxu0 %v710
    %1685 = vmatpush1.bf16.msra.mxu0 %v709
    %1686 = vmatprep.subr.bf16.mxu0 %v718
    %1687 = vmatpush1.bf16.msra.mxu0 %v717
    %1688 = vmatprep.subr.bf16.mxu0 %v726
    %1689 = vmatpush1.bf16.msra.mxu0 %v725
    %1690 = vmatprep.subr.bf16.mxu0 %v734
    %1691 = vmatpush1.bf16.msra.mxu0 %v733
    %1692 = vmatprep.subr.bf16.mxu0 %v742
    %1693 = vmatpush1.bf16.msra.mxu0 %v741
    %1694 = vmatprep.subr.bf16.mxu0 %v750
    %1695 = vmatpush1.bf16.msra.mxu0 %v749
    %1696 = vmatprep.subr.bf16.mxu0 %v758
    %1697 = vmatpush1.bf16.msra.mxu0 %v757
    %1698 = vmatprep.subr.bf16.mxu0 %v766
    %1699 = vmatpush1.bf16.msra.mxu0 %v765
    %1700 = vmatprep.subr.bf16.mxu0 %v774
    %1701 = vmatpush1.bf16.msra.mxu0 %v773
    %1702 = vmatprep.subr.bf16.mxu0 %v782
    %1703 = vmatpush1.bf16.msra.mxu0 %v781
    %1704 = vmatprep.subr.bf16.mxu0 %v790
    %1705 = vmatpush1.bf16.msra.mxu0 %v789
    %1706 = vmatprep.subr.bf16.mxu0 %v798
    %1707 = vmatpush1.bf16.msra.mxu0 %v797
    %1708 = vmatprep.subr.bf16.mxu0 %v806
    %1709 = vmatpush1.bf16.msra.mxu0 %v805
    %1710 = vmatprep.mubr.bf16.mxu0 %v1608
    %1711 = vmatmul.mubr.bf16.gmra.mrb[0].mxu0 %v1607
    %v1712 = vpop.f32.mrb[0].mxu0
    %v1713 = vadd.f32 %v1672, %v1712
    %v1714 = vpop.f32.mrb[0].mxu0
    %v1715 = vadd.f32 %v1674, %v1714
    %v1716 = vpop.f32.mrb[0].mxu0
    %v1717 = vpop.f32.mrb[0].mxu0
    %1718 = vdwg.mxu0
    %1719 = vmatprep.subr.bf16.mxu0 %v814
    %1720 = vmatpush1.bf16.msra.mxu0 %v813
    %1721 = vmatprep.subr.bf16.mxu0 %v822
    %1722 = vmatpush1.bf16.msra.mxu0 %v821
    %1723 = vmatprep.subr.bf16.mxu0 %v830
    %1724 = vmatpush1.bf16.msra.mxu0 %v829
    %1725 = vmatprep.subr.bf16.mxu0 %v838
    %1726 = vmatpush1.bf16.msra.mxu0 %v837
    %1727 = vmatprep.subr.bf16.mxu0 %v846
    %1728 = vmatpush1.bf16.msra.mxu0 %v845
    %1729 = vmatprep.subr.bf16.mxu0 %v854
    %1730 = vmatpush1.bf16.msra.mxu0 %v853
    %1731 = vmatprep.subr.bf16.mxu0 %v862
    %1732 = vmatpush1.bf16.msra.mxu0 %v861
    %1733 = vmatprep.subr.bf16.mxu0 %v870
    %1734 = vmatpush1.bf16.msra.mxu0 %v869
    %1735 = vmatprep.subr.bf16.mxu0 %v878
    %1736 = vmatpush1.bf16.msra.mxu0 %v877
    %1737 = vmatprep.subr.bf16.mxu0 %v886
    %1738 = vmatpush1.bf16.msra.mxu0 %v885
    %1739 = vmatprep.subr.bf16.mxu0 %v894
    %1740 = vmatpush1.bf16.msra.mxu0 %v893
    %1741 = vmatprep.subr.bf16.mxu0 %v902
    %1742 = vmatpush1.bf16.msra.mxu0 %v901
    %1743 = vmatprep.subr.bf16.mxu0 %v910
    %1744 = vmatpush1.bf16.msra.mxu0 %v909
    %1745 = vmatprep.subr.bf16.mxu0 %v918
    %1746 = vmatpush1.bf16.msra.mxu0 %v917
    %1747 = vmatprep.subr.bf16.mxu0 %v926
    %1748 = vmatpush1.bf16.msra.mxu0 %v925
    %1749 = vmatprep.subr.bf16.mxu0 %v934
    %1750 = vmatpush1.bf16.msra.mxu0 %v933
    %1751 = vmatprep.mubr.bf16.mxu0 %v1610
    %1752 = vmatmul.mubr.bf16.gmra.mrb[0].mxu0 %v1609
    %v1753 = vpop.f32.mrb[0].mxu0
    %v1754 = vadd.f32 %v1713, %v1753
    %v1755 = vpop.f32.mrb[0].mxu0
    %v1756 = vadd.f32 %v1715, %v1755
    %v1757 = vpop.f32.mrb[0].mxu0
    %v1758 = vpop.f32.mrb[0].mxu0
    %1759 = vdwg.mxu0
    %1760 = vmatprep.subr.bf16.mxu0 %v942
    %1761 = vmatpush1.bf16.msra.mxu0 %v941
    %1762 = vmatprep.subr.bf16.mxu0 %v950
    %1763 = vmatpush1.bf16.msra.mxu0 %v949
    %1764 = vmatprep.subr.bf16.mxu0 %v958
    %1765 = vmatpush1.bf16.msra.mxu0 %v957
    %1766 = vmatprep.subr.bf16.mxu0 %v966
    %1767 = vmatpush1.bf16.msra.mxu0 %v965
    %1768 = vmatprep.subr.bf16.mxu0 %v974
    %1769 = vmatpush1.bf16.msra.mxu0 %v973
    %1770 = vmatprep.subr.bf16.mxu0 %v982
    %1771 = vmatpush1.bf16.msra.mxu0 %v981
    %1772 = vmatprep.subr.bf16.mxu0 %v990
    %1773 = vmatpush1.bf16.msra.mxu0 %v989
    %1774 = vmatprep.subr.bf16.mxu0 %v998
    %1775 = vmatpush1.bf16.msra.mxu0 %v997
    %1776 = vmatprep.subr.bf16.mxu0 %v1006
    %1777 = vmatpush1.bf16.msra.mxu0 %v1005
    %1778 = vmatprep.subr.bf16.mxu0 %v1014
    %1779 = vmatpush1.bf16.msra.mxu0 %v1013
    %1780 = vmatprep.subr.bf16.mxu0 %v1022
    %1781 = vmatpush1.bf16.msra.mxu0 %v1021
    %1782 = vmatprep.subr.bf16.mxu0 %v1030
    %1783 = vmatpush1.bf16.msra.mxu0 %v1029
    %1784 = vmatprep.subr.bf16.mxu0 %v1038
    %1785 = vmatpush1.bf16.msra.mxu0 %v1037
    %1786 = vmatprep.subr.bf16.mxu0 %v1046
    %1787 = vmatpush1.bf16.msra.mxu0 %v1045
    %1788 = vmatprep.subr.bf16.mxu0 %v1054
    %1789 = vmatpush1.bf16.msra.mxu0 %v1053
    %1790 = vmatprep.subr.bf16.mxu0 %v1062
    %1791 = vmatpush1.bf16.msra.mxu0 %v1061
    %1792 = vmatprep.mubr.bf16.mxu0 %v1612
    %1793 = vmatmul.mubr.bf16.gmra.mrb[0].mxu0 %v1611
    %v1794 = vpop.f32.mrb[0].mxu0
    %v1795 = vadd.f32 %v1754, %v1794
    %v1796 = vpop.f32.mrb[0].mxu0
    %v1797 = vadd.f32 %v1756, %v1796
    %v1798 = vpop.f32.mrb[0].mxu0
    %v1799 = vpop.f32.mrb[0].mxu0
    %1800 = vdwg.mxu0
    %1801 = vmatprep.subr.bf16.mxu0 %v1070
    %1802 = vmatpush1.bf16.msra.mxu0 %v1069
    %1803 = vmatprep.subr.bf16.mxu0 %v1078
    %1804 = vmatpush1.bf16.msra.mxu0 %v1077
    %1805 = vmatprep.subr.bf16.mxu0 %v1086
    %1806 = vmatpush1.bf16.msra.mxu0 %v1085
    %1807 = vmatprep.subr.bf16.mxu0 %v1094
    %1808 = vmatpush1.bf16.msra.mxu0 %v1093
    %1809 = vmatprep.subr.bf16.mxu0 %v1102
    %1810 = vmatpush1.bf16.msra.mxu0 %v1101
    %1811 = vmatprep.subr.bf16.mxu0 %v1110
    %1812 = vmatpush1.bf16.msra.mxu0 %v1109
    %1813 = vmatprep.subr.bf16.mxu0 %v1118
    %1814 = vmatpush1.bf16.msra.mxu0 %v1117
    %1815 = vmatprep.subr.bf16.mxu0 %v1126
    %1816 = vmatpush1.bf16.msra.mxu0 %v1125
    %1817 = vmatprep.subr.bf16.mxu0 %v1134
    %1818 = vmatpush1.bf16.msra.mxu0 %v1133
    %1819 = vmatprep.subr.bf16.mxu0 %v1142
    %1820 = vmatpush1.bf16.msra.mxu0 %v1141
    %1821 = vmatprep.subr.bf16.mxu0 %v1150
    %1822 = vmatpush1.bf16.msra.mxu0 %v1149
    %1823 = vmatprep.subr.bf16.mxu0 %v1158
    %1824 = vmatpush1.bf16.msra.mxu0 %v1157
    %1825 = vmatprep.subr.bf16.mxu0 %v1166
    %1826 = vmatpush1.bf16.msra.mxu0 %v1165
    %1827 = vmatprep.subr.bf16.mxu0 %v1174
    %1828 = vmatpush1.bf16.msra.mxu0 %v1173
    %1829 = vmatprep.subr.bf16.mxu0 %v1182
    %1830 = vmatpush1.bf16.msra.mxu0 %v1181
    %1831 = vmatprep.subr.bf16.mxu0 %v1190
    %1832 = vmatpush1.bf16.msra.mxu0 %v1189
    %1833 = vmatprep.mubr.bf16.mxu0 %v1614
    %1834 = vmatmul.mubr.bf16.gmra.mrb[0].mxu0 %v1613
    %v1835 = vpop.f32.mrb[0].mxu0
    %v1836 = vadd.f32 %v1795, %v1835
    %v1837 = vpop.f32.mrb[0].mxu0
    %v1838 = vadd.f32 %v1797, %v1837
    %v1839 = vpop.f32.mrb[0].mxu0
    %v1840 = vpop.f32.mrb[0].mxu0
    %1841 = vdwg.mxu0
    %1842 = vmatprep.subr.bf16.mxu0 %v1198
    %1843 = vmatpush1.bf16.msra.mxu0 %v1197
    %1844 = vmatprep.subr.bf16.mxu0 %v1206
    %1845 = vmatpush1.bf16.msra.mxu0 %v1205
    %1846 = vmatprep.subr.bf16.mxu0 %v1214
    %1847 = vmatpush1.bf16.msra.mxu0 %v1213
    %1848 = vmatprep.subr.bf16.mxu0 %v1222
    %1849 = vmatpush1.bf16.msra.mxu0 %v1221
    %1850 = vmatprep.subr.bf16.mxu0 %v1230
    %1851 = vmatpush1.bf16.msra.mxu0 %v1229
    %1852 = vmatprep.subr.bf16.mxu0 %v1238
    %1853 = vmatpush1.bf16.msra.mxu0 %v1237
    %1854 = vmatprep.subr.bf16.mxu0 %v1246
    %1855 = vmatpush1.bf16.msra.mxu0 %v1245
    %1856 = vmatprep.subr.bf16.mxu0 %v1254
    %1857 = vmatpush1.bf16.msra.mxu0 %v1253
    %1858 = vmatprep.subr.bf16.mxu0 %v1262
    %1859 = vmatpush1.bf16.msra.mxu0 %v1261
    %1860 = vmatprep.subr.bf16.mxu0 %v1270
    %1861 = vmatpush1.bf16.msra.mxu0 %v1269
    %1862 = vmatprep.subr.bf16.mxu0 %v1278
    %1863 = vmatpush1.bf16.msra.mxu0 %v1277
    %1864 = vmatprep.subr.bf16.mxu0 %v1286
    %1865 = vmatpush1.bf16.msra.mxu0 %v1285
    %1866 = vmatprep.subr.bf16.mxu0 %v1294
    %1867 = vmatpush1.bf16.msra.mxu0 %v1293
    %1868 = vmatprep.subr.bf16.mxu0 %v1302
    %1869 = vmatpush1.bf16.msra.mxu0 %v1301
    %1870 = vmatprep.subr.bf16.mxu0 %v1310
    %1871 = vmatpush1.bf16.msra.mxu0 %v1309
    %1872 = vmatprep.subr.bf16.mxu0 %v1318
    %1873 = vmatpush1.bf16.msra.mxu0 %v1317
    %1874 = vmatprep.mubr.bf16.mxu0 %v1616
    %1875 = vmatmul.mubr.bf16.gmra.mrb[0].mxu0 %v1615
    %v1876 = vpop.f32.mrb[0].mxu0
    %v1877 = vadd.f32 %v1836, %v1876
    %v1878 = vpop.f32.mrb[0].mxu0
    %v1879 = vadd.f32 %v1838, %v1878
    %v1880 = vpop.f32.mrb[0].mxu0
    %v1881 = vpop.f32.mrb[0].mxu0
    %1882 = vdwg.mxu0
    %1883 = vmatprep.subr.bf16.mxu0 %v1326
    %1884 = vmatpush1.bf16.msra.mxu0 %v1325
    %1885 = vmatprep.subr.bf16.mxu0 %v1334
    %1886 = vmatpush1.bf16.msra.mxu0 %v1333
    %1887 = vmatprep.subr.bf16.mxu0 %v1342
    %1888 = vmatpush1.bf16.msra.mxu0 %v1341
    %1889 = vmatprep.subr.bf16.mxu0 %v1350
    %1890 = vmatpush1.bf16.msra.mxu0 %v1349
    %1891 = vmatprep.subr.bf16.mxu0 %v1358
    %1892 = vmatpush1.bf16.msra.mxu0 %v1357
    %1893 = vmatprep.subr.bf16.mxu0 %v1366
    %1894 = vmatpush1.bf16.msra.mxu0 %v1365
    %1895 = vmatprep.subr.bf16.mxu0 %v1374
    %1896 = vmatpush1.bf16.msra.mxu0 %v1373
    %1897 = vmatprep.subr.bf16.mxu0 %v1382
    %1898 = vmatpush1.bf16.msra.mxu0 %v1381
    %1899 = vmatprep.subr.bf16.mxu0 %v1390
    %1900 = vmatpush1.bf16.msra.mxu0 %v1389
    %1901 = vmatprep.subr.bf16.mxu0 %v1398
    %1902 = vmatpush1.bf16.msra.mxu0 %v1397
    %1903 = vmatprep.subr.bf16.mxu0 %v1406
    %1904 = vmatpush1.bf16.msra.mxu0 %v1405
    %1905 = vmatprep.subr.bf16.mxu0 %v1414
    %1906 = vmatpush1.bf16.msra.mxu0 %v1413
    %1907 = vmatprep.subr.bf16.mxu0 %v1422
    %1908 = vmatpush1.bf16.msra.mxu0 %v1421
    %1909 = vmatprep.subr.bf16.mxu0 %v1430
    %1910 = vmatpush1.bf16.msra.mxu0 %v1429
    %1911 = vmatprep.subr.bf16.mxu0 %v1438
    %1912 = vmatpush1.bf16.msra.mxu0 %v1437
    %1913 = vmatprep.subr.bf16.mxu0 %v1446
    %1914 = vmatpush1.bf16.msra.mxu0 %v1445
    %1915 = vmatprep.mubr.bf16.mxu0 %v1618
    %1916 = vmatmul.mubr.bf16.gmra.mrb[0].mxu0 %v1617
    %v1917 = vpop.f32.mrb[0].mxu0
    %v1918 = vadd.f32 %v1877, %v1917
    %v1919 = vpop.f32.mrb[0].mxu0
    %v1920 = vadd.f32 %v1879, %v1919
    %v1921 = vpop.f32.mrb[0].mxu0
    %v1922 = vpop.f32.mrb[0].mxu0
    %1923 = vdwg.mxu0
    %1924 = vmatprep.subr.bf16.mxu0 %v1454
    %1925 = vmatpush1.bf16.msra.mxu0 %v1453
    %1926 = vmatprep.subr.bf16.mxu0 %v1462
    %1927 = vmatpush1.bf16.msra.mxu0 %v1461
    %1928 = vmatprep.subr.bf16.mxu0 %v1470
    %1929 = vmatpush1.bf16.msra.mxu0 %v1469
    %1930 = vmatprep.subr.bf16.mxu0 %v1478
    %1931 = vmatpush1.bf16.msra.mxu0 %v1477
    %1932 = vmatprep.subr.bf16.mxu0 %v1486
    %1933 = vmatpush1.bf16.msra.mxu0 %v1485
    %1934 = vmatprep.subr.bf16.mxu0 %v1494
    %1935 = vmatpush1.bf16.msra.mxu0 %v1493
    %1936 = vmatprep.subr.bf16.mxu0 %v1502
    %1937 = vmatpush1.bf16.msra.mxu0 %v1501
    %1938 = vmatprep.subr.bf16.mxu0 %v1510
    %1939 = vmatpush1.bf16.msra.mxu0 %v1509
    %1940 = vmatprep.subr.bf16.mxu0 %v1518
    %1941 = vmatpush1.bf16.msra.mxu0 %v1517
    %1942 = vmatprep.subr.bf16.mxu0 %v1526
    %1943 = vmatpush1.bf16.msra.mxu0 %v1525
    %1944 = vmatprep.subr.bf16.mxu0 %v1534
    %1945 = vmatpush1.bf16.msra.mxu0 %v1533
    %1946 = vmatprep.subr.bf16.mxu0 %v1542
    %1947 = vmatpush1.bf16.msra.mxu0 %v1541
    %1948 = vmatprep.subr.bf16.mxu0 %v1550
    %1949 = vmatpush1.bf16.msra.mxu0 %v1549
    %1950 = vmatprep.subr.bf16.mxu0 %v1558
    %1951 = vmatpush1.bf16.msra.mxu0 %v1557
    %1952 = vmatprep.subr.bf16.mxu0 %v1566
    %1953 = vmatpush1.bf16.msra.mxu0 %v1565
    %1954 = vmatprep.subr.bf16.mxu0 %v1574
    %1955 = vmatpush1.bf16.msra.mxu0 %v1573
    %1956 = vmatprep.mubr.bf16.mxu0 %v1620
    %1957 = vmatmul.mubr.bf16.gmra.mrb[0].mxu0 %v1619
    %v1958 = vpop.f32.mrb[0].mxu0
    %v1959 = vadd.f32 %v1918, %v1958
    %v1960 = vpop.f32.mrb[0].mxu0
    %v1961 = vadd.f32 %v1920, %v1960
    %v1962 = vpop.f32.mrb[0].mxu0
    %v1963 = vpop.f32.mrb[0].mxu0
    %1964 = vdwg.mxu0
    %1965 = vmatprep.subr.bf16.mxu0 %v560
    %1966 = vmatpush1.bf16.msra.mxu0 %v559
    %1967 = vmatprep.subr.bf16.mxu0 %v568
    %1968 = vmatpush1.bf16.msra.mxu0 %v567
    %1969 = vmatprep.subr.bf16.mxu0 %v576
    %1970 = vmatpush1.bf16.msra.mxu0 %v575
    %1971 = vmatprep.subr.bf16.mxu0 %v584
    %1972 = vmatpush1.bf16.msra.mxu0 %v583
    %1973 = vmatprep.subr.bf16.mxu0 %v592
    %1974 = vmatpush1.bf16.msra.mxu0 %v591
    %1975 = vmatprep.subr.bf16.mxu0 %v600
    %1976 = vmatpush1.bf16.msra.mxu0 %v599
    %1977 = vmatprep.subr.bf16.mxu0 %v608
    %1978 = vmatpush1.bf16.msra.mxu0 %v607
    %1979 = vmatprep.subr.bf16.mxu0 %v616
    %1980 = vmatpush1.bf16.msra.mxu0 %v615
    %1981 = vmatprep.subr.bf16.mxu0 %v624
    %1982 = vmatpush1.bf16.msra.mxu0 %v623
    %1983 = vmatprep.subr.bf16.mxu0 %v632
    %1984 = vmatpush1.bf16.msra.mxu0 %v631
    %1985 = vmatprep.subr.bf16.mxu0 %v640
    %1986 = vmatpush1.bf16.msra.mxu0 %v639
    %1987 = vmatprep.subr.bf16.mxu0 %v648
    %1988 = vmatpush1.bf16.msra.mxu0 %v647
    %1989 = vmatprep.subr.bf16.mxu0 %v656
    %1990 = vmatpush1.bf16.msra.mxu0 %v655
    %1991 = vmatprep.subr.bf16.mxu0 %v664
    %1992 = vmatpush1.bf16.msra.mxu0 %v663
    %1993 = vmatprep.subr.bf16.mxu0 %v672
    %1994 = vmatpush1.bf16.msra.mxu0 %v671
    %1995 = vmatprep.subr.bf16.mxu0 %v680
    %1996 = vmatpush1.bf16.msra.mxu0 %v679
    %1997 = vmatprep.mubr.bf16.mxu0 %v1606
    %1998 = vmatmul.mubr.bf16.gmra.mrb[0].mxu0 %v1605
    %v1999 = vpop.f32.mrb[0].mxu0
    %v2000 = vadd.f32 0.0, %v1999
    %v2001 = vpop.f32.mrb[0].mxu0
    %v2002 = vadd.f32 0.0, %v2001
    %v2003 = vpop.f32.mrb[0].mxu0
    %v2004 = vpop.f32.mrb[0].mxu0
    %2005 = vdwg.mxu0
    %2006 = vmatprep.subr.bf16.mxu0 %v688
    %2007 = vmatpush1.bf16.msra.mxu0 %v687
    %2008 = vmatprep.subr.bf16.mxu0 %v696
    %2009 = vmatpush1.bf16.msra.mxu0 %v695
    %2010 = vmatprep.subr.bf16.mxu0 %v704
    %2011 = vmatpush1.bf16.msra.mxu0 %v703
    %2012 = vmatprep.subr.bf16.mxu0 %v712
    %2013 = vmatpush1.bf16.msra.mxu0 %v711
    %2014 = vmatprep.subr.bf16.mxu0 %v720
    %2015 = vmatpush1.bf16.msra.mxu0 %v719
    %2016 = vmatprep.subr.bf16.mxu0 %v728
    %2017 = vmatpush1.bf16.msra.mxu0 %v727
    %2018 = vmatprep.subr.bf16.mxu0 %v736
    %2019 = vmatpush1.bf16.msra.mxu0 %v735
    %2020 = vmatprep.subr.bf16.mxu0 %v744
    %2021 = vmatpush1.bf16.msra.mxu0 %v743
    %2022 = vmatprep.subr.bf16.mxu0 %v752
    %2023 = vmatpush1.bf16.msra.mxu0 %v751
    %2024 = vmatprep.subr.bf16.mxu0 %v760
    %2025 = vmatpush1.bf16.msra.mxu0 %v759
    %2026 = vmatprep.subr.bf16.mxu0 %v768
    %2027 = vmatpush1.bf16.msra.mxu0 %v767
    %2028 = vmatprep.subr.bf16.mxu0 %v776
    %2029 = vmatpush1.bf16.msra.mxu0 %v775
    %2030 = vmatprep.subr.bf16.mxu0 %v784
    %2031 = vmatpush1.bf16.msra.mxu0 %v783
    %2032 = vmatprep.subr.bf16.mxu0 %v792
    %2033 = vmatpush1.bf16.msra.mxu0 %v791
    %2034 = vmatprep.subr.bf16.mxu0 %v800
    %2035 = vmatpush1.bf16.msra.mxu0 %v799
    %2036 = vmatprep.subr.bf16.mxu0 %v808
    %2037 = vmatpush1.bf16.msra.mxu0 %v807
    %2038 = vmatprep.mubr.bf16.mxu0 %v1608
    %2039 = vmatmul.mubr.bf16.gmra.mrb[0].mxu0 %v1607
    %v2040 = vpop.f32.mrb[0].mxu0
    %v2041 = vadd.f32 %v2000, %v2040
    %v2042 = vpop.f32.mrb[0].mxu0
    %v2043 = vadd.f32 %v2002, %v2042
    %v2044 = vpop.f32.mrb[0].mxu0
    %v2045 = vpop.f32.mrb[0].mxu0
    %2046 = vdwg.mxu0
    %2047 = vmatprep.subr.bf16.mxu0 %v816
    %2048 = vmatpush1.bf16.msra.mxu0 %v815
    %2049 = vmatprep.subr.bf16.mxu0 %v824
    %2050 = vmatpush1.bf16.msra.mxu0 %v823
    %2051 = vmatprep.subr.bf16.mxu0 %v832
    %2052 = vmatpush1.bf16.msra.mxu0 %v831
    %2053 = vmatprep.subr.bf16.mxu0 %v840
    %2054 = vmatpush1.bf16.msra.mxu0 %v839
    %2055 = vmatprep.subr.bf16.mxu0 %v848
    %2056 = vmatpush1.bf16.msra.mxu0 %v847
    %2057 = vmatprep.subr.bf16.mxu0 %v856
    %2058 = vmatpush1.bf16.msra.mxu0 %v855
    %2059 = vmatprep.subr.bf16.mxu0 %v864
    %2060 = vmatpush1.bf16.msra.mxu0 %v863
    %2061 = vmatprep.subr.bf16.mxu0 %v872
    %2062 = vmatpush1.bf16.msra.mxu0 %v871
    %2063 = vmatprep.subr.bf16.mxu0 %v880
    %2064 = vmatpush1.bf16.msra.mxu0 %v879
    %2065 = vmatprep.subr.bf16.mxu0 %v888
    %2066 = vmatpush1.bf16.msra.mxu0 %v887
    %2067 = vmatprep.subr.bf16.mxu0 %v896
    %2068 = vmatpush1.bf16.msra.mxu0 %v895
    %2069 = vmatprep.subr.bf16.mxu0 %v904
    %2070 = vmatpush1.bf16.msra.mxu0 %v903
    %2071 = vmatprep.subr.bf16.mxu0 %v912
    %2072 = vmatpush1.bf16.msra.mxu0 %v911
    %2073 = vmatprep.subr.bf16.mxu0 %v920
    %2074 = vmatpush1.bf16.msra.mxu0 %v919
    %2075 = vmatprep.subr.bf16.mxu0 %v928
    %2076 = vmatpush1.bf16.msra.mxu0 %v927
    %2077 = vmatprep.subr.bf16.mxu0 %v936
    %2078 = vmatpush1.bf16.msra.mxu0 %v935
    %2079 = vmatprep.mubr.bf16.mxu0 %v1610
    %2080 = vmatmul.mubr.bf16.gmra.mrb[0].mxu0 %v1609
    %v2081 = vpop.f32.mrb[0].mxu0
    %v2082 = vadd.f32 %v2041, %v2081
    %v2083 = vpop.f32.mrb[0].mxu0
    %v2084 = vadd.f32 %v2043, %v2083
    %v2085 = vpop.f32.mrb[0].mxu0
    %v2086 = vpop.f32.mrb[0].mxu0
    %2087 = vdwg.mxu0
    %2088 = vmatprep.subr.bf16.mxu0 %v944
    %2089 = vmatpush1.bf16.msra.mxu0 %v943
    %2090 = vmatprep.subr.bf16.mxu0 %v952
    %2091 = vmatpush1.bf16.msra.mxu0 %v951
    %2092 = vmatprep.subr.bf16.mxu0 %v960
    %2093 = vmatpush1.bf16.msra.mxu0 %v959
    %2094 = vmatprep.subr.bf16.mxu0 %v968
    %2095 = vmatpush1.bf16.msra.mxu0 %v967
    %2096 = vmatprep.subr.bf16.mxu0 %v976
    %2097 = vmatpush1.bf16.msra.mxu0 %v975
    %2098 = vmatprep.subr.bf16.mxu0 %v984
    %2099 = vmatpush1.bf16.msra.mxu0 %v983
    %2100 = vmatprep.subr.bf16.mxu0 %v992
    %2101 = vmatpush1.bf16.msra.mxu0 %v991
    %2102 = vmatprep.subr.bf16.mxu0 %v1000
    %2103 = vmatpush1.bf16.msra.mxu0 %v999
    %2104 = vmatprep.subr.bf16.mxu0 %v1008
    %2105 = vmatpush1.bf16.msra.mxu0 %v1007
    %2106 = vmatprep.subr.bf16.mxu0 %v1016
    %2107 = vmatpush1.bf16.msra.mxu0 %v1015
    %2108 = vmatprep.subr.bf16.mxu0 %v1024
    %2109 = vmatpush1.bf16.msra.mxu0 %v1023
    %2110 = vmatprep.subr.bf16.mxu0 %v1032
    %2111 = vmatpush1.bf16.msra.mxu0 %v1031
    %2112 = vmatprep.subr.bf16.mxu0 %v1040
    %2113 = vmatpush1.bf16.msra.mxu0 %v1039
    %2114 = vmatprep.subr.bf16.mxu0 %v1048
    %2115 = vmatpush1.bf16.msra.mxu0 %v1047
    %2116 = vmatprep.subr.bf16.mxu0 %v1056
    %2117 = vmatpush1.bf16.msra.mxu0 %v1055
    %2118 = vmatprep.subr.bf16.mxu0 %v1064
    %2119 = vmatpush1.bf16.msra.mxu0 %v1063
    %2120 = vmatprep.mubr.bf16.mxu0 %v1612
    %2121 = vmatmul.mubr.bf16.gmra.mrb[0].mxu0 %v1611
    %v2122 = vpop.f32.mrb[0].mxu0
    %v2123 = vadd.f32 %v2082, %v2122
    %v2124 = vpop.f32.mrb[0].mxu0
    %v2125 = vadd.f32 %v2084, %v2124
    %v2126 = vpop.f32.mrb[0].mxu0
    %v2127 = vpop.f32.mrb[0].mxu0
    %2128 = vdwg.mxu0
    %2129 = vmatprep.subr.bf16.mxu0 %v1072
    %2130 = vmatpush1.bf16.msra.mxu0 %v1071
    %2131 = vmatprep.subr.bf16.mxu0 %v1080
    %2132 = vmatpush1.bf16.msra.mxu0 %v1079
    %2133 = vmatprep.subr.bf16.mxu0 %v1088
    %2134 = vmatpush1.bf16.msra.mxu0 %v1087
    %2135 = vmatprep.subr.bf16.mxu0 %v1096
    %2136 = vmatpush1.bf16.msra.mxu0 %v1095
    %2137 = vmatprep.subr.bf16.mxu0 %v1104
    %2138 = vmatpush1.bf16.msra.mxu0 %v1103
    %2139 = vmatprep.subr.bf16.mxu0 %v1112
    %2140 = vmatpush1.bf16.msra.mxu0 %v1111
    %2141 = vmatprep.subr.bf16.mxu0 %v1120
    %2142 = vmatpush1.bf16.msra.mxu0 %v1119
    %2143 = vmatprep.subr.bf16.mxu0 %v1128
    %2144 = vmatpush1.bf16.msra.mxu0 %v1127
    %2145 = vmatprep.subr.bf16.mxu0 %v1136
    %2146 = vmatpush1.bf16.msra.mxu0 %v1135
    %2147 = vmatprep.subr.bf16.mxu0 %v1144
    %2148 = vmatpush1.bf16.msra.mxu0 %v1143
    %2149 = vmatprep.subr.bf16.mxu0 %v1152
    %2150 = vmatpush1.bf16.msra.mxu0 %v1151
    %2151 = vmatprep.subr.bf16.mxu0 %v1160
    %2152 = vmatpush1.bf16.msra.mxu0 %v1159
    %2153 = vmatprep.subr.bf16.mxu0 %v1168
    %2154 = vmatpush1.bf16.msra.mxu0 %v1167
    %2155 = vmatprep.subr.bf16.mxu0 %v1176
    %2156 = vmatpush1.bf16.msra.mxu0 %v1175
    %2157 = vmatprep.subr.bf16.mxu0 %v1184
    %2158 = vmatpush1.bf16.msra.mxu0 %v1183
    %2159 = vmatprep.subr.bf16.mxu0 %v1192
    %2160 = vmatpush1.bf16.msra.mxu0 %v1191
    %2161 = vmatprep.mubr.bf16.mxu0 %v1614
    %2162 = vmatmul.mubr.bf16.gmra.mrb[0].mxu0 %v1613
    %v2163 = vpop.f32.mrb[0].mxu0
    %v2164 = vadd.f32 %v2123, %v2163
    %v2165 = vpop.f32.mrb[0].mxu0
    %v2166 = vadd.f32 %v2125, %v2165
    %v2167 = vpop.f32.mrb[0].mxu0
    %v2168 = vpop.f32.mrb[0].mxu0
    %2169 = vdwg.mxu0
    %2170 = vmatprep.subr.bf16.mxu0 %v1200
    %2171 = vmatpush1.bf16.msra.mxu0 %v1199
    %2172 = vmatprep.subr.bf16.mxu0 %v1208
    %2173 = vmatpush1.bf16.msra.mxu0 %v1207
    %2174 = vmatprep.subr.bf16.mxu0 %v1216
    %2175 = vmatpush1.bf16.msra.mxu0 %v1215
    %2176 = vmatprep.subr.bf16.mxu0 %v1224
    %2177 = vmatpush1.bf16.msra.mxu0 %v1223
    %2178 = vmatprep.subr.bf16.mxu0 %v1232
    %2179 = vmatpush1.bf16.msra.mxu0 %v1231
    %2180 = vmatprep.subr.bf16.mxu0 %v1240
    %2181 = vmatpush1.bf16.msra.mxu0 %v1239
    %2182 = vmatprep.subr.bf16.mxu0 %v1248
    %2183 = vmatpush1.bf16.msra.mxu0 %v1247
    %2184 = vmatprep.subr.bf16.mxu0 %v1256
    %2185 = vmatpush1.bf16.msra.mxu0 %v1255
    %2186 = vmatprep.subr.bf16.mxu0 %v1264
    %2187 = vmatpush1.bf16.msra.mxu0 %v1263
    %2188 = vmatprep.subr.bf16.mxu0 %v1272
    %2189 = vmatpush1.bf16.msra.mxu0 %v1271
    %2190 = vmatprep.subr.bf16.mxu0 %v1280
    %2191 = vmatpush1.bf16.msra.mxu0 %v1279
    %2192 = vmatprep.subr.bf16.mxu0 %v1288
    %2193 = vmatpush1.bf16.msra.mxu0 %v1287
    %2194 = vmatprep.subr.bf16.mxu0 %v1296
    %2195 = vmatpush1.bf16.msra.mxu0 %v1295
    %2196 = vmatprep.subr.bf16.mxu0 %v1304
    %2197 = vmatpush1.bf16.msra.mxu0 %v1303
    %2198 = vmatprep.subr.bf16.mxu0 %v1312
    %2199 = vmatpush1.bf16.msra.mxu0 %v1311
    %2200 = vmatprep.subr.bf16.mxu0 %v1320
    %2201 = vmatpush1.bf16.msra.mxu0 %v1319
    %2202 = vmatprep.mubr.bf16.mxu0 %v1616
    %2203 = vmatmul.mubr.bf16.gmra.mrb[0].mxu0 %v1615
    %v2204 = vpop.f32.mrb[0].mxu0
    %v2205 = vadd.f32 %v2164, %v2204
    %v2206 = vpop.f32.mrb[0].mxu0
    %v2207 = vadd.f32 %v2166, %v2206
    %v2208 = vpop.f32.mrb[0].mxu0
    %v2209 = vpop.f32.mrb[0].mxu0
    %2210 = vdwg.mxu0
    %2211 = vmatprep.subr.bf16.mxu0 %v1328
    %2212 = vmatpush1.bf16.msra.mxu0 %v1327
    %2213 = vmatprep.subr.bf16.mxu0 %v1336
    %2214 = vmatpush1.bf16.msra.mxu0 %v1335
    %2215 = vmatprep.subr.bf16.mxu0 %v1344
    %2216 = vmatpush1.bf16.msra.mxu0 %v1343
    %2217 = vmatprep.subr.bf16.mxu0 %v1352
    %2218 = vmatpush1.bf16.msra.mxu0 %v1351
    %2219 = vmatprep.subr.bf16.mxu0 %v1360
    %2220 = vmatpush1.bf16.msra.mxu0 %v1359
    %2221 = vmatprep.subr.bf16.mxu0 %v1368
    %2222 = vmatpush1.bf16.msra.mxu0 %v1367
    %2223 = vmatprep.subr.bf16.mxu0 %v1376
    %2224 = vmatpush1.bf16.msra.mxu0 %v1375
    %2225 = vmatprep.subr.bf16.mxu0 %v1384
    %2226 = vmatpush1.bf16.msra.mxu0 %v1383
    %2227 = vmatprep.subr.bf16.mxu0 %v1392
    %2228 = vmatpush1.bf16.msra.mxu0 %v1391
    %2229 = vmatprep.subr.bf16.mxu0 %v1400
    %2230 = vmatpush1.bf16.msra.mxu0 %v1399
    %2231 = vmatprep.subr.bf16.mxu0 %v1408
    %2232 = vmatpush1.bf16.msra.mxu0 %v1407
    %2233 = vmatprep.subr.bf16.mxu0 %v1416
    %2234 = vmatpush1.bf16.msra.mxu0 %v1415
    %2235 = vmatprep.subr.bf16.mxu0 %v1424
    %2236 = vmatpush1.bf16.msra.mxu0 %v1423
    %2237 = vmatprep.subr.bf16.mxu0 %v1432
    %2238 = vmatpush1.bf16.msra.mxu0 %v1431
    %2239 = vmatprep.subr.bf16.mxu0 %v1440
    %2240 = vmatpush1.bf16.msra.mxu0 %v1439
    %2241 = vmatprep.subr.bf16.mxu0 %v1448
    %2242 = vmatpush1.bf16.msra.mxu0 %v1447
    %2243 = vmatprep.mubr.bf16.mxu0 %v1618
    %2244 = vmatmul.mubr.bf16.gmra.mrb[0].mxu0 %v1617
    %v2245 = vpop.f32.mrb[0].mxu0
    %v2246 = vadd.f32 %v2205, %v2245
    %v2247 = vpop.f32.mrb[0].mxu0
    %v2248 = vadd.f32 %v2207, %v2247
    %v2249 = vpop.f32.mrb[0].mxu0
    %v2250 = vpop.f32.mrb[0].mxu0
    %2251 = vdwg.mxu0
    %2252 = vmatprep.subr.bf16.mxu0 %v1456
    %2253 = vmatpush1.bf16.msra.mxu0 %v1455
    %2254 = vmatprep.subr.bf16.mxu0 %v1464
    %2255 = vmatpush1.bf16.msra.mxu0 %v1463
    %2256 = vmatprep.subr.bf16.mxu0 %v1472
    %2257 = vmatpush1.bf16.msra.mxu0 %v1471
    %2258 = vmatprep.subr.bf16.mxu0 %v1480
    %2259 = vmatpush1.bf16.msra.mxu0 %v1479
    %2260 = vmatprep.subr.bf16.mxu0 %v1488
    %2261 = vmatpush1.bf16.msra.mxu0 %v1487
    %2262 = vmatprep.subr.bf16.mxu0 %v1496
    %2263 = vmatpush1.bf16.msra.mxu0 %v1495
    %2264 = vmatprep.subr.bf16.mxu0 %v1504
    %2265 = vmatpush1.bf16.msra.mxu0 %v1503
    %2266 = vmatprep.subr.bf16.mxu0 %v1512
    %2267 = vmatpush1.bf16.msra.mxu0 %v1511
    %2268 = vmatprep.subr.bf16.mxu0 %v1520
    %2269 = vmatpush1.bf16.msra.mxu0 %v1519
    %2270 = vmatprep.subr.bf16.mxu0 %v1528
    %2271 = vmatpush1.bf16.msra.mxu0 %v1527
    %2272 = vmatprep.subr.bf16.mxu0 %v1536
    %2273 = vmatpush1.bf16.msra.mxu0 %v1535
    %2274 = vmatprep.subr.bf16.mxu0 %v1544
    %2275 = vmatpush1.bf16.msra.mxu0 %v1543
    %2276 = vmatprep.subr.bf16.mxu0 %v1552
    %2277 = vmatpush1.bf16.msra.mxu0 %v1551
    %2278 = vmatprep.subr.bf16.mxu0 %v1560
    %2279 = vmatpush1.bf16.msra.mxu0 %v1559
    %2280 = vmatprep.subr.bf16.mxu0 %v1568
    %2281 = vmatpush1.bf16.msra.mxu0 %v1567
    %2282 = vmatprep.subr.bf16.mxu0 %v1576
    %2283 = vmatpush1.bf16.msra.mxu0 %v1575
    %2284 = vmatprep.mubr.bf16.mxu0 %v1620
    %2285 = vmatmul.mubr.bf16.gmra.mrb[0].mxu0 %v1619
    %v2286 = vpop.f32.mrb[0].mxu0
    %v2287 = vadd.f32 %v2246, %v2286
    %v2288 = vpop.f32.mrb[0].mxu0
    %v2289 = vadd.f32 %v2248, %v2288
    %v2290 = vpop.f32.mrb[0].mxu0
    %v2291 = vpop.f32.mrb[0].mxu0
    %2292 = vdwg.mxu0
    %2293 = vmatprep.subr.bf16.mxu0 %v562
    %2294 = vmatpush1.bf16.msra.mxu0 %v561
    %2295 = vmatprep.subr.bf16.mxu0 %v570
    %2296 = vmatpush1.bf16.msra.mxu0 %v569
    %2297 = vmatprep.subr.bf16.mxu0 %v578
    %2298 = vmatpush1.bf16.msra.mxu0 %v577
    %2299 = vmatprep.subr.bf16.mxu0 %v586
    %2300 = vmatpush1.bf16.msra.mxu0 %v585
    %2301 = vmatprep.subr.bf16.mxu0 %v594
    %2302 = vmatpush1.bf16.msra.mxu0 %v593
    %2303 = vmatprep.subr.bf16.mxu0 %v602
    %2304 = vmatpush1.bf16.msra.mxu0 %v601
    %2305 = vmatprep.subr.bf16.mxu0 %v610
    %2306 = vmatpush1.bf16.msra.mxu0 %v609
    %2307 = vmatprep.subr.bf16.mxu0 %v618
    %2308 = vmatpush1.bf16.msra.mxu0 %v617
    %2309 = vmatprep.subr.bf16.mxu0 %v626
    %2310 = vmatpush1.bf16.msra.mxu0 %v625
    %2311 = vmatprep.subr.bf16.mxu0 %v634
    %2312 = vmatpush1.bf16.msra.mxu0 %v633
    %2313 = vmatprep.subr.bf16.mxu0 %v642
    %2314 = vmatpush1.bf16.msra.mxu0 %v641
    %2315 = vmatprep.subr.bf16.mxu0 %v650
    %2316 = vmatpush1.bf16.msra.mxu0 %v649
    %2317 = vmatprep.subr.bf16.mxu0 %v658
    %2318 = vmatpush1.bf16.msra.mxu0 %v657
    %2319 = vmatprep.subr.bf16.mxu0 %v666
    %2320 = vmatpush1.bf16.msra.mxu0 %v665
    %2321 = vmatprep.subr.bf16.mxu0 %v674
    %2322 = vmatpush1.bf16.msra.mxu0 %v673
    %2323 = vmatprep.subr.bf16.mxu0 %v682
    %2324 = vmatpush1.bf16.msra.mxu0 %v681
    %2325 = vmatprep.mubr.bf16.mxu0 %v1606
    %2326 = vmatmul.mubr.bf16.gmra.mrb[0].mxu0 %v1605
    %v2327 = vpop.f32.mrb[0].mxu0
    %v2328 = vadd.f32 0.0, %v2327
    %v2329 = vpop.f32.mrb[0].mxu0
    %v2330 = vadd.f32 0.0, %v2329
    %v2331 = vpop.f32.mrb[0].mxu0
    %v2332 = vpop.f32.mrb[0].mxu0
    %2333 = vdwg.mxu0
    %2334 = vmatprep.subr.bf16.mxu0 %v690
    %2335 = vmatpush1.bf16.msra.mxu0 %v689
    %2336 = vmatprep.subr.bf16.mxu0 %v698
    %2337 = vmatpush1.bf16.msra.mxu0 %v697
    %2338 = vmatprep.subr.bf16.mxu0 %v706
    %2339 = vmatpush1.bf16.msra.mxu0 %v705
    %2340 = vmatprep.subr.bf16.mxu0 %v714
    %2341 = vmatpush1.bf16.msra.mxu0 %v713
    %2342 = vmatprep.subr.bf16.mxu0 %v722
    %2343 = vmatpush1.bf16.msra.mxu0 %v721
    %2344 = vmatprep.subr.bf16.mxu0 %v730
    %2345 = vmatpush1.bf16.msra.mxu0 %v729
    %2346 = vmatprep.subr.bf16.mxu0 %v738
    %2347 = vmatpush1.bf16.msra.mxu0 %v737
    %2348 = vmatprep.subr.bf16.mxu0 %v746
    %2349 = vmatpush1.bf16.msra.mxu0 %v745
    %2350 = vmatprep.subr.bf16.mxu0 %v754
    %2351 = vmatpush1.bf16.msra.mxu0 %v753
    %2352 = vmatprep.subr.bf16.mxu0 %v762
    %2353 = vmatpush1.bf16.msra.mxu0 %v761
    %2354 = vmatprep.subr.bf16.mxu0 %v770
    %2355 = vmatpush1.bf16.msra.mxu0 %v769
    %2356 = vmatprep.subr.bf16.mxu0 %v778
    %2357 = vmatpush1.bf16.msra.mxu0 %v777
    %2358 = vmatprep.subr.bf16.mxu0 %v786
    %2359 = vmatpush1.bf16.msra.mxu0 %v785
    %2360 = vmatprep.subr.bf16.mxu0 %v794
    %2361 = vmatpush1.bf16.msra.mxu0 %v793
    %2362 = vmatprep.subr.bf16.mxu0 %v802
    %2363 = vmatpush1.bf16.msra.mxu0 %v801
    %2364 = vmatprep.subr.bf16.mxu0 %v810
    %2365 = vmatpush1.bf16.msra.mxu0 %v809
    %2366 = vmatprep.mubr.bf16.mxu0 %v1608
    %2367 = vmatmul.mubr.bf16.gmra.mrb[0].mxu0 %v1607
    %v2368 = vpop.f32.mrb[0].mxu0
    %v2369 = vadd.f32 %v2328, %v2368
    %v2370 = vpop.f32.mrb[0].mxu0
    %v2371 = vadd.f32 %v2330, %v2370
    %v2372 = vpop.f32.mrb[0].mxu0
    %v2373 = vpop.f32.mrb[0].mxu0
    %2374 = vdwg.mxu0
    %2375 = vmatprep.subr.bf16.mxu0 %v818
    %2376 = vmatpush1.bf16.msra.mxu0 %v817
    %2377 = vmatprep.subr.bf16.mxu0 %v826
    %2378 = vmatpush1.bf16.msra.mxu0 %v825
    %2379 = vmatprep.subr.bf16.mxu0 %v834
    %2380 = vmatpush1.bf16.msra.mxu0 %v833
    %2381 = vmatprep.subr.bf16.mxu0 %v842
    %2382 = vmatpush1.bf16.msra.mxu0 %v841
    %2383 = vmatprep.subr.bf16.mxu0 %v850
    %2384 = vmatpush1.bf16.msra.mxu0 %v849
    %2385 = vmatprep.subr.bf16.mxu0 %v858
    %2386 = vmatpush1.bf16.msra.mxu0 %v857
    %2387 = vmatprep.subr.bf16.mxu0 %v866
    %2388 = vmatpush1.bf16.msra.mxu0 %v865
    %2389 = vmatprep.subr.bf16.mxu0 %v874
    %2390 = vmatpush1.bf16.msra.mxu0 %v873
    %2391 = vmatprep.subr.bf16.mxu0 %v882
    %2392 = vmatpush1.bf16.msra.mxu0 %v881
    %2393 = vmatprep.subr.bf16.mxu0 %v890
    %2394 = vmatpush1.bf16.msra.mxu0 %v889
    %2395 = vmatprep.subr.bf16.mxu0 %v898
    %2396 = vmatpush1.bf16.msra.mxu0 %v897
    %2397 = vmatprep.subr.bf16.mxu0 %v906
    %2398 = vmatpush1.bf16.msra.mxu0 %v905
    %2399 = vmatprep.subr.bf16.mxu0 %v914
    %2400 = vmatpush1.bf16.msra.mxu0 %v913
    %2401 = vmatprep.subr.bf16.mxu0 %v922
    %2402 = vmatpush1.bf16.msra.mxu0 %v921
    %2403 = vmatprep.subr.bf16.mxu0 %v930
    %2404 = vmatpush1.bf16.msra.mxu0 %v929
    %2405 = vmatprep.subr.bf16.mxu0 %v938
    %2406 = vmatpush1.bf16.msra.mxu0 %v937
    %2407 = vmatprep.mubr.bf16.mxu0 %v1610
    %2408 = vmatmul.mubr.bf16.gmra.mrb[0].mxu0 %v1609
    %v2409 = vpop.f32.mrb[0].mxu0
    %v2410 = vadd.f32 %v2369, %v2409
    %v2411 = vpop.f32.mrb[0].mxu0
    %v2412 = vadd.f32 %v2371, %v2411
    %v2413 = vpop.f32.mrb[0].mxu0
    %v2414 = vpop.f32.mrb[0].mxu0
    %2415 = vdwg.mxu0
    %2416 = vmatprep.subr.bf16.mxu0 %v946
    %2417 = vmatpush1.bf16.msra.mxu0 %v945
    %2418 = vmatprep.subr.bf16.mxu0 %v954
    %2419 = vmatpush1.bf16.msra.mxu0 %v953
    %2420 = vmatprep.subr.bf16.mxu0 %v962
    %2421 = vmatpush1.bf16.msra.mxu0 %v961
    %2422 = vmatprep.subr.bf16.mxu0 %v970
    %2423 = vmatpush1.bf16.msra.mxu0 %v969
    %2424 = vmatprep.subr.bf16.mxu0 %v978
    %2425 = vmatpush1.bf16.msra.mxu0 %v977
    %2426 = vmatprep.subr.bf16.mxu0 %v986
    %2427 = vmatpush1.bf16.msra.mxu0 %v985
    %2428 = vmatprep.subr.bf16.mxu0 %v994
    %2429 = vmatpush1.bf16.msra.mxu0 %v993
    %2430 = vmatprep.subr.bf16.mxu0 %v1002
    %2431 = vmatpush1.bf16.msra.mxu0 %v1001
    %2432 = vmatprep.subr.bf16.mxu0 %v1010
    %2433 = vmatpush1.bf16.msra.mxu0 %v1009
    %2434 = vmatprep.subr.bf16.mxu0 %v1018
    %2435 = vmatpush1.bf16.msra.mxu0 %v1017
    %2436 = vmatprep.subr.bf16.mxu0 %v1026
    %2437 = vmatpush1.bf16.msra.mxu0 %v1025
    %2438 = vmatprep.subr.bf16.mxu0 %v1034
    %2439 = vmatpush1.bf16.msra.mxu0 %v1033
    %2440 = vmatprep.subr.bf16.mxu0 %v1042
    %2441 = vmatpush1.bf16.msra.mxu0 %v1041
    %2442 = vmatprep.subr.bf16.mxu0 %v1050
    %2443 = vmatpush1.bf16.msra.mxu0 %v1049
    %2444 = vmatprep.subr.bf16.mxu0 %v1058
    %2445 = vmatpush1.bf16.msra.mxu0 %v1057
    %2446 = vmatprep.subr.bf16.mxu0 %v1066
    %2447 = vmatpush1.bf16.msra.mxu0 %v1065
    %2448 = vmatprep.mubr.bf16.mxu0 %v1612
    %2449 = vmatmul.mubr.bf16.gmra.mrb[0].mxu0 %v1611
    %v2450 = vpop.f32.mrb[0].mxu0
    %v2451 = vadd.f32 %v2410, %v2450
    %v2452 = vpop.f32.mrb[0].mxu0
    %v2453 = vadd.f32 %v2412, %v2452
    %v2454 = vpop.f32.mrb[0].mxu0
    %v2455 = vpop.f32.mrb[0].mxu0
    %2456 = vdwg.mxu0
    %2457 = vmatprep.subr.bf16.mxu0 %v1074
    %2458 = vmatpush1.bf16.msra.mxu0 %v1073
    %2459 = vmatprep.subr.bf16.mxu0 %v1082
    %2460 = vmatpush1.bf16.msra.mxu0 %v1081
    %2461 = vmatprep.subr.bf16.mxu0 %v1090
    %2462 = vmatpush1.bf16.msra.mxu0 %v1089
    %2463 = vmatprep.subr.bf16.mxu0 %v1098
    %2464 = vmatpush1.bf16.msra.mxu0 %v1097
    %2465 = vmatprep.subr.bf16.mxu0 %v1106
    %2466 = vmatpush1.bf16.msra.mxu0 %v1105
    %2467 = vmatprep.subr.bf16.mxu0 %v1114
    %2468 = vmatpush1.bf16.msra.mxu0 %v1113
    %2469 = vmatprep.subr.bf16.mxu0 %v1122
    %2470 = vmatpush1.bf16.msra.mxu0 %v1121
    %2471 = vmatprep.subr.bf16.mxu0 %v1130
    %2472 = vmatpush1.bf16.msra.mxu0 %v1129
    %2473 = vmatprep.subr.bf16.mxu0 %v1138
    %2474 = vmatpush1.bf16.msra.mxu0 %v1137
    %2475 = vmatprep.subr.bf16.mxu0 %v1146
    %2476 = vmatpush1.bf16.msra.mxu0 %v1145
    %2477 = vmatprep.subr.bf16.mxu0 %v1154
    %2478 = vmatpush1.bf16.msra.mxu0 %v1153
    %2479 = vmatprep.subr.bf16.mxu0 %v1162
    %2480 = vmatpush1.bf16.msra.mxu0 %v1161
    %2481 = vmatprep.subr.bf16.mxu0 %v1170
    %2482 = vmatpush1.bf16.msra.mxu0 %v1169
    %2483 = vmatprep.subr.bf16.mxu0 %v1178
    %2484 = vmatpush1.bf16.msra.mxu0 %v1177
    %2485 = vmatprep.subr.bf16.mxu0 %v1186
    %2486 = vmatpush1.bf16.msra.mxu0 %v1185
    %2487 = vmatprep.subr.bf16.mxu0 %v1194
    %2488 = vmatpush1.bf16.msra.mxu0 %v1193
    %2489 = vmatprep.mubr.bf16.mxu0 %v1614
    %2490 = vmatmul.mubr.bf16.gmra.mrb[0].mxu0 %v1613
    %v2491 = vpop.f32.mrb[0].mxu0
    %v2492 = vadd.f32 %v2451, %v2491
    %v2493 = vpop.f32.mrb[0].mxu0
    %v2494 = vadd.f32 %v2453, %v2493
    %v2495 = vpop.f32.mrb[0].mxu0
    %v2496 = vpop.f32.mrb[0].mxu0
    %2497 = vdwg.mxu0
    %2498 = vmatprep.subr.bf16.mxu0 %v1202
    %2499 = vmatpush1.bf16.msra.mxu0 %v1201
    %2500 = vmatprep.subr.bf16.mxu0 %v1210
    %2501 = vmatpush1.bf16.msra.mxu0 %v1209
    %2502 = vmatprep.subr.bf16.mxu0 %v1218
    %2503 = vmatpush1.bf16.msra.mxu0 %v1217
    %2504 = vmatprep.subr.bf16.mxu0 %v1226
    %2505 = vmatpush1.bf16.msra.mxu0 %v1225
    %2506 = vmatprep.subr.bf16.mxu0 %v1234
    %2507 = vmatpush1.bf16.msra.mxu0 %v1233
    %2508 = vmatprep.subr.bf16.mxu0 %v1242
    %2509 = vmatpush1.bf16.msra.mxu0 %v1241
    %2510 = vmatprep.subr.bf16.mxu0 %v1250
    %2511 = vmatpush1.bf16.msra.mxu0 %v1249
    %2512 = vmatprep.subr.bf16.mxu0 %v1258
    %2513 = vmatpush1.bf16.msra.mxu0 %v1257
    %2514 = vmatprep.subr.bf16.mxu0 %v1266
    %2515 = vmatpush1.bf16.msra.mxu0 %v1265
    %2516 = vmatprep.subr.bf16.mxu0 %v1274
    %2517 = vmatpush1.bf16.msra.mxu0 %v1273
    %2518 = vmatprep.subr.bf16.mxu0 %v1282
    %2519 = vmatpush1.bf16.msra.mxu0 %v1281
    %2520 = vmatprep.subr.bf16.mxu0 %v1290
    %2521 = vmatpush1.bf16.msra.mxu0 %v1289
    %2522 = vmatprep.subr.bf16.mxu0 %v1298
    %2523 = vmatpush1.bf16.msra.mxu0 %v1297
    %2524 = vmatprep.subr.bf16.mxu0 %v1306
    %2525 = vmatpush1.bf16.msra.mxu0 %v1305
    %2526 = vmatprep.subr.bf16.mxu0 %v1314
    %2527 = vmatpush1.bf16.msra.mxu0 %v1313
    %2528 = vmatprep.subr.bf16.mxu0 %v1322
    %2529 = vmatpush1.bf16.msra.mxu0 %v1321
    %2530 = vmatprep.mubr.bf16.mxu0 %v1616
    %2531 = vmatmul.mubr.bf16.gmra.mrb[0].mxu0 %v1615
    %v2532 = vpop.f32.mrb[0].mxu0
    %v2533 = vadd.f32 %v2492, %v2532
    %v2534 = vpop.f32.mrb[0].mxu0
    %v2535 = vadd.f32 %v2494, %v2534
    %v2536 = vpop.f32.mrb[0].mxu0
    %v2537 = vpop.f32.mrb[0].mxu0
    %2538 = vdwg.mxu0
    %2539 = vmatprep.subr.bf16.mxu0 %v1330
    %2540 = vmatpush1.bf16.msra.mxu0 %v1329
    %2541 = vmatprep.subr.bf16.mxu0 %v1338
    %2542 = vmatpush1.bf16.msra.mxu0 %v1337
    %2543 = vmatprep.subr.bf16.mxu0 %v1346
    %2544 = vmatpush1.bf16.msra.mxu0 %v1345
    %2545 = vmatprep.subr.bf16.mxu0 %v1354
    %2546 = vmatpush1.bf16.msra.mxu0 %v1353
    %2547 = vmatprep.subr.bf16.mxu0 %v1362
    %2548 = vmatpush1.bf16.msra.mxu0 %v1361
    %2549 = vmatprep.subr.bf16.mxu0 %v1370
    %2550 = vmatpush1.bf16.msra.mxu0 %v1369
    %2551 = vmatprep.subr.bf16.mxu0 %v1378
    %2552 = vmatpush1.bf16.msra.mxu0 %v1377
    %2553 = vmatprep.subr.bf16.mxu0 %v1386
    %2554 = vmatpush1.bf16.msra.mxu0 %v1385
    %2555 = vmatprep.subr.bf16.mxu0 %v1394
    %2556 = vmatpush1.bf16.msra.mxu0 %v1393
    %2557 = vmatprep.subr.bf16.mxu0 %v1402
    %2558 = vmatpush1.bf16.msra.mxu0 %v1401
    %2559 = vmatprep.subr.bf16.mxu0 %v1410
    %2560 = vmatpush1.bf16.msra.mxu0 %v1409
    %2561 = vmatprep.subr.bf16.mxu0 %v1418
    %2562 = vmatpush1.bf16.msra.mxu0 %v1417
    %2563 = vmatprep.subr.bf16.mxu0 %v1426
    %2564 = vmatpush1.bf16.msra.mxu0 %v1425
    %2565 = vmatprep.subr.bf16.mxu0 %v1434
    %2566 = vmatpush1.bf16.msra.mxu0 %v1433
    %2567 = vmatprep.subr.bf16.mxu0 %v1442
    %2568 = vmatpush1.bf16.msra.mxu0 %v1441
    %2569 = vmatprep.subr.bf16.mxu0 %v1450
    %2570 = vmatpush1.bf16.msra.mxu0 %v1449
    %2571 = vmatprep.mubr.bf16.mxu0 %v1618
    %2572 = vmatmul.mubr.bf16.gmra.mrb[0].mxu0 %v1617
    %v2573 = vpop.f32.mrb[0].mxu0
    %v2574 = vadd.f32 %v2533, %v2573
    %v2575 = vpop.f32.mrb[0].mxu0
    %v2576 = vadd.f32 %v2535, %v2575
    %v2577 = vpop.f32.mrb[0].mxu0
    %v2578 = vpop.f32.mrb[0].mxu0
    %2579 = vdwg.mxu0
    %2580 = vmatprep.subr.bf16.mxu0 %v1458
    %2581 = vmatpush1.bf16.msra.mxu0 %v1457
    %2582 = vmatprep.subr.bf16.mxu0 %v1466
    %2583 = vmatpush1.bf16.msra.mxu0 %v1465
    %2584 = vmatprep.subr.bf16.mxu0 %v1474
    %2585 = vmatpush1.bf16.msra.mxu0 %v1473
    %2586 = vmatprep.subr.bf16.mxu0 %v1482
    %2587 = vmatpush1.bf16.msra.mxu0 %v1481
    %2588 = vmatprep.subr.bf16.mxu0 %v1490
    %2589 = vmatpush1.bf16.msra.mxu0 %v1489
    %2590 = vmatprep.subr.bf16.mxu0 %v1498
    %2591 = vmatpush1.bf16.msra.mxu0 %v1497
    %2592 = vmatprep.subr.bf16.mxu0 %v1506
    %2593 = vmatpush1.bf16.msra.mxu0 %v1505
    %2594 = vmatprep.subr.bf16.mxu0 %v1514
    %2595 = vmatpush1.bf16.msra.mxu0 %v1513
    %2596 = vmatprep.subr.bf16.mxu0 %v1522
    %2597 = vmatpush1.bf16.msra.mxu0 %v1521
    %2598 = vmatprep.subr.bf16.mxu0 %v1530
    %2599 = vmatpush1.bf16.msra.mxu0 %v1529
    %2600 = vmatprep.subr.bf16.mxu0 %v1538
    %2601 = vmatpush1.bf16.msra.mxu0 %v1537
    %2602 = vmatprep.subr.bf16.mxu0 %v1546
    %2603 = vmatpush1.bf16.msra.mxu0 %v1545
    %2604 = vmatprep.subr.bf16.mxu0 %v1554
    %2605 = vmatpush1.bf16.msra.mxu0 %v1553
    %2606 = vmatprep.subr.bf16.mxu0 %v1562
    %2607 = vmatpush1.bf16.msra.mxu0 %v1561
    %2608 = vmatprep.subr.bf16.mxu0 %v1570
    %2609 = vmatpush1.bf16.msra.mxu0 %v1569
    %2610 = vmatprep.subr.bf16.mxu0 %v1578
    %2611 = vmatpush1.bf16.msra.mxu0 %v1577
    %2612 = vmatprep.mubr.bf16.mxu0 %v1620
    %2613 = vmatmul.mubr.bf16.gmra.mrb[0].mxu0 %v1619
    %v2614 = vpop.f32.mrb[0].mxu0
    %v2615 = vadd.f32 %v2574, %v2614
    %v2616 = vpop.f32.mrb[0].mxu0
    %v2617 = vadd.f32 %v2576, %v2616
    %v2618 = vpop.f32.mrb[0].mxu0
    %v2619 = vpop.f32.mrb[0].mxu0
    %2620 = vdwg.mxu0
    %2621 = vmatprep.subr.bf16.mxu0 %v564
    %2622 = vmatpush1.bf16.msra.mxu0 %v563
    %2623 = vmatprep.subr.bf16.mxu0 %v572
    %2624 = vmatpush1.bf16.msra.mxu0 %v571
    %2625 = vmatprep.subr.bf16.mxu0 %v580
    %2626 = vmatpush1.bf16.msra.mxu0 %v579
    %2627 = vmatprep.subr.bf16.mxu0 %v588
    %2628 = vmatpush1.bf16.msra.mxu0 %v587
    %2629 = vmatprep.subr.bf16.mxu0 %v596
    %2630 = vmatpush1.bf16.msra.mxu0 %v595
    %2631 = vmatprep.subr.bf16.mxu0 %v604
    %2632 = vmatpush1.bf16.msra.mxu0 %v603
    %2633 = vmatprep.subr.bf16.mxu0 %v612
    %2634 = vmatpush1.bf16.msra.mxu0 %v611
    %2635 = vmatprep.subr.bf16.mxu0 %v620
    %2636 = vmatpush1.bf16.msra.mxu0 %v619
    %2637 = vmatprep.subr.bf16.mxu0 %v628
    %2638 = vmatpush1.bf16.msra.mxu0 %v627
    %2639 = vmatprep.subr.bf16.mxu0 %v636
    %2640 = vmatpush1.bf16.msra.mxu0 %v635
    %2641 = vmatprep.subr.bf16.mxu0 %v644
    %2642 = vmatpush1.bf16.msra.mxu0 %v643
    %2643 = vmatprep.subr.bf16.mxu0 %v652
    %2644 = vmatpush1.bf16.msra.mxu0 %v651
    %2645 = vmatprep.subr.bf16.mxu0 %v660
    %2646 = vmatpush1.bf16.msra.mxu0 %v659
    %2647 = vmatprep.subr.bf16.mxu0 %v668
    %2648 = vmatpush1.bf16.msra.mxu0 %v667
    %2649 = vmatprep.subr.bf16.mxu0 %v676
    %2650 = vmatpush1.bf16.msra.mxu0 %v675
    %2651 = vmatprep.subr.bf16.mxu0 %v684
    %2652 = vmatpush1.bf16.msra.mxu0 %v683
    %2653 = vmatprep.mubr.bf16.mxu0 %v1606
    %2654 = vmatmul.mubr.bf16.gmra.mrb[0].mxu0 %v1605
    %v2655 = vpop.f32.mrb[0].mxu0
    %v2656 = vadd.f32 0.0, %v2655
    %v2657 = vpop.f32.mrb[0].mxu0
    %v2658 = vadd.f32 0.0, %v2657
    %v2659 = vpop.f32.mrb[0].mxu0
    %v2660 = vpop.f32.mrb[0].mxu0
    %2661 = vdwg.mxu0
    %2662 = vmatprep.subr.bf16.mxu0 %v692
    %2663 = vmatpush1.bf16.msra.mxu0 %v691
    %2664 = vmatprep.subr.bf16.mxu0 %v700
    %2665 = vmatpush1.bf16.msra.mxu0 %v699
    %2666 = vmatprep.subr.bf16.mxu0 %v708
    %2667 = vmatpush1.bf16.msra.mxu0 %v707
    %2668 = vmatprep.subr.bf16.mxu0 %v716
    %2669 = vmatpush1.bf16.msra.mxu0 %v715
    %2670 = vmatprep.subr.bf16.mxu0 %v724
    %2671 = vmatpush1.bf16.msra.mxu0 %v723
    %2672 = vmatprep.subr.bf16.mxu0 %v732
    %2673 = vmatpush1.bf16.msra.mxu0 %v731
    %2674 = vmatprep.subr.bf16.mxu0 %v740
    %2675 = vmatpush1.bf16.msra.mxu0 %v739
    %2676 = vmatprep.subr.bf16.mxu0 %v748
    %2677 = vmatpush1.bf16.msra.mxu0 %v747
    %2678 = vmatprep.subr.bf16.mxu0 %v756
    %2679 = vmatpush1.bf16.msra.mxu0 %v755
    %2680 = vmatprep.subr.bf16.mxu0 %v764
    %2681 = vmatpush1.bf16.msra.mxu0 %v763
    %2682 = vmatprep.subr.bf16.mxu0 %v772
    %2683 = vmatpush1.bf16.msra.mxu0 %v771
    %2684 = vmatprep.subr.bf16.mxu0 %v780
    %2685 = vmatpush1.bf16.msra.mxu0 %v779
    %2686 = vmatprep.subr.bf16.mxu0 %v788
    %2687 = vmatpush1.bf16.msra.mxu0 %v787
    %2688 = vmatprep.subr.bf16.mxu0 %v796
    %2689 = vmatpush1.bf16.msra.mxu0 %v795
    %2690 = vmatprep.subr.bf16.mxu0 %v804
    %2691 = vmatpush1.bf16.msra.mxu0 %v803
    %2692 = vmatprep.subr.bf16.mxu0 %v812
    %2693 = vmatpush1.bf16.msra.mxu0 %v811
    %2694 = vmatprep.mubr.bf16.mxu0 %v1608
    %2695 = vmatmul.mubr.bf16.gmra.mrb[0].mxu0 %v1607
    %v2696 = vpop.f32.mrb[0].mxu0
    %v2697 = vadd.f32 %v2656, %v2696
    %v2698 = vpop.f32.mrb[0].mxu0
    %v2699 = vadd.f32 %v2658, %v2698
    %v2700 = vpop.f32.mrb[0].mxu0
    %v2701 = vpop.f32.mrb[0].mxu0
    %2702 = vdwg.mxu0
    %2703 = vmatprep.subr.bf16.mxu0 %v820
    %2704 = vmatpush1.bf16.msra.mxu0 %v819
    %2705 = vmatprep.subr.bf16.mxu0 %v828
    %2706 = vmatpush1.bf16.msra.mxu0 %v827
    %2707 = vmatprep.subr.bf16.mxu0 %v836
    %2708 = vmatpush1.bf16.msra.mxu0 %v835
    %2709 = vmatprep.subr.bf16.mxu0 %v844
    %2710 = vmatpush1.bf16.msra.mxu0 %v843
    %2711 = vmatprep.subr.bf16.mxu0 %v852
    %2712 = vmatpush1.bf16.msra.mxu0 %v851
    %2713 = vmatprep.subr.bf16.mxu0 %v860
    %2714 = vmatpush1.bf16.msra.mxu0 %v859
    %2715 = vmatprep.subr.bf16.mxu0 %v868
    %2716 = vmatpush1.bf16.msra.mxu0 %v867
    %2717 = vmatprep.subr.bf16.mxu0 %v876
    %2718 = vmatpush1.bf16.msra.mxu0 %v875
    %2719 = vmatprep.subr.bf16.mxu0 %v884
    %2720 = vmatpush1.bf16.msra.mxu0 %v883
    %2721 = vmatprep.subr.bf16.mxu0 %v892
    %2722 = vmatpush1.bf16.msra.mxu0 %v891
    %2723 = vmatprep.subr.bf16.mxu0 %v900
    %2724 = vmatpush1.bf16.msra.mxu0 %v899
    %2725 = vmatprep.subr.bf16.mxu0 %v908
    %2726 = vmatpush1.bf16.msra.mxu0 %v907
    %2727 = vmatprep.subr.bf16.mxu0 %v916
    %2728 = vmatpush1.bf16.msra.mxu0 %v915
    %2729 = vmatprep.subr.bf16.mxu0 %v924
    %2730 = vmatpush1.bf16.msra.mxu0 %v923
    %2731 = vmatprep.subr.bf16.mxu0 %v932
    %2732 = vmatpush1.bf16.msra.mxu0 %v931
    %2733 = vmatprep.subr.bf16.mxu0 %v940
    %2734 = vmatpush1.bf16.msra.mxu0 %v939
    %2735 = vmatprep.mubr.bf16.mxu0 %v1610
    %2736 = vmatmul.mubr.bf16.gmra.mrb[0].mxu0 %v1609
    %v2737 = vpop.f32.mrb[0].mxu0
    %v2738 = vadd.f32 %v2697, %v2737
    %v2739 = vpop.f32.mrb[0].mxu0
    %v2740 = vadd.f32 %v2699, %v2739
    %v2741 = vpop.f32.mrb[0].mxu0
    %v2742 = vpop.f32.mrb[0].mxu0
    %2743 = vdwg.mxu0
    %2744 = vmatprep.subr.bf16.mxu0 %v948
    %2745 = vmatpush1.bf16.msra.mxu0 %v947
    %2746 = vmatprep.subr.bf16.mxu0 %v956
    %2747 = vmatpush1.bf16.msra.mxu0 %v955
    %2748 = vmatprep.subr.bf16.mxu0 %v964
    %2749 = vmatpush1.bf16.msra.mxu0 %v963
    %2750 = vmatprep.subr.bf16.mxu0 %v972
    %2751 = vmatpush1.bf16.msra.mxu0 %v971
    %2752 = vmatprep.subr.bf16.mxu0 %v980
    %2753 = vmatpush1.bf16.msra.mxu0 %v979
    %2754 = vmatprep.subr.bf16.mxu0 %v988
    %2755 = vmatpush1.bf16.msra.mxu0 %v987
    %2756 = vmatprep.subr.bf16.mxu0 %v996
    %2757 = vmatpush1.bf16.msra.mxu0 %v995
    %2758 = vmatprep.subr.bf16.mxu0 %v1004
    %2759 = vmatpush1.bf16.msra.mxu0 %v1003
    %2760 = vmatprep.subr.bf16.mxu0 %v1012
    %2761 = vmatpush1.bf16.msra.mxu0 %v1011
    %2762 = vmatprep.subr.bf16.mxu0 %v1020
    %2763 = vmatpush1.bf16.msra.mxu0 %v1019
    %2764 = vmatprep.subr.bf16.mxu0 %v1028
    %2765 = vmatpush1.bf16.msra.mxu0 %v1027
    %2766 = vmatprep.subr.bf16.mxu0 %v1036
    %2767 = vmatpush1.bf16.msra.mxu0 %v1035
    %2768 = vmatprep.subr.bf16.mxu0 %v1044
    %2769 = vmatpush1.bf16.msra.mxu0 %v1043
    %2770 = vmatprep.subr.bf16.mxu0 %v1052
    %2771 = vmatpush1.bf16.msra.mxu0 %v1051
    %2772 = vmatprep.subr.bf16.mxu0 %v1060
    %2773 = vmatpush1.bf16.msra.mxu0 %v1059
    %2774 = vmatprep.subr.bf16.mxu0 %v1068
    %2775 = vmatpush1.bf16.msra.mxu0 %v1067
    %2776 = vmatprep.mubr.bf16.mxu0 %v1612
    %2777 = vmatmul.mubr.bf16.gmra.mrb[0].mxu0 %v1611
    %v2778 = vpop.f32.mrb[0].mxu0
    %v2779 = vadd.f32 %v2738, %v2778
    %v2780 = vpop.f32.mrb[0].mxu0
    %v2781 = vadd.f32 %v2740, %v2780
    %v2782 = vpop.f32.mrb[0].mxu0
    %v2783 = vpop.f32.mrb[0].mxu0
    %2784 = vdwg.mxu0
    %2785 = vmatprep.subr.bf16.mxu0 %v1076
    %2786 = vmatpush1.bf16.msra.mxu0 %v1075
    %2787 = vmatprep.subr.bf16.mxu0 %v1084
    %2788 = vmatpush1.bf16.msra.mxu0 %v1083
    %2789 = vmatprep.subr.bf16.mxu0 %v1092
    %2790 = vmatpush1.bf16.msra.mxu0 %v1091
    %2791 = vmatprep.subr.bf16.mxu0 %v1100
    %2792 = vmatpush1.bf16.msra.mxu0 %v1099
    %2793 = vmatprep.subr.bf16.mxu0 %v1108
    %2794 = vmatpush1.bf16.msra.mxu0 %v1107
    %2795 = vmatprep.subr.bf16.mxu0 %v1116
    %2796 = vmatpush1.bf16.msra.mxu0 %v1115
    %2797 = vmatprep.subr.bf16.mxu0 %v1124
    %2798 = vmatpush1.bf16.msra.mxu0 %v1123
    %2799 = vmatprep.subr.bf16.mxu0 %v1132
    %2800 = vmatpush1.bf16.msra.mxu0 %v1131
    %2801 = vmatprep.subr.bf16.mxu0 %v1140
    %2802 = vmatpush1.bf16.msra.mxu0 %v1139
    %2803 = vmatprep.subr.bf16.mxu0 %v1148
    %2804 = vmatpush1.bf16.msra.mxu0 %v1147
    %2805 = vmatprep.subr.bf16.mxu0 %v1156
    %2806 = vmatpush1.bf16.msra.mxu0 %v1155
    %2807 = vmatprep.subr.bf16.mxu0 %v1164
    %2808 = vmatpush1.bf16.msra.mxu0 %v1163
    %2809 = vmatprep.subr.bf16.mxu0 %v1172
    %2810 = vmatpush1.bf16.msra.mxu0 %v1171
    %2811 = vmatprep.subr.bf16.mxu0 %v1180
    %2812 = vmatpush1.bf16.msra.mxu0 %v1179
    %2813 = vmatprep.subr.bf16.mxu0 %v1188
    %2814 = vmatpush1.bf16.msra.mxu0 %v1187
    %2815 = vmatprep.subr.bf16.mxu0 %v1196
    %2816 = vmatpush1.bf16.msra.mxu0 %v1195
    %2817 = vmatprep.mubr.bf16.mxu0 %v1614
    %2818 = vmatmul.mubr.bf16.gmra.mrb[0].mxu0 %v1613
    %v2819 = vpop.f32.mrb[0].mxu0
    %v2820 = vadd.f32 %v2779, %v2819
    %v2821 = vpop.f32.mrb[0].mxu0
    %v2822 = vadd.f32 %v2781, %v2821
    %v2823 = vpop.f32.mrb[0].mxu0
    %v2824 = vpop.f32.mrb[0].mxu0
    %2825 = vdwg.mxu0
    %2826 = vmatprep.subr.bf16.mxu0 %v1204
    %2827 = vmatpush1.bf16.msra.mxu0 %v1203
    %2828 = vmatprep.subr.bf16.mxu0 %v1212
    %2829 = vmatpush1.bf16.msra.mxu0 %v1211
    %2830 = vmatprep.subr.bf16.mxu0 %v1220
    %2831 = vmatpush1.bf16.msra.mxu0 %v1219
    %2832 = vmatprep.subr.bf16.mxu0 %v1228
    %2833 = vmatpush1.bf16.msra.mxu0 %v1227
    %2834 = vmatprep.subr.bf16.mxu0 %v1236
    %2835 = vmatpush1.bf16.msra.mxu0 %v1235
    %2836 = vmatprep.subr.bf16.mxu0 %v1244
    %2837 = vmatpush1.bf16.msra.mxu0 %v1243
    %2838 = vmatprep.subr.bf16.mxu0 %v1252
    %2839 = vmatpush1.bf16.msra.mxu0 %v1251
    %2840 = vmatprep.subr.bf16.mxu0 %v1260
    %2841 = vmatpush1.bf16.msra.mxu0 %v1259
    %2842 = vmatprep.subr.bf16.mxu0 %v1268
    %2843 = vmatpush1.bf16.msra.mxu0 %v1267
    %2844 = vmatprep.subr.bf16.mxu0 %v1276
    %2845 = vmatpush1.bf16.msra.mxu0 %v1275
    %2846 = vmatprep.subr.bf16.mxu0 %v1284
    %2847 = vmatpush1.bf16.msra.mxu0 %v1283
    %2848 = vmatprep.subr.bf16.mxu0 %v1292
    %2849 = vmatpush1.bf16.msra.mxu0 %v1291
    %2850 = vmatprep.subr.bf16.mxu0 %v1300
    %2851 = vmatpush1.bf16.msra.mxu0 %v1299
    %2852 = vmatprep.subr.bf16.mxu0 %v1308
    %2853 = vmatpush1.bf16.msra.mxu0 %v1307
    %2854 = vmatprep.subr.bf16.mxu0 %v1316
    %2855 = vmatpush1.bf16.msra.mxu0 %v1315
    %2856 = vmatprep.subr.bf16.mxu0 %v1324
    %2857 = vmatpush1.bf16.msra.mxu0 %v1323
    %2858 = vmatprep.mubr.bf16.mxu0 %v1616
    %2859 = vmatmul.mubr.bf16.gmra.mrb[0].mxu0 %v1615
    %v2860 = vpop.f32.mrb[0].mxu0
    %v2861 = vadd.f32 %v2820, %v2860
    %v2862 = vpop.f32.mrb[0].mxu0
    %v2863 = vadd.f32 %v2822, %v2862
    %v2864 = vpop.f32.mrb[0].mxu0
    %v2865 = vpop.f32.mrb[0].mxu0
    %2866 = vdwg.mxu0
    %2867 = vmatprep.subr.bf16.mxu0 %v1332
    %2868 = vmatpush1.bf16.msra.mxu0 %v1331
    %2869 = vmatprep.subr.bf16.mxu0 %v1340
    %2870 = vmatpush1.bf16.msra.mxu0 %v1339
    %2871 = vmatprep.subr.bf16.mxu0 %v1348
    %2872 = vmatpush1.bf16.msra.mxu0 %v1347
    %2873 = vmatprep.subr.bf16.mxu0 %v1356
    %2874 = vmatpush1.bf16.msra.mxu0 %v1355
    %2875 = vmatprep.subr.bf16.mxu0 %v1364
    %2876 = vmatpush1.bf16.msra.mxu0 %v1363
    %2877 = vmatprep.subr.bf16.mxu0 %v1372
    %2878 = vmatpush1.bf16.msra.mxu0 %v1371
    %2879 = vmatprep.subr.bf16.mxu0 %v1380
    %2880 = vmatpush1.bf16.msra.mxu0 %v1379
    %2881 = vmatprep.subr.bf16.mxu0 %v1388
    %2882 = vmatpush1.bf16.msra.mxu0 %v1387
    %2883 = vmatprep.subr.bf16.mxu0 %v1396
    %2884 = vmatpush1.bf16.msra.mxu0 %v1395
    %2885 = vmatprep.subr.bf16.mxu0 %v1404
    %2886 = vmatpush1.bf16.msra.mxu0 %v1403
    %2887 = vmatprep.subr.bf16.mxu0 %v1412
    %2888 = vmatpush1.bf16.msra.mxu0 %v1411
    %2889 = vmatprep.subr.bf16.mxu0 %v1420
    %2890 = vmatpush1.bf16.msra.mxu0 %v1419
    %2891 = vmatprep.subr.bf16.mxu0 %v1428
    %2892 = vmatpush1.bf16.msra.mxu0 %v1427
    %2893 = vmatprep.subr.bf16.mxu0 %v1436
    %2894 = vmatpush1.bf16.msra.mxu0 %v1435
    %2895 = vmatprep.subr.bf16.mxu0 %v1444
    %2896 = vmatpush1.bf16.msra.mxu0 %v1443
    %2897 = vmatprep.subr.bf16.mxu0 %v1452
    %2898 = vmatpush1.bf16.msra.mxu0 %v1451
    %2899 = vmatprep.mubr.bf16.mxu0 %v1618
    %2900 = vmatmul.mubr.bf16.gmra.mrb[0].mxu0 %v1617
    %v2901 = vpop.f32.mrb[0].mxu0
    %v2902 = vadd.f32 %v2861, %v2901
    %v2903 = vpop.f32.mrb[0].mxu0
    %v2904 = vadd.f32 %v2863, %v2903
    %v2905 = vpop.f32.mrb[0].mxu0
    %v2906 = vpop.f32.mrb[0].mxu0
    %2907 = vdwg.mxu0
    %2908 = vmatprep.subr.bf16.mxu0 %v1460
    %2909 = vmatpush1.bf16.msra.mxu0 %v1459
    %2910 = vmatprep.subr.bf16.mxu0 %v1468
    %2911 = vmatpush1.bf16.msra.mxu0 %v1467
    %2912 = vmatprep.subr.bf16.mxu0 %v1476
    %2913 = vmatpush1.bf16.msra.mxu0 %v1475
    %2914 = vmatprep.subr.bf16.mxu0 %v1484
    %2915 = vmatpush1.bf16.msra.mxu0 %v1483
    %2916 = vmatprep.subr.bf16.mxu0 %v1492
    %2917 = vmatpush1.bf16.msra.mxu0 %v1491
    %2918 = vmatprep.subr.bf16.mxu0 %v1500
    %2919 = vmatpush1.bf16.msra.mxu0 %v1499
    %2920 = vmatprep.subr.bf16.mxu0 %v1508
    %2921 = vmatpush1.bf16.msra.mxu0 %v1507
    %2922 = vmatprep.subr.bf16.mxu0 %v1516
    %2923 = vmatpush1.bf16.msra.mxu0 %v1515
    %2924 = vmatprep.subr.bf16.mxu0 %v1524
    %2925 = vmatpush1.bf16.msra.mxu0 %v1523
    %2926 = vmatprep.subr.bf16.mxu0 %v1532
    %2927 = vmatpush1.bf16.msra.mxu0 %v1531
    %2928 = vmatprep.subr.bf16.mxu0 %v1540
    %2929 = vmatpush1.bf16.msra.mxu0 %v1539
    %2930 = vmatprep.subr.bf16.mxu0 %v1548
    %2931 = vmatpush1.bf16.msra.mxu0 %v1547
    %2932 = vmatprep.subr.bf16.mxu0 %v1556
    %2933 = vmatpush1.bf16.msra.mxu0 %v1555
    %2934 = vmatprep.subr.bf16.mxu0 %v1564
    %2935 = vmatpush1.bf16.msra.mxu0 %v1563
    %2936 = vmatprep.subr.bf16.mxu0 %v1572
    %2937 = vmatpush1.bf16.msra.mxu0 %v1571
    %2938 = vmatprep.subr.bf16.mxu0 %v1580
    %2939 = vmatpush1.bf16.msra.mxu0 %v1579
    %2940 = vmatprep.mubr.bf16.mxu0 %v1620
    %2941 = vmatmul.mubr.bf16.gmra.mrb[0].mxu0 %v1619
    %v2942 = vpop.f32.mrb[0].mxu0
    %v2943 = vadd.f32 %v2902, %v2942
    %v2944 = vpop.f32.mrb[0].mxu0
    %v2945 = vadd.f32 %v2904, %v2944
    %v2946 = vpop.f32.mrb[0].mxu0
    %v2947 = vpop.f32.mrb[0].mxu0
    %2948 = vdwg.mxu0
    %v2949 = vld [vmem:[%s2] sm:$0xff]
    %v2951 = vlaneseq
    %v2952 = vshrl.u32 %v2951, 7
    %v2953 = vsub.s32 0, %v2952
    %v2954 = vrot.slane %v2949, %v2953
    %v2955 = vlaneseq
    %v2956 = vshrl.u32 %v2955, 7
    %v2957 = vsub.s32 1, %v2956
    %v2958 = vrot.slane %v2949, %v2957
    %v2959 = vlaneseq
    %v2960 = vshrl.u32 %v2959, 7
    %v2961 = vsub.s32 2, %v2960
    %v2962 = vrot.slane %v2949, %v2961
    %v2963 = vlaneseq
    %v2964 = vshrl.u32 %v2963, 7
    %v2965 = vsub.s32 3, %v2964
    %v2966 = vrot.slane %v2949, %v2965
    %v2967 = vlaneseq
    %v2968 = vshrl.u32 %v2967, 7
    %v2969 = vsub.s32 4, %v2968
    %v2970 = vrot.slane %v2949, %v2969
    %v2971 = vlaneseq
    %v2972 = vshrl.u32 %v2971, 7
    %v2973 = vsub.s32 5, %v2972
    %v2974 = vrot.slane %v2949, %v2973
    %v2975 = vlaneseq
    %v2976 = vshrl.u32 %v2975, 7
    %v2977 = vsub.s32 6, %v2976
    %v2978 = vrot.slane %v2949, %v2977
    %v2979 = vlaneseq
    %v2980 = vshrl.u32 %v2979, 7
    %v2981 = vsub.s32 7, %v2980
    %v2982 = vrot.slane %v2949, %v2981
    %v2991 = vmul.f32 %v1959, %v2954
    %v2992 = vmul.f32 %v1961, %v2958
    %v2993 = vmul.f32 %v2287, %v2962
    %v2994 = vmul.f32 %v2289, %v2966
    %v2995 = vmul.f32 %v2615, %v2970
    %v2996 = vmul.f32 %v2617, %v2974
    %v2997 = vmul.f32 %v2943, %v2978
    %v2998 = vmul.f32 %v2945, %v2982
    %v2999 = vld [vmem:[%s3] sm:$0xff]
    %v3001 = vlaneseq
    %v3002 = vshrl.u32 %v3001, 7
    %v3003 = vsub.s32 0, %v3002
    %v3004 = vrot.slane %v2999, %v3003
    %v3005 = vlaneseq
    %v3006 = vshrl.u32 %v3005, 7
    %v3007 = vsub.s32 1, %v3006
    %v3008 = vrot.slane %v2999, %v3007
    %v3009 = vlaneseq
    %v3010 = vshrl.u32 %v3009, 7
    %v3011 = vsub.s32 2, %v3010
    %v3012 = vrot.slane %v2999, %v3011
    %v3013 = vlaneseq
    %v3014 = vshrl.u32 %v3013, 7
    %v3015 = vsub.s32 3, %v3014
    %v3016 = vrot.slane %v2999, %v3015
    %v3017 = vlaneseq
    %v3018 = vshrl.u32 %v3017, 7
    %v3019 = vsub.s32 4, %v3018
    %v3020 = vrot.slane %v2999, %v3019
    %v3021 = vlaneseq
    %v3022 = vshrl.u32 %v3021, 7
    %v3023 = vsub.s32 5, %v3022
    %v3024 = vrot.slane %v2999, %v3023
    %v3025 = vlaneseq
    %v3026 = vshrl.u32 %v3025, 7
    %v3027 = vsub.s32 6, %v3026
    %v3028 = vrot.slane %v2999, %v3027
    %v3029 = vlaneseq
    %v3030 = vshrl.u32 %v3029, 7
    %v3031 = vsub.s32 7, %v3030
    %v3032 = vrot.slane %v2999, %v3031
    %v3041 = vadd.f32 %v2991, %v3004
    %v3042 = vadd.f32 %v2992, %v3008
    %v3043 = vadd.f32 %v2993, %v3012
    %v3044 = vadd.f32 %v2994, %v3016
    %v3045 = vadd.f32 %v2995, %v3020
    %v3046 = vadd.f32 %v2996, %v3024
    %v3047 = vadd.f32 %v2997, %v3028
    %v3048 = vadd.f32 %v2998, %v3032
    %v3049 = vmax.f32 %v3041, 0.0
    %v3050 = vmax.f32 %v3042, 0.0
    %v3051 = vmax.f32 %v3043, 0.0
    %v3052 = vmax.f32 %v3044, 0.0
    %v3053 = vmax.f32 %v3045, 0.0
    %v3054 = vmax.f32 %v3046, 0.0
    %v3055 = vmax.f32 %v3047, 0.0
    %v3056 = vmax.f32 %v3048, 0.0
    %v3057 = vpack.c.bf16 %v3049, %v3049
    %v3058 = vpack.c.bf16 %v3050, %v3050
    %v3059 = vpack.c.bf16 %v3051, %v3051
    %v3060 = vpack.c.bf16 %v3052, %v3052
    %v3061 = vpack.c.bf16 %v3053, %v3053
    %v3062 = vpack.c.bf16 %v3054, %v3054
    %v3063 = vpack.c.bf16 %v3055, %v3055
    %v3064 = vpack.c.bf16 %v3056, %v3056
    %v3065 = vld [vmem:[%s4] sm:$0xff]
    %v3066 = vld [vmem:[%s4 + $0x8] sm:$0xff]
    %v3067 = vld [vmem:[%s4 + $0x10] sm:$0xff]
    %v3068 = vld [vmem:[%s4 + $0x18] sm:$0xff]
    %v3069 = vld [vmem:[%s4 + $0x20] sm:$0xff]
    %v3070 = vld [vmem:[%s4 + $0x28] sm:$0xff]
    %v3071 = vld [vmem:[%s4 + $0x30] sm:$0xff]
    %v3072 = vld [vmem:[%s4 + $0x38] sm:$0xff]
    %v3073 = vld [vmem:[%s4 + $0x40] sm:$0xff]
    %v3074 = vld [vmem:[%s4 + $0x48] sm:$0xff]
    %v3075 = vld [vmem:[%s4 + $0x50] sm:$0xff]
    %v3076 = vld [vmem:[%s4 + $0x58] sm:$0xff]
    %v3077 = vld [vmem:[%s4 + $0x60] sm:$0xff]
    %v3078 = vld [vmem:[%s4 + $0x68] sm:$0xff]
    %v3079 = vld [vmem:[%s4 + $0x70] sm:$0xff]
    %v3080 = vld [vmem:[%s4 + $0x78] sm:$0xff]
    %v3081 = vld [vmem:[%s4 + $0x80] sm:$0xff]
    %v3082 = vld [vmem:[%s4 + $0x88] sm:$0xff]
    %v3083 = vld [vmem:[%s4 + $0x90] sm:$0xff]
    %v3084 = vld [vmem:[%s4 + $0x98] sm:$0xff]
    %v3085 = vld [vmem:[%s4 + $0xa0] sm:$0xff]
    %v3086 = vld [vmem:[%s4 + $0xa8] sm:$0xff]
    %v3087 = vld [vmem:[%s4 + $0xb0] sm:$0xff]
    %v3088 = vld [vmem:[%s4 + $0xb8] sm:$0xff]
    %v3089 = vld [vmem:[%s4 + $0xc0] sm:$0xff]
    %v3090 = vld [vmem:[%s4 + $0xc8] sm:$0xff]
    %v3091 = vld [vmem:[%s4 + $0xd0] sm:$0xff]
    %v3092 = vld [vmem:[%s4 + $0xd8] sm:$0xff]
    %v3093 = vld [vmem:[%s4 + $0xe0] sm:$0xff]
    %v3094 = vld [vmem:[%s4 + $0xe8] sm:$0xff]
    %v3095 = vld [vmem:[%s4 + $0xf0] sm:$0xff]
    %v3096 = vld [vmem:[%s4 + $0xf8] sm:$0xff]
    %v3097 = vld [vmem:[%s4 + $0x100] sm:$0xff]
    %v3098 = vld [vmem:[%s4 + $0x108] sm:$0xff]
    %v3099 = vld [vmem:[%s4 + $0x110] sm:$0xff]
    %v3100 = vld [vmem:[%s4 + $0x118] sm:$0xff]
    %v3101 = vld [vmem:[%s4 + $0x120] sm:$0xff]
    %v3102 = vld [vmem:[%s4 + $0x128] sm:$0xff]
    %v3103 = vld [vmem:[%s4 + $0x130] sm:$0xff]
    %v3104 = vld [vmem:[%s4 + $0x138] sm:$0xff]
    %v3105 = vld [vmem:[%s4 + $0x140] sm:$0xff]
    %v3106 = vld [vmem:[%s4 + $0x148] sm:$0xff]
    %v3107 = vld [vmem:[%s4 + $0x150] sm:$0xff]
    %v3108 = vld [vmem:[%s4 + $0x158] sm:$0xff]
    %v3109 = vld [vmem:[%s4 + $0x160] sm:$0xff]
    %v3110 = vld [vmem:[%s4 + $0x168] sm:$0xff]
    %v3111 = vld [vmem:[%s4 + $0x170] sm:$0xff]
    %v3112 = vld [vmem:[%s4 + $0x178] sm:$0xff]
    %v3113 = vld [vmem:[%s4 + $0x180] sm:$0xff]
    %v3114 = vld [vmem:[%s4 + $0x188] sm:$0xff]
    %v3115 = vld [vmem:[%s4 + $0x190] sm:$0xff]
    %v3116 = vld [vmem:[%s4 + $0x198] sm:$0xff]
    %v3117 = vld [vmem:[%s4 + $0x1a0] sm:$0xff]
    %v3118 = vld [vmem:[%s4 + $0x1a8] sm:$0xff]
    %v3119 = vld [vmem:[%s4 + $0x1b0] sm:$0xff]
    %v3120 = vld [vmem:[%s4 + $0x1b8] sm:$0xff]
    %v3121 = vld [vmem:[%s4 + $0x1c0] sm:$0xff]
    %v3122 = vld [vmem:[%s4 + $0x1c8] sm:$0xff]
    %v3123 = vld [vmem:[%s4 + $0x1d0] sm:$0xff]
    %v3124 = vld [vmem:[%s4 + $0x1d8] sm:$0xff]
    %v3125 = vld [vmem:[%s4 + $0x1e0] sm:$0xff]
    %v3126 = vld [vmem:[%s4 + $0x1e8] sm:$0xff]
    %v3127 = vld [vmem:[%s4 + $0x1f0] sm:$0xff]
    %v3128 = vld [vmem:[%s4 + $0x1f8] sm:$0xff]
    %v3129 = vld [vmem:[%s4 + $0x200] sm:$0xff]
    %v3130 = vld [vmem:[%s4 + $0x208] sm:$0xff]
    %v3131 = vld [vmem:[%s4 + $0x210] sm:$0xff]
    %v3132 = vld [vmem:[%s4 + $0x218] sm:$0xff]
    %v3133 = vld [vmem:[%s4 + $0x220] sm:$0xff]
    %v3134 = vld [vmem:[%s4 + $0x228] sm:$0xff]
    %v3135 = vld [vmem:[%s4 + $0x230] sm:$0xff]
    %v3136 = vld [vmem:[%s4 + $0x238] sm:$0xff]
    %v3137 = vld [vmem:[%s4 + $0x240] sm:$0xff]
    %v3138 = vld [vmem:[%s4 + $0x248] sm:$0xff]
    %v3139 = vld [vmem:[%s4 + $0x250] sm:$0xff]
    %v3140 = vld [vmem:[%s4 + $0x258] sm:$0xff]
    %v3141 = vld [vmem:[%s4 + $0x260] sm:$0xff]
    %v3142 = vld [vmem:[%s4 + $0x268] sm:$0xff]
    %v3143 = vld [vmem:[%s4 + $0x270] sm:$0xff]
    %v3144 = vld [vmem:[%s4 + $0x278] sm:$0xff]
    %v3145 = vld [vmem:[%s4 + $0x280] sm:$0xff]
    %v3146 = vld [vmem:[%s4 + $0x288] sm:$0xff]
    %v3147 = vld [vmem:[%s4 + $0x290] sm:$0xff]
    %v3148 = vld [vmem:[%s4 + $0x298] sm:$0xff]
    %v3149 = vld [vmem:[%s4 + $0x2a0] sm:$0xff]
    %v3150 = vld [vmem:[%s4 + $0x2a8] sm:$0xff]
    %v3151 = vld [vmem:[%s4 + $0x2b0] sm:$0xff]
    %v3152 = vld [vmem:[%s4 + $0x2b8] sm:$0xff]
    %v3153 = vld [vmem:[%s4 + $0x2c0] sm:$0xff]
    %v3154 = vld [vmem:[%s4 + $0x2c8] sm:$0xff]
    %v3155 = vld [vmem:[%s4 + $0x2d0] sm:$0xff]
    %v3156 = vld [vmem:[%s4 + $0x2d8] sm:$0xff]
    %v3157 = vld [vmem:[%s4 + $0x2e0] sm:$0xff]
    %v3158 = vld [vmem:[%s4 + $0x2e8] sm:$0xff]
    %v3159 = vld [vmem:[%s4 + $0x2f0] sm:$0xff]
    %v3160 = vld [vmem:[%s4 + $0x2f8] sm:$0xff]
    %v3161 = vld [vmem:[%s4 + $0x300] sm:$0xff]
    %v3162 = vld [vmem:[%s4 + $0x308] sm:$0xff]
    %v3163 = vld [vmem:[%s4 + $0x310] sm:$0xff]
    %v3164 = vld [vmem:[%s4 + $0x318] sm:$0xff]
    %v3165 = vld [vmem:[%s4 + $0x320] sm:$0xff]
    %v3166 = vld [vmem:[%s4 + $0x328] sm:$0xff]
    %v3167 = vld [vmem:[%s4 + $0x330] sm:$0xff]
    %v3168 = vld [vmem:[%s4 + $0x338] sm:$0xff]
    %v3169 = vld [vmem:[%s4 + $0x340] sm:$0xff]
    %v3170 = vld [vmem:[%s4 + $0x348] sm:$0xff]
    %v3171 = vld [vmem:[%s4 + $0x350] sm:$0xff]
    %v3172 = vld [vmem:[%s4 + $0x358] sm:$0xff]
    %v3173 = vld [vmem:[%s4 + $0x360] sm:$0xff]
    %v3174 = vld [vmem:[%s4 + $0x368] sm:$0xff]
    %v3175 = vld [vmem:[%s4 + $0x370] sm:$0xff]
    %v3176 = vld [vmem:[%s4 + $0x378] sm:$0xff]
    %v3177 = vld [vmem:[%s4 + $0x380] sm:$0xff]
    %v3178 = vld [vmem:[%s4 + $0x388] sm:$0xff]
    %v3179 = vld [vmem:[%s4 + $0x390] sm:$0xff]
    %v3180 = vld [vmem:[%s4 + $0x398] sm:$0xff]
    %v3181 = vld [vmem:[%s4 + $0x3a0] sm:$0xff]
    %v3182 = vld [vmem:[%s4 + $0x3a8] sm:$0xff]
    %v3183 = vld [vmem:[%s4 + $0x3b0] sm:$0xff]
    %v3184 = vld [vmem:[%s4 + $0x3b8] sm:$0xff]
    %v3185 = vld [vmem:[%s4 + $0x3c0] sm:$0xff]
    %v3186 = vld [vmem:[%s4 + $0x3c8] sm:$0xff]
    %v3187 = vld [vmem:[%s4 + $0x3d0] sm:$0xff]
    %v3188 = vld [vmem:[%s4 + $0x3d8] sm:$0xff]
    %v3189 = vld [vmem:[%s4 + $0x3e0] sm:$0xff]
    %v3190 = vld [vmem:[%s4 + $0x3e8] sm:$0xff]
    %v3191 = vld [vmem:[%s4 + $0x3f0] sm:$0xff]
    %v3192 = vld [vmem:[%s4 + $0x3f8] sm:$0xff]
    %v3193 = vunpack.c.l.s8.bf16 %v3065
    %v3194 = vunpack.c.l.s8.bf16 %v3066
    %v3195 = vunpack.c.l.s8.bf16 %v3067
    %v3196 = vunpack.c.l.s8.bf16 %v3068
    %v3197 = vunpack.c.h.s8.bf16 %v3065
    %v3198 = vunpack.c.h.s8.bf16 %v3066
    %v3199 = vunpack.c.h.s8.bf16 %v3067
    %v3200 = vunpack.c.h.s8.bf16 %v3068
    %v3201 = vunpack.c.l.s8.bf16 %v3069
    %v3202 = vunpack.c.l.s8.bf16 %v3070
    %v3203 = vunpack.c.l.s8.bf16 %v3071
    %v3204 = vunpack.c.l.s8.bf16 %v3072
    %v3205 = vunpack.c.h.s8.bf16 %v3069
    %v3206 = vunpack.c.h.s8.bf16 %v3070
    %v3207 = vunpack.c.h.s8.bf16 %v3071
    %v3208 = vunpack.c.h.s8.bf16 %v3072
    %v3209 = vunpack.c.l.s8.bf16 %v3073
    %v3210 = vunpack.c.l.s8.bf16 %v3074
    %v3211 = vunpack.c.l.s8.bf16 %v3075
    %v3212 = vunpack.c.l.s8.bf16 %v3076
    %v3213 = vunpack.c.h.s8.bf16 %v3073
    %v3214 = vunpack.c.h.s8.bf16 %v3074
    %v3215 = vunpack.c.h.s8.bf16 %v3075
    %v3216 = vunpack.c.h.s8.bf16 %v3076
    %v3217 = vunpack.c.l.s8.bf16 %v3077
    %v3218 = vunpack.c.l.s8.bf16 %v3078
    %v3219 = vunpack.c.l.s8.bf16 %v3079
    %v3220 = vunpack.c.l.s8.bf16 %v3080
    %v3221 = vunpack.c.h.s8.bf16 %v3077
    %v3222 = vunpack.c.h.s8.bf16 %v3078
    %v3223 = vunpack.c.h.s8.bf16 %v3079
    %v3224 = vunpack.c.h.s8.bf16 %v3080
    %v3225 = vunpack.c.l.s8.bf16 %v3081
    %v3226 = vunpack.c.l.s8.bf16 %v3082
    %v3227 = vunpack.c.l.s8.bf16 %v3083
    %v3228 = vunpack.c.l.s8.bf16 %v3084
    %v3229 = vunpack.c.h.s8.bf16 %v3081
    %v3230 = vunpack.c.h.s8.bf16 %v3082
    %v3231 = vunpack.c.h.s8.bf16 %v3083
    %v3232 = vunpack.c.h.s8.bf16 %v3084
    %v3233 = vunpack.c.l.s8.bf16 %v3085
    %v3234 = vunpack.c.l.s8.bf16 %v3086
    %v3235 = vunpack.c.l.s8.bf16 %v3087
    %v3236 = vunpack.c.l.s8.bf16 %v3088
    %v3237 = vunpack.c.h.s8.bf16 %v3085
    %v3238 = vunpack.c.h.s8.bf16 %v3086
    %v3239 = vunpack.c.h.s8.bf16 %v3087
    %v3240 = vunpack.c.h.s8.bf16 %v3088
    %v3241 = vunpack.c.l.s8.bf16 %v3089
    %v3242 = vunpack.c.l.s8.bf16 %v3090
    %v3243 = vunpack.c.l.s8.bf16 %v3091
    %v3244 = vunpack.c.l.s8.bf16 %v3092
    %v3245 = vunpack.c.h.s8.bf16 %v3089
    %v3246 = vunpack.c.h.s8.bf16 %v3090
    %v3247 = vunpack.c.h.s8.bf16 %v3091
    %v3248 = vunpack.c.h.s8.bf16 %v3092
    %v3249 = vunpack.c.l.s8.bf16 %v3093
    %v3250 = vunpack.c.l.s8.bf16 %v3094
    %v3251 = vunpack.c.l.s8.bf16 %v3095
    %v3252 = vunpack.c.l.s8.bf16 %v3096
    %v3253 = vunpack.c.h.s8.bf16 %v3093
    %v3254 = vunpack.c.h.s8.bf16 %v3094
    %v3255 = vunpack.c.h.s8.bf16 %v3095
    %v3256 = vunpack.c.h.s8.bf16 %v3096
    %v3257 = vunpack.c.l.s8.bf16 %v3097
    %v3258 = vunpack.c.l.s8.bf16 %v3098
    %v3259 = vunpack.c.l.s8.bf16 %v3099
    %v3260 = vunpack.c.l.s8.bf16 %v3100
    %v3261 = vunpack.c.h.s8.bf16 %v3097
    %v3262 = vunpack.c.h.s8.bf16 %v3098
    %v3263 = vunpack.c.h.s8.bf16 %v3099
    %v3264 = vunpack.c.h.s8.bf16 %v3100
    %v3265 = vunpack.c.l.s8.bf16 %v3101
    %v3266 = vunpack.c.l.s8.bf16 %v3102
    %v3267 = vunpack.c.l.s8.bf16 %v3103
    %v3268 = vunpack.c.l.s8.bf16 %v3104
    %v3269 = vunpack.c.h.s8.bf16 %v3101
    %v3270 = vunpack.c.h.s8.bf16 %v3102
    %v3271 = vunpack.c.h.s8.bf16 %v3103
    %v3272 = vunpack.c.h.s8.bf16 %v3104
    %v3273 = vunpack.c.l.s8.bf16 %v3105
    %v3274 = vunpack.c.l.s8.bf16 %v3106
    %v3275 = vunpack.c.l.s8.bf16 %v3107
    %v3276 = vunpack.c.l.s8.bf16 %v3108
    %v3277 = vunpack.c.h.s8.bf16 %v3105
    %v3278 = vunpack.c.h.s8.bf16 %v3106
    %v3279 = vunpack.c.h.s8.bf16 %v3107
    %v3280 = vunpack.c.h.s8.bf16 %v3108
    %v3281 = vunpack.c.l.s8.bf16 %v3109
    %v3282 = vunpack.c.l.s8.bf16 %v3110
    %v3283 = vunpack.c.l.s8.bf16 %v3111
    %v3284 = vunpack.c.l.s8.bf16 %v3112
    %v3285 = vunpack.c.h.s8.bf16 %v3109
    %v3286 = vunpack.c.h.s8.bf16 %v3110
    %v3287 = vunpack.c.h.s8.bf16 %v3111
    %v3288 = vunpack.c.h.s8.bf16 %v3112
    %v3289 = vunpack.c.l.s8.bf16 %v3113
    %v3290 = vunpack.c.l.s8.bf16 %v3114
    %v3291 = vunpack.c.l.s8.bf16 %v3115
    %v3292 = vunpack.c.l.s8.bf16 %v3116
    %v3293 = vunpack.c.h.s8.bf16 %v3113
    %v3294 = vunpack.c.h.s8.bf16 %v3114
    %v3295 = vunpack.c.h.s8.bf16 %v3115
    %v3296 = vunpack.c.h.s8.bf16 %v3116
    %v3297 = vunpack.c.l.s8.bf16 %v3117
    %v3298 = vunpack.c.l.s8.bf16 %v3118
    %v3299 = vunpack.c.l.s8.bf16 %v3119
    %v3300 = vunpack.c.l.s8.bf16 %v3120
    %v3301 = vunpack.c.h.s8.bf16 %v3117
    %v3302 = vunpack.c.h.s8.bf16 %v3118
    %v3303 = vunpack.c.h.s8.bf16 %v3119
    %v3304 = vunpack.c.h.s8.bf16 %v3120
    %v3305 = vunpack.c.l.s8.bf16 %v3121
    %v3306 = vunpack.c.l.s8.bf16 %v3122
    %v3307 = vunpack.c.l.s8.bf16 %v3123
    %v3308 = vunpack.c.l.s8.bf16 %v3124
    %v3309 = vunpack.c.h.s8.bf16 %v3121
    %v3310 = vunpack.c.h.s8.bf16 %v3122
    %v3311 = vunpack.c.h.s8.bf16 %v3123
    %v3312 = vunpack.c.h.s8.bf16 %v3124
    %v3313 = vunpack.c.l.s8.bf16 %v3125
    %v3314 = vunpack.c.l.s8.bf16 %v3126
    %v3315 = vunpack.c.l.s8.bf16 %v3127
    %v3316 = vunpack.c.l.s8.bf16 %v3128
    %v3317 = vunpack.c.h.s8.bf16 %v3125
    %v3318 = vunpack.c.h.s8.bf16 %v3126
    %v3319 = vunpack.c.h.s8.bf16 %v3127
    %v3320 = vunpack.c.h.s8.bf16 %v3128
    %v3321 = vunpack.c.l.s8.bf16 %v3129
    %v3322 = vunpack.c.l.s8.bf16 %v3130
    %v3323 = vunpack.c.l.s8.bf16 %v3131
    %v3324 = vunpack.c.l.s8.bf16 %v3132
    %v3325 = vunpack.c.h.s8.bf16 %v3129
    %v3326 = vunpack.c.h.s8.bf16 %v3130
    %v3327 = vunpack.c.h.s8.bf16 %v3131
    %v3328 = vunpack.c.h.s8.bf16 %v3132
    %v3329 = vunpack.c.l.s8.bf16 %v3133
    %v3330 = vunpack.c.l.s8.bf16 %v3134
    %v3331 = vunpack.c.l.s8.bf16 %v3135
    %v3332 = vunpack.c.l.s8.bf16 %v3136
    %v3333 = vunpack.c.h.s8.bf16 %v3133
    %v3334 = vunpack.c.h.s8.bf16 %v3134
    %v3335 = vunpack.c.h.s8.bf16 %v3135
    %v3336 = vunpack.c.h.s8.bf16 %v3136
    %v3337 = vunpack.c.l.s8.bf16 %v3137
    %v3338 = vunpack.c.l.s8.bf16 %v3138
    %v3339 = vunpack.c.l.s8.bf16 %v3139
    %v3340 = vunpack.c.l.s8.bf16 %v3140
    %v3341 = vunpack.c.h.s8.bf16 %v3137
    %v3342 = vunpack.c.h.s8.bf16 %v3138
    %v3343 = vunpack.c.h.s8.bf16 %v3139
    %v3344 = vunpack.c.h.s8.bf16 %v3140
    %v3345 = vunpack.c.l.s8.bf16 %v3141
    %v3346 = vunpack.c.l.s8.bf16 %v3142
    %v3347 = vunpack.c.l.s8.bf16 %v3143
    %v3348 = vunpack.c.l.s8.bf16 %v3144
    %v3349 = vunpack.c.h.s8.bf16 %v3141
    %v3350 = vunpack.c.h.s8.bf16 %v3142
    %v3351 = vunpack.c.h.s8.bf16 %v3143
    %v3352 = vunpack.c.h.s8.bf16 %v3144
    %v3353 = vunpack.c.l.s8.bf16 %v3145
    %v3354 = vunpack.c.l.s8.bf16 %v3146
    %v3355 = vunpack.c.l.s8.bf16 %v3147
    %v3356 = vunpack.c.l.s8.bf16 %v3148
    %v3357 = vunpack.c.h.s8.bf16 %v3145
    %v3358 = vunpack.c.h.s8.bf16 %v3146
    %v3359 = vunpack.c.h.s8.bf16 %v3147
    %v3360 = vunpack.c.h.s8.bf16 %v3148
    %v3361 = vunpack.c.l.s8.bf16 %v3149
    %v3362 = vunpack.c.l.s8.bf16 %v3150
    %v3363 = vunpack.c.l.s8.bf16 %v3151
    %v3364 = vunpack.c.l.s8.bf16 %v3152
    %v3365 = vunpack.c.h.s8.bf16 %v3149
    %v3366 = vunpack.c.h.s8.bf16 %v3150
    %v3367 = vunpack.c.h.s8.bf16 %v3151
    %v3368 = vunpack.c.h.s8.bf16 %v3152
    %v3369 = vunpack.c.l.s8.bf16 %v3153
    %v3370 = vunpack.c.l.s8.bf16 %v3154
    %v3371 = vunpack.c.l.s8.bf16 %v3155
    %v3372 = vunpack.c.l.s8.bf16 %v3156
    %v3373 = vunpack.c.h.s8.bf16 %v3153
    %v3374 = vunpack.c.h.s8.bf16 %v3154
    %v3375 = vunpack.c.h.s8.bf16 %v3155
    %v3376 = vunpack.c.h.s8.bf16 %v3156
    %v3377 = vunpack.c.l.s8.bf16 %v3157
    %v3378 = vunpack.c.l.s8.bf16 %v3158
    %v3379 = vunpack.c.l.s8.bf16 %v3159
    %v3380 = vunpack.c.l.s8.bf16 %v3160
    %v3381 = vunpack.c.h.s8.bf16 %v3157
    %v3382 = vunpack.c.h.s8.bf16 %v3158
    %v3383 = vunpack.c.h.s8.bf16 %v3159
    %v3384 = vunpack.c.h.s8.bf16 %v3160
    %v3385 = vunpack.c.l.s8.bf16 %v3161
    %v3386 = vunpack.c.l.s8.bf16 %v3162
    %v3387 = vunpack.c.l.s8.bf16 %v3163
    %v3388 = vunpack.c.l.s8.bf16 %v3164
    %v3389 = vunpack.c.h.s8.bf16 %v3161
    %v3390 = vunpack.c.h.s8.bf16 %v3162
    %v3391 = vunpack.c.h.s8.bf16 %v3163
    %v3392 = vunpack.c.h.s8.bf16 %v3164
    %v3393 = vunpack.c.l.s8.bf16 %v3165
    %v3394 = vunpack.c.l.s8.bf16 %v3166
    %v3395 = vunpack.c.l.s8.bf16 %v3167
    %v3396 = vunpack.c.l.s8.bf16 %v3168
    %v3397 = vunpack.c.h.s8.bf16 %v3165
    %v3398 = vunpack.c.h.s8.bf16 %v3166
    %v3399 = vunpack.c.h.s8.bf16 %v3167
    %v3400 = vunpack.c.h.s8.bf16 %v3168
    %v3401 = vunpack.c.l.s8.bf16 %v3169
    %v3402 = vunpack.c.l.s8.bf16 %v3170
    %v3403 = vunpack.c.l.s8.bf16 %v3171
    %v3404 = vunpack.c.l.s8.bf16 %v3172
    %v3405 = vunpack.c.h.s8.bf16 %v3169
    %v3406 = vunpack.c.h.s8.bf16 %v3170
    %v3407 = vunpack.c.h.s8.bf16 %v3171
    %v3408 = vunpack.c.h.s8.bf16 %v3172
    %v3409 = vunpack.c.l.s8.bf16 %v3173
    %v3410 = vunpack.c.l.s8.bf16 %v3174
    %v3411 = vunpack.c.l.s8.bf16 %v3175
    %v3412 = vunpack.c.l.s8.bf16 %v3176
    %v3413 = vunpack.c.h.s8.bf16 %v3173
    %v3414 = vunpack.c.h.s8.bf16 %v3174
    %v3415 = vunpack.c.h.s8.bf16 %v3175
    %v3416 = vunpack.c.h.s8.bf16 %v3176
    %v3417 = vunpack.c.l.s8.bf16 %v3177
    %v3418 = vunpack.c.l.s8.bf16 %v3178
    %v3419 = vunpack.c.l.s8.bf16 %v3179
    %v3420 = vunpack.c.l.s8.bf16 %v3180
    %v3421 = vunpack.c.h.s8.bf16 %v3177
    %v3422 = vunpack.c.h.s8.bf16 %v3178
    %v3423 = vunpack.c.h.s8.bf16 %v3179
    %v3424 = vunpack.c.h.s8.bf16 %v3180
    %v3425 = vunpack.c.l.s8.bf16 %v3181
    %v3426 = vunpack.c.l.s8.bf16 %v3182
    %v3427 = vunpack.c.l.s8.bf16 %v3183
    %v3428 = vunpack.c.l.s8.bf16 %v3184
    %v3429 = vunpack.c.h.s8.bf16 %v3181
    %v3430 = vunpack.c.h.s8.bf16 %v3182
    %v3431 = vunpack.c.h.s8.bf16 %v3183
    %v3432 = vunpack.c.h.s8.bf16 %v3184
    %v3433 = vunpack.c.l.s8.bf16 %v3185
    %v3434 = vunpack.c.l.s8.bf16 %v3186
    %v3435 = vunpack.c.l.s8.bf16 %v3187
    %v3436 = vunpack.c.l.s8.bf16 %v3188
    %v3437 = vunpack.c.h.s8.bf16 %v3185
    %v3438 = vunpack.c.h.s8.bf16 %v3186
    %v3439 = vunpack.c.h.s8.bf16 %v3187
    %v3440 = vunpack.c.h.s8.bf16 %v3188
    %v3441 = vunpack.c.l.s8.bf16 %v3189
    %v3442 = vunpack.c.l.s8.bf16 %v3190
    %v3443 = vunpack.c.l.s8.bf16 %v3191
    %v3444 = vunpack.c.l.s8.bf16 %v3192
    %v3445 = vunpack.c.h.s8.bf16 %v3189
    %v3446 = vunpack.c.h.s8.bf16 %v3190
    %v3447 = vunpack.c.h.s8.bf16 %v3191
    %v3448 = vunpack.c.h.s8.bf16 %v3192
    %3449 = vmatprep.subr.bf16.mxu0 %v3194
    %3450 = vmatpush1.bf16.msra.mxu0 %v3193
    %3451 = vmatprep.subr.bf16.mxu0 %v3198
    %3452 = vmatpush1.bf16.msra.mxu0 %v3197
    %3453 = vmatprep.subr.bf16.mxu0 %v3202
    %3454 = vmatpush1.bf16.msra.mxu0 %v3201
    %3455 = vmatprep.subr.bf16.mxu0 %v3206
    %3456 = vmatpush1.bf16.msra.mxu0 %v3205
    %3457 = vmatprep.subr.bf16.mxu0 %v3210
    %3458 = vmatpush1.bf16.msra.mxu0 %v3209
    %3459 = vmatprep.subr.bf16.mxu0 %v3214
    %3460 = vmatpush1.bf16.msra.mxu0 %v3213
    %3461 = vmatprep.subr.bf16.mxu0 %v3218
    %3462 = vmatpush1.bf16.msra.mxu0 %v3217
    %3463 = vmatprep.subr.bf16.mxu0 %v3222
    %3464 = vmatpush1.bf16.msra.mxu0 %v3221
    %3465 = vmatprep.subr.bf16.mxu0 %v3226
    %3466 = vmatpush1.bf16.msra.mxu0 %v3225
    %3467 = vmatprep.subr.bf16.mxu0 %v3230
    %3468 = vmatpush1.bf16.msra.mxu0 %v3229
    %3469 = vmatprep.subr.bf16.mxu0 %v3234
    %3470 = vmatpush1.bf16.msra.mxu0 %v3233
    %3471 = vmatprep.subr.bf16.mxu0 %v3238
    %3472 = vmatpush1.bf16.msra.mxu0 %v3237
    %3473 = vmatprep.subr.bf16.mxu0 %v3242
    %3474 = vmatpush1.bf16.msra.mxu0 %v3241
    %3475 = vmatprep.subr.bf16.mxu0 %v3246
    %3476 = vmatpush1.bf16.msra.mxu0 %v3245
    %3477 = vmatprep.subr.bf16.mxu0 %v3250
    %3478 = vmatpush1.bf16.msra.mxu0 %v3249
    %3479 = vmatprep.subr.bf16.mxu0 %v3254
    %3480 = vmatpush1.bf16.msra.mxu0 %v3253
    %3481 = vmatprep.mubr.bf16.mxu0 %v3058
    %3482 = vmatmul.mubr.bf16.gmra.mrb[0].mxu0 %v3057
    %v3483 = vpop.f32.mrb[0].mxu0
    %v3484 = vadd.f32 0.0, %v3483
    %v3485 = vpop.f32.mrb[0].mxu0
    %v3486 = vadd.f32 0.0, %v3485
    %v3487 = vpop.f32.mrb[0].mxu0
    %v3488 = vpop.f32.mrb[0].mxu0
    %3489 = vdwg.mxu0
    %3490 = vmatprep.subr.bf16.mxu0 %v3258
    %3491 = vmatpush1.bf16.msra.mxu0 %v3257
    %3492 = vmatprep.subr.bf16.mxu0 %v3262
    %3493 = vmatpush1.bf16.msra.mxu0 %v3261
    %3494 = vmatprep.subr.bf16.mxu0 %v3266
    %3495 = vmatpush1.bf16.msra.mxu0 %v3265
    %3496 = vmatprep.subr.bf16.mxu0 %v3270
    %3497 = vmatpush1.bf16.msra.mxu0 %v3269
    %3498 = vmatprep.subr.bf16.mxu0 %v3274
    %3499 = vmatpush1.bf16.msra.mxu0 %v3273
    %3500 = vmatprep.subr.bf16.mxu0 %v3278
    %3501 = vmatpush1.bf16.msra.mxu0 %v3277
    %3502 = vmatprep.subr.bf16.mxu0 %v3282
    %3503 = vmatpush1.bf16.msra.mxu0 %v3281
    %3504 = vmatprep.subr.bf16.mxu0 %v3286
    %3505 = vmatpush1.bf16.msra.mxu0 %v3285
    %3506 = vmatprep.subr.bf16.mxu0 %v3290
    %3507 = vmatpush1.bf16.msra.mxu0 %v3289
    %3508 = vmatprep.subr.bf16.mxu0 %v3294
    %3509 = vmatpush1.bf16.msra.mxu0 %v3293
    %3510 = vmatprep.subr.bf16.mxu0 %v3298
    %3511 = vmatpush1.bf16.msra.mxu0 %v3297
    %3512 = vmatprep.subr.bf16.mxu0 %v3302
    %3513 = vmatpush1.bf16.msra.mxu0 %v3301
    %3514 = vmatprep.subr.bf16.mxu0 %v3306
    %3515 = vmatpush1.bf16.msra.mxu0 %v3305
    %3516 = vmatprep.subr.bf16.mxu0 %v3310
    %3517 = vmatpush1.bf16.msra.mxu0 %v3309
    %3518 = vmatprep.subr.bf16.mxu0 %v3314
    %3519 = vmatpush1.bf16.msra.mxu0 %v3313
    %3520 = vmatprep.subr.bf16.mxu0 %v3318
    %3521 = vmatpush1.bf16.msra.mxu0 %v3317
    %3522 = vmatprep.mubr.bf16.mxu0 %v3060
    %3523 = vmatmul.mubr.bf16.gmra.mrb[0].mxu0 %v3059
    %v3524 = vpop.f32.mrb[0].mxu0
    %v3525 = vadd.f32 %v3484, %v3524
    %v3526 = vpop.f32.mrb[0].mxu0
    %v3527 = vadd.f32 %v3486, %v3526
    %v3528 = vpop.f32.mrb[0].mxu0
    %v3529 = vpop.f32.mrb[0].mxu0
    %3530 = vdwg.mxu0
    %3531 = vmatprep.subr.bf16.mxu0 %v3322
    %3532 = vmatpush1.bf16.msra.mxu0 %v3321
    %3533 = vmatprep.subr.bf16.mxu0 %v3326
    %3534 = vmatpush1.bf16.msra.mxu0 %v3325
    %3535 = vmatprep.subr.bf16.mxu0 %v3330
    %3536 = vmatpush1.bf16.msra.mxu0 %v3329
    %3537 = vmatprep.subr.bf16.mxu0 %v3334
    %3538 = vmatpush1.bf16.msra.mxu0 %v3333
    %3539 = vmatprep.subr.bf16.mxu0 %v3338
    %3540 = vmatpush1.bf16.msra.mxu0 %v3337
    %3541 = vmatprep.subr.bf16.mxu0 %v3342
    %3542 = vmatpush1.bf16.msra.mxu0 %v3341
    %3543 = vmatprep.subr.bf16.mxu0 %v3346
    %3544 = vmatpush1.bf16.msra.mxu0 %v3345
    %3545 = vmatprep.subr.bf16.mxu0 %v3350
    %3546 = vmatpush1.bf16.msra.mxu0 %v3349
    %3547 = vmatprep.subr.bf16.mxu0 %v3354
    %3548 = vmatpush1.bf16.msra.mxu0 %v3353
    %3549 = vmatprep.subr.bf16.mxu0 %v3358
    %3550 = vmatpush1.bf16.msra.mxu0 %v3357
    %3551 = vmatprep.subr.bf16.mxu0 %v3362
    %3552 = vmatpush1.bf16.msra.mxu0 %v3361
    %3553 = vmatprep.subr.bf16.mxu0 %v3366
    %3554 = vmatpush1.bf16.msra.mxu0 %v3365
    %3555 = vmatprep.subr.bf16.mxu0 %v3370
    %3556 = vmatpush1.bf16.msra.mxu0 %v3369
    %3557 = vmatprep.subr.bf16.mxu0 %v3374
    %3558 = vmatpush1.bf16.msra.mxu0 %v3373
    %3559 = vmatprep.subr.bf16.mxu0 %v3378
    %3560 = vmatpush1.bf16.msra.mxu0 %v3377
    %3561 = vmatprep.subr.bf16.mxu0 %v3382
    %3562 = vmatpush1.bf16.msra.mxu0 %v3381
    %3563 = vmatprep.mubr.bf16.mxu0 %v3062
    %3564 = vmatmul.mubr.bf16.gmra.mrb[0].mxu0 %v3061
    %v3565 = vpop.f32.mrb[0].mxu0
    %v3566 = vadd.f32 %v3525, %v3565
    %v3567 = vpop.f32.mrb[0].mxu0
    %v3568 = vadd.f32 %v3527, %v3567
    %v3569 = vpop.f32.mrb[0].mxu0
    %v3570 = vpop.f32.mrb[0].mxu0
    %3571 = vdwg.mxu0
    %3572 = vmatprep.subr.bf16.mxu0 %v3386
    %3573 = vmatpush1.bf16.msra.mxu0 %v3385
    %3574 = vmatprep.subr.bf16.mxu0 %v3390
    %3575 = vmatpush1.bf16.msra.mxu0 %v3389
    %3576 = vmatprep.subr.bf16.mxu0 %v3394
    %3577 = vmatpush1.bf16.msra.mxu0 %v3393
    %3578 = vmatprep.subr.bf16.mxu0 %v3398
    %3579 = vmatpush1.bf16.msra.mxu0 %v3397
    %3580 = vmatprep.subr.bf16.mxu0 %v3402
    %3581 = vmatpush1.bf16.msra.mxu0 %v3401
    %3582 = vmatprep.subr.bf16.mxu0 %v3406
    %3583 = vmatpush1.bf16.msra.mxu0 %v3405
    %3584 = vmatprep.subr.bf16.mxu0 %v3410
    %3585 = vmatpush1.bf16.msra.mxu0 %v3409
    %3586 = vmatprep.subr.bf16.mxu0 %v3414
    %3587 = vmatpush1.bf16.msra.mxu0 %v3413
    %3588 = vmatprep.subr.bf16.mxu0 %v3418
    %3589 = vmatpush1.bf16.msra.mxu0 %v3417
    %3590 = vmatprep.subr.bf16.mxu0 %v3422
    %3591 = vmatpush1.bf16.msra.mxu0 %v3421
    %3592 = vmatprep.subr.bf16.mxu0 %v3426
    %3593 = vmatpush1.bf16.msra.mxu0 %v3425
    %3594 = vmatprep.subr.bf16.mxu0 %v3430
    %3595 = vmatpush1.bf16.msra.mxu0 %v3429
    %3596 = vmatprep.subr.bf16.mxu0 %v3434
    %3597 = vmatpush1.bf16.msra.mxu0 %v3433
    %3598 = vmatprep.subr.bf16.mxu0 %v3438
    %3599 = vmatpush1.bf16.msra.mxu0 %v3437
    %3600 = vmatprep.subr.bf16.mxu0 %v3442
    %3601 = vmatpush1.bf16.msra.mxu0 %v3441
    %3602 = vmatprep.subr.bf16.mxu0 %v3446
    %3603 = vmatpush1.bf16.msra.mxu0 %v3445
    %3604 = vmatprep.mubr.bf16.mxu0 %v3064
    %3605 = vmatmul.mubr.bf16.gmra.mrb[0].mxu0 %v3063
    %v3606 = vpop.f32.mrb[0].mxu0
    %v3607 = vadd.f32 %v3566, %v3606
    %v3608 = vpop.f32.mrb[0].mxu0
    %v3609 = vadd.f32 %v3568, %v3608
    %v3610 = vpop.f32.mrb[0].mxu0
    %v3611 = vpop.f32.mrb[0].mxu0
    %3612 = vdwg.mxu0
    %3613 = vmatprep.subr.bf16.mxu0 %v3196
    %3614 = vmatpush1.bf16.msra.mxu0 %v3195
    %3615 = vmatprep.subr.bf16.mxu0 %v3200
    %3616 = vmatpush1.bf16.msra.mxu0 %v3199
    %3617 = vmatprep.subr.bf16.mxu0 %v3204
    %3618 = vmatpush1.bf16.msra.mxu0 %v3203
    %3619 = vmatprep.subr.bf16.mxu0 %v3208
    %3620 = vmatpush1.bf16.msra.mxu0 %v3207
    %3621 = vmatprep.subr.bf16.mxu0 %v3212
    %3622 = vmatpush1.bf16.msra.mxu0 %v3211
    %3623 = vmatprep.subr.bf16.mxu0 %v3216
    %3624 = vmatpush1.bf16.msra.mxu0 %v3215
    %3625 = vmatprep.subr.bf16.mxu0 %v3220
    %3626 = vmatpush1.bf16.msra.mxu0 %v3219
    %3627 = vmatprep.subr.bf16.mxu0 %v3224
    %3628 = vmatpush1.bf16.msra.mxu0 %v3223
    %3629 = vmatprep.subr.bf16.mxu0 %v3228
    %3630 = vmatpush1.bf16.msra.mxu0 %v3227
    %3631 = vmatprep.subr.bf16.mxu0 %v3232
    %3632 = vmatpush1.bf16.msra.mxu0 %v3231
    %3633 = vmatprep.subr.bf16.mxu0 %v3236
    %3634 = vmatpush1.bf16.msra.mxu0 %v3235
    %3635 = vmatprep.subr.bf16.mxu0 %v3240
    %3636 = vmatpush1.bf16.msra.mxu0 %v3239
    %3637 = vmatprep.subr.bf16.mxu0 %v3244
    %3638 = vmatpush1.bf16.msra.mxu0 %v3243
    %3639 = vmatprep.subr.bf16.mxu0 %v3248
    %3640 = vmatpush1.bf16.msra.mxu0 %v3247
    %3641 = vmatprep.subr.bf16.mxu0 %v3252
    %3642 = vmatpush1.bf16.msra.mxu0 %v3251
    %3643 = vmatprep.subr.bf16.mxu0 %v3256
    %3644 = vmatpush1.bf16.msra.mxu0 %v3255
    %3645 = vmatprep.mubr.bf16.mxu0 %v3058
    %3646 = vmatmul.mubr.bf16.gmra.mrb[0].mxu0 %v3057
    %v3647 = vpop.f32.mrb[0].mxu0
    %v3648 = vadd.f32 0.0, %v3647
    %v3649 = vpop.f32.mrb[0].mxu0
    %v3650 = vadd.f32 0.0, %v3649
    %v3651 = vpop.f32.mrb[0].mxu0
    %v3652 = vpop.f32.mrb[0].mxu0
    %3653 = vdwg.mxu0
    %3654 = vmatprep.subr.bf16.mxu0 %v3260
    %3655 = vmatpush1.bf16.msra.mxu0 %v3259
    %3656 = vmatprep.subr.bf16.mxu0 %v3264
    %3657 = vmatpush1.bf16.msra.mxu0 %v3263
    %3658 = vmatprep.subr.bf16.mxu0 %v3268
    %3659 = vmatpush1.bf16.msra.mxu0 %v3267
    %3660 = vmatprep.subr.bf16.mxu0 %v3272
    %3661 = vmatpush1.bf16.msra.mxu0 %v3271
    %3662 = vmatprep.subr.bf16.mxu0 %v3276
    %3663 = vmatpush1.bf16.msra.mxu0 %v3275
    %3664 = vmatprep.subr.bf16.mxu0 %v3280
    %3665 = vmatpush1.bf16.msra.mxu0 %v3279
    %3666 = vmatprep.subr.bf16.mxu0 %v3284
    %3667 = vmatpush1.bf16.msra.mxu0 %v3283
    %3668 = vmatprep.subr.bf16.mxu0 %v3288
    %3669 = vmatpush1.bf16.msra.mxu0 %v3287
    %3670 = vmatprep.subr.bf16.mxu0 %v3292
    %3671 = vmatpush1.bf16.msra.mxu0 %v3291
    %3672 = vmatprep.subr.bf16.mxu0 %v3296
    %3673 = vmatpush1.bf16.msra.mxu0 %v3295
    %3674 = vmatprep.subr.bf16.mxu0 %v3300
    %3675 = vmatpush1.bf16.msra.mxu0 %v3299
    %3676 = vmatprep.subr.bf16.mxu0 %v3304
    %3677 = vmatpush1.bf16.msra.mxu0 %v3303
    %3678 = vmatprep.subr.bf16.mxu0 %v3308
    %3679 = vmatpush1.bf16.msra.mxu0 %v3307
    %3680 = vmatprep.subr.bf16.mxu0 %v3312
    %3681 = vmatpush1.bf16.msra.mxu0 %v3311
    %3682 = vmatprep.subr.bf16.mxu0 %v3316
    %3683 = vmatpush1.bf16.msra.mxu0 %v3315
    %3684 = vmatprep.subr.bf16.mxu0 %v3320
    %3685 = vmatpush1.bf16.msra.mxu0 %v3319
    %3686 = vmatprep.mubr.bf16.mxu0 %v3060
    %3687 = vmatmul.mubr.bf16.gmra.mrb[0].mxu0 %v3059
    %v3688 = vpop.f32.mrb[0].mxu0
    %v3689 = vadd.f32 %v3648, %v3688
    %v3690 = vpop.f32.mrb[0].mxu0
    %v3691 = vadd.f32 %v3650, %v3690
    %v3692 = vpop.f32.mrb[0].mxu0
    %v3693 = vpop.f32.mrb[0].mxu0
    %3694 = vdwg.mxu0
    %3695 = vmatprep.subr.bf16.mxu0 %v3324
    %3696 = vmatpush1.bf16.msra.mxu0 %v3323
    %3697 = vmatprep.subr.bf16.mxu0 %v3328
    %3698 = vmatpush1.bf16.msra.mxu0 %v3327
    %3699 = vmatprep.subr.bf16.mxu0 %v3332
    %3700 = vmatpush1.bf16.msra.mxu0 %v3331
    %3701 = vmatprep.subr.bf16.mxu0 %v3336
    %3702 = vmatpush1.bf16.msra.mxu0 %v3335
    %3703 = vmatprep.subr.bf16.mxu0 %v3340
    %3704 = vmatpush1.bf16.msra.mxu0 %v3339
    %3705 = vmatprep.subr.bf16.mxu0 %v3344
    %3706 = vmatpush1.bf16.msra.mxu0 %v3343
    %3707 = vmatprep.subr.bf16.mxu0 %v3348
    %3708 = vmatpush1.bf16.msra.mxu0 %v3347
    %3709 = vmatprep.subr.bf16.mxu0 %v3352
    %3710 = vmatpush1.bf16.msra.mxu0 %v3351
    %3711 = vmatprep.subr.bf16.mxu0 %v3356
    %3712 = vmatpush1.bf16.msra.mxu0 %v3355
    %3713 = vmatprep.subr.bf16.mxu0 %v3360
    %3714 = vmatpush1.bf16.msra.mxu0 %v3359
    %3715 = vmatprep.subr.bf16.mxu0 %v3364
    %3716 = vmatpush1.bf16.msra.mxu0 %v3363
    %3717 = vmatprep.subr.bf16.mxu0 %v3368
    %3718 = vmatpush1.bf16.msra.mxu0 %v3367
    %3719 = vmatprep.subr.bf16.mxu0 %v3372
    %3720 = vmatpush1.bf16.msra.mxu0 %v3371
    %3721 = vmatprep.subr.bf16.mxu0 %v3376
    %3722 = vmatpush1.bf16.msra.mxu0 %v3375
    %3723 = vmatprep.subr.bf16.mxu0 %v3380
    %3724 = vmatpush1.bf16.msra.mxu0 %v3379
    %3725 = vmatprep.subr.bf16.mxu0 %v3384
    %3726 = vmatpush1.bf16.msra.mxu0 %v3383
    %3727 = vmatprep.mubr.bf16.mxu0 %v3062
    %3728 = vmatmul.mubr.bf16.gmra.mrb[0].mxu0 %v3061
    %v3729 = vpop.f32.mrb[0].mxu0
    %v3730 = vadd.f32 %v3689, %v3729
    %v3731 = vpop.f32.mrb[0].mxu0
    %v3732 = vadd.f32 %v3691, %v3731
    %v3733 = vpop.f32.mrb[0].mxu0
    %v3734 = vpop.f32.mrb[0].mxu0
    %3735 = vdwg.mxu0
    %3736 = vmatprep.subr.bf16.mxu0 %v3388
    %3737 = vmatpush1.bf16.msra.mxu0 %v3387
    %3738 = vmatprep.subr.bf16.mxu0 %v3392
    %3739 = vmatpush1.bf16.msra.mxu0 %v3391
    %3740 = vmatprep.subr.bf16.mxu0 %v3396
    %3741 = vmatpush1.bf16.msra.mxu0 %v3395
    %3742 = vmatprep.subr.bf16.mxu0 %v3400
    %3743 = vmatpush1.bf16.msra.mxu0 %v3399
    %3744 = vmatprep.subr.bf16.mxu0 %v3404
    %3745 = vmatpush1.bf16.msra.mxu0 %v3403
    %3746 = vmatprep.subr.bf16.mxu0 %v3408
    %3747 = vmatpush1.bf16.msra.mxu0 %v3407
    %3748 = vmatprep.subr.bf16.mxu0 %v3412
    %3749 = vmatpush1.bf16.msra.mxu0 %v3411
    %3750 = vmatprep.subr.bf16.mxu0 %v3416
    %3751 = vmatpush1.bf16.msra.mxu0 %v3415
    %3752 = vmatprep.subr.bf16.mxu0 %v3420
    %3753 = vmatpush1.bf16.msra.mxu0 %v3419
    %3754 = vmatprep.subr.bf16.mxu0 %v3424
    %3755 = vmatpush1.bf16.msra.mxu0 %v3423
    %3756 = vmatprep.subr.bf16.mxu0 %v3428
    %3757 = vmatpush1.bf16.msra.mxu0 %v3427
    %3758 = vmatprep.subr.bf16.mxu0 %v3432
    %3759 = vmatpush1.bf16.msra.mxu0 %v3431
    %3760 = vmatprep.subr.bf16.mxu0 %v3436
    %3761 = vmatpush1.bf16.msra.mxu0 %v3435
    %3762 = vmatprep.subr.bf16.mxu0 %v3440
    %3763 = vmatpush1.bf16.msra.mxu0 %v3439
    %3764 = vmatprep.subr.bf16.mxu0 %v3444
    %3765 = vmatpush1.bf16.msra.mxu0 %v3443
    %3766 = vmatprep.subr.bf16.mxu0 %v3448
    %3767 = vmatpush1.bf16.msra.mxu0 %v3447
    %3768 = vmatprep.mubr.bf16.mxu0 %v3064
    %3769 = vmatmul.mubr.bf16.gmra.mrb[0].mxu0 %v3063
    %v3770 = vpop.f32.mrb[0].mxu0
    %v3771 = vadd.f32 %v3730, %v3770
    %v3772 = vpop.f32.mrb[0].mxu0
    %v3773 = vadd.f32 %v3732, %v3772
    %v3774 = vpop.f32.mrb[0].mxu0
    %v3775 = vpop.f32.mrb[0].mxu0
    %3776 = vdwg.mxu0
    %v3777 = vld [vmem:[%s5] sm:$0xf]
    %v3779 = vlaneseq
    %v3780 = vshrl.u32 %v3779, 7
    %v3781 = vsub.s32 0, %v3780
    %v3782 = vrot.slane %v3777, %v3781
    %v3783 = vlaneseq
    %v3784 = vshrl.u32 %v3783, 7
    %v3785 = vsub.s32 1, %v3784
    %v3786 = vrot.slane %v3777, %v3785
    %v3787 = vlaneseq
    %v3788 = vshrl.u32 %v3787, 7
    %v3789 = vsub.s32 2, %v3788
    %v3790 = vrot.slane %v3777, %v3789
    %v3791 = vlaneseq
    %v3792 = vshrl.u32 %v3791, 7
    %v3793 = vsub.s32 3, %v3792
    %v3794 = vrot.slane %v3777, %v3793
    %v3799 = vmul.f32 %v3607, %v3782
    %v3800 = vmul.f32 %v3609, %v3786
    %v3801 = vmul.f32 %v3771, %v3790
    %v3802 = vmul.f32 %v3773, %v3794
    %v3803 = vld [vmem:[%s6] sm:$0xf]
    %v3805 = vlaneseq
    %v3806 = vshrl.u32 %v3805, 7
    %v3807 = vsub.s32 0, %v3806
    %v3808 = vrot.slane %v3803, %v3807
    %v3809 = vlaneseq
    %v3810 = vshrl.u32 %v3809, 7
    %v3811 = vsub.s32 1, %v3810
    %v3812 = vrot.slane %v3803, %v3811
    %v3813 = vlaneseq
    %v3814 = vshrl.u32 %v3813, 7
    %v3815 = vsub.s32 2, %v3814
    %v3816 = vrot.slane %v3803, %v3815
    %v3817 = vlaneseq
    %v3818 = vshrl.u32 %v3817, 7
    %v3819 = vsub.s32 3, %v3818
    %v3820 = vrot.slane %v3803, %v3819
    %v3825 = vadd.f32 %v3799, %v3808
    %v3826 = vadd.f32 %v3800, %v3812
    %v3827 = vadd.f32 %v3801, %v3816
    %v3828 = vadd.f32 %v3802, %v3820
    %v3829 = vmax.f32 %v3825, 0.0
    %v3830 = vmax.f32 %v3826, 0.0
    %v3831 = vmax.f32 %v3827, 0.0
    %v3832 = vmax.f32 %v3828, 0.0
    %v3833 = vpack.c.bf16 %v3829, %v3829
    %v3834 = vpack.c.bf16 %v3830, %v3830
    %v3835 = vpack.c.bf16 %v3831, %v3831
    %v3836 = vpack.c.bf16 %v3832, %v3832
    %v3837 = vld [vmem:[%s7] sm:$0xff]
    %v3838 = vld [vmem:[%s7 + $0x8] sm:$0xff]
    %v3839 = vld [vmem:[%s7 + $0x10] sm:$0xff]
    %v3840 = vld [vmem:[%s7 + $0x18] sm:$0xff]
    %v3841 = vld [vmem:[%s7 + $0x20] sm:$0xff]
    %v3842 = vld [vmem:[%s7 + $0x28] sm:$0xff]
    %v3843 = vld [vmem:[%s7 + $0x30] sm:$0xff]
    %v3844 = vld [vmem:[%s7 + $0x38] sm:$0xff]
    %v3845 = vld [vmem:[%s7 + $0x40] sm:$0xff]
    %v3846 = vld [vmem:[%s7 + $0x48] sm:$0xff]
    %v3847 = vld [vmem:[%s7 + $0x50] sm:$0xff]
    %v3848 = vld [vmem:[%s7 + $0x58] sm:$0xff]
    %v3849 = vld [vmem:[%s7 + $0x60] sm:$0xff]
    %v3850 = vld [vmem:[%s7 + $0x68] sm:$0xff]
    %v3851 = vld [vmem:[%s7 + $0x70] sm:$0xff]
    %v3852 = vld [vmem:[%s7 + $0x78] sm:$0xff]
    %v3853 = vunpack.c.l.s8.bf16 %v3837
    %v3854 = vunpack.c.h.s8.bf16 %v3837
    %v3855 = vunpack.c.l.s8.bf16 %v3838
    %v3856 = vunpack.c.h.s8.bf16 %v3838
    %v3857 = vunpack.c.l.s8.bf16 %v3839
    %v3858 = vunpack.c.h.s8.bf16 %v3839
    %v3859 = vunpack.c.l.s8.bf16 %v3840
    %v3860 = vunpack.c.h.s8.bf16 %v3840
    %v3861 = vunpack.c.l.s8.bf16 %v3841
    %v3862 = vunpack.c.h.s8.bf16 %v3841
    %v3863 = vunpack.c.l.s8.bf16 %v3842
    %v3864 = vunpack.c.h.s8.bf16 %v3842
    %v3865 = vunpack.c.l.s8.bf16 %v3843
    %v3866 = vunpack.c.h.s8.bf16 %v3843
    %v3867 = vunpack.c.l.s8.bf16 %v3844
    %v3868 = vunpack.c.h.s8.bf16 %v3844
    %v3869 = vunpack.c.l.s8.bf16 %v3845
    %v3870 = vunpack.c.h.s8.bf16 %v3845
    %v3871 = vunpack.c.l.s8.bf16 %v3846
    %v3872 = vunpack.c.h.s8.bf16 %v3846
    %v3873 = vunpack.c.l.s8.bf16 %v3847
    %v3874 = vunpack.c.h.s8.bf16 %v3847
    %v3875 = vunpack.c.l.s8.bf16 %v3848
    %v3876 = vunpack.c.h.s8.bf16 %v3848
    %v3877 = vunpack.c.l.s8.bf16 %v3849
    %v3878 = vunpack.c.h.s8.bf16 %v3849
    %v3879 = vunpack.c.l.s8.bf16 %v3850
    %v3880 = vunpack.c.h.s8.bf16 %v3850
    %v3881 = vunpack.c.l.s8.bf16 %v3851
    %v3882 = vunpack.c.h.s8.bf16 %v3851
    %v3883 = vunpack.c.l.s8.bf16 %v3852
    %v3884 = vunpack.c.h.s8.bf16 %v3852
    %3885 = vmatprep.subr.bf16.mxu0 0
    %3886 = vmatpush1.bf16.msra.mxu0 %v3853
    %3887 = vmatprep.subr.bf16.mxu0 0
    %3888 = vmatpush1.bf16.msra.mxu0 %v3854
    %3889 = vmatprep.subr.bf16.mxu0 0
    %3890 = vmatpush1.bf16.msra.mxu0 %v3855
    %3891 = vmatprep.subr.bf16.mxu0 0
    %3892 = vmatpush1.bf16.msra.mxu0 %v3856
    %3893 = vmatprep.subr.bf16.mxu0 0
    %3894 = vmatpush1.bf16.msra.mxu0 %v3857
    %3895 = vmatprep.subr.bf16.mxu0 0
    %3896 = vmatpush1.bf16.msra.mxu0 %v3858
    %3897 = vmatprep.subr.bf16.mxu0 0
    %3898 = vmatpush1.bf16.msra.mxu0 %v3859
    %3899 = vmatprep.subr.bf16.mxu0 0
    %3900 = vmatpush1.bf16.msra.mxu0 %v3860
    %3901 = vmatprep.subr.bf16.mxu0 0
    %3902 = vmatpush1.bf16.msra.mxu0 %v3861
    %3903 = vmatprep.subr.bf16.mxu0 0
    %3904 = vmatpush1.bf16.msra.mxu0 %v3862
    %3905 = vmatprep.subr.bf16.mxu0 0
    %3906 = vmatpush1.bf16.msra.mxu0 %v3863
    %3907 = vmatprep.subr.bf16.mxu0 0
    %3908 = vmatpush1.bf16.msra.mxu0 %v3864
    %3909 = vmatprep.subr.bf16.mxu0 0
    %3910 = vmatpush1.bf16.msra.mxu0 %v3865
    %3911 = vmatprep.subr.bf16.mxu0 0
    %3912 = vmatpush1.bf16.msra.mxu0 %v3866
    %3913 = vmatprep.subr.bf16.mxu0 0
    %3914 = vmatpush1.bf16.msra.mxu0 %v3867
    %3915 = vmatprep.subr.bf16.mxu0 0
    %3916 = vmatpush1.bf16.msra.mxu0 %v3868
    %3917 = vmatprep.mubr.bf16.mxu0 %v3834
    %3918 = vmatmul.mubr.bf16.gmra.mrb[0].mxu0 %v3833
    %v3919 = vpop.f32.mrb[0].mxu0
    %v3920 = vadd.f32 0.0, %v3919
    %v3921 = vpop.f32.mrb[0].mxu0
    %v3922 = vpop.f32.mrb[0].mxu0
    %v3923 = vpop.f32.mrb[0].mxu0
    %3924 = vdwg.mxu0
    %3925 = vmatprep.subr.bf16.mxu0 0
    %3926 = vmatpush1.bf16.msra.mxu0 %v3869
    %3927 = vmatprep.subr.bf16.mxu0 0
    %3928 = vmatpush1.bf16.msra.mxu0 %v3870
    %3929 = vmatprep.subr.bf16.mxu0 0
    %3930 = vmatpush1.bf16.msra.mxu0 %v3871
    %3931 = vmatprep.subr.bf16.mxu0 0
    %3932 = vmatpush1.bf16.msra.mxu0 %v3872
    %3933 = vmatprep.subr.bf16.mxu0 0
    %3934 = vmatpush1.bf16.msra.mxu0 %v3873
    %3935 = vmatprep.subr.bf16.mxu0 0
    %3936 = vmatpush1.bf16.msra.mxu0 %v3874
    %3937 = vmatprep.subr.bf16.mxu0 0
    %3938 = vmatpush1.bf16.msra.mxu0 %v3875
    %3939 = vmatprep.subr.bf16.mxu0 0
    %3940 = vmatpush1.bf16.msra.mxu0 %v3876
    %3941 = vmatprep.subr.bf16.mxu0 0
    %3942 = vmatpush1.bf16.msra.mxu0 %v3877
    %3943 = vmatprep.subr.bf16.mxu0 0
    %3944 = vmatpush1.bf16.msra.mxu0 %v3878
    %3945 = vmatprep.subr.bf16.mxu0 0
    %3946 = vmatpush1.bf16.msra.mxu0 %v3879
    %3947 = vmatprep.subr.bf16.mxu0 0
    %3948 = vmatpush1.bf16.msra.mxu0 %v3880
    %3949 = vmatprep.subr.bf16.mxu0 0
    %3950 = vmatpush1.bf16.msra.mxu0 %v3881
    %3951 = vmatprep.subr.bf16.mxu0 0
    %3952 = vmatpush1.bf16.msra.mxu0 %v3882
    %3953 = vmatprep.subr.bf16.mxu0 0
    %3954 = vmatpush1.bf16.msra.mxu0 %v3883
    %3955 = vmatprep.subr.bf16.mxu0 0
    %3956 = vmatpush1.bf16.msra.mxu0 %v3884
    %3957 = vmatprep.mubr.bf16.mxu0 %v3836
    %3958 = vmatmul.mubr.bf16.gmra.mrb[0].mxu0 %v3835
    %v3959 = vpop.f32.mrb[0].mxu0
    %v3960 = vadd.f32 %v3920, %v3959
    %v3961 = vpop.f32.mrb[0].mxu0
    %v3962 = vpop.f32.mrb[0].mxu0
    %v3963 = vpop.f32.mrb[0].mxu0
    %3964 = vdwg.mxu0
    %v3965 = vld [vmem:[%s8] sm:$0x1]
    %v3967 = vlaneseq
    %v3968 = vshrl.u32 %v3967, 7
    %v3969 = vsub.s32 0, %v3968
    %v3970 = vrot.slane %v3965, %v3969
    %v3972 = vmul.f32 %v3960, %v3970
    %v3973 = vld [vmem:[%s9] sm:$0x1]
    %v3975 = vlaneseq
    %v3976 = vshrl.u32 %v3975, 7
    %v3977 = vsub.s32 0, %v3976
    %v3978 = vrot.slane %v3973, %v3977
    %v3980 = vadd.f32 %v3972, %v3978
    %3981 = vst [vmem:[#allocation2] sm:$0xff] %v3980
    // Predicated region
    $region42: #{neural_net_forward.3} parent=1 // pred_check
      _
    $region43: #{neural_net_forward.3} parent=1 // pred_check_branch
      %3983 = sbr.rel (0) target = $region45
    $region44: #{neural_net_forward.3} parent=1 // pred_region
      %s3985 = ssub.s32 128, 128
      %3986 = vsyncadd [#allocation3], %s3985
      %s3988 = sshll.u32 [#allocation2], 4
      %s3989 = int_to_ptr.vmem [resolvable:$true] %s3988
      %3991 = dma.vmem_to_hbm [thread:$0]  %s3989, 128, %s10, [#allocation3]
    $region45: #{neural_net_forward.3} parent=1 // pred_fallthru
      _
    // Predicated region
    $region46: #{neural_net_forward.3} parent=1 // pred_check
      _
    $region47: #{neural_net_forward.3} parent=1 // pred_check_branch
      %3993 = sbr.rel (0) target = $region49
    $region48: #{neural_net_forward.3} parent=1 // pred_region
      %3994 = dma.done [#allocation3], 128
    $region49: #{neural_net_forward.3} parent=1 // pred_fallthru
      _
    %3995 = vsyncpa [#allocation3], 1

// kernel: neural_net_forward.2
$region0: #{neural_net_forward.2}
  #allocation0 [shape = 'u32[]', space=smem, size = 0x4, offset = 0x4, fixed_abs, tag = 'smem constant byte address 0x4 - core index']
  #allocation1 [shape = 'u32[144,128]{1,0:T(1,128)}', space=vmem, size = 0x12000, scoped, tag = 'internal scratch']
  %s0 = inlined_call_operand.hbm [shape: f32[8,3072], index: 0, kind: input, shape index: {}]
  %s1 = inlined_call_operand.hbm [shape: s8[2,3072,1024], index: 1, kind: input, shape index: {}]
  %s2 = inlined_call_operand.hbm [shape: f32[1,2048], index: 2, kind: input, shape index: {}]
  %s3 = inlined_call_operand.hbm [shape: f32[1,2048], index: 3, kind: input, shape index: {}]
  %s4 = inlined_call_operand.vmem [shape: bf16[8,2048], index: 4, kind: output, shape index: {}]
  %s5 = sld [smem:[#allocation0]]
  $region65: #{neural_net_forward.2} parent=0
    _
  %s7 = ssub.s32 1, %s5
  %s8 = scalar_select 0, %s7, %s5
  $region1: #{neural_net_forward.2} parent=0
    #allocation2 [shape = 'u8[98304]{0}', space=vmem, size = 0x18000, scoped, tag = 'input window, operand 0, single buffered']
    #allocation3 [shape = 's32[2]{0}', space=sflag, size = 0x8, scoped, tag = 'scoped memory for neural_net_forward.2']
    #allocation4 [shape = 'u8[6291456]{0}', space=vmem, size = 0x600000, scoped, tag = 'input window, operand 1']
    #allocation5 [shape = 's32[2]{0}', space=sflag, size = 0x8, scoped, tag = 'scoped memory for neural_net_forward.2']
    #allocation6 [shape = 'u8[8192]{0}', space=vmem, size = 0x2000, scoped, tag = 'input window, operand 2']
    #allocation7 [shape = 'u8[8192]{0}', space=vmem, size = 0x2000, scoped, tag = 'input window, operand 3']
    #allocation8 [shape = 's32[2]{0}', space=sflag, size = 0x8, scoped, tag = 'scoped memory for neural_net_forward.2']
    %9 = vsyncpa [#allocation3], 0
    %10 = vsyncpa [#allocation5], 0
    %s11 = scalar_lea.sflag [#allocation5], 1
    %12 = vsyncpa %s11, 0
    %13 = vsyncpa [#allocation8], 0
    %s14 = scalar_lea.sflag [#allocation8], 1
    %15 = vsyncpa %s14, 0
    loop: start=0, step=1, limit=4
    $region2: #{neural_net_forward.2} parent=1 // loop_pre_header
      _
    $region3: #{neural_net_forward.2} parent=1 // loop_header
      %s17 = sphi 0, %s21
      %p18 = scmp.ge.s32.totalorder %s17, 4
      %s25 = sphi 0, %s25
      %s27 = sphi 0, %s25
      %s28 = sphi 0, %s27
      %s42 = sphi 0, %s28
      %s48 = sphi 0, %s50
      %s51 = sphi 0, %s48
      %s52 = sphi 0, %s51
      %s68 = sphi 0, %s52
      %s74 = sphi 0, %s76
      %s77 = sphi 0, %s74
      %s78 = sphi 0, %s77
      %s94 = sphi 0, %s78
      %s100 = sphi 0, %s102
      %s103 = sphi 0, %s100
      %s104 = sphi 0, %s103
      %s120 = sphi 0, %s104
      %s126 = sphi 0, %s128
      %s129 = sphi 0, %s126
      %s130 = sphi 0, %s129
      %s146 = sphi 0, %s130
    $region4: #{neural_net_forward.2} parent=1 // loop_header_branch
      %20 = sbr.rel (%p18) target = $region8
    $region5: #{neural_net_forward.2} parent=1 // loop_body
      %s22 = ssub.s32 %s17, 1
      %s23 = ssub.s32 %s17, 2
      %s24 = sadd.s32 %s17, 1
      %s26 = sadd.s32 %s25, 1
      %p29 = scmp.eq.s32.totalorder %s17, 1
      %p30 = scmp.ne.s32.totalorder %s25, %s27
      %p31 = scmp.eq.s32.totalorder %s17, 0
      %p32 = por %p30, %p31
      %p33 = scmp.ne.s32.totalorder %s25, %s27
      %p34 = scmp.eq.s32.totalorder %s22, 1
      %p35 = por %p33, %p34
      %p36 = scmp.ne.s32.totalorder %s27, %s28
      %p37 = scmp.eq.s32.totalorder %s22, 0
      %p38 = por %p36, %p37
      %p39 = scmp.ne.s32.totalorder %s27, %s28
      %p40 = scmp.eq.s32.totalorder %s23, 1
      %p41 = por %p39, %p40
      %p43 = scmp.ne.s32.totalorder %s28, %s42
      %p44 = scmp.eq.s32.totalorder %s23, 0
      %p45 = por %p43, %p44
      %s46 = ssub.s32 %s17, %s24
      %p47 = scmp.eq.s32.totalorder %s46, 0
      %s49 = sadd.s32 %s48, 1
      %s50 = scalar_select %p47, %s48, %s49
      %p53 = pneg %p47
      %p54 = scmp.eq.s32.totalorder %s17, 1
      %p55 = por %p53, %p54
      %p56 = scmp.ne.s32.totalorder %s48, %s51
      %p57 = scmp.eq.s32.totalorder %s17, 0
      %p58 = por %p56, %p57
      %p59 = scmp.ne.s32.totalorder %s48, %s51
      %p60 = scmp.eq.s32.totalorder %s22, 1
      %p61 = por %p59, %p60
      %p62 = scmp.ne.s32.totalorder %s51, %s52
      %p63 = scmp.eq.s32.totalorder %s22, 0
      %p64 = por %p62, %p63
      %p65 = scmp.ne.s32.totalorder %s51, %s52
      %p66 = scmp.eq.s32.totalorder %s23, 1
      %p67 = por %p65, %p66
      %p69 = scmp.ne.s32.totalorder %s52, %s68
      %p70 = scmp.eq.s32.totalorder %s23, 0
      %p71 = por %p69, %p70
      %s72 = ssub.s32 %s17, %s24
      %p73 = scmp.eq.s32.totalorder %s72, 0
      %s75 = sadd.s32 %s74, 1
      %s76 = scalar_select %p73, %s74, %s75
      %p79 = pneg %p73
      %p80 = scmp.eq.s32.totalorder %s17, 1
      %p81 = por %p79, %p80
      %p82 = scmp.ne.s32.totalorder %s74, %s77
      %p83 = scmp.eq.s32.totalorder %s17, 0
      %p84 = por %p82, %p83
      %p85 = scmp.ne.s32.totalorder %s74, %s77
      %p86 = scmp.eq.s32.totalorder %s22, 1
      %p87 = por %p85, %p86
      %p88 = scmp.ne.s32.totalorder %s77, %s78
      %p89 = scmp.eq.s32.totalorder %s22, 0
      %p90 = por %p88, %p89
      %p91 = scmp.ne.s32.totalorder %s77, %s78
      %p92 = scmp.eq.s32.totalorder %s23, 1
      %p93 = por %p91, %p92
      %p95 = scmp.ne.s32.totalorder %s78, %s94
      %p96 = scmp.eq.s32.totalorder %s23, 0
      %p97 = por %p95, %p96
      %s98 = ssub.s32 %s17, %s24
      %p99 = scmp.eq.s32.totalorder %s98, 0
      %s101 = sadd.s32 %s100, 1
      %s102 = scalar_select %p99, %s100, %s101
      %p105 = pneg %p99
      %p106 = scmp.eq.s32.totalorder %s17, 1
      %p107 = por %p105, %p106
      %p108 = scmp.ne.s32.totalorder %s100, %s103
      %p109 = scmp.eq.s32.totalorder %s17, 0
      %p110 = por %p108, %p109
      %p111 = scmp.ne.s32.totalorder %s100, %s103
      %p112 = scmp.eq.s32.totalorder %s22, 1
      %p113 = por %p111, %p112
      %p114 = scmp.ne.s32.totalorder %s103, %s104
      %p115 = scmp.eq.s32.totalorder %s22, 0
      %p116 = por %p114, %p115
      %p117 = scmp.ne.s32.totalorder %s103, %s104
      %p118 = scmp.eq.s32.totalorder %s23, 1
      %p119 = por %p117, %p118
      %p121 = scmp.ne.s32.totalorder %s104, %s120
      %p122 = scmp.eq.s32.totalorder %s23, 0
      %p123 = por %p121, %p122
      %s124 = ssub.s32 %s17, %s24
      %p125 = scmp.eq.s32.totalorder %s124, 0
      %s127 = sadd.s32 %s126, 1
      %s128 = scalar_select %p125, %s126, %s127
      %p131 = pneg %p125
      %p132 = scmp.eq.s32.totalorder %s17, 1
      %p133 = por %p131, %p132
      %p134 = scmp.ne.s32.totalorder %s126, %s129
      %p135 = scmp.eq.s32.totalorder %s17, 0
      %p136 = por %p134, %p135
      %p137 = scmp.ne.s32.totalorder %s126, %s129
      %p138 = scmp.eq.s32.totalorder %s22, 1
      %p139 = por %p137, %p138
      %p140 = scmp.ne.s32.totalorder %s129, %s130
      %p141 = scmp.eq.s32.totalorder %s22, 0
      %p142 = por %p140, %p141
      %p143 = scmp.ne.s32.totalorder %s129, %s130
      %p144 = scmp.eq.s32.totalorder %s23, 1
      %p145 = por %p143, %p144
      %p147 = scmp.ne.s32.totalorder %s130, %s146
      %p148 = scmp.eq.s32.totalorder %s23, 0
      %p149 = por %p147, %p148
      %p150 = scmp.le.s32.totalorder 1, %s17
      %p151 = scmp.lt.s32.totalorder %s17, 3
      %p152 = pnand %p150, %p151
      %p153 = pneg %p152
      // Predicated region
      $region9: #{neural_net_forward.2} parent=5 // pred_check
        _
      $region10: #{neural_net_forward.2} parent=5 // pred_check_branch
        %155 = sbr.rel (%p152) target = $region12
      $region11: #{neural_net_forward.2} parent=5 // pred_region
        %s156 = ssub.s32 %s17, 1
        // Predicated region
        $region13: #{neural_net_forward.2} parent=11 // pred_check
          %p157 = pneg %p38
        $region14: #{neural_net_forward.2} parent=11 // pred_check_branch
          %159 = sbr.rel (%p157) target = $region16
        $region15: #{neural_net_forward.2} parent=11 // pred_region
          %s161 = ssub.s32 3072, 3072
          %162 = vsyncadd [#allocation3], %s161
          %s164 = sshll.u32 [#allocation2], 4
          %s165 = int_to_ptr.vmem [resolvable:$true] %s164
          %167 = dma.hbm_to_vmem [thread:$0]  %s0, 3072, %s165, [#allocation3]
        $region16: #{neural_net_forward.2} parent=11 // pred_fallthru
          _
      $region12: #{neural_net_forward.2} parent=5 // pred_fallthru
        _
      %p168 = scmp.lt.s32.totalorder %s17, 2
      // Predicated region
      $region17: #{neural_net_forward.2} parent=5 // pred_check
        %p169 = pneg %p168
      $region18: #{neural_net_forward.2} parent=5 // pred_check_branch
        %171 = sbr.rel (%p169) target = $region20
      $region19: #{neural_net_forward.2} parent=5 // pred_region
        // Predicated region
        $region21: #{neural_net_forward.2} parent=19 // pred_check
          %p172 = pneg %p58
        $region22: #{neural_net_forward.2} parent=19 // pred_check_branch
          %174 = sbr.rel (%p172) target = $region24
        $region23: #{neural_net_forward.2} parent=19 // pred_region
          %s175 = sand.u32 %s17, 1
          %s176 = scalar_lea.sflag [#allocation5], %s175
          %s177 = sand.u32 %s48, 1
          %s178 = smul.addr %s177, 6144
          %s179 = scalar_lea.vmem [#allocation4], %s178
          %s181 = ssub.s32 98304, 98304
          %182 = vsyncadd %s176, %s181
          %s183 = smul.addr %s17, 768
          %s184 = smul.addr %s183, 128
          %s185 = scalar_lea.hbm %s1, %s184
          %s186 = sshll.u32 %s179, 4
          %s187 = int_to_ptr.vmem [resolvable:$true] %s186
          %192 = dma.hbm_to_vmem [thread:$0]  %s185, 98304, %s187, %s176, 1024, 1024, 64
        $region24: #{neural_net_forward.2} parent=19 // pred_fallthru
          _
        // Predicated region
        $region25: #{neural_net_forward.2} parent=19 // pred_check
          %p193 = pneg %p84
        $region26: #{neural_net_forward.2} parent=19 // pred_check_branch
          %195 = sbr.rel (%p193) target = $region28
        $region27: #{neural_net_forward.2} parent=19 // pred_region
          %s196 = sand.u32 %s17, 1
          %s197 = scalar_lea.sflag [#allocation5], %s196
          %s198 = sand.u32 %s74, 1
          %s199 = smul.addr %s198, 8
          %s200 = scalar_lea.vmem [#allocation6], %s199
          %s201 = smul.u32 8, %s17
          %s203 = ssub.s32 128, 128
          %204 = vsyncadd %s197, %s203
          %s205 = smul.addr %s201, 16
          %s206 = scalar_lea.hbm %s2, %s205
          %s208 = sshll.u32 %s200, 4
          %s209 = int_to_ptr.vmem [resolvable:$true] %s208
          %211 = dma.hbm_to_vmem [thread:$0]  %s206, 128, %s209, %s197
        $region28: #{neural_net_forward.2} parent=19 // pred_fallthru
          _
        // Predicated region
        $region29: #{neural_net_forward.2} parent=19 // pred_check
          %p212 = pneg %p110
        $region30: #{neural_net_forward.2} parent=19 // pred_check_branch
          %214 = sbr.rel (%p212) target = $region32
        $region31: #{neural_net_forward.2} parent=19 // pred_region
          %s215 = sand.u32 %s100, 1
          %s216 = scalar_lea.sflag [#allocation8], %s215
          %s217 = sand.u32 %s100, 1
          %s218 = smul.addr %s217, 8
          %s219 = scalar_lea.vmem [#allocation7], %s218
          %s220 = smul.u32 8, %s17
          %s222 = ssub.s32 128, 128
          %223 = vsyncadd %s216, %s222
          %s224 = smul.addr %s220, 16
          %s225 = scalar_lea.hbm %s3, %s224
          %s227 = sshll.u32 %s219, 4
          %s228 = int_to_ptr.vmem [resolvable:$true] %s227
          %230 = dma.hbm_to_vmem [thread:$0]  %s225, 128, %s228, %s216
        $region32: #{neural_net_forward.2} parent=19 // pred_fallthru
          _
      $region20: #{neural_net_forward.2} parent=5 // pred_fallthru
        _
      %p231 = scmp.le.s32.totalorder 1, %s17
      %p232 = scmp.lt.s32.totalorder %s17, 3
      %p233 = pnand %p231, %p232
      %p234 = pneg %p233
      // Predicated region
      $region33: #{neural_net_forward.2} parent=5 // pred_check
        _
      $region34: #{neural_net_forward.2} parent=5 // pred_check_branch
        %236 = sbr.rel (%p233) target = $region36
      $region35: #{neural_net_forward.2} parent=5 // pred_region
        %s237 = ssub.s32 %s17, 1
        // Predicated region
        $region37: #{neural_net_forward.2} parent=35 // pred_check
          %p238 = pneg %p38
        $region38: #{neural_net_forward.2} parent=35 // pred_check_branch
          %240 = sbr.rel (%p238) target = $region40
        $region39: #{neural_net_forward.2} parent=35 // pred_region
          %241 = dma.done [#allocation3], 3072
        $region40: #{neural_net_forward.2} parent=35 // pred_fallthru
          _
        %s242 = sand.u32 %s22, 1
        %s243 = scalar_lea.sflag [#allocation5], %s242
        %s244 = sand.u32 %s51, 1
        %s245 = smul.addr %s244, 6144
        %s246 = scalar_lea.vmem [#allocation4], %s245
        // Predicated region
        $region41: #{neural_net_forward.2} parent=35 // pred_check
          %p247 = pneg %p64
        $region42: #{neural_net_forward.2} parent=35 // pred_check_branch
          %249 = sbr.rel (%p247) target = $region44
        $region43: #{neural_net_forward.2} parent=35 // pred_region
          %250 = dma.done %s243, 98304
        $region44: #{neural_net_forward.2} parent=35 // pred_fallthru
          _
        %s251 = sand.u32 %s22, 1
        %s252 = scalar_lea.sflag [#allocation5], %s251
        %s253 = sand.u32 %s77, 1
        %s254 = smul.addr %s253, 8
        %s255 = scalar_lea.vmem [#allocation6], %s254
        // Predicated region
        $region45: #{neural_net_forward.2} parent=35 // pred_check
          %p256 = pneg %p90
        $region46: #{neural_net_forward.2} parent=35 // pred_check_branch
          %258 = sbr.rel (%p256) target = $region48
        $region47: #{neural_net_forward.2} parent=35 // pred_region
          %259 = dma.done %s252, 128
        $region48: #{neural_net_forward.2} parent=35 // pred_fallthru
          _
        %s260 = sand.u32 %s103, 1
        %s261 = scalar_lea.sflag [#allocation8], %s260
        %s262 = sand.u32 %s103, 1
        %s263 = smul.addr %s262, 8
        %s264 = scalar_lea.vmem [#allocation7], %s263
        // Predicated region
        $region49: #{neural_net_forward.2} parent=35 // pred_check
          %p265 = pneg %p116
        $region50: #{neural_net_forward.2} parent=35 // pred_check_branch
          %267 = sbr.rel (%p265) target = $region52
        $region51: #{neural_net_forward.2} parent=35 // pred_region
          %268 = dma.done %s261, 128
        $region52: #{neural_net_forward.2} parent=35 // pred_fallthru
          _
        %p269 = pneg %p38
        %p270 = pneg %p35
        %s271 = sand.u32 %s22, 1
        %s272 = scalar_lea.sflag [#allocation5], %s271
        %s273 = sand.u32 %s51, 1
        %s274 = smul.addr %s273, 6144
        %s275 = scalar_lea.vmem [#allocation4], %s274
        %p276 = pneg %p64
        %p277 = pneg %p61
        %s278 = sand.u32 %s22, 1
        %s279 = scalar_lea.sflag [#allocation5], %s278
        %s280 = sand.u32 %s77, 1
        %s281 = smul.addr %s280, 8
        %s282 = scalar_lea.vmem [#allocation6], %s281
        %p283 = pneg %p90
        %p284 = pneg %p87
        %s285 = sand.u32 %s103, 1
        %s286 = scalar_lea.sflag [#allocation8], %s285
        %s287 = sand.u32 %s103, 1
        %s288 = smul.addr %s287, 8
        %s289 = scalar_lea.vmem [#allocation7], %s288
        %p290 = pneg %p116
        %p291 = pneg %p113
        %p292 = pneg %p142
        %p293 = pneg %p139
        %s294 = smul.u32 8, %s22
        %p295 = scmp.lt.s32.totalorder %s294, 15
        %s296 = scalar_select %p295, %s294, 15
        %s297 = smul.addr %s296, 4
        %s298 = scalar_lea.vmem %s4, %s297
        %s299 = smul.u32 8, %s22
        %s300 = smul.u32 8, %s22
        %s301 = smul.u32 8, %s22
        %p302 = scmp.lt.s32.totalorder %s301, 15
        %s303 = scalar_select %p302, %s301, 15
        %s304 = smul.addr %s303, 4
        %s305 = scalar_lea.vmem %s4, %s304
        %s306 = smul.u32 8, %s22
        %v307 = vld [vmem:[#allocation2] sm:$0xff]
        %v308 = vld [vmem:[#allocation2 + $0x8] sm:$0xff]
        %v309 = vld [vmem:[#allocation2 + $0x10] sm:$0xff]
        %v310 = vld [vmem:[#allocation2 + $0x18] sm:$0xff]
        %v311 = vld [vmem:[#allocation2 + $0x20] sm:$0xff]
        %v312 = vld [vmem:[#allocation2 + $0x28] sm:$0xff]
        %v313 = vld [vmem:[#allocation2 + $0x30] sm:$0xff]
        %v314 = vld [vmem:[#allocation2 + $0x38] sm:$0xff]
        %v315 = vld [vmem:[#allocation2 + $0x40] sm:$0xff]
        %v316 = vld [vmem:[#allocation2 + $0x48] sm:$0xff]
        %v317 = vld [vmem:[#allocation2 + $0x50] sm:$0xff]
        %v318 = vld [vmem:[#allocation2 + $0x58] sm:$0xff]
        %v319 = vld [vmem:[#allocation2 + $0x60] sm:$0xff]
        %v320 = vld [vmem:[#allocation2 + $0x68] sm:$0xff]
        %v321 = vld [vmem:[#allocation2 + $0x70] sm:$0xff]
        %v322 = vld [vmem:[#allocation2 + $0x78] sm:$0xff]
        %v323 = vld [vmem:[#allocation2 + $0x80] sm:$0xff]
        %v324 = vld [vmem:[#allocation2 + $0x88] sm:$0xff]
        %v325 = vld [vmem:[#allocation2 + $0x90] sm:$0xff]
        %v326 = vld [vmem:[#allocation2 + $0x98] sm:$0xff]
        %v327 = vld [vmem:[#allocation2 + $0xa0] sm:$0xff]
        %v328 = vld [vmem:[#allocation2 + $0xa8] sm:$0xff]
        %v329 = vld [vmem:[#allocation2 + $0xb0] sm:$0xff]
        %v330 = vld [vmem:[#allocation2 + $0xb8] sm:$0xff]
        %v331 = vpack.c.bf16 %v307, %v307
        %v332 = vpack.c.bf16 %v308, %v308
        %v333 = vpack.c.bf16 %v309, %v309
        %v334 = vpack.c.bf16 %v310, %v310
        %v335 = vpack.c.bf16 %v311, %v311
        %v336 = vpack.c.bf16 %v312, %v312
        %v337 = vpack.c.bf16 %v313, %v313
        %v338 = vpack.c.bf16 %v314, %v314
        %v339 = vpack.c.bf16 %v315, %v315
        %v340 = vpack.c.bf16 %v316, %v316
        %v341 = vpack.c.bf16 %v317, %v317
        %v342 = vpack.c.bf16 %v318, %v318
        %v343 = vpack.c.bf16 %v319, %v319
        %v344 = vpack.c.bf16 %v320, %v320
        %v345 = vpack.c.bf16 %v321, %v321
        %v346 = vpack.c.bf16 %v322, %v322
        %v347 = vpack.c.bf16 %v323, %v323
        %v348 = vpack.c.bf16 %v324, %v324
        %v349 = vpack.c.bf16 %v325, %v325
        %v350 = vpack.c.bf16 %v326, %v326
        %v351 = vpack.c.bf16 %v327, %v327
        %v352 = vpack.c.bf16 %v328, %v328
        %v353 = vpack.c.bf16 %v329, %v329
        %v354 = vpack.c.bf16 %v330, %v330
        %v355 = vld [vmem:[%s246] sm:$0xff]
        %v356 = vld [vmem:[%s246 + $0x8] sm:$0xff]
        %v357 = vld [vmem:[%s246 + $0x10] sm:$0xff]
        %v358 = vld [vmem:[%s246 + $0x18] sm:$0xff]
        %v359 = vld [vmem:[%s246 + $0x20] sm:$0xff]
        %v360 = vld [vmem:[%s246 + $0x28] sm:$0xff]
        %v361 = vld [vmem:[%s246 + $0x30] sm:$0xff]
        %v362 = vld [vmem:[%s246 + $0x38] sm:$0xff]
        %v363 = vld [vmem:[%s246 + $0x40] sm:$0xff]
        %v364 = vld [vmem:[%s246 + $0x48] sm:$0xff]
        %v365 = vld [vmem:[%s246 + $0x50] sm:$0xff]
        %v366 = vld [vmem:[%s246 + $0x58] sm:$0xff]
        %v367 = vld [vmem:[%s246 + $0x60] sm:$0xff]
        %v368 = vld [vmem:[%s246 + $0x68] sm:$0xff]
        %v369 = vld [vmem:[%s246 + $0x70] sm:$0xff]
        %v370 = vld [vmem:[%s246 + $0x78] sm:$0xff]
        %v371 = vld [vmem:[%s246 + $0x80] sm:$0xff]
        %v372 = vld [vmem:[%s246 + $0x88] sm:$0xff]
        %v373 = vld [vmem:[%s246 + $0x90] sm:$0xff]
        %v374 = vld [vmem:[%s246 + $0x98] sm:$0xff]
        %v375 = vld [vmem:[%s246 + $0xa0] sm:$0xff]
        %v376 = vld [vmem:[%s246 + $0xa8] sm:$0xff]
        %v377 = vld [vmem:[%s246 + $0xb0] sm:$0xff]
        %v378 = vld [vmem:[%s246 + $0xb8] sm:$0xff]
        %v379 = vld [vmem:[%s246 + $0xc0] sm:$0xff]
        %v380 = vld [vmem:[%s246 + $0xc8] sm:$0xff]
        %v381 = vld [vmem:[%s246 + $0xd0] sm:$0xff]
        %v382 = vld [vmem:[%s246 + $0xd8] sm:$0xff]
        %v383 = vld [vmem:[%s246 + $0xe0] sm:$0xff]
        %v384 = vld [vmem:[%s246 + $0xe8] sm:$0xff]
        %v385 = vld [vmem:[%s246 + $0xf0] sm:$0xff]
        %v386 = vld [vmem:[%s246 + $0xf8] sm:$0xff]
        %v387 = vld [vmem:[%s246 + $0x100] sm:$0xff]
        %v388 = vld [vmem:[%s246 + $0x108] sm:$0xff]
        %v389 = vld [vmem:[%s246 + $0x110] sm:$0xff]
        %v390 = vld [vmem:[%s246 + $0x118] sm:$0xff]
        %v391 = vld [vmem:[%s246 + $0x120] sm:$0xff]
        %v392 = vld [vmem:[%s246 + $0x128] sm:$0xff]
        %v393 = vld [vmem:[%s246 + $0x130] sm:$0xff]
        %v394 = vld [vmem:[%s246 + $0x138] sm:$0xff]
        %v395 = vld [vmem:[%s246 + $0x140] sm:$0xff]
        %v396 = vld [vmem:[%s246 + $0x148] sm:$0xff]
        %v397 = vld [vmem:[%s246 + $0x150] sm:$0xff]
        %v398 = vld [vmem:[%s246 + $0x158] sm:$0xff]
        %v399 = vld [vmem:[%s246 + $0x160] sm:$0xff]
        %v400 = vld [vmem:[%s246 + $0x168] sm:$0xff]
        %v401 = vld [vmem:[%s246 + $0x170] sm:$0xff]
        %v402 = vld [vmem:[%s246 + $0x178] sm:$0xff]
        %v403 = vld [vmem:[%s246 + $0x180] sm:$0xff]
        %v404 = vld [vmem:[%s246 + $0x188] sm:$0xff]
        %v405 = vld [vmem:[%s246 + $0x190] sm:$0xff]
        %v406 = vld [vmem:[%s246 + $0x198] sm:$0xff]
        %v407 = vld [vmem:[%s246 + $0x1a0] sm:$0xff]
        %v408 = vld [vmem:[%s246 + $0x1a8] sm:$0xff]
        %v409 = vld [vmem:[%s246 + $0x1b0] sm:$0xff]
        %v410 = vld [vmem:[%s246 + $0x1b8] sm:$0xff]
        %v411 = vld [vmem:[%s246 + $0x1c0] sm:$0xff]
        %v412 = vld [vmem:[%s246 + $0x1c8] sm:$0xff]
        %v413 = vld [vmem:[%s246 + $0x1d0] sm:$0xff]
        %v414 = vld [vmem:[%s246 + $0x1d8] sm:$0xff]
        %v415 = vld [vmem:[%s246 + $0x1e0] sm:$0xff]
        %v416 = vld [vmem:[%s246 + $0x1e8] sm:$0xff]
        %v417 = vld [vmem:[%s246 + $0x1f0] sm:$0xff]
        %v418 = vld [vmem:[%s246 + $0x1f8] sm:$0xff]
        %v419 = vld [vmem:[%s246 + $0x200] sm:$0xff]
        %v420 = vld [vmem:[%s246 + $0x208] sm:$0xff]
        %v421 = vld [vmem:[%s246 + $0x210] sm:$0xff]
        %v422 = vld [vmem:[%s246 + $0x218] sm:$0xff]
        %v423 = vld [vmem:[%s246 + $0x220] sm:$0xff]
        %v424 = vld [vmem:[%s246 + $0x228] sm:$0xff]
        %v425 = vld [vmem:[%s246 + $0x230] sm:$0xff]
        %v426 = vld [vmem:[%s246 + $0x238] sm:$0xff]
        %v427 = vld [vmem:[%s246 + $0x240] sm:$0xff]
        %v428 = vld [vmem:[%s246 + $0x248] sm:$0xff]
        %v429 = vld [vmem:[%s246 + $0x250] sm:$0xff]
        %v430 = vld [vmem:[%s246 + $0x258] sm:$0xff]
        %v431 = vld [vmem:[%s246 + $0x260] sm:$0xff]
        %v432 = vld [vmem:[%s246 + $0x268] sm:$0xff]
        %v433 = vld [vmem:[%s246 + $0x270] sm:$0xff]
        %v434 = vld [vmem:[%s246 + $0x278] sm:$0xff]
        %v435 = vld [vmem:[%s246 + $0x280] sm:$0xff]
        %v436 = vld [vmem:[%s246 + $0x288] sm:$0xff]
        %v437 = vld [vmem:[%s246 + $0x290] sm:$0xff]
        %v438 = vld [vmem:[%s246 + $0x298] sm:$0xff]
        %v439 = vld [vmem:[%s246 + $0x2a0] sm:$0xff]
        %v440 = vld [vmem:[%s246 + $0x2a8] sm:$0xff]
        %v441 = vld [vmem:[%s246 + $0x2b0] sm:$0xff]
        %v442 = vld [vmem:[%s246 + $0x2b8] sm:$0xff]
        %v443 = vld [vmem:[%s246 + $0x2c0] sm:$0xff]
        %v444 = vld [vmem:[%s246 + $0x2c8] sm:$0xff]
        %v445 = vld [vmem:[%s246 + $0x2d0] sm:$0xff]
        %v446 = vld [vmem:[%s246 + $0x2d8] sm:$0xff]
        %v447 = vld [vmem:[%s246 + $0x2e0] sm:$0xff]
        %v448 = vld [vmem:[%s246 + $0x2e8] sm:$0xff]
        %v449 = vld [vmem:[%s246 + $0x2f0] sm:$0xff]
        %v450 = vld [vmem:[%s246 + $0x2f8] sm:$0xff]
        %v451 = vld [vmem:[%s246 + $0x300] sm:$0xff]
        %v452 = vld [vmem:[%s246 + $0x308] sm:$0xff]
        %v453 = vld [vmem:[%s246 + $0x310] sm:$0xff]
        %v454 = vld [vmem:[%s246 + $0x318] sm:$0xff]
        %v455 = vld [vmem:[%s246 + $0x320] sm:$0xff]
        %v456 = vld [vmem:[%s246 + $0x328] sm:$0xff]
        %v457 = vld [vmem:[%s246 + $0x330] sm:$0xff]
        %v458 = vld [vmem:[%s246 + $0x338] sm:$0xff]
        %v459 = vld [vmem:[%s246 + $0x340] sm:$0xff]
        %v460 = vld [vmem:[%s246 + $0x348] sm:$0xff]
        %v461 = vld [vmem:[%s246 + $0x350] sm:$0xff]
        %v462 = vld [vmem:[%s246 + $0x358] sm:$0xff]
        %v463 = vld [vmem:[%s246 + $0x360] sm:$0xff]
        %v464 = vld [vmem:[%s246 + $0x368] sm:$0xff]
        %v465 = vld [vmem:[%s246 + $0x370] sm:$0xff]
        %v466 = vld [vmem:[%s246 + $0x378] sm:$0xff]
        %v467 = vld [vmem:[%s246 + $0x380] sm:$0xff]
        %v468 = vld [vmem:[%s246 + $0x388] sm:$0xff]
        %v469 = vld [vmem:[%s246 + $0x390] sm:$0xff]
        %v470 = vld [vmem:[%s246 + $0x398] sm:$0xff]
        %v471 = vld [vmem:[%s246 + $0x3a0] sm:$0xff]
        %v472 = vld [vmem:[%s246 + $0x3a8] sm:$0xff]
        %v473 = vld [vmem:[%s246 + $0x3b0] sm:$0xff]
        %v474 = vld [vmem:[%s246 + $0x3b8] sm:$0xff]
        %v475 = vld [vmem:[%s246 + $0x3c0] sm:$0xff]
        %v476 = vld [vmem:[%s246 + $0x3c8] sm:$0xff]
        %v477 = vld [vmem:[%s246 + $0x3d0] sm:$0xff]
        %v478 = vld [vmem:[%s246 + $0x3d8] sm:$0xff]
        %v479 = vld [vmem:[%s246 + $0x3e0] sm:$0xff]
        %v480 = vld [vmem:[%s246 + $0x3e8] sm:$0xff]
        %v481 = vld [vmem:[%s246 + $0x3f0] sm:$0xff]
        %v482 = vld [vmem:[%s246 + $0x3f8] sm:$0xff]
        %v483 = vld [vmem:[%s246 + $0x400] sm:$0xff]
        %v484 = vld [vmem:[%s246 + $0x408] sm:$0xff]
        %v485 = vld [vmem:[%s246 + $0x410] sm:$0xff]
        %v486 = vld [vmem:[%s246 + $0x418] sm:$0xff]
        %v487 = vld [vmem:[%s246 + $0x420] sm:$0xff]
        %v488 = vld [vmem:[%s246 + $0x428] sm:$0xff]
        %v489 = vld [vmem:[%s246 + $0x430] sm:$0xff]
        %v490 = vld [vmem:[%s246 + $0x438] sm:$0xff]
        %v491 = vld [vmem:[%s246 + $0x440] sm:$0xff]
        %v492 = vld [vmem:[%s246 + $0x448] sm:$0xff]
        %v493 = vld [vmem:[%s246 + $0x450] sm:$0xff]
        %v494 = vld [vmem:[%s246 + $0x458] sm:$0xff]
        %v495 = vld [vmem:[%s246 + $0x460] sm:$0xff]
        %v496 = vld [vmem:[%s246 + $0x468] sm:$0xff]
        %v497 = vld [vmem:[%s246 + $0x470] sm:$0xff]
        %v498 = vld [vmem:[%s246 + $0x478] sm:$0xff]
        %v499 = vld [vmem:[%s246 + $0x480] sm:$0xff]
        %v500 = vld [vmem:[%s246 + $0x488] sm:$0xff]
        %v501 = vld [vmem:[%s246 + $0x490] sm:$0xff]
        %v502 = vld [vmem:[%s246 + $0x498] sm:$0xff]
        %v503 = vld [vmem:[%s246 + $0x4a0] sm:$0xff]
        %v504 = vld [vmem:[%s246 + $0x4a8] sm:$0xff]
        %v505 = vld [vmem:[%s246 + $0x4b0] sm:$0xff]
        %v506 = vld [vmem:[%s246 + $0x4b8] sm:$0xff]
        %v507 = vld [vmem:[%s246 + $0x4c0] sm:$0xff]
        %v508 = vld [vmem:[%s246 + $0x4c8] sm:$0xff]
        %v509 = vld [vmem:[%s246 + $0x4d0] sm:$0xff]
        %v510 = vld [vmem:[%s246 + $0x4d8] sm:$0xff]
        %v511 = vld [vmem:[%s246 + $0x4e0] sm:$0xff]
        %v512 = vld [vmem:[%s246 + $0x4e8] sm:$0xff]
        %v513 = vld [vmem:[%s246 + $0x4f0] sm:$0xff]
        %v514 = vld [vmem:[%s246 + $0x4f8] sm:$0xff]
        %v515 = vld [vmem:[%s246 + $0x500] sm:$0xff]
        %v516 = vld [vmem:[%s246 + $0x508] sm:$0xff]
        %v517 = vld [vmem:[%s246 + $0x510] sm:$0xff]
        %v518 = vld [vmem:[%s246 + $0x518] sm:$0xff]
        %v519 = vld [vmem:[%s246 + $0x520] sm:$0xff]
        %v520 = vld [vmem:[%s246 + $0x528] sm:$0xff]
        %v521 = vld [vmem:[%s246 + $0x530] sm:$0xff]
        %v522 = vld [vmem:[%s246 + $0x538] sm:$0xff]
        %v523 = vld [vmem:[%s246 + $0x540] sm:$0xff]
        %v524 = vld [vmem:[%s246 + $0x548] sm:$0xff]
        %v525 = vld [vmem:[%s246 + $0x550] sm:$0xff]
        %v526 = vld [vmem:[%s246 + $0x558] sm:$0xff]
        %v527 = vld [vmem:[%s246 + $0x560] sm:$0xff]
        %v528 = vld [vmem:[%s246 + $0x568] sm:$0xff]
        %v529 = vld [vmem:[%s246 + $0x570] sm:$0xff]
        %v530 = vld [vmem:[%s246 + $0x578] sm:$0xff]
        %v531 = vld [vmem:[%s246 + $0x580] sm:$0xff]
        %v532 = vld [vmem:[%s246 + $0x588] sm:$0xff]
        %v533 = vld [vmem:[%s246 + $0x590] sm:$0xff]
        %v534 = vld [vmem:[%s246 + $0x598] sm:$0xff]
        %v535 = vld [vmem:[%s246 + $0x5a0] sm:$0xff]
        %v536 = vld [vmem:[%s246 + $0x5a8] sm:$0xff]
        %v537 = vld [vmem:[%s246 + $0x5b0] sm:$0xff]
        %v538 = vld [vmem:[%s246 + $0x5b8] sm:$0xff]
        %v539 = vld [vmem:[%s246 + $0x5c0] sm:$0xff]
        %v540 = vld [vmem:[%s246 + $0x5c8] sm:$0xff]
        %v541 = vld [vmem:[%s246 + $0x5d0] sm:$0xff]
        %v542 = vld [vmem:[%s246 + $0x5d8] sm:$0xff]
        %v543 = vld [vmem:[%s246 + $0x5e0] sm:$0xff]
        %v544 = vld [vmem:[%s246 + $0x5e8] sm:$0xff]
        %v545 = vld [vmem:[%s246 + $0x5f0] sm:$0xff]
        %v546 = vld [vmem:[%s246 + $0x5f8] sm:$0xff]
        %v547 = vld [vmem:[%s246 + $0x600] sm:$0xff]
        %v548 = vld [vmem:[%s246 + $0x608] sm:$0xff]
        %v549 = vld [vmem:[%s246 + $0x610] sm:$0xff]
        %v550 = vld [vmem:[%s246 + $0x618] sm:$0xff]
        %v551 = vld [vmem:[%s246 + $0x620] sm:$0xff]
        %v552 = vld [vmem:[%s246 + $0x628] sm:$0xff]
        %v553 = vld [vmem:[%s246 + $0x630] sm:$0xff]
        %v554 = vld [vmem:[%s246 + $0x638] sm:$0xff]
        %v555 = vld [vmem:[%s246 + $0x640] sm:$0xff]
        %v556 = vld [vmem:[%s246 + $0x648] sm:$0xff]
        %v557 = vld [vmem:[%s246 + $0x650] sm:$0xff]
        %v558 = vld [vmem:[%s246 + $0x658] sm:$0xff]
        %v559 = vld [vmem:[%s246 + $0x660] sm:$0xff]
        %v560 = vld [vmem:[%s246 + $0x668] sm:$0xff]
        %v561 = vld [vmem:[%s246 + $0x670] sm:$0xff]
        %v562 = vld [vmem:[%s246 + $0x678] sm:$0xff]
        %v563 = vld [vmem:[%s246 + $0x680] sm:$0xff]
        %v564 = vld [vmem:[%s246 + $0x688] sm:$0xff]
        %v565 = vld [vmem:[%s246 + $0x690] sm:$0xff]
        %v566 = vld [vmem:[%s246 + $0x698] sm:$0xff]
        %v567 = vld [vmem:[%s246 + $0x6a0] sm:$0xff]
        %v568 = vld [vmem:[%s246 + $0x6a8] sm:$0xff]
        %v569 = vld [vmem:[%s246 + $0x6b0] sm:$0xff]
        %v570 = vld [vmem:[%s246 + $0x6b8] sm:$0xff]
        %v571 = vld [vmem:[%s246 + $0x6c0] sm:$0xff]
        %v572 = vld [vmem:[%s246 + $0x6c8] sm:$0xff]
        %v573 = vld [vmem:[%s246 + $0x6d0] sm:$0xff]
        %v574 = vld [vmem:[%s246 + $0x6d8] sm:$0xff]
        %v575 = vld [vmem:[%s246 + $0x6e0] sm:$0xff]
        %v576 = vld [vmem:[%s246 + $0x6e8] sm:$0xff]
        %v577 = vld [vmem:[%s246 + $0x6f0] sm:$0xff]
        %v578 = vld [vmem:[%s246 + $0x6f8] sm:$0xff]
        %v579 = vld [vmem:[%s246 + $0x700] sm:$0xff]
        %v580 = vld [vmem:[%s246 + $0x708] sm:$0xff]
        %v581 = vld [vmem:[%s246 + $0x710] sm:$0xff]
        %v582 = vld [vmem:[%s246 + $0x718] sm:$0xff]
        %v583 = vld [vmem:[%s246 + $0x720] sm:$0xff]
        %v584 = vld [vmem:[%s246 + $0x728] sm:$0xff]
        %v585 = vld [vmem:[%s246 + $0x730] sm:$0xff]
        %v586 = vld [vmem:[%s246 + $0x738] sm:$0xff]
        %v587 = vld [vmem:[%s246 + $0x740] sm:$0xff]
        %v588 = vld [vmem:[%s246 + $0x748] sm:$0xff]
        %v589 = vld [vmem:[%s246 + $0x750] sm:$0xff]
        %v590 = vld [vmem:[%s246 + $0x758] sm:$0xff]
        %v591 = vld [vmem:[%s246 + $0x760] sm:$0xff]
        %v592 = vld [vmem:[%s246 + $0x768] sm:$0xff]
        %v593 = vld [vmem:[%s246 + $0x770] sm:$0xff]
        %v594 = vld [vmem:[%s246 + $0x778] sm:$0xff]
        %v595 = vld [vmem:[%s246 + $0x780] sm:$0xff]
        %v596 = vld [vmem:[%s246 + $0x788] sm:$0xff]
        %v597 = vld [vmem:[%s246 + $0x790] sm:$0xff]
        %v598 = vld [vmem:[%s246 + $0x798] sm:$0xff]
        %v599 = vld [vmem:[%s246 + $0x7a0] sm:$0xff]
        %v600 = vld [vmem:[%s246 + $0x7a8] sm:$0xff]
        %v601 = vld [vmem:[%s246 + $0x7b0] sm:$0xff]
        %v602 = vld [vmem:[%s246 + $0x7b8] sm:$0xff]
        %v603 = vld [vmem:[%s246 + $0x7c0] sm:$0xff]
        %v604 = vld [vmem:[%s246 + $0x7c8] sm:$0xff]
        %v605 = vld [vmem:[%s246 + $0x7d0] sm:$0xff]
        %v606 = vld [vmem:[%s246 + $0x7d8] sm:$0xff]
        %v607 = vld [vmem:[%s246 + $0x7e0] sm:$0xff]
        %v608 = vld [vmem:[%s246 + $0x7e8] sm:$0xff]
        %v609 = vld [vmem:[%s246 + $0x7f0] sm:$0xff]
        %v610 = vld [vmem:[%s246 + $0x7f8] sm:$0xff]
        %v611 = vld [vmem:[%s246 + $0x800] sm:$0xff]
        %v612 = vld [vmem:[%s246 + $0x808] sm:$0xff]
        %v613 = vld [vmem:[%s246 + $0x810] sm:$0xff]
        %v614 = vld [vmem:[%s246 + $0x818] sm:$0xff]
        %v615 = vld [vmem:[%s246 + $0x820] sm:$0xff]
        %v616 = vld [vmem:[%s246 + $0x828] sm:$0xff]
        %v617 = vld [vmem:[%s246 + $0x830] sm:$0xff]
        %v618 = vld [vmem:[%s246 + $0x838] sm:$0xff]
        %v619 = vld [vmem:[%s246 + $0x840] sm:$0xff]
        %v620 = vld [vmem:[%s246 + $0x848] sm:$0xff]
        %v621 = vld [vmem:[%s246 + $0x850] sm:$0xff]
        %v622 = vld [vmem:[%s246 + $0x858] sm:$0xff]
        %v623 = vld [vmem:[%s246 + $0x860] sm:$0xff]
        %v624 = vld [vmem:[%s246 + $0x868] sm:$0xff]
        %v625 = vld [vmem:[%s246 + $0x870] sm:$0xff]
        %v626 = vld [vmem:[%s246 + $0x878] sm:$0xff]
        %v627 = vld [vmem:[%s246 + $0x880] sm:$0xff]
        %v628 = vld [vmem:[%s246 + $0x888] sm:$0xff]
        %v629 = vld [vmem:[%s246 + $0x890] sm:$0xff]
        %v630 = vld [vmem:[%s246 + $0x898] sm:$0xff]
        %v631 = vld [vmem:[%s246 + $0x8a0] sm:$0xff]
        %v632 = vld [vmem:[%s246 + $0x8a8] sm:$0xff]
        %v633 = vld [vmem:[%s246 + $0x8b0] sm:$0xff]
        %v634 = vld [vmem:[%s246 + $0x8b8] sm:$0xff]
        %v635 = vld [vmem:[%s246 + $0x8c0] sm:$0xff]
        %v636 = vld [vmem:[%s246 + $0x8c8] sm:$0xff]
        %v637 = vld [vmem:[%s246 + $0x8d0] sm:$0xff]
        %v638 = vld [vmem:[%s246 + $0x8d8] sm:$0xff]
        %v639 = vld [vmem:[%s246 + $0x8e0] sm:$0xff]
        %v640 = vld [vmem:[%s246 + $0x8e8] sm:$0xff]
        %v641 = vld [vmem:[%s246 + $0x8f0] sm:$0xff]
        %v642 = vld [vmem:[%s246 + $0x8f8] sm:$0xff]
        %v643 = vld [vmem:[%s246 + $0x900] sm:$0xff]
        %v644 = vld [vmem:[%s246 + $0x908] sm:$0xff]
        %v645 = vld [vmem:[%s246 + $0x910] sm:$0xff]
        %v646 = vld [vmem:[%s246 + $0x918] sm:$0xff]
        %v647 = vld [vmem:[%s246 + $0x920] sm:$0xff]
        %v648 = vld [vmem:[%s246 + $0x928] sm:$0xff]
        %v649 = vld [vmem:[%s246 + $0x930] sm:$0xff]
        %v650 = vld [vmem:[%s246 + $0x938] sm:$0xff]
        %v651 = vld [vmem:[%s246 + $0x940] sm:$0xff]
        %v652 = vld [vmem:[%s246 + $0x948] sm:$0xff]
        %v653 = vld [vmem:[%s246 + $0x950] sm:$0xff]
        %v654 = vld [vmem:[%s246 + $0x958] sm:$0xff]
        %v655 = vld [vmem:[%s246 + $0x960] sm:$0xff]
        %v656 = vld [vmem:[%s246 + $0x968] sm:$0xff]
        %v657 = vld [vmem:[%s246 + $0x970] sm:$0xff]
        %v658 = vld [vmem:[%s246 + $0x978] sm:$0xff]
        %v659 = vld [vmem:[%s246 + $0x980] sm:$0xff]
        %v660 = vld [vmem:[%s246 + $0x988] sm:$0xff]
        %v661 = vld [vmem:[%s246 + $0x990] sm:$0xff]
        %v662 = vld [vmem:[%s246 + $0x998] sm:$0xff]
        %v663 = vld [vmem:[%s246 + $0x9a0] sm:$0xff]
        %v664 = vld [vmem:[%s246 + $0x9a8] sm:$0xff]
        %v665 = vld [vmem:[%s246 + $0x9b0] sm:$0xff]
        %v666 = vld [vmem:[%s246 + $0x9b8] sm:$0xff]
        %v667 = vld [vmem:[%s246 + $0x9c0] sm:$0xff]
        %v668 = vld [vmem:[%s246 + $0x9c8] sm:$0xff]
        %v669 = vld [vmem:[%s246 + $0x9d0] sm:$0xff]
        %v670 = vld [vmem:[%s246 + $0x9d8] sm:$0xff]
        %v671 = vld [vmem:[%s246 + $0x9e0] sm:$0xff]
        %v672 = vld [vmem:[%s246 + $0x9e8] sm:$0xff]
        %v673 = vld [vmem:[%s246 + $0x9f0] sm:$0xff]
        %v674 = vld [vmem:[%s246 + $0x9f8] sm:$0xff]
        %v675 = vld [vmem:[%s246 + $0xa00] sm:$0xff]
        %v676 = vld [vmem:[%s246 + $0xa08] sm:$0xff]
        %v677 = vld [vmem:[%s246 + $0xa10] sm:$0xff]
        %v678 = vld [vmem:[%s246 + $0xa18] sm:$0xff]
        %v679 = vld [vmem:[%s246 + $0xa20] sm:$0xff]
        %v680 = vld [vmem:[%s246 + $0xa28] sm:$0xff]
        %v681 = vld [vmem:[%s246 + $0xa30] sm:$0xff]
        %v682 = vld [vmem:[%s246 + $0xa38] sm:$0xff]
        %v683 = vld [vmem:[%s246 + $0xa40] sm:$0xff]
        %v684 = vld [vmem:[%s246 + $0xa48] sm:$0xff]
        %v685 = vld [vmem:[%s246 + $0xa50] sm:$0xff]
        %v686 = vld [vmem:[%s246 + $0xa58] sm:$0xff]
        %v687 = vld [vmem:[%s246 + $0xa60] sm:$0xff]
        %v688 = vld [vmem:[%s246 + $0xa68] sm:$0xff]
        %v689 = vld [vmem:[%s246 + $0xa70] sm:$0xff]
        %v690 = vld [vmem:[%s246 + $0xa78] sm:$0xff]
        %v691 = vld [vmem:[%s246 + $0xa80] sm:$0xff]
        %v692 = vld [vmem:[%s246 + $0xa88] sm:$0xff]
        %v693 = vld [vmem:[%s246 + $0xa90] sm:$0xff]
        %v694 = vld [vmem:[%s246 + $0xa98] sm:$0xff]
        %v695 = vld [vmem:[%s246 + $0xaa0] sm:$0xff]
        %v696 = vld [vmem:[%s246 + $0xaa8] sm:$0xff]
        %v697 = vld [vmem:[%s246 + $0xab0] sm:$0xff]
        %v698 = vld [vmem:[%s246 + $0xab8] sm:$0xff]
        %v699 = vld [vmem:[%s246 + $0xac0] sm:$0xff]
        %v700 = vld [vmem:[%s246 + $0xac8] sm:$0xff]
        %v701 = vld [vmem:[%s246 + $0xad0] sm:$0xff]
        %v702 = vld [vmem:[%s246 + $0xad8] sm:$0xff]
        %v703 = vld [vmem:[%s246 + $0xae0] sm:$0xff]
        %v704 = vld [vmem:[%s246 + $0xae8] sm:$0xff]
        %v705 = vld [vmem:[%s246 + $0xaf0] sm:$0xff]
        %v706 = vld [vmem:[%s246 + $0xaf8] sm:$0xff]
        %v707 = vld [vmem:[%s246 + $0xb00] sm:$0xff]
        %v708 = vld [vmem:[%s246 + $0xb08] sm:$0xff]
        %v709 = vld [vmem:[%s246 + $0xb10] sm:$0xff]
        %v710 = vld [vmem:[%s246 + $0xb18] sm:$0xff]
        %v711 = vld [vmem:[%s246 + $0xb20] sm:$0xff]
        %v712 = vld [vmem:[%s246 + $0xb28] sm:$0xff]
        %v713 = vld [vmem:[%s246 + $0xb30] sm:$0xff]
        %v714 = vld [vmem:[%s246 + $0xb38] sm:$0xff]
        %v715 = vld [vmem:[%s246 + $0xb40] sm:$0xff]
        %v716 = vld [vmem:[%s246 + $0xb48] sm:$0xff]
        %v717 = vld [vmem:[%s246 + $0xb50] sm:$0xff]
        %v718 = vld [vmem:[%s246 + $0xb58] sm:$0xff]
        %v719 = vld [vmem:[%s246 + $0xb60] sm:$0xff]
        %v720 = vld [vmem:[%s246 + $0xb68] sm:$0xff]
        %v721 = vld [vmem:[%s246 + $0xb70] sm:$0xff]
        %v722 = vld [vmem:[%s246 + $0xb78] sm:$0xff]
        %v723 = vld [vmem:[%s246 + $0xb80] sm:$0xff]
        %v724 = vld [vmem:[%s246 + $0xb88] sm:$0xff]
        %v725 = vld [vmem:[%s246 + $0xb90] sm:$0xff]
        %v726 = vld [vmem:[%s246 + $0xb98] sm:$0xff]
        %v727 = vld [vmem:[%s246 + $0xba0] sm:$0xff]
        %v728 = vld [vmem:[%s246 + $0xba8] sm:$0xff]
        %v729 = vld [vmem:[%s246 + $0xbb0] sm:$0xff]
        %v730 = vld [vmem:[%s246 + $0xbb8] sm:$0xff]
        %v731 = vld [vmem:[%s246 + $0xbc0] sm:$0xff]
        %v732 = vld [vmem:[%s246 + $0xbc8] sm:$0xff]
        %v733 = vld [vmem:[%s246 + $0xbd0] sm:$0xff]
        %v734 = vld [vmem:[%s246 + $0xbd8] sm:$0xff]
        %v735 = vld [vmem:[%s246 + $0xbe0] sm:$0xff]
        %v736 = vld [vmem:[%s246 + $0xbe8] sm:$0xff]
        %v737 = vld [vmem:[%s246 + $0xbf0] sm:$0xff]
        %v738 = vld [vmem:[%s246 + $0xbf8] sm:$0xff]
        %v739 = vld [vmem:[%s246 + $0xc00] sm:$0xff]
        %v740 = vld [vmem:[%s246 + $0xc08] sm:$0xff]
        %v741 = vld [vmem:[%s246 + $0xc10] sm:$0xff]
        %v742 = vld [vmem:[%s246 + $0xc18] sm:$0xff]
        %v743 = vld [vmem:[%s246 + $0xc20] sm:$0xff]
        %v744 = vld [vmem:[%s246 + $0xc28] sm:$0xff]
        %v745 = vld [vmem:[%s246 + $0xc30] sm:$0xff]
        %v746 = vld [vmem:[%s246 + $0xc38] sm:$0xff]
        %v747 = vld [vmem:[%s246 + $0xc40] sm:$0xff]
        %v748 = vld [vmem:[%s246 + $0xc48] sm:$0xff]
        %v749 = vld [vmem:[%s246 + $0xc50] sm:$0xff]
        %v750 = vld [vmem:[%s246 + $0xc58] sm:$0xff]
        %v751 = vld [vmem:[%s246 + $0xc60] sm:$0xff]
        %v752 = vld [vmem:[%s246 + $0xc68] sm:$0xff]
        %v753 = vld [vmem:[%s246 + $0xc70] sm:$0xff]
        %v754 = vld [vmem:[%s246 + $0xc78] sm:$0xff]
        %v755 = vld [vmem:[%s246 + $0xc80] sm:$0xff]
        %v756 = vld [vmem:[%s246 + $0xc88] sm:$0xff]
        %v757 = vld [vmem:[%s246 + $0xc90] sm:$0xff]
        %v758 = vld [vmem:[%s246 + $0xc98] sm:$0xff]
        %v759 = vld [vmem:[%s246 + $0xca0] sm:$0xff]
        %v760 = vld [vmem:[%s246 + $0xca8] sm:$0xff]
        %v761 = vld [vmem:[%s246 + $0xcb0] sm:$0xff]
        %v762 = vld [vmem:[%s246 + $0xcb8] sm:$0xff]
        %v763 = vld [vmem:[%s246 + $0xcc0] sm:$0xff]
        %v764 = vld [vmem:[%s246 + $0xcc8] sm:$0xff]
        %v765 = vld [vmem:[%s246 + $0xcd0] sm:$0xff]
        %v766 = vld [vmem:[%s246 + $0xcd8] sm:$0xff]
        %v767 = vld [vmem:[%s246 + $0xce0] sm:$0xff]
        %v768 = vld [vmem:[%s246 + $0xce8] sm:$0xff]
        %v769 = vld [vmem:[%s246 + $0xcf0] sm:$0xff]
        %v770 = vld [vmem:[%s246 + $0xcf8] sm:$0xff]
        %v771 = vld [vmem:[%s246 + $0xd00] sm:$0xff]
        %v772 = vld [vmem:[%s246 + $0xd08] sm:$0xff]
        %v773 = vld [vmem:[%s246 + $0xd10] sm:$0xff]
        %v774 = vld [vmem:[%s246 + $0xd18] sm:$0xff]
        %v775 = vld [vmem:[%s246 + $0xd20] sm:$0xff]
        %v776 = vld [vmem:[%s246 + $0xd28] sm:$0xff]
        %v777 = vld [vmem:[%s246 + $0xd30] sm:$0xff]
        %v778 = vld [vmem:[%s246 + $0xd38] sm:$0xff]
        %v779 = vld [vmem:[%s246 + $0xd40] sm:$0xff]
        %v780 = vld [vmem:[%s246 + $0xd48] sm:$0xff]
        %v781 = vld [vmem:[%s246 + $0xd50] sm:$0xff]
        %v782 = vld [vmem:[%s246 + $0xd58] sm:$0xff]
        %v783 = vld [vmem:[%s246 + $0xd60] sm:$0xff]
        %v784 = vld [vmem:[%s246 + $0xd68] sm:$0xff]
        %v785 = vld [vmem:[%s246 + $0xd70] sm:$0xff]
        %v786 = vld [vmem:[%s246 + $0xd78] sm:$0xff]
        %v787 = vld [vmem:[%s246 + $0xd80] sm:$0xff]
        %v788 = vld [vmem:[%s246 + $0xd88] sm:$0xff]
        %v789 = vld [vmem:[%s246 + $0xd90] sm:$0xff]
        %v790 = vld [vmem:[%s246 + $0xd98] sm:$0xff]
        %v791 = vld [vmem:[%s246 + $0xda0] sm:$0xff]
        %v792 = vld [vmem:[%s246 + $0xda8] sm:$0xff]
        %v793 = vld [vmem:[%s246 + $0xdb0] sm:$0xff]
        %v794 = vld [vmem:[%s246 + $0xdb8] sm:$0xff]
        %v795 = vld [vmem:[%s246 + $0xdc0] sm:$0xff]
        %v796 = vld [vmem:[%s246 + $0xdc8] sm:$0xff]
        %v797 = vld [vmem:[%s246 + $0xdd0] sm:$0xff]
        %v798 = vld [vmem:[%s246 + $0xdd8] sm:$0xff]
        %v799 = vld [vmem:[%s246 + $0xde0] sm:$0xff]
        %v800 = vld [vmem:[%s246 + $0xde8] sm:$0xff]
        %v801 = vld [vmem:[%s246 + $0xdf0] sm:$0xff]
        %v802 = vld [vmem:[%s246 + $0xdf8] sm:$0xff]
        %v803 = vld [vmem:[%s246 + $0xe00] sm:$0xff]
        %v804 = vld [vmem:[%s246 + $0xe08] sm:$0xff]
        %v805 = vld [vmem:[%s246 + $0xe10] sm:$0xff]
        %v806 = vld [vmem:[%s246 + $0xe18] sm:$0xff]
        %v807 = vld [vmem:[%s246 + $0xe20] sm:$0xff]
        %v808 = vld [vmem:[%s246 + $0xe28] sm:$0xff]
        %v809 = vld [vmem:[%s246 + $0xe30] sm:$0xff]
        %v810 = vld [vmem:[%s246 + $0xe38] sm:$0xff]
        %v811 = vld [vmem:[%s246 + $0xe40] sm:$0xff]
        %v812 = vld [vmem:[%s246 + $0xe48] sm:$0xff]
        %v813 = vld [vmem:[%s246 + $0xe50] sm:$0xff]
        %v814 = vld [vmem:[%s246 + $0xe58] sm:$0xff]
        %v815 = vld [vmem:[%s246 + $0xe60] sm:$0xff]
        %v816 = vld [vmem:[%s246 + $0xe68] sm:$0xff]
        %v817 = vld [vmem:[%s246 + $0xe70] sm:$0xff]
        %v818 = vld [vmem:[%s246 + $0xe78] sm:$0xff]
        %v819 = vld [vmem:[%s246 + $0xe80] sm:$0xff]
        %v820 = vld [vmem:[%s246 + $0xe88] sm:$0xff]
        %v821 = vld [vmem:[%s246 + $0xe90] sm:$0xff]
        %v822 = vld [vmem:[%s246 + $0xe98] sm:$0xff]
        %v823 = vld [vmem:[%s246 + $0xea0] sm:$0xff]
        %v824 = vld [vmem:[%s246 + $0xea8] sm:$0xff]
        %v825 = vld [vmem:[%s246 + $0xeb0] sm:$0xff]
        %v826 = vld [vmem:[%s246 + $0xeb8] sm:$0xff]
        %v827 = vld [vmem:[%s246 + $0xec0] sm:$0xff]
        %v828 = vld [vmem:[%s246 + $0xec8] sm:$0xff]
        %v829 = vld [vmem:[%s246 + $0xed0] sm:$0xff]
        %v830 = vld [vmem:[%s246 + $0xed8] sm:$0xff]
        %v831 = vld [vmem:[%s246 + $0xee0] sm:$0xff]
        %v832 = vld [vmem:[%s246 + $0xee8] sm:$0xff]
        %v833 = vld [vmem:[%s246 + $0xef0] sm:$0xff]
        %v834 = vld [vmem:[%s246 + $0xef8] sm:$0xff]
        %v835 = vld [vmem:[%s246 + $0xf00] sm:$0xff]
        %v836 = vld [vmem:[%s246 + $0xf08] sm:$0xff]
        %v837 = vld [vmem:[%s246 + $0xf10] sm:$0xff]
        %v838 = vld [vmem:[%s246 + $0xf18] sm:$0xff]
        %v839 = vld [vmem:[%s246 + $0xf20] sm:$0xff]
        %v840 = vld [vmem:[%s246 + $0xf28] sm:$0xff]
        %v841 = vld [vmem:[%s246 + $0xf30] sm:$0xff]
        %v842 = vld [vmem:[%s246 + $0xf38] sm:$0xff]
        %v843 = vld [vmem:[%s246 + $0xf40] sm:$0xff]
        %v844 = vld [vmem:[%s246 + $0xf48] sm:$0xff]
        %v845 = vld [vmem:[%s246 + $0xf50] sm:$0xff]
        %v846 = vld [vmem:[%s246 + $0xf58] sm:$0xff]
        %v847 = vld [vmem:[%s246 + $0xf60] sm:$0xff]
        %v848 = vld [vmem:[%s246 + $0xf68] sm:$0xff]
        %v849 = vld [vmem:[%s246 + $0xf70] sm:$0xff]
        %v850 = vld [vmem:[%s246 + $0xf78] sm:$0xff]
        %v851 = vld [vmem:[%s246 + $0xf80] sm:$0xff]
        %v852 = vld [vmem:[%s246 + $0xf88] sm:$0xff]
        %v853 = vld [vmem:[%s246 + $0xf90] sm:$0xff]
        %v854 = vld [vmem:[%s246 + $0xf98] sm:$0xff]
        %v855 = vld [vmem:[%s246 + $0xfa0] sm:$0xff]
        %v856 = vld [vmem:[%s246 + $0xfa8] sm:$0xff]
        %v857 = vld [vmem:[%s246 + $0xfb0] sm:$0xff]
        %v858 = vld [vmem:[%s246 + $0xfb8] sm:$0xff]
        %v859 = vld [vmem:[%s246 + $0xfc0] sm:$0xff]
        %v860 = vld [vmem:[%s246 + $0xfc8] sm:$0xff]
        %v861 = vld [vmem:[%s246 + $0xfd0] sm:$0xff]
        %v862 = vld [vmem:[%s246 + $0xfd8] sm:$0xff]
        %v863 = vld [vmem:[%s246 + $0xfe0] sm:$0xff]
        %v864 = vld [vmem:[%s246 + $0xfe8] sm:$0xff]
        %v865 = vld [vmem:[%s246 + $0xff0] sm:$0xff]
        %v866 = vld [vmem:[%s246 + $0xff8] sm:$0xff]
        %v867 = vld [vmem:[%s246 + $0x1000] sm:$0xff]
        %v868 = vld [vmem:[%s246 + $0x1008] sm:$0xff]
        %v869 = vld [vmem:[%s246 + $0x1010] sm:$0xff]
        %v870 = vld [vmem:[%s246 + $0x1018] sm:$0xff]
        %v871 = vld [vmem:[%s246 + $0x1020] sm:$0xff]
        %v872 = vld [vmem:[%s246 + $0x1028] sm:$0xff]
        %v873 = vld [vmem:[%s246 + $0x1030] sm:$0xff]
        %v874 = vld [vmem:[%s246 + $0x1038] sm:$0xff]
        %v875 = vld [vmem:[%s246 + $0x1040] sm:$0xff]
        %v876 = vld [vmem:[%s246 + $0x1048] sm:$0xff]
        %v877 = vld [vmem:[%s246 + $0x1050] sm:$0xff]
        %v878 = vld [vmem:[%s246 + $0x1058] sm:$0xff]
        %v879 = vld [vmem:[%s246 + $0x1060] sm:$0xff]
        %v880 = vld [vmem:[%s246 + $0x1068] sm:$0xff]
        %v881 = vld [vmem:[%s246 + $0x1070] sm:$0xff]
        %v882 = vld [vmem:[%s246 + $0x1078] sm:$0xff]
        %v883 = vld [vmem:[%s246 + $0x1080] sm:$0xff]
        %v884 = vld [vmem:[%s246 + $0x1088] sm:$0xff]
        %v885 = vld [vmem:[%s246 + $0x1090] sm:$0xff]
        %v886 = vld [vmem:[%s246 + $0x1098] sm:$0xff]
        %v887 = vld [vmem:[%s246 + $0x10a0] sm:$0xff]
        %v888 = vld [vmem:[%s246 + $0x10a8] sm:$0xff]
        %v889 = vld [vmem:[%s246 + $0x10b0] sm:$0xff]
        %v890 = vld [vmem:[%s246 + $0x10b8] sm:$0xff]
        %v891 = vld [vmem:[%s246 + $0x10c0] sm:$0xff]
        %v892 = vld [vmem:[%s246 + $0x10c8] sm:$0xff]
        %v893 = vld [vmem:[%s246 + $0x10d0] sm:$0xff]
        %v894 = vld [vmem:[%s246 + $0x10d8] sm:$0xff]
        %v895 = vld [vmem:[%s246 + $0x10e0] sm:$0xff]
        %v896 = vld [vmem:[%s246 + $0x10e8] sm:$0xff]
        %v897 = vld [vmem:[%s246 + $0x10f0] sm:$0xff]
        %v898 = vld [vmem:[%s246 + $0x10f8] sm:$0xff]
        %v899 = vld [vmem:[%s246 + $0x1100] sm:$0xff]
        %v900 = vld [vmem:[%s246 + $0x1108] sm:$0xff]
        %v901 = vld [vmem:[%s246 + $0x1110] sm:$0xff]
        %v902 = vld [vmem:[%s246 + $0x1118] sm:$0xff]
        %v903 = vld [vmem:[%s246 + $0x1120] sm:$0xff]
        %v904 = vld [vmem:[%s246 + $0x1128] sm:$0xff]
        %v905 = vld [vmem:[%s246 + $0x1130] sm:$0xff]
        %v906 = vld [vmem:[%s246 + $0x1138] sm:$0xff]
        %v907 = vld [vmem:[%s246 + $0x1140] sm:$0xff]
        %v908 = vld [vmem:[%s246 + $0x1148] sm:$0xff]
        %v909 = vld [vmem:[%s246 + $0x1150] sm:$0xff]
        %v910 = vld [vmem:[%s246 + $0x1158] sm:$0xff]
        %v911 = vld [vmem:[%s246 + $0x1160] sm:$0xff]
        %v912 = vld [vmem:[%s246 + $0x1168] sm:$0xff]
        %v913 = vld [vmem:[%s246 + $0x1170] sm:$0xff]
        %v914 = vld [vmem:[%s246 + $0x1178] sm:$0xff]
        %v915 = vld [vmem:[%s246 + $0x1180] sm:$0xff]
        %v916 = vld [vmem:[%s246 + $0x1188] sm:$0xff]
        %v917 = vld [vmem:[%s246 + $0x1190] sm:$0xff]
        %v918 = vld [vmem:[%s246 + $0x1198] sm:$0xff]
        %v919 = vld [vmem:[%s246 + $0x11a0] sm:$0xff]
        %v920 = vld [vmem:[%s246 + $0x11a8] sm:$0xff]
        %v921 = vld [vmem:[%s246 + $0x11b0] sm:$0xff]
        %v922 = vld [vmem:[%s246 + $0x11b8] sm:$0xff]
        %v923 = vld [vmem:[%s246 + $0x11c0] sm:$0xff]
        %v924 = vld [vmem:[%s246 + $0x11c8] sm:$0xff]
        %v925 = vld [vmem:[%s246 + $0x11d0] sm:$0xff]
        %v926 = vld [vmem:[%s246 + $0x11d8] sm:$0xff]
        %v927 = vld [vmem:[%s246 + $0x11e0] sm:$0xff]
        %v928 = vld [vmem:[%s246 + $0x11e8] sm:$0xff]
        %v929 = vld [vmem:[%s246 + $0x11f0] sm:$0xff]
        %v930 = vld [vmem:[%s246 + $0x11f8] sm:$0xff]
        %v931 = vld [vmem:[%s246 + $0x1200] sm:$0xff]
        %v932 = vld [vmem:[%s246 + $0x1208] sm:$0xff]
        %v933 = vld [vmem:[%s246 + $0x1210] sm:$0xff]
        %v934 = vld [vmem:[%s246 + $0x1218] sm:$0xff]
        %v935 = vld [vmem:[%s246 + $0x1220] sm:$0xff]
        %v936 = vld [vmem:[%s246 + $0x1228] sm:$0xff]
        %v937 = vld [vmem:[%s246 + $0x1230] sm:$0xff]
        %v938 = vld [vmem:[%s246 + $0x1238] sm:$0xff]
        %v939 = vld [vmem:[%s246 + $0x1240] sm:$0xff]
        %v940 = vld [vmem:[%s246 + $0x1248] sm:$0xff]
        %v941 = vld [vmem:[%s246 + $0x1250] sm:$0xff]
        %v942 = vld [vmem:[%s246 + $0x1258] sm:$0xff]
        %v943 = vld [vmem:[%s246 + $0x1260] sm:$0xff]
        %v944 = vld [vmem:[%s246 + $0x1268] sm:$0xff]
        %v945 = vld [vmem:[%s246 + $0x1270] sm:$0xff]
        %v946 = vld [vmem:[%s246 + $0x1278] sm:$0xff]
        %v947 = vld [vmem:[%s246 + $0x1280] sm:$0xff]
        %v948 = vld [vmem:[%s246 + $0x1288] sm:$0xff]
        %v949 = vld [vmem:[%s246 + $0x1290] sm:$0xff]
        %v950 = vld [vmem:[%s246 + $0x1298] sm:$0xff]
        %v951 = vld [vmem:[%s246 + $0x12a0] sm:$0xff]
        %v952 = vld [vmem:[%s246 + $0x12a8] sm:$0xff]
        %v953 = vld [vmem:[%s246 + $0x12b0] sm:$0xff]
        %v954 = vld [vmem:[%s246 + $0x12b8] sm:$0xff]
        %v955 = vld [vmem:[%s246 + $0x12c0] sm:$0xff]
        %v956 = vld [vmem:[%s246 + $0x12c8] sm:$0xff]
        %v957 = vld [vmem:[%s246 + $0x12d0] sm:$0xff]
        %v958 = vld [vmem:[%s246 + $0x12d8] sm:$0xff]
        %v959 = vld [vmem:[%s246 + $0x12e0] sm:$0xff]
        %v960 = vld [vmem:[%s246 + $0x12e8] sm:$0xff]
        %v961 = vld [vmem:[%s246 + $0x12f0] sm:$0xff]
        %v962 = vld [vmem:[%s246 + $0x12f8] sm:$0xff]
        %v963 = vld [vmem:[%s246 + $0x1300] sm:$0xff]
        %v964 = vld [vmem:[%s246 + $0x1308] sm:$0xff]
        %v965 = vld [vmem:[%s246 + $0x1310] sm:$0xff]
        %v966 = vld [vmem:[%s246 + $0x1318] sm:$0xff]
        %v967 = vld [vmem:[%s246 + $0x1320] sm:$0xff]
        %v968 = vld [vmem:[%s246 + $0x1328] sm:$0xff]
        %v969 = vld [vmem:[%s246 + $0x1330] sm:$0xff]
        %v970 = vld [vmem:[%s246 + $0x1338] sm:$0xff]
        %v971 = vld [vmem:[%s246 + $0x1340] sm:$0xff]
        %v972 = vld [vmem:[%s246 + $0x1348] sm:$0xff]
        %v973 = vld [vmem:[%s246 + $0x1350] sm:$0xff]
        %v974 = vld [vmem:[%s246 + $0x1358] sm:$0xff]
        %v975 = vld [vmem:[%s246 + $0x1360] sm:$0xff]
        %v976 = vld [vmem:[%s246 + $0x1368] sm:$0xff]
        %v977 = vld [vmem:[%s246 + $0x1370] sm:$0xff]
        %v978 = vld [vmem:[%s246 + $0x1378] sm:$0xff]
        %v979 = vld [vmem:[%s246 + $0x1380] sm:$0xff]
        %v980 = vld [vmem:[%s246 + $0x1388] sm:$0xff]
        %v981 = vld [vmem:[%s246 + $0x1390] sm:$0xff]
        %v982 = vld [vmem:[%s246 + $0x1398] sm:$0xff]
        %v983 = vld [vmem:[%s246 + $0x13a0] sm:$0xff]
        %v984 = vld [vmem:[%s246 + $0x13a8] sm:$0xff]
        %v985 = vld [vmem:[%s246 + $0x13b0] sm:$0xff]
        %v986 = vld [vmem:[%s246 + $0x13b8] sm:$0xff]
        %v987 = vld [vmem:[%s246 + $0x13c0] sm:$0xff]
        %v988 = vld [vmem:[%s246 + $0x13c8] sm:$0xff]
        %v989 = vld [vmem:[%s246 + $0x13d0] sm:$0xff]
        %v990 = vld [vmem:[%s246 + $0x13d8] sm:$0xff]
        %v991 = vld [vmem:[%s246 + $0x13e0] sm:$0xff]
        %v992 = vld [vmem:[%s246 + $0x13e8] sm:$0xff]
        %v993 = vld [vmem:[%s246 + $0x13f0] sm:$0xff]
        %v994 = vld [vmem:[%s246 + $0x13f8] sm:$0xff]
        %v995 = vld [vmem:[%s246 + $0x1400] sm:$0xff]
        %v996 = vld [vmem:[%s246 + $0x1408] sm:$0xff]
        %v997 = vld [vmem:[%s246 + $0x1410] sm:$0xff]
        %v998 = vld [vmem:[%s246 + $0x1418] sm:$0xff]
        %v999 = vld [vmem:[%s246 + $0x1420] sm:$0xff]
        %v1000 = vld [vmem:[%s246 + $0x1428] sm:$0xff]
        %v1001 = vld [vmem:[%s246 + $0x1430] sm:$0xff]
        %v1002 = vld [vmem:[%s246 + $0x1438] sm:$0xff]
        %v1003 = vld [vmem:[%s246 + $0x1440] sm:$0xff]
        %v1004 = vld [vmem:[%s246 + $0x1448] sm:$0xff]
        %v1005 = vld [vmem:[%s246 + $0x1450] sm:$0xff]
        %v1006 = vld [vmem:[%s246 + $0x1458] sm:$0xff]
        %v1007 = vld [vmem:[%s246 + $0x1460] sm:$0xff]
        %v1008 = vld [vmem:[%s246 + $0x1468] sm:$0xff]
        %v1009 = vld [vmem:[%s246 + $0x1470] sm:$0xff]
        %v1010 = vld [vmem:[%s246 + $0x1478] sm:$0xff]
        %v1011 = vld [vmem:[%s246 + $0x1480] sm:$0xff]
        %v1012 = vld [vmem:[%s246 + $0x1488] sm:$0xff]
        %v1013 = vld [vmem:[%s246 + $0x1490] sm:$0xff]
        %v1014 = vld [vmem:[%s246 + $0x1498] sm:$0xff]
        %v1015 = vld [vmem:[%s246 + $0x14a0] sm:$0xff]
        %v1016 = vld [vmem:[%s246 + $0x14a8] sm:$0xff]
        %v1017 = vld [vmem:[%s246 + $0x14b0] sm:$0xff]
        %v1018 = vld [vmem:[%s246 + $0x14b8] sm:$0xff]
        %v1019 = vld [vmem:[%s246 + $0x14c0] sm:$0xff]
        %v1020 = vld [vmem:[%s246 + $0x14c8] sm:$0xff]
        %v1021 = vld [vmem:[%s246 + $0x14d0] sm:$0xff]
        %v1022 = vld [vmem:[%s246 + $0x14d8] sm:$0xff]
        %v1023 = vld [vmem:[%s246 + $0x14e0] sm:$0xff]
        %v1024 = vld [vmem:[%s246 + $0x14e8] sm:$0xff]
        %v1025 = vld [vmem:[%s246 + $0x14f0] sm:$0xff]
        %v1026 = vld [vmem:[%s246 + $0x14f8] sm:$0xff]
        %v1027 = vld [vmem:[%s246 + $0x1500] sm:$0xff]
        %v1028 = vld [vmem:[%s246 + $0x1508] sm:$0xff]
        %v1029 = vld [vmem:[%s246 + $0x1510] sm:$0xff]
        %v1030 = vld [vmem:[%s246 + $0x1518] sm:$0xff]
        %v1031 = vld [vmem:[%s246 + $0x1520] sm:$0xff]
        %v1032 = vld [vmem:[%s246 + $0x1528] sm:$0xff]
        %v1033 = vld [vmem:[%s246 + $0x1530] sm:$0xff]
        %v1034 = vld [vmem:[%s246 + $0x1538] sm:$0xff]
        %v1035 = vld [vmem:[%s246 + $0x1540] sm:$0xff]
        %v1036 = vld [vmem:[%s246 + $0x1548] sm:$0xff]
        %v1037 = vld [vmem:[%s246 + $0x1550] sm:$0xff]
        %v1038 = vld [vmem:[%s246 + $0x1558] sm:$0xff]
        %v1039 = vld [vmem:[%s246 + $0x1560] sm:$0xff]
        %v1040 = vld [vmem:[%s246 + $0x1568] sm:$0xff]
        %v1041 = vld [vmem:[%s246 + $0x1570] sm:$0xff]
        %v1042 = vld [vmem:[%s246 + $0x1578] sm:$0xff]
        %v1043 = vld [vmem:[%s246 + $0x1580] sm:$0xff]
        %v1044 = vld [vmem:[%s246 + $0x1588] sm:$0xff]
        %v1045 = vld [vmem:[%s246 + $0x1590] sm:$0xff]
        %v1046 = vld [vmem:[%s246 + $0x1598] sm:$0xff]
        %v1047 = vld [vmem:[%s246 + $0x15a0] sm:$0xff]
        %v1048 = vld [vmem:[%s246 + $0x15a8] sm:$0xff]
        %v1049 = vld [vmem:[%s246 + $0x15b0] sm:$0xff]
        %v1050 = vld [vmem:[%s246 + $0x15b8] sm:$0xff]
        %v1051 = vld [vmem:[%s246 + $0x15c0] sm:$0xff]
        %v1052 = vld [vmem:[%s246 + $0x15c8] sm:$0xff]
        %v1053 = vld [vmem:[%s246 + $0x15d0] sm:$0xff]
        %v1054 = vld [vmem:[%s246 + $0x15d8] sm:$0xff]
        %v1055 = vld [vmem:[%s246 + $0x15e0] sm:$0xff]
        %v1056 = vld [vmem:[%s246 + $0x15e8] sm:$0xff]
        %v1057 = vld [vmem:[%s246 + $0x15f0] sm:$0xff]
        %v1058 = vld [vmem:[%s246 + $0x15f8] sm:$0xff]
        %v1059 = vld [vmem:[%s246 + $0x1600] sm:$0xff]
        %v1060 = vld [vmem:[%s246 + $0x1608] sm:$0xff]
        %v1061 = vld [vmem:[%s246 + $0x1610] sm:$0xff]
        %v1062 = vld [vmem:[%s246 + $0x1618] sm:$0xff]
        %v1063 = vld [vmem:[%s246 + $0x1620] sm:$0xff]
        %v1064 = vld [vmem:[%s246 + $0x1628] sm:$0xff]
        %v1065 = vld [vmem:[%s246 + $0x1630] sm:$0xff]
        %v1066 = vld [vmem:[%s246 + $0x1638] sm:$0xff]
        %v1067 = vld [vmem:[%s246 + $0x1640] sm:$0xff]
        %v1068 = vld [vmem:[%s246 + $0x1648] sm:$0xff]
        %v1069 = vld [vmem:[%s246 + $0x1650] sm:$0xff]
        %v1070 = vld [vmem:[%s246 + $0x1658] sm:$0xff]
        %v1071 = vld [vmem:[%s246 + $0x1660] sm:$0xff]
        %v1072 = vld [vmem:[%s246 + $0x1668] sm:$0xff]
        %v1073 = vld [vmem:[%s246 + $0x1670] sm:$0xff]
        %v1074 = vld [vmem:[%s246 + $0x1678] sm:$0xff]
        %v1075 = vld [vmem:[%s246 + $0x1680] sm:$0xff]
        %v1076 = vld [vmem:[%s246 + $0x1688] sm:$0xff]
        %v1077 = vld [vmem:[%s246 + $0x1690] sm:$0xff]
        %v1078 = vld [vmem:[%s246 + $0x1698] sm:$0xff]
        %v1079 = vld [vmem:[%s246 + $0x16a0] sm:$0xff]
        %v1080 = vld [vmem:[%s246 + $0x16a8] sm:$0xff]
        %v1081 = vld [vmem:[%s246 + $0x16b0] sm:$0xff]
        %v1082 = vld [vmem:[%s246 + $0x16b8] sm:$0xff]
        %v1083 = vld [vmem:[%s246 + $0x16c0] sm:$0xff]
        %v1084 = vld [vmem:[%s246 + $0x16c8] sm:$0xff]
        %v1085 = vld [vmem:[%s246 + $0x16d0] sm:$0xff]
        %v1086 = vld [vmem:[%s246 + $0x16d8] sm:$0xff]
        %v1087 = vld [vmem:[%s246 + $0x16e0] sm:$0xff]
        %v1088 = vld [vmem:[%s246 + $0x16e8] sm:$0xff]
        %v1089 = vld [vmem:[%s246 + $0x16f0] sm:$0xff]
        %v1090 = vld [vmem:[%s246 + $0x16f8] sm:$0xff]
        %v1091 = vld [vmem:[%s246 + $0x1700] sm:$0xff]
        %v1092 = vld [vmem:[%s246 + $0x1708] sm:$0xff]
        %v1093 = vld [vmem:[%s246 + $0x1710] sm:$0xff]
        %v1094 = vld [vmem:[%s246 + $0x1718] sm:$0xff]
        %v1095 = vld [vmem:[%s246 + $0x1720] sm:$0xff]
        %v1096 = vld [vmem:[%s246 + $0x1728] sm:$0xff]
        %v1097 = vld [vmem:[%s246 + $0x1730] sm:$0xff]
        %v1098 = vld [vmem:[%s246 + $0x1738] sm:$0xff]
        %v1099 = vld [vmem:[%s246 + $0x1740] sm:$0xff]
        %v1100 = vld [vmem:[%s246 + $0x1748] sm:$0xff]
        %v1101 = vld [vmem:[%s246 + $0x1750] sm:$0xff]
        %v1102 = vld [vmem:[%s246 + $0x1758] sm:$0xff]
        %v1103 = vld [vmem:[%s246 + $0x1760] sm:$0xff]
        %v1104 = vld [vmem:[%s246 + $0x1768] sm:$0xff]
        %v1105 = vld [vmem:[%s246 + $0x1770] sm:$0xff]
        %v1106 = vld [vmem:[%s246 + $0x1778] sm:$0xff]
        %v1107 = vld [vmem:[%s246 + $0x1780] sm:$0xff]
        %v1108 = vld [vmem:[%s246 + $0x1788] sm:$0xff]
        %v1109 = vld [vmem:[%s246 + $0x1790] sm:$0xff]
        %v1110 = vld [vmem:[%s246 + $0x1798] sm:$0xff]
        %v1111 = vld [vmem:[%s246 + $0x17a0] sm:$0xff]
        %v1112 = vld [vmem:[%s246 + $0x17a8] sm:$0xff]
        %v1113 = vld [vmem:[%s246 + $0x17b0] sm:$0xff]
        %v1114 = vld [vmem:[%s246 + $0x17b8] sm:$0xff]
        %v1115 = vld [vmem:[%s246 + $0x17c0] sm:$0xff]
        %v1116 = vld [vmem:[%s246 + $0x17c8] sm:$0xff]
        %v1117 = vld [vmem:[%s246 + $0x17d0] sm:$0xff]
        %v1118 = vld [vmem:[%s246 + $0x17d8] sm:$0xff]
        %v1119 = vld [vmem:[%s246 + $0x17e0] sm:$0xff]
        %v1120 = vld [vmem:[%s246 + $0x17e8] sm:$0xff]
        %v1121 = vld [vmem:[%s246 + $0x17f0] sm:$0xff]
        %v1122 = vld [vmem:[%s246 + $0x17f8] sm:$0xff]
        %v1123 = vunpack.c.l.s8.bf16 %v355
        %v1124 = vunpack.c.l.s8.bf16 %v356
        %v1125 = vunpack.c.l.s8.bf16 %v357
        %v1126 = vunpack.c.l.s8.bf16 %v358
        %v1127 = vunpack.c.l.s8.bf16 %v359
        %v1128 = vunpack.c.l.s8.bf16 %v360
        %v1129 = vunpack.c.l.s8.bf16 %v361
        %v1130 = vunpack.c.l.s8.bf16 %v362
        %v1131 = vunpack.c.h.s8.bf16 %v355
        %v1132 = vunpack.c.h.s8.bf16 %v356
        %v1133 = vunpack.c.h.s8.bf16 %v357
        %v1134 = vunpack.c.h.s8.bf16 %v358
        %v1135 = vunpack.c.h.s8.bf16 %v359
        %v1136 = vunpack.c.h.s8.bf16 %v360
        %v1137 = vunpack.c.h.s8.bf16 %v361
        %v1138 = vunpack.c.h.s8.bf16 %v362
        %v1139 = vunpack.c.l.s8.bf16 %v363
        %v1140 = vunpack.c.l.s8.bf16 %v364
        %v1141 = vunpack.c.l.s8.bf16 %v365
        %v1142 = vunpack.c.l.s8.bf16 %v366
        %v1143 = vunpack.c.l.s8.bf16 %v367
        %v1144 = vunpack.c.l.s8.bf16 %v368
        %v1145 = vunpack.c.l.s8.bf16 %v369
        %v1146 = vunpack.c.l.s8.bf16 %v370
        %v1147 = vunpack.c.h.s8.bf16 %v363
        %v1148 = vunpack.c.h.s8.bf16 %v364
        %v1149 = vunpack.c.h.s8.bf16 %v365
        %v1150 = vunpack.c.h.s8.bf16 %v366
        %v1151 = vunpack.c.h.s8.bf16 %v367
        %v1152 = vunpack.c.h.s8.bf16 %v368
        %v1153 = vunpack.c.h.s8.bf16 %v369
        %v1154 = vunpack.c.h.s8.bf16 %v370
        %v1155 = vunpack.c.l.s8.bf16 %v371
        %v1156 = vunpack.c.l.s8.bf16 %v372
        %v1157 = vunpack.c.l.s8.bf16 %v373
        %v1158 = vunpack.c.l.s8.bf16 %v374
        %v1159 = vunpack.c.l.s8.bf16 %v375
        %v1160 = vunpack.c.l.s8.bf16 %v376
        %v1161 = vunpack.c.l.s8.bf16 %v377
        %v1162 = vunpack.c.l.s8.bf16 %v378
        %v1163 = vunpack.c.h.s8.bf16 %v371
        %v1164 = vunpack.c.h.s8.bf16 %v372
        %v1165 = vunpack.c.h.s8.bf16 %v373
        %v1166 = vunpack.c.h.s8.bf16 %v374
        %v1167 = vunpack.c.h.s8.bf16 %v375
        %v1168 = vunpack.c.h.s8.bf16 %v376
        %v1169 = vunpack.c.h.s8.bf16 %v377
        %v1170 = vunpack.c.h.s8.bf16 %v378
        %v1171 = vunpack.c.l.s8.bf16 %v379
        %v1172 = vunpack.c.l.s8.bf16 %v380
        %v1173 = vunpack.c.l.s8.bf16 %v381
        %v1174 = vunpack.c.l.s8.bf16 %v382
        %v1175 = vunpack.c.l.s8.bf16 %v383
        %v1176 = vunpack.c.l.s8.bf16 %v384
        %v1177 = vunpack.c.l.s8.bf16 %v385
        %v1178 = vunpack.c.l.s8.bf16 %v386
        %v1179 = vunpack.c.h.s8.bf16 %v379
        %v1180 = vunpack.c.h.s8.bf16 %v380
        %v1181 = vunpack.c.h.s8.bf16 %v381
        %v1182 = vunpack.c.h.s8.bf16 %v382
        %v1183 = vunpack.c.h.s8.bf16 %v383
        %v1184 = vunpack.c.h.s8.bf16 %v384
        %v1185 = vunpack.c.h.s8.bf16 %v385
        %v1186 = vunpack.c.h.s8.bf16 %v386
        %v1187 = vunpack.c.l.s8.bf16 %v387
        %v1188 = vunpack.c.l.s8.bf16 %v388
        %v1189 = vunpack.c.l.s8.bf16 %v389
        %v1190 = vunpack.c.l.s8.bf16 %v390
        %v1191 = vunpack.c.l.s8.bf16 %v391
        %v1192 = vunpack.c.l.s8.bf16 %v392
        %v1193 = vunpack.c.l.s8.bf16 %v393
        %v1194 = vunpack.c.l.s8.bf16 %v394
        %v1195 = vunpack.c.h.s8.bf16 %v387
        %v1196 = vunpack.c.h.s8.bf16 %v388
        %v1197 = vunpack.c.h.s8.bf16 %v389
        %v1198 = vunpack.c.h.s8.bf16 %v390
        %v1199 = vunpack.c.h.s8.bf16 %v391
        %v1200 = vunpack.c.h.s8.bf16 %v392
        %v1201 = vunpack.c.h.s8.bf16 %v393
        %v1202 = vunpack.c.h.s8.bf16 %v394
        %v1203 = vunpack.c.l.s8.bf16 %v395
        %v1204 = vunpack.c.l.s8.bf16 %v396
        %v1205 = vunpack.c.l.s8.bf16 %v397
        %v1206 = vunpack.c.l.s8.bf16 %v398
        %v1207 = vunpack.c.l.s8.bf16 %v399
        %v1208 = vunpack.c.l.s8.bf16 %v400
        %v1209 = vunpack.c.l.s8.bf16 %v401
        %v1210 = vunpack.c.l.s8.bf16 %v402
        %v1211 = vunpack.c.h.s8.bf16 %v395
        %v1212 = vunpack.c.h.s8.bf16 %v396
        %v1213 = vunpack.c.h.s8.bf16 %v397
        %v1214 = vunpack.c.h.s8.bf16 %v398
        %v1215 = vunpack.c.h.s8.bf16 %v399
        %v1216 = vunpack.c.h.s8.bf16 %v400
        %v1217 = vunpack.c.h.s8.bf16 %v401
        %v1218 = vunpack.c.h.s8.bf16 %v402
        %v1219 = vunpack.c.l.s8.bf16 %v403
        %v1220 = vunpack.c.l.s8.bf16 %v404
        %v1221 = vunpack.c.l.s8.bf16 %v405
        %v1222 = vunpack.c.l.s8.bf16 %v406
        %v1223 = vunpack.c.l.s8.bf16 %v407
        %v1224 = vunpack.c.l.s8.bf16 %v408
        %v1225 = vunpack.c.l.s8.bf16 %v409
        %v1226 = vunpack.c.l.s8.bf16 %v410
        %v1227 = vunpack.c.h.s8.bf16 %v403
        %v1228 = vunpack.c.h.s8.bf16 %v404
        %v1229 = vunpack.c.h.s8.bf16 %v405
        %v1230 = vunpack.c.h.s8.bf16 %v406
        %v1231 = vunpack.c.h.s8.bf16 %v407
        %v1232 = vunpack.c.h.s8.bf16 %v408
        %v1233 = vunpack.c.h.s8.bf16 %v409
        %v1234 = vunpack.c.h.s8.bf16 %v410
        %v1235 = vunpack.c.l.s8.bf16 %v411
        %v1236 = vunpack.c.l.s8.bf16 %v412
        %v1237 = vunpack.c.l.s8.bf16 %v413
        %v1238 = vunpack.c.l.s8.bf16 %v414
        %v1239 = vunpack.c.l.s8.bf16 %v415
        %v1240 = vunpack.c.l.s8.bf16 %v416
        %v1241 = vunpack.c.l.s8.bf16 %v417
        %v1242 = vunpack.c.l.s8.bf16 %v418
        %v1243 = vunpack.c.h.s8.bf16 %v411
        %v1244 = vunpack.c.h.s8.bf16 %v412
        %v1245 = vunpack.c.h.s8.bf16 %v413
        %v1246 = vunpack.c.h.s8.bf16 %v414
        %v1247 = vunpack.c.h.s8.bf16 %v415
        %v1248 = vunpack.c.h.s8.bf16 %v416
        %v1249 = vunpack.c.h.s8.bf16 %v417
        %v1250 = vunpack.c.h.s8.bf16 %v418
        %v1251 = vunpack.c.l.s8.bf16 %v419
        %v1252 = vunpack.c.l.s8.bf16 %v420
        %v1253 = vunpack.c.l.s8.bf16 %v421
        %v1254 = vunpack.c.l.s8.bf16 %v422
        %v1255 = vunpack.c.l.s8.bf16 %v423
        %v1256 = vunpack.c.l.s8.bf16 %v424
        %v1257 = vunpack.c.l.s8.bf16 %v425
        %v1258 = vunpack.c.l.s8.bf16 %v426
        %v1259 = vunpack.c.h.s8.bf16 %v419
        %v1260 = vunpack.c.h.s8.bf16 %v420
        %v1261 = vunpack.c.h.s8.bf16 %v421
        %v1262 = vunpack.c.h.s8.bf16 %v422
        %v1263 = vunpack.c.h.s8.bf16 %v423
        %v1264 = vunpack.c.h.s8.bf16 %v424
        %v1265 = vunpack.c.h.s8.bf16 %v425
        %v1266 = vunpack.c.h.s8.bf16 %v426
        %v1267 = vunpack.c.l.s8.bf16 %v427
        %v1268 = vunpack.c.l.s8.bf16 %v428
        %v1269 = vunpack.c.l.s8.bf16 %v429
        %v1270 = vunpack.c.l.s8.bf16 %v430
        %v1271 = vunpack.c.l.s8.bf16 %v431
        %v1272 = vunpack.c.l.s8.bf16 %v432
        %v1273 = vunpack.c.l.s8.bf16 %v433
        %v1274 = vunpack.c.l.s8.bf16 %v434
        %v1275 = vunpack.c.h.s8.bf16 %v427
        %v1276 = vunpack.c.h.s8.bf16 %v428
        %v1277 = vunpack.c.h.s8.bf16 %v429
        %v1278 = vunpack.c.h.s8.bf16 %v430
        %v1279 = vunpack.c.h.s8.bf16 %v431
        %v1280 = vunpack.c.h.s8.bf16 %v432
        %v1281 = vunpack.c.h.s8.bf16 %v433
        %v1282 = vunpack.c.h.s8.bf16 %v434
        %v1283 = vunpack.c.l.s8.bf16 %v435
        %v1284 = vunpack.c.l.s8.bf16 %v436
        %v1285 = vunpack.c.l.s8.bf16 %v437
        %v1286 = vunpack.c.l.s8.bf16 %v438
        %v1287 = vunpack.c.l.s8.bf16 %v439
        %v1288 = vunpack.c.l.s8.bf16 %v440
        %v1289 = vunpack.c.l.s8.bf16 %v441
        %v1290 = vunpack.c.l.s8.bf16 %v442
        %v1291 = vunpack.c.h.s8.bf16 %v435
        %v1292 = vunpack.c.h.s8.bf16 %v436
        %v1293 = vunpack.c.h.s8.bf16 %v437
        %v1294 = vunpack.c.h.s8.bf16 %v438
        %v1295 = vunpack.c.h.s8.bf16 %v439
        %v1296 = vunpack.c.h.s8.bf16 %v440
        %v1297 = vunpack.c.h.s8.bf16 %v441
        %v1298 = vunpack.c.h.s8.bf16 %v442
        %v1299 = vunpack.c.l.s8.bf16 %v443
        %v1300 = vunpack.c.l.s8.bf16 %v444
        %v1301 = vunpack.c.l.s8.bf16 %v445
        %v1302 = vunpack.c.l.s8.bf16 %v446
        %v1303 = vunpack.c.l.s8.bf16 %v447
        %v1304 = vunpack.c.l.s8.bf16 %v448
        %v1305 = vunpack.c.l.s8.bf16 %v449
        %v1306 = vunpack.c.l.s8.bf16 %v450
        %v1307 = vunpack.c.h.s8.bf16 %v443
        %v1308 = vunpack.c.h.s8.bf16 %v444
        %v1309 = vunpack.c.h.s8.bf16 %v445
        %v1310 = vunpack.c.h.s8.bf16 %v446
        %v1311 = vunpack.c.h.s8.bf16 %v447
        %v1312 = vunpack.c.h.s8.bf16 %v448
        %v1313 = vunpack.c.h.s8.bf16 %v449
        %v1314 = vunpack.c.h.s8.bf16 %v450
        %v1315 = vunpack.c.l.s8.bf16 %v451
        %v1316 = vunpack.c.l.s8.bf16 %v452
        %v1317 = vunpack.c.l.s8.bf16 %v453
        %v1318 = vunpack.c.l.s8.bf16 %v454
        %v1319 = vunpack.c.l.s8.bf16 %v455
        %v1320 = vunpack.c.l.s8.bf16 %v456
        %v1321 = vunpack.c.l.s8.bf16 %v457
        %v1322 = vunpack.c.l.s8.bf16 %v458
        %v1323 = vunpack.c.h.s8.bf16 %v451
        %v1324 = vunpack.c.h.s8.bf16 %v452
        %v1325 = vunpack.c.h.s8.bf16 %v453
        %v1326 = vunpack.c.h.s8.bf16 %v454
        %v1327 = vunpack.c.h.s8.bf16 %v455
        %v1328 = vunpack.c.h.s8.bf16 %v456
        %v1329 = vunpack.c.h.s8.bf16 %v457
        %v1330 = vunpack.c.h.s8.bf16 %v458
        %v1331 = vunpack.c.l.s8.bf16 %v459
        %v1332 = vunpack.c.l.s8.bf16 %v460
        %v1333 = vunpack.c.l.s8.bf16 %v461
        %v1334 = vunpack.c.l.s8.bf16 %v462
        %v1335 = vunpack.c.l.s8.bf16 %v463
        %v1336 = vunpack.c.l.s8.bf16 %v464
        %v1337 = vunpack.c.l.s8.bf16 %v465
        %v1338 = vunpack.c.l.s8.bf16 %v466
        %v1339 = vunpack.c.h.s8.bf16 %v459
        %v1340 = vunpack.c.h.s8.bf16 %v460
        %v1341 = vunpack.c.h.s8.bf16 %v461
        %v1342 = vunpack.c.h.s8.bf16 %v462
        %v1343 = vunpack.c.h.s8.bf16 %v463
        %v1344 = vunpack.c.h.s8.bf16 %v464
        %v1345 = vunpack.c.h.s8.bf16 %v465
        %v1346 = vunpack.c.h.s8.bf16 %v466
        %v1347 = vunpack.c.l.s8.bf16 %v467
        %v1348 = vunpack.c.l.s8.bf16 %v468
        %v1349 = vunpack.c.l.s8.bf16 %v469
        %v1350 = vunpack.c.l.s8.bf16 %v470
        %v1351 = vunpack.c.l.s8.bf16 %v471
        %v1352 = vunpack.c.l.s8.bf16 %v472
        %v1353 = vunpack.c.l.s8.bf16 %v473
        %v1354 = vunpack.c.l.s8.bf16 %v474
        %v1355 = vunpack.c.h.s8.bf16 %v467
        %v1356 = vunpack.c.h.s8.bf16 %v468
        %v1357 = vunpack.c.h.s8.bf16 %v469
        %v1358 = vunpack.c.h.s8.bf16 %v470
        %v1359 = vunpack.c.h.s8.bf16 %v471
        %v1360 = vunpack.c.h.s8.bf16 %v472
        %v1361 = vunpack.c.h.s8.bf16 %v473
        %v1362 = vunpack.c.h.s8.bf16 %v474
        %v1363 = vunpack.c.l.s8.bf16 %v475
        %v1364 = vunpack.c.l.s8.bf16 %v476
        %v1365 = vunpack.c.l.s8.bf16 %v477
        %v1366 = vunpack.c.l.s8.bf16 %v478
        %v1367 = vunpack.c.l.s8.bf16 %v479
        %v1368 = vunpack.c.l.s8.bf16 %v480
        %v1369 = vunpack.c.l.s8.bf16 %v481
        %v1370 = vunpack.c.l.s8.bf16 %v482
        %v1371 = vunpack.c.h.s8.bf16 %v475
        %v1372 = vunpack.c.h.s8.bf16 %v476
        %v1373 = vunpack.c.h.s8.bf16 %v477
        %v1374 = vunpack.c.h.s8.bf16 %v478
        %v1375 = vunpack.c.h.s8.bf16 %v479
        %v1376 = vunpack.c.h.s8.bf16 %v480
        %v1377 = vunpack.c.h.s8.bf16 %v481
        %v1378 = vunpack.c.h.s8.bf16 %v482
        %v1379 = vunpack.c.l.s8.bf16 %v483
        %v1380 = vunpack.c.l.s8.bf16 %v484
        %v1381 = vunpack.c.l.s8.bf16 %v485
        %v1382 = vunpack.c.l.s8.bf16 %v486
        %v1383 = vunpack.c.l.s8.bf16 %v487
        %v1384 = vunpack.c.l.s8.bf16 %v488
        %v1385 = vunpack.c.l.s8.bf16 %v489
        %v1386 = vunpack.c.l.s8.bf16 %v490
        %v1387 = vunpack.c.h.s8.bf16 %v483
        %v1388 = vunpack.c.h.s8.bf16 %v484
        %v1389 = vunpack.c.h.s8.bf16 %v485
        %v1390 = vunpack.c.h.s8.bf16 %v486
        %v1391 = vunpack.c.h.s8.bf16 %v487
        %v1392 = vunpack.c.h.s8.bf16 %v488
        %v1393 = vunpack.c.h.s8.bf16 %v489
        %v1394 = vunpack.c.h.s8.bf16 %v490
        %v1395 = vunpack.c.l.s8.bf16 %v491
        %v1396 = vunpack.c.l.s8.bf16 %v492
        %v1397 = vunpack.c.l.s8.bf16 %v493
        %v1398 = vunpack.c.l.s8.bf16 %v494
        %v1399 = vunpack.c.l.s8.bf16 %v495
        %v1400 = vunpack.c.l.s8.bf16 %v496
        %v1401 = vunpack.c.l.s8.bf16 %v497
        %v1402 = vunpack.c.l.s8.bf16 %v498
        %v1403 = vunpack.c.h.s8.bf16 %v491
        %v1404 = vunpack.c.h.s8.bf16 %v492
        %v1405 = vunpack.c.h.s8.bf16 %v493
        %v1406 = vunpack.c.h.s8.bf16 %v494
        %v1407 = vunpack.c.h.s8.bf16 %v495
        %v1408 = vunpack.c.h.s8.bf16 %v496
        %v1409 = vunpack.c.h.s8.bf16 %v497
        %v1410 = vunpack.c.h.s8.bf16 %v498
        %v1411 = vunpack.c.l.s8.bf16 %v499
        %v1412 = vunpack.c.l.s8.bf16 %v500
        %v1413 = vunpack.c.l.s8.bf16 %v501
        %v1414 = vunpack.c.l.s8.bf16 %v502
        %v1415 = vunpack.c.l.s8.bf16 %v503
        %v1416 = vunpack.c.l.s8.bf16 %v504
        %v1417 = vunpack.c.l.s8.bf16 %v505
        %v1418 = vunpack.c.l.s8.bf16 %v506
        %v1419 = vunpack.c.h.s8.bf16 %v499
        %v1420 = vunpack.c.h.s8.bf16 %v500
        %v1421 = vunpack.c.h.s8.bf16 %v501
        %v1422 = vunpack.c.h.s8.bf16 %v502
        %v1423 = vunpack.c.h.s8.bf16 %v503
        %v1424 = vunpack.c.h.s8.bf16 %v504
        %v1425 = vunpack.c.h.s8.bf16 %v505
        %v1426 = vunpack.c.h.s8.bf16 %v506
        %v1427 = vunpack.c.l.s8.bf16 %v507
        %v1428 = vunpack.c.l.s8.bf16 %v508
        %v1429 = vunpack.c.l.s8.bf16 %v509
        %v1430 = vunpack.c.l.s8.bf16 %v510
        %v1431 = vunpack.c.l.s8.bf16 %v511
        %v1432 = vunpack.c.l.s8.bf16 %v512
        %v1433 = vunpack.c.l.s8.bf16 %v513
        %v1434 = vunpack.c.l.s8.bf16 %v514
        %v1435 = vunpack.c.h.s8.bf16 %v507
        %v1436 = vunpack.c.h.s8.bf16 %v508
        %v1437 = vunpack.c.h.s8.bf16 %v509
        %v1438 = vunpack.c.h.s8.bf16 %v510
        %v1439 = vunpack.c.h.s8.bf16 %v511
        %v1440 = vunpack.c.h.s8.bf16 %v512
        %v1441 = vunpack.c.h.s8.bf16 %v513
        %v1442 = vunpack.c.h.s8.bf16 %v514
        %v1443 = vunpack.c.l.s8.bf16 %v515
        %v1444 = vunpack.c.l.s8.bf16 %v516
        %v1445 = vunpack.c.l.s8.bf16 %v517
        %v1446 = vunpack.c.l.s8.bf16 %v518
        %v1447 = vunpack.c.l.s8.bf16 %v519
        %v1448 = vunpack.c.l.s8.bf16 %v520
        %v1449 = vunpack.c.l.s8.bf16 %v521
        %v1450 = vunpack.c.l.s8.bf16 %v522
        %v1451 = vunpack.c.h.s8.bf16 %v515
        %v1452 = vunpack.c.h.s8.bf16 %v516
        %v1453 = vunpack.c.h.s8.bf16 %v517
        %v1454 = vunpack.c.h.s8.bf16 %v518
        %v1455 = vunpack.c.h.s8.bf16 %v519
        %v1456 = vunpack.c.h.s8.bf16 %v520
        %v1457 = vunpack.c.h.s8.bf16 %v521
        %v1458 = vunpack.c.h.s8.bf16 %v522
        %v1459 = vunpack.c.l.s8.bf16 %v523
        %v1460 = vunpack.c.l.s8.bf16 %v524
        %v1461 = vunpack.c.l.s8.bf16 %v525
        %v1462 = vunpack.c.l.s8.bf16 %v526
        %v1463 = vunpack.c.l.s8.bf16 %v527
        %v1464 = vunpack.c.l.s8.bf16 %v528
        %v1465 = vunpack.c.l.s8.bf16 %v529
        %v1466 = vunpack.c.l.s8.bf16 %v530
        %v1467 = vunpack.c.h.s8.bf16 %v523
        %v1468 = vunpack.c.h.s8.bf16 %v524
        %v1469 = vunpack.c.h.s8.bf16 %v525
        %v1470 = vunpack.c.h.s8.bf16 %v526
        %v1471 = vunpack.c.h.s8.bf16 %v527
        %v1472 = vunpack.c.h.s8.bf16 %v528
        %v1473 = vunpack.c.h.s8.bf16 %v529
        %v1474 = vunpack.c.h.s8.bf16 %v530
        %v1475 = vunpack.c.l.s8.bf16 %v531
        %v1476 = vunpack.c.l.s8.bf16 %v532
        %v1477 = vunpack.c.l.s8.bf16 %v533
        %v1478 = vunpack.c.l.s8.bf16 %v534
        %v1479 = vunpack.c.l.s8.bf16 %v535
        %v1480 = vunpack.c.l.s8.bf16 %v536
        %v1481 = vunpack.c.l.s8.bf16 %v537
        %v1482 = vunpack.c.l.s8.bf16 %v538
        %v1483 = vunpack.c.h.s8.bf16 %v531
        %v1484 = vunpack.c.h.s8.bf16 %v532
        %v1485 = vunpack.c.h.s8.bf16 %v533
        %v1486 = vunpack.c.h.s8.bf16 %v534
        %v1487 = vunpack.c.h.s8.bf16 %v535
        %v1488 = vunpack.c.h.s8.bf16 %v536
        %v1489 = vunpack.c.h.s8.bf16 %v537
        %v1490 = vunpack.c.h.s8.bf16 %v538
        %v1491 = vunpack.c.l.s8.bf16 %v539
        %v1492 = vunpack.c.l.s8.bf16 %v540
        %v1493 = vunpack.c.l.s8.bf16 %v541
        %v1494 = vunpack.c.l.s8.bf16 %v542
        %v1495 = vunpack.c.l.s8.bf16 %v543
        %v1496 = vunpack.c.l.s8.bf16 %v544
        %v1497 = vunpack.c.l.s8.bf16 %v545
        %v1498 = vunpack.c.l.s8.bf16 %v546
        %v1499 = vunpack.c.h.s8.bf16 %v539
        %v1500 = vunpack.c.h.s8.bf16 %v540
        %v1501 = vunpack.c.h.s8.bf16 %v541
        %v1502 = vunpack.c.h.s8.bf16 %v542
        %v1503 = vunpack.c.h.s8.bf16 %v543
        %v1504 = vunpack.c.h.s8.bf16 %v544
        %v1505 = vunpack.c.h.s8.bf16 %v545
        %v1506 = vunpack.c.h.s8.bf16 %v546
        %v1507 = vunpack.c.l.s8.bf16 %v547
        %v1508 = vunpack.c.l.s8.bf16 %v548
        %v1509 = vunpack.c.l.s8.bf16 %v549
        %v1510 = vunpack.c.l.s8.bf16 %v550
        %v1511 = vunpack.c.l.s8.bf16 %v551
        %v1512 = vunpack.c.l.s8.bf16 %v552
        %v1513 = vunpack.c.l.s8.bf16 %v553
        %v1514 = vunpack.c.l.s8.bf16 %v554
        %v1515 = vunpack.c.h.s8.bf16 %v547
        %v1516 = vunpack.c.h.s8.bf16 %v548
        %v1517 = vunpack.c.h.s8.bf16 %v549
        %v1518 = vunpack.c.h.s8.bf16 %v550
        %v1519 = vunpack.c.h.s8.bf16 %v551
        %v1520 = vunpack.c.h.s8.bf16 %v552
        %v1521 = vunpack.c.h.s8.bf16 %v553
        %v1522 = vunpack.c.h.s8.bf16 %v554
        %v1523 = vunpack.c.l.s8.bf16 %v555
        %v1524 = vunpack.c.l.s8.bf16 %v556
        %v1525 = vunpack.c.l.s8.bf16 %v557
        %v1526 = vunpack.c.l.s8.bf16 %v558
        %v1527 = vunpack.c.l.s8.bf16 %v559
        %v1528 = vunpack.c.l.s8.bf16 %v560
        %v1529 = vunpack.c.l.s8.bf16 %v561
        %v1530 = vunpack.c.l.s8.bf16 %v562
        %v1531 = vunpack.c.h.s8.bf16 %v555
        %v1532 = vunpack.c.h.s8.bf16 %v556
        %v1533 = vunpack.c.h.s8.bf16 %v557
        %v1534 = vunpack.c.h.s8.bf16 %v558
        %v1535 = vunpack.c.h.s8.bf16 %v559
        %v1536 = vunpack.c.h.s8.bf16 %v560
        %v1537 = vunpack.c.h.s8.bf16 %v561
        %v1538 = vunpack.c.h.s8.bf16 %v562
        %v1539 = vunpack.c.l.s8.bf16 %v563
        %v1540 = vunpack.c.l.s8.bf16 %v564
        %v1541 = vunpack.c.l.s8.bf16 %v565
        %v1542 = vunpack.c.l.s8.bf16 %v566
        %v1543 = vunpack.c.l.s8.bf16 %v567
        %v1544 = vunpack.c.l.s8.bf16 %v568
        %v1545 = vunpack.c.l.s8.bf16 %v569
        %v1546 = vunpack.c.l.s8.bf16 %v570
        %v1547 = vunpack.c.h.s8.bf16 %v563
        %v1548 = vunpack.c.h.s8.bf16 %v564
        %v1549 = vunpack.c.h.s8.bf16 %v565
        %v1550 = vunpack.c.h.s8.bf16 %v566
        %v1551 = vunpack.c.h.s8.bf16 %v567
        %v1552 = vunpack.c.h.s8.bf16 %v568
        %v1553 = vunpack.c.h.s8.bf16 %v569
        %v1554 = vunpack.c.h.s8.bf16 %v570
        %v1555 = vunpack.c.l.s8.bf16 %v571
        %v1556 = vunpack.c.l.s8.bf16 %v572
        %v1557 = vunpack.c.l.s8.bf16 %v573
        %v1558 = vunpack.c.l.s8.bf16 %v574
        %v1559 = vunpack.c.l.s8.bf16 %v575
        %v1560 = vunpack.c.l.s8.bf16 %v576
        %v1561 = vunpack.c.l.s8.bf16 %v577
        %v1562 = vunpack.c.l.s8.bf16 %v578
        %v1563 = vunpack.c.h.s8.bf16 %v571
        %v1564 = vunpack.c.h.s8.bf16 %v572
        %v1565 = vunpack.c.h.s8.bf16 %v573
        %v1566 = vunpack.c.h.s8.bf16 %v574
        %v1567 = vunpack.c.h.s8.bf16 %v575
        %v1568 = vunpack.c.h.s8.bf16 %v576
        %v1569 = vunpack.c.h.s8.bf16 %v577
        %v1570 = vunpack.c.h.s8.bf16 %v578
        %v1571 = vunpack.c.l.s8.bf16 %v579
        %v1572 = vunpack.c.l.s8.bf16 %v580
        %v1573 = vunpack.c.l.s8.bf16 %v581
        %v1574 = vunpack.c.l.s8.bf16 %v582
        %v1575 = vunpack.c.l.s8.bf16 %v583
        %v1576 = vunpack.c.l.s8.bf16 %v584
        %v1577 = vunpack.c.l.s8.bf16 %v585
        %v1578 = vunpack.c.l.s8.bf16 %v586
        %v1579 = vunpack.c.h.s8.bf16 %v579
        %v1580 = vunpack.c.h.s8.bf16 %v580
        %v1581 = vunpack.c.h.s8.bf16 %v581
        %v1582 = vunpack.c.h.s8.bf16 %v582
        %v1583 = vunpack.c.h.s8.bf16 %v583
        %v1584 = vunpack.c.h.s8.bf16 %v584
        %v1585 = vunpack.c.h.s8.bf16 %v585
        %v1586 = vunpack.c.h.s8.bf16 %v586
        %v1587 = vunpack.c.l.s8.bf16 %v587
        %v1588 = vunpack.c.l.s8.bf16 %v588
        %v1589 = vunpack.c.l.s8.bf16 %v589
        %v1590 = vunpack.c.l.s8.bf16 %v590
        %v1591 = vunpack.c.l.s8.bf16 %v591
        %v1592 = vunpack.c.l.s8.bf16 %v592
        %v1593 = vunpack.c.l.s8.bf16 %v593
        %v1594 = vunpack.c.l.s8.bf16 %v594
        %v1595 = vunpack.c.h.s8.bf16 %v587
        %v1596 = vunpack.c.h.s8.bf16 %v588
        %v1597 = vunpack.c.h.s8.bf16 %v589
        %v1598 = vunpack.c.h.s8.bf16 %v590
        %v1599 = vunpack.c.h.s8.bf16 %v591
        %v1600 = vunpack.c.h.s8.bf16 %v592
        %v1601 = vunpack.c.h.s8.bf16 %v593
        %v1602 = vunpack.c.h.s8.bf16 %v594
        %v1603 = vunpack.c.l.s8.bf16 %v595
        %v1604 = vunpack.c.l.s8.bf16 %v596
        %v1605 = vunpack.c.l.s8.bf16 %v597
        %v1606 = vunpack.c.l.s8.bf16 %v598
        %v1607 = vunpack.c.l.s8.bf16 %v599
        %v1608 = vunpack.c.l.s8.bf16 %v600
        %v1609 = vunpack.c.l.s8.bf16 %v601
        %v1610 = vunpack.c.l.s8.bf16 %v602
        %v1611 = vunpack.c.h.s8.bf16 %v595
        %v1612 = vunpack.c.h.s8.bf16 %v596
        %v1613 = vunpack.c.h.s8.bf16 %v597
        %v1614 = vunpack.c.h.s8.bf16 %v598
        %v1615 = vunpack.c.h.s8.bf16 %v599
        %v1616 = vunpack.c.h.s8.bf16 %v600
        %v1617 = vunpack.c.h.s8.bf16 %v601
        %v1618 = vunpack.c.h.s8.bf16 %v602
        %v1619 = vunpack.c.l.s8.bf16 %v603
        %v1620 = vunpack.c.l.s8.bf16 %v604
        %v1621 = vunpack.c.l.s8.bf16 %v605
        %v1622 = vunpack.c.l.s8.bf16 %v606
        %v1623 = vunpack.c.l.s8.bf16 %v607
        %v1624 = vunpack.c.l.s8.bf16 %v608
        %v1625 = vunpack.c.l.s8.bf16 %v609
        %v1626 = vunpack.c.l.s8.bf16 %v610
        %v1627 = vunpack.c.h.s8.bf16 %v603
        %v1628 = vunpack.c.h.s8.bf16 %v604
        %v1629 = vunpack.c.h.s8.bf16 %v605
        %v1630 = vunpack.c.h.s8.bf16 %v606
        %v1631 = vunpack.c.h.s8.bf16 %v607
        %v1632 = vunpack.c.h.s8.bf16 %v608
        %v1633 = vunpack.c.h.s8.bf16 %v609
        %v1634 = vunpack.c.h.s8.bf16 %v610
        %v1635 = vunpack.c.l.s8.bf16 %v611
        %v1636 = vunpack.c.l.s8.bf16 %v612
        %v1637 = vunpack.c.l.s8.bf16 %v613
        %v1638 = vunpack.c.l.s8.bf16 %v614
        %v1639 = vunpack.c.l.s8.bf16 %v615
        %v1640 = vunpack.c.l.s8.bf16 %v616
        %v1641 = vunpack.c.l.s8.bf16 %v617
        %v1642 = vunpack.c.l.s8.bf16 %v618
        %v1643 = vunpack.c.h.s8.bf16 %v611
        %v1644 = vunpack.c.h.s8.bf16 %v612
        %v1645 = vunpack.c.h.s8.bf16 %v613
        %v1646 = vunpack.c.h.s8.bf16 %v614
        %v1647 = vunpack.c.h.s8.bf16 %v615
        %v1648 = vunpack.c.h.s8.bf16 %v616
        %v1649 = vunpack.c.h.s8.bf16 %v617
        %v1650 = vunpack.c.h.s8.bf16 %v618
        %v1651 = vunpack.c.l.s8.bf16 %v619
        %v1652 = vunpack.c.l.s8.bf16 %v620
        %v1653 = vunpack.c.l.s8.bf16 %v621
        %v1654 = vunpack.c.l.s8.bf16 %v622
        %v1655 = vunpack.c.l.s8.bf16 %v623
        %v1656 = vunpack.c.l.s8.bf16 %v624
        %v1657 = vunpack.c.l.s8.bf16 %v625
        %v1658 = vunpack.c.l.s8.bf16 %v626
        %v1659 = vunpack.c.h.s8.bf16 %v619
        %v1660 = vunpack.c.h.s8.bf16 %v620
        %v1661 = vunpack.c.h.s8.bf16 %v621
        %v1662 = vunpack.c.h.s8.bf16 %v622
        %v1663 = vunpack.c.h.s8.bf16 %v623
        %v1664 = vunpack.c.h.s8.bf16 %v624
        %v1665 = vunpack.c.h.s8.bf16 %v625
        %v1666 = vunpack.c.h.s8.bf16 %v626
        %v1667 = vunpack.c.l.s8.bf16 %v627
        %v1668 = vunpack.c.l.s8.bf16 %v628
        %v1669 = vunpack.c.l.s8.bf16 %v629
        %v1670 = vunpack.c.l.s8.bf16 %v630
        %v1671 = vunpack.c.l.s8.bf16 %v631
        %v1672 = vunpack.c.l.s8.bf16 %v632
        %v1673 = vunpack.c.l.s8.bf16 %v633
        %v1674 = vunpack.c.l.s8.bf16 %v634
        %v1675 = vunpack.c.h.s8.bf16 %v627
        %v1676 = vunpack.c.h.s8.bf16 %v628
        %v1677 = vunpack.c.h.s8.bf16 %v629
        %v1678 = vunpack.c.h.s8.bf16 %v630
        %v1679 = vunpack.c.h.s8.bf16 %v631
        %v1680 = vunpack.c.h.s8.bf16 %v632
        %v1681 = vunpack.c.h.s8.bf16 %v633
        %v1682 = vunpack.c.h.s8.bf16 %v634
        %v1683 = vunpack.c.l.s8.bf16 %v635
        %v1684 = vunpack.c.l.s8.bf16 %v636
        %v1685 = vunpack.c.l.s8.bf16 %v637
        %v1686 = vunpack.c.l.s8.bf16 %v638
        %v1687 = vunpack.c.l.s8.bf16 %v639
        %v1688 = vunpack.c.l.s8.bf16 %v640
        %v1689 = vunpack.c.l.s8.bf16 %v641
        %v1690 = vunpack.c.l.s8.bf16 %v642
        %v1691 = vunpack.c.h.s8.bf16 %v635
        %v1692 = vunpack.c.h.s8.bf16 %v636
        %v1693 = vunpack.c.h.s8.bf16 %v637
        %v1694 = vunpack.c.h.s8.bf16 %v638
        %v1695 = vunpack.c.h.s8.bf16 %v639
        %v1696 = vunpack.c.h.s8.bf16 %v640
        %v1697 = vunpack.c.h.s8.bf16 %v641
        %v1698 = vunpack.c.h.s8.bf16 %v642
        %v1699 = vunpack.c.l.s8.bf16 %v643
        %v1700 = vunpack.c.l.s8.bf16 %v644
        %v1701 = vunpack.c.l.s8.bf16 %v645
        %v1702 = vunpack.c.l.s8.bf16 %v646
        %v1703 = vunpack.c.l.s8.bf16 %v647
        %v1704 = vunpack.c.l.s8.bf16 %v648
        %v1705 = vunpack.c.l.s8.bf16 %v649
        %v1706 = vunpack.c.l.s8.bf16 %v650
        %v1707 = vunpack.c.h.s8.bf16 %v643
        %v1708 = vunpack.c.h.s8.bf16 %v644
        %v1709 = vunpack.c.h.s8.bf16 %v645
        %v1710 = vunpack.c.h.s8.bf16 %v646
        %v1711 = vunpack.c.h.s8.bf16 %v647
        %v1712 = vunpack.c.h.s8.bf16 %v648
        %v1713 = vunpack.c.h.s8.bf16 %v649
        %v1714 = vunpack.c.h.s8.bf16 %v650
        %v1715 = vunpack.c.l.s8.bf16 %v651
        %v1716 = vunpack.c.l.s8.bf16 %v652
        %v1717 = vunpack.c.l.s8.bf16 %v653
        %v1718 = vunpack.c.l.s8.bf16 %v654
        %v1719 = vunpack.c.l.s8.bf16 %v655
        %v1720 = vunpack.c.l.s8.bf16 %v656
        %v1721 = vunpack.c.l.s8.bf16 %v657
        %v1722 = vunpack.c.l.s8.bf16 %v658
        %v1723 = vunpack.c.h.s8.bf16 %v651
        %v1724 = vunpack.c.h.s8.bf16 %v652
        %v1725 = vunpack.c.h.s8.bf16 %v653
        %v1726 = vunpack.c.h.s8.bf16 %v654
        %v1727 = vunpack.c.h.s8.bf16 %v655
        %v1728 = vunpack.c.h.s8.bf16 %v656
        %v1729 = vunpack.c.h.s8.bf16 %v657
        %v1730 = vunpack.c.h.s8.bf16 %v658
        %v1731 = vunpack.c.l.s8.bf16 %v659
        %v1732 = vunpack.c.l.s8.bf16 %v660
        %v1733 = vunpack.c.l.s8.bf16 %v661
        %v1734 = vunpack.c.l.s8.bf16 %v662
        %v1735 = vunpack.c.l.s8.bf16 %v663
        %v1736 = vunpack.c.l.s8.bf16 %v664
        %v1737 = vunpack.c.l.s8.bf16 %v665
        %v1738 = vunpack.c.l.s8.bf16 %v666
        %v1739 = vunpack.c.h.s8.bf16 %v659
        %v1740 = vunpack.c.h.s8.bf16 %v660
        %v1741 = vunpack.c.h.s8.bf16 %v661
        %v1742 = vunpack.c.h.s8.bf16 %v662
        %v1743 = vunpack.c.h.s8.bf16 %v663
        %v1744 = vunpack.c.h.s8.bf16 %v664
        %v1745 = vunpack.c.h.s8.bf16 %v665
        %v1746 = vunpack.c.h.s8.bf16 %v666
        %v1747 = vunpack.c.l.s8.bf16 %v667
        %v1748 = vunpack.c.l.s8.bf16 %v668
        %v1749 = vunpack.c.l.s8.bf16 %v669
        %v1750 = vunpack.c.l.s8.bf16 %v670
        %v1751 = vunpack.c.l.s8.bf16 %v671
        %v1752 = vunpack.c.l.s8.bf16 %v672
        %v1753 = vunpack.c.l.s8.bf16 %v673
        %v1754 = vunpack.c.l.s8.bf16 %v674
        %v1755 = vunpack.c.h.s8.bf16 %v667
        %v1756 = vunpack.c.h.s8.bf16 %v668
        %v1757 = vunpack.c.h.s8.bf16 %v669
        %v1758 = vunpack.c.h.s8.bf16 %v670
        %v1759 = vunpack.c.h.s8.bf16 %v671
        %v1760 = vunpack.c.h.s8.bf16 %v672
        %v1761 = vunpack.c.h.s8.bf16 %v673
        %v1762 = vunpack.c.h.s8.bf16 %v674
        %v1763 = vunpack.c.l.s8.bf16 %v675
        %v1764 = vunpack.c.l.s8.bf16 %v676
        %v1765 = vunpack.c.l.s8.bf16 %v677
        %v1766 = vunpack.c.l.s8.bf16 %v678
        %v1767 = vunpack.c.l.s8.bf16 %v679
        %v1768 = vunpack.c.l.s8.bf16 %v680
        %v1769 = vunpack.c.l.s8.bf16 %v681
        %v1770 = vunpack.c.l.s8.bf16 %v682
        %v1771 = vunpack.c.h.s8.bf16 %v675
        %v1772 = vunpack.c.h.s8.bf16 %v676
        %v1773 = vunpack.c.h.s8.bf16 %v677
        %v1774 = vunpack.c.h.s8.bf16 %v678
        %v1775 = vunpack.c.h.s8.bf16 %v679
        %v1776 = vunpack.c.h.s8.bf16 %v680
        %v1777 = vunpack.c.h.s8.bf16 %v681
        %v1778 = vunpack.c.h.s8.bf16 %v682
        %v1779 = vunpack.c.l.s8.bf16 %v683
        %v1780 = vunpack.c.l.s8.bf16 %v684
        %v1781 = vunpack.c.l.s8.bf16 %v685
        %v1782 = vunpack.c.l.s8.bf16 %v686
        %v1783 = vunpack.c.l.s8.bf16 %v687
        %v1784 = vunpack.c.l.s8.bf16 %v688
        %v1785 = vunpack.c.l.s8.bf16 %v689
        %v1786 = vunpack.c.l.s8.bf16 %v690
        %v1787 = vunpack.c.h.s8.bf16 %v683
        %v1788 = vunpack.c.h.s8.bf16 %v684
        %v1789 = vunpack.c.h.s8.bf16 %v685
        %v1790 = vunpack.c.h.s8.bf16 %v686
        %v1791 = vunpack.c.h.s8.bf16 %v687
        %v1792 = vunpack.c.h.s8.bf16 %v688
        %v1793 = vunpack.c.h.s8.bf16 %v689
        %v1794 = vunpack.c.h.s8.bf16 %v690
        %v1795 = vunpack.c.l.s8.bf16 %v691
        %v1796 = vunpack.c.l.s8.bf16 %v692
        %v1797 = vunpack.c.l.s8.bf16 %v693
        %v1798 = vunpack.c.l.s8.bf16 %v694
        %v1799 = vunpack.c.l.s8.bf16 %v695
        %v1800 = vunpack.c.l.s8.bf16 %v696
        %v1801 = vunpack.c.l.s8.bf16 %v697
        %v1802 = vunpack.c.l.s8.bf16 %v698
        %v1803 = vunpack.c.h.s8.bf16 %v691
        %v1804 = vunpack.c.h.s8.bf16 %v692
        %v1805 = vunpack.c.h.s8.bf16 %v693
        %v1806 = vunpack.c.h.s8.bf16 %v694
        %v1807 = vunpack.c.h.s8.bf16 %v695
        %v1808 = vunpack.c.h.s8.bf16 %v696
        %v1809 = vunpack.c.h.s8.bf16 %v697
        %v1810 = vunpack.c.h.s8.bf16 %v698
        %v1811 = vunpack.c.l.s8.bf16 %v699
        %v1812 = vunpack.c.l.s8.bf16 %v700
        %v1813 = vunpack.c.l.s8.bf16 %v701
        %v1814 = vunpack.c.l.s8.bf16 %v702
        %v1815 = vunpack.c.l.s8.bf16 %v703
        %v1816 = vunpack.c.l.s8.bf16 %v704
        %v1817 = vunpack.c.l.s8.bf16 %v705
        %v1818 = vunpack.c.l.s8.bf16 %v706
        %v1819 = vunpack.c.h.s8.bf16 %v699
        %v1820 = vunpack.c.h.s8.bf16 %v700
        %v1821 = vunpack.c.h.s8.bf16 %v701
        %v1822 = vunpack.c.h.s8.bf16 %v702
        %v1823 = vunpack.c.h.s8.bf16 %v703
        %v1824 = vunpack.c.h.s8.bf16 %v704
        %v1825 = vunpack.c.h.s8.bf16 %v705
        %v1826 = vunpack.c.h.s8.bf16 %v706
        %v1827 = vunpack.c.l.s8.bf16 %v707
        %v1828 = vunpack.c.l.s8.bf16 %v708
        %v1829 = vunpack.c.l.s8.bf16 %v709
        %v1830 = vunpack.c.l.s8.bf16 %v710
        %v1831 = vunpack.c.l.s8.bf16 %v711
        %v1832 = vunpack.c.l.s8.bf16 %v712
        %v1833 = vunpack.c.l.s8.bf16 %v713
        %v1834 = vunpack.c.l.s8.bf16 %v714
        %v1835 = vunpack.c.h.s8.bf16 %v707
        %v1836 = vunpack.c.h.s8.bf16 %v708
        %v1837 = vunpack.c.h.s8.bf16 %v709
        %v1838 = vunpack.c.h.s8.bf16 %v710
        %v1839 = vunpack.c.h.s8.bf16 %v711
        %v1840 = vunpack.c.h.s8.bf16 %v712
        %v1841 = vunpack.c.h.s8.bf16 %v713
        %v1842 = vunpack.c.h.s8.bf16 %v714
        %v1843 = vunpack.c.l.s8.bf16 %v715
        %v1844 = vunpack.c.l.s8.bf16 %v716
        %v1845 = vunpack.c.l.s8.bf16 %v717
        %v1846 = vunpack.c.l.s8.bf16 %v718
        %v1847 = vunpack.c.l.s8.bf16 %v719
        %v1848 = vunpack.c.l.s8.bf16 %v720
        %v1849 = vunpack.c.l.s8.bf16 %v721
        %v1850 = vunpack.c.l.s8.bf16 %v722
        %v1851 = vunpack.c.h.s8.bf16 %v715
        %v1852 = vunpack.c.h.s8.bf16 %v716
        %v1853 = vunpack.c.h.s8.bf16 %v717
        %v1854 = vunpack.c.h.s8.bf16 %v718
        %v1855 = vunpack.c.h.s8.bf16 %v719
        %v1856 = vunpack.c.h.s8.bf16 %v720
        %v1857 = vunpack.c.h.s8.bf16 %v721
        %v1858 = vunpack.c.h.s8.bf16 %v722
        %v1859 = vunpack.c.l.s8.bf16 %v723
        %v1860 = vunpack.c.l.s8.bf16 %v724
        %v1861 = vunpack.c.l.s8.bf16 %v725
        %v1862 = vunpack.c.l.s8.bf16 %v726
        %v1863 = vunpack.c.l.s8.bf16 %v727
        %v1864 = vunpack.c.l.s8.bf16 %v728
        %v1865 = vunpack.c.l.s8.bf16 %v729
        %v1866 = vunpack.c.l.s8.bf16 %v730
        %v1867 = vunpack.c.h.s8.bf16 %v723
        %v1868 = vunpack.c.h.s8.bf16 %v724
        %v1869 = vunpack.c.h.s8.bf16 %v725
        %v1870 = vunpack.c.h.s8.bf16 %v726
        %v1871 = vunpack.c.h.s8.bf16 %v727
        %v1872 = vunpack.c.h.s8.bf16 %v728
        %v1873 = vunpack.c.h.s8.bf16 %v729
        %v1874 = vunpack.c.h.s8.bf16 %v730
        %v1875 = vunpack.c.l.s8.bf16 %v731
        %v1876 = vunpack.c.l.s8.bf16 %v732
        %v1877 = vunpack.c.l.s8.bf16 %v733
        %v1878 = vunpack.c.l.s8.bf16 %v734
        %v1879 = vunpack.c.l.s8.bf16 %v735
        %v1880 = vunpack.c.l.s8.bf16 %v736
        %v1881 = vunpack.c.l.s8.bf16 %v737
        %v1882 = vunpack.c.l.s8.bf16 %v738
        %v1883 = vunpack.c.h.s8.bf16 %v731
        %v1884 = vunpack.c.h.s8.bf16 %v732
        %v1885 = vunpack.c.h.s8.bf16 %v733
        %v1886 = vunpack.c.h.s8.bf16 %v734
        %v1887 = vunpack.c.h.s8.bf16 %v735
        %v1888 = vunpack.c.h.s8.bf16 %v736
        %v1889 = vunpack.c.h.s8.bf16 %v737
        %v1890 = vunpack.c.h.s8.bf16 %v738
        %v1891 = vunpack.c.l.s8.bf16 %v739
        %v1892 = vunpack.c.l.s8.bf16 %v740
        %v1893 = vunpack.c.l.s8.bf16 %v741
        %v1894 = vunpack.c.l.s8.bf16 %v742
        %v1895 = vunpack.c.l.s8.bf16 %v743
        %v1896 = vunpack.c.l.s8.bf16 %v744
        %v1897 = vunpack.c.l.s8.bf16 %v745
        %v1898 = vunpack.c.l.s8.bf16 %v746
        %v1899 = vunpack.c.h.s8.bf16 %v739
        %v1900 = vunpack.c.h.s8.bf16 %v740
        %v1901 = vunpack.c.h.s8.bf16 %v741
        %v1902 = vunpack.c.h.s8.bf16 %v742
        %v1903 = vunpack.c.h.s8.bf16 %v743
        %v1904 = vunpack.c.h.s8.bf16 %v744
        %v1905 = vunpack.c.h.s8.bf16 %v745
        %v1906 = vunpack.c.h.s8.bf16 %v746
        %v1907 = vunpack.c.l.s8.bf16 %v747
        %v1908 = vunpack.c.l.s8.bf16 %v748
        %v1909 = vunpack.c.l.s8.bf16 %v749
        %v1910 = vunpack.c.l.s8.bf16 %v750
        %v1911 = vunpack.c.l.s8.bf16 %v751
        %v1912 = vunpack.c.l.s8.bf16 %v752
        %v1913 = vunpack.c.l.s8.bf16 %v753
        %v1914 = vunpack.c.l.s8.bf16 %v754
        %v1915 = vunpack.c.h.s8.bf16 %v747
        %v1916 = vunpack.c.h.s8.bf16 %v748
        %v1917 = vunpack.c.h.s8.bf16 %v749
        %v1918 = vunpack.c.h.s8.bf16 %v750
        %v1919 = vunpack.c.h.s8.bf16 %v751
        %v1920 = vunpack.c.h.s8.bf16 %v752
        %v1921 = vunpack.c.h.s8.bf16 %v753
        %v1922 = vunpack.c.h.s8.bf16 %v754
        %v1923 = vunpack.c.l.s8.bf16 %v755
        %v1924 = vunpack.c.l.s8.bf16 %v756
        %v1925 = vunpack.c.l.s8.bf16 %v757
        %v1926 = vunpack.c.l.s8.bf16 %v758
        %v1927 = vunpack.c.l.s8.bf16 %v759
        %v1928 = vunpack.c.l.s8.bf16 %v760
        %v1929 = vunpack.c.l.s8.bf16 %v761
        %v1930 = vunpack.c.l.s8.bf16 %v762
        %v1931 = vunpack.c.h.s8.bf16 %v755
        %v1932 = vunpack.c.h.s8.bf16 %v756
        %v1933 = vunpack.c.h.s8.bf16 %v757
        %v1934 = vunpack.c.h.s8.bf16 %v758
        %v1935 = vunpack.c.h.s8.bf16 %v759
        %v1936 = vunpack.c.h.s8.bf16 %v760
        %v1937 = vunpack.c.h.s8.bf16 %v761
        %v1938 = vunpack.c.h.s8.bf16 %v762
        %v1939 = vunpack.c.l.s8.bf16 %v763
        %v1940 = vunpack.c.l.s8.bf16 %v764
        %v1941 = vunpack.c.l.s8.bf16 %v765
        %v1942 = vunpack.c.l.s8.bf16 %v766
        %v1943 = vunpack.c.l.s8.bf16 %v767
        %v1944 = vunpack.c.l.s8.bf16 %v768
        %v1945 = vunpack.c.l.s8.bf16 %v769
        %v1946 = vunpack.c.l.s8.bf16 %v770
        %v1947 = vunpack.c.h.s8.bf16 %v763
        %v1948 = vunpack.c.h.s8.bf16 %v764
        %v1949 = vunpack.c.h.s8.bf16 %v765
        %v1950 = vunpack.c.h.s8.bf16 %v766
        %v1951 = vunpack.c.h.s8.bf16 %v767
        %v1952 = vunpack.c.h.s8.bf16 %v768
        %v1953 = vunpack.c.h.s8.bf16 %v769
        %v1954 = vunpack.c.h.s8.bf16 %v770
        %v1955 = vunpack.c.l.s8.bf16 %v771
        %v1956 = vunpack.c.l.s8.bf16 %v772
        %v1957 = vunpack.c.l.s8.bf16 %v773
        %v1958 = vunpack.c.l.s8.bf16 %v774
        %v1959 = vunpack.c.l.s8.bf16 %v775
        %v1960 = vunpack.c.l.s8.bf16 %v776
        %v1961 = vunpack.c.l.s8.bf16 %v777
        %v1962 = vunpack.c.l.s8.bf16 %v778
        %v1963 = vunpack.c.h.s8.bf16 %v771
        %v1964 = vunpack.c.h.s8.bf16 %v772
        %v1965 = vunpack.c.h.s8.bf16 %v773
        %v1966 = vunpack.c.h.s8.bf16 %v774
        %v1967 = vunpack.c.h.s8.bf16 %v775
        %v1968 = vunpack.c.h.s8.bf16 %v776
        %v1969 = vunpack.c.h.s8.bf16 %v777
        %v1970 = vunpack.c.h.s8.bf16 %v778
        %v1971 = vunpack.c.l.s8.bf16 %v779
        %v1972 = vunpack.c.l.s8.bf16 %v780
        %v1973 = vunpack.c.l.s8.bf16 %v781
        %v1974 = vunpack.c.l.s8.bf16 %v782
        %v1975 = vunpack.c.l.s8.bf16 %v783
        %v1976 = vunpack.c.l.s8.bf16 %v784
        %v1977 = vunpack.c.l.s8.bf16 %v785
        %v1978 = vunpack.c.l.s8.bf16 %v786
        %v1979 = vunpack.c.h.s8.bf16 %v779
        %v1980 = vunpack.c.h.s8.bf16 %v780
        %v1981 = vunpack.c.h.s8.bf16 %v781
        %v1982 = vunpack.c.h.s8.bf16 %v782
        %v1983 = vunpack.c.h.s8.bf16 %v783
        %v1984 = vunpack.c.h.s8.bf16 %v784
        %v1985 = vunpack.c.h.s8.bf16 %v785
        %v1986 = vunpack.c.h.s8.bf16 %v786
        %v1987 = vunpack.c.l.s8.bf16 %v787
        %v1988 = vunpack.c.l.s8.bf16 %v788
        %v1989 = vunpack.c.l.s8.bf16 %v789
        %v1990 = vunpack.c.l.s8.bf16 %v790
        %v1991 = vunpack.c.l.s8.bf16 %v791
        %v1992 = vunpack.c.l.s8.bf16 %v792
        %v1993 = vunpack.c.l.s8.bf16 %v793
        %v1994 = vunpack.c.l.s8.bf16 %v794
        %v1995 = vunpack.c.h.s8.bf16 %v787
        %v1996 = vunpack.c.h.s8.bf16 %v788
        %v1997 = vunpack.c.h.s8.bf16 %v789
        %v1998 = vunpack.c.h.s8.bf16 %v790
        %v1999 = vunpack.c.h.s8.bf16 %v791
        %v2000 = vunpack.c.h.s8.bf16 %v792
        %v2001 = vunpack.c.h.s8.bf16 %v793
        %v2002 = vunpack.c.h.s8.bf16 %v794
        %v2003 = vunpack.c.l.s8.bf16 %v795
        %v2004 = vunpack.c.l.s8.bf16 %v796
        %v2005 = vunpack.c.l.s8.bf16 %v797
        %v2006 = vunpack.c.l.s8.bf16 %v798
        %v2007 = vunpack.c.l.s8.bf16 %v799
        %v2008 = vunpack.c.l.s8.bf16 %v800
        %v2009 = vunpack.c.l.s8.bf16 %v801
        %v2010 = vunpack.c.l.s8.bf16 %v802
        %v2011 = vunpack.c.h.s8.bf16 %v795
        %v2012 = vunpack.c.h.s8.bf16 %v796
        %v2013 = vunpack.c.h.s8.bf16 %v797
        %v2014 = vunpack.c.h.s8.bf16 %v798
        %v2015 = vunpack.c.h.s8.bf16 %v799
        %v2016 = vunpack.c.h.s8.bf16 %v800
        %v2017 = vunpack.c.h.s8.bf16 %v801
        %v2018 = vunpack.c.h.s8.bf16 %v802
        %v2019 = vunpack.c.l.s8.bf16 %v803
        %v2020 = vunpack.c.l.s8.bf16 %v804
        %v2021 = vunpack.c.l.s8.bf16 %v805
        %v2022 = vunpack.c.l.s8.bf16 %v806
        %v2023 = vunpack.c.l.s8.bf16 %v807
        %v2024 = vunpack.c.l.s8.bf16 %v808
        %v2025 = vunpack.c.l.s8.bf16 %v809
        %v2026 = vunpack.c.l.s8.bf16 %v810
        %v2027 = vunpack.c.h.s8.bf16 %v803
        %v2028 = vunpack.c.h.s8.bf16 %v804
        %v2029 = vunpack.c.h.s8.bf16 %v805
        %v2030 = vunpack.c.h.s8.bf16 %v806
        %v2031 = vunpack.c.h.s8.bf16 %v807
        %v2032 = vunpack.c.h.s8.bf16 %v808
        %v2033 = vunpack.c.h.s8.bf16 %v809
        %v2034 = vunpack.c.h.s8.bf16 %v810
        %v2035 = vunpack.c.l.s8.bf16 %v811
        %v2036 = vunpack.c.l.s8.bf16 %v812
        %v2037 = vunpack.c.l.s8.bf16 %v813
        %v2038 = vunpack.c.l.s8.bf16 %v814
        %v2039 = vunpack.c.l.s8.bf16 %v815
        %v2040 = vunpack.c.l.s8.bf16 %v816
        %v2041 = vunpack.c.l.s8.bf16 %v817
        %v2042 = vunpack.c.l.s8.bf16 %v818
        %v2043 = vunpack.c.h.s8.bf16 %v811
        %v2044 = vunpack.c.h.s8.bf16 %v812
        %v2045 = vunpack.c.h.s8.bf16 %v813
        %v2046 = vunpack.c.h.s8.bf16 %v814
        %v2047 = vunpack.c.h.s8.bf16 %v815
        %v2048 = vunpack.c.h.s8.bf16 %v816
        %v2049 = vunpack.c.h.s8.bf16 %v817
        %v2050 = vunpack.c.h.s8.bf16 %v818
        %v2051 = vunpack.c.l.s8.bf16 %v819
        %v2052 = vunpack.c.l.s8.bf16 %v820
        %v2053 = vunpack.c.l.s8.bf16 %v821
        %v2054 = vunpack.c.l.s8.bf16 %v822
        %v2055 = vunpack.c.l.s8.bf16 %v823
        %v2056 = vunpack.c.l.s8.bf16 %v824
        %v2057 = vunpack.c.l.s8.bf16 %v825
        %v2058 = vunpack.c.l.s8.bf16 %v826
        %v2059 = vunpack.c.h.s8.bf16 %v819
        %v2060 = vunpack.c.h.s8.bf16 %v820
        %v2061 = vunpack.c.h.s8.bf16 %v821
        %v2062 = vunpack.c.h.s8.bf16 %v822
        %v2063 = vunpack.c.h.s8.bf16 %v823
        %v2064 = vunpack.c.h.s8.bf16 %v824
        %v2065 = vunpack.c.h.s8.bf16 %v825
        %v2066 = vunpack.c.h.s8.bf16 %v826
        %v2067 = vunpack.c.l.s8.bf16 %v827
        %v2068 = vunpack.c.l.s8.bf16 %v828
        %v2069 = vunpack.c.l.s8.bf16 %v829
        %v2070 = vunpack.c.l.s8.bf16 %v830
        %v2071 = vunpack.c.l.s8.bf16 %v831
        %v2072 = vunpack.c.l.s8.bf16 %v832
        %v2073 = vunpack.c.l.s8.bf16 %v833
        %v2074 = vunpack.c.l.s8.bf16 %v834
        %v2075 = vunpack.c.h.s8.bf16 %v827
        %v2076 = vunpack.c.h.s8.bf16 %v828
        %v2077 = vunpack.c.h.s8.bf16 %v829
        %v2078 = vunpack.c.h.s8.bf16 %v830
        %v2079 = vunpack.c.h.s8.bf16 %v831
        %v2080 = vunpack.c.h.s8.bf16 %v832
        %v2081 = vunpack.c.h.s8.bf16 %v833
        %v2082 = vunpack.c.h.s8.bf16 %v834
        %v2083 = vunpack.c.l.s8.bf16 %v835
        %v2084 = vunpack.c.l.s8.bf16 %v836
        %v2085 = vunpack.c.l.s8.bf16 %v837
        %v2086 = vunpack.c.l.s8.bf16 %v838
        %v2087 = vunpack.c.l.s8.bf16 %v839
        %v2088 = vunpack.c.l.s8.bf16 %v840
        %v2089 = vunpack.c.l.s8.bf16 %v841
        %v2090 = vunpack.c.l.s8.bf16 %v842
        %v2091 = vunpack.c.h.s8.bf16 %v835
        %v2092 = vunpack.c.h.s8.bf16 %v836
        %v2093 = vunpack.c.h.s8.bf16 %v837
        %v2094 = vunpack.c.h.s8.bf16 %v838
        %v2095 = vunpack.c.h.s8.bf16 %v839
        %v2096 = vunpack.c.h.s8.bf16 %v840
        %v2097 = vunpack.c.h.s8.bf16 %v841
        %v2098 = vunpack.c.h.s8.bf16 %v842
        %v2099 = vunpack.c.l.s8.bf16 %v843
        %v2100 = vunpack.c.l.s8.bf16 %v844
        %v2101 = vunpack.c.l.s8.bf16 %v845
        %v2102 = vunpack.c.l.s8.bf16 %v846
        %v2103 = vunpack.c.l.s8.bf16 %v847
        %v2104 = vunpack.c.l.s8.bf16 %v848
        %v2105 = vunpack.c.l.s8.bf16 %v849
        %v2106 = vunpack.c.l.s8.bf16 %v850
        %v2107 = vunpack.c.h.s8.bf16 %v843
        %v2108 = vunpack.c.h.s8.bf16 %v844
        %v2109 = vunpack.c.h.s8.bf16 %v845
        %v2110 = vunpack.c.h.s8.bf16 %v846
        %v2111 = vunpack.c.h.s8.bf16 %v847
        %v2112 = vunpack.c.h.s8.bf16 %v848
        %v2113 = vunpack.c.h.s8.bf16 %v849
        %v2114 = vunpack.c.h.s8.bf16 %v850
        %v2115 = vunpack.c.l.s8.bf16 %v851
        %v2116 = vunpack.c.l.s8.bf16 %v852
        %v2117 = vunpack.c.l.s8.bf16 %v853
        %v2118 = vunpack.c.l.s8.bf16 %v854
        %v2119 = vunpack.c.l.s8.bf16 %v855
        %v2120 = vunpack.c.l.s8.bf16 %v856
        %v2121 = vunpack.c.l.s8.bf16 %v857
        %v2122 = vunpack.c.l.s8.bf16 %v858
        %v2123 = vunpack.c.h.s8.bf16 %v851
        %v2124 = vunpack.c.h.s8.bf16 %v852
        %v2125 = vunpack.c.h.s8.bf16 %v853
        %v2126 = vunpack.c.h.s8.bf16 %v854
        %v2127 = vunpack.c.h.s8.bf16 %v855
        %v2128 = vunpack.c.h.s8.bf16 %v856
        %v2129 = vunpack.c.h.s8.bf16 %v857
        %v2130 = vunpack.c.h.s8.bf16 %v858
        %v2131 = vunpack.c.l.s8.bf16 %v859
        %v2132 = vunpack.c.l.s8.bf16 %v860
        %v2133 = vunpack.c.l.s8.bf16 %v861
        %v2134 = vunpack.c.l.s8.bf16 %v862
        %v2135 = vunpack.c.l.s8.bf16 %v863
        %v2136 = vunpack.c.l.s8.bf16 %v864
        %v2137 = vunpack.c.l.s8.bf16 %v865
        %v2138 = vunpack.c.l.s8.bf16 %v866
        %v2139 = vunpack.c.h.s8.bf16 %v859
        %v2140 = vunpack.c.h.s8.bf16 %v860
        %v2141 = vunpack.c.h.s8.bf16 %v861
        %v2142 = vunpack.c.h.s8.bf16 %v862
        %v2143 = vunpack.c.h.s8.bf16 %v863
        %v2144 = vunpack.c.h.s8.bf16 %v864
        %v2145 = vunpack.c.h.s8.bf16 %v865
        %v2146 = vunpack.c.h.s8.bf16 %v866
        %v2147 = vunpack.c.l.s8.bf16 %v867
        %v2148 = vunpack.c.l.s8.bf16 %v868
        %v2149 = vunpack.c.l.s8.bf16 %v869
        %v2150 = vunpack.c.l.s8.bf16 %v870
        %v2151 = vunpack.c.l.s8.bf16 %v871
        %v2152 = vunpack.c.l.s8.bf16 %v872
        %v2153 = vunpack.c.l.s8.bf16 %v873
        %v2154 = vunpack.c.l.s8.bf16 %v874
        %v2155 = vunpack.c.h.s8.bf16 %v867
        %v2156 = vunpack.c.h.s8.bf16 %v868
        %v2157 = vunpack.c.h.s8.bf16 %v869
        %v2158 = vunpack.c.h.s8.bf16 %v870
        %v2159 = vunpack.c.h.s8.bf16 %v871
        %v2160 = vunpack.c.h.s8.bf16 %v872
        %v2161 = vunpack.c.h.s8.bf16 %v873
        %v2162 = vunpack.c.h.s8.bf16 %v874
        %v2163 = vunpack.c.l.s8.bf16 %v875
        %v2164 = vunpack.c.l.s8.bf16 %v876
        %v2165 = vunpack.c.l.s8.bf16 %v877
        %v2166 = vunpack.c.l.s8.bf16 %v878
        %v2167 = vunpack.c.l.s8.bf16 %v879
        %v2168 = vunpack.c.l.s8.bf16 %v880
        %v2169 = vunpack.c.l.s8.bf16 %v881
        %v2170 = vunpack.c.l.s8.bf16 %v882
        %v2171 = vunpack.c.h.s8.bf16 %v875
        %v2172 = vunpack.c.h.s8.bf16 %v876
        %v2173 = vunpack.c.h.s8.bf16 %v877
        %v2174 = vunpack.c.h.s8.bf16 %v878
        %v2175 = vunpack.c.h.s8.bf16 %v879
        %v2176 = vunpack.c.h.s8.bf16 %v880
        %v2177 = vunpack.c.h.s8.bf16 %v881
        %v2178 = vunpack.c.h.s8.bf16 %v882
        %v2179 = vunpack.c.l.s8.bf16 %v883
        %v2180 = vunpack.c.l.s8.bf16 %v884
        %v2181 = vunpack.c.l.s8.bf16 %v885
        %v2182 = vunpack.c.l.s8.bf16 %v886
        %v2183 = vunpack.c.l.s8.bf16 %v887
        %v2184 = vunpack.c.l.s8.bf16 %v888
        %v2185 = vunpack.c.l.s8.bf16 %v889
        %v2186 = vunpack.c.l.s8.bf16 %v890
        %v2187 = vunpack.c.h.s8.bf16 %v883
        %v2188 = vunpack.c.h.s8.bf16 %v884
        %v2189 = vunpack.c.h.s8.bf16 %v885
        %v2190 = vunpack.c.h.s8.bf16 %v886
        %v2191 = vunpack.c.h.s8.bf16 %v887
        %v2192 = vunpack.c.h.s8.bf16 %v888
        %v2193 = vunpack.c.h.s8.bf16 %v889
        %v2194 = vunpack.c.h.s8.bf16 %v890
        %v2195 = vunpack.c.l.s8.bf16 %v891
        %v2196 = vunpack.c.l.s8.bf16 %v892
        %v2197 = vunpack.c.l.s8.bf16 %v893
        %v2198 = vunpack.c.l.s8.bf16 %v894
        %v2199 = vunpack.c.l.s8.bf16 %v895
        %v2200 = vunpack.c.l.s8.bf16 %v896
        %v2201 = vunpack.c.l.s8.bf16 %v897
        %v2202 = vunpack.c.l.s8.bf16 %v898
        %v2203 = vunpack.c.h.s8.bf16 %v891
        %v2204 = vunpack.c.h.s8.bf16 %v892
        %v2205 = vunpack.c.h.s8.bf16 %v893
        %v2206 = vunpack.c.h.s8.bf16 %v894
        %v2207 = vunpack.c.h.s8.bf16 %v895
        %v2208 = vunpack.c.h.s8.bf16 %v896
        %v2209 = vunpack.c.h.s8.bf16 %v897
        %v2210 = vunpack.c.h.s8.bf16 %v898
        %v2211 = vunpack.c.l.s8.bf16 %v899
        %v2212 = vunpack.c.l.s8.bf16 %v900
        %v2213 = vunpack.c.l.s8.bf16 %v901
        %v2214 = vunpack.c.l.s8.bf16 %v902
        %v2215 = vunpack.c.l.s8.bf16 %v903
        %v2216 = vunpack.c.l.s8.bf16 %v904
        %v2217 = vunpack.c.l.s8.bf16 %v905
        %v2218 = vunpack.c.l.s8.bf16 %v906
        %v2219 = vunpack.c.h.s8.bf16 %v899
        %v2220 = vunpack.c.h.s8.bf16 %v900
        %v2221 = vunpack.c.h.s8.bf16 %v901
        %v2222 = vunpack.c.h.s8.bf16 %v902
        %v2223 = vunpack.c.h.s8.bf16 %v903
        %v2224 = vunpack.c.h.s8.bf16 %v904
        %v2225 = vunpack.c.h.s8.bf16 %v905
        %v2226 = vunpack.c.h.s8.bf16 %v906
        %v2227 = vunpack.c.l.s8.bf16 %v907
        %v2228 = vunpack.c.l.s8.bf16 %v908
        %v2229 = vunpack.c.l.s8.bf16 %v909
        %v2230 = vunpack.c.l.s8.bf16 %v910
        %v2231 = vunpack.c.l.s8.bf16 %v911
        %v2232 = vunpack.c.l.s8.bf16 %v912
        %v2233 = vunpack.c.l.s8.bf16 %v913
        %v2234 = vunpack.c.l.s8.bf16 %v914
        %v2235 = vunpack.c.h.s8.bf16 %v907
        %v2236 = vunpack.c.h.s8.bf16 %v908
        %v2237 = vunpack.c.h.s8.bf16 %v909
        %v2238 = vunpack.c.h.s8.bf16 %v910
        %v2239 = vunpack.c.h.s8.bf16 %v911
        %v2240 = vunpack.c.h.s8.bf16 %v912
        %v2241 = vunpack.c.h.s8.bf16 %v913
        %v2242 = vunpack.c.h.s8.bf16 %v914
        %v2243 = vunpack.c.l.s8.bf16 %v915
        %v2244 = vunpack.c.l.s8.bf16 %v916
        %v2245 = vunpack.c.l.s8.bf16 %v917
        %v2246 = vunpack.c.l.s8.bf16 %v918
        %v2247 = vunpack.c.l.s8.bf16 %v919
        %v2248 = vunpack.c.l.s8.bf16 %v920
        %v2249 = vunpack.c.l.s8.bf16 %v921
        %v2250 = vunpack.c.l.s8.bf16 %v922
        %v2251 = vunpack.c.h.s8.bf16 %v915
        %v2252 = vunpack.c.h.s8.bf16 %v916
        %v2253 = vunpack.c.h.s8.bf16 %v917
        %v2254 = vunpack.c.h.s8.bf16 %v918
        %v2255 = vunpack.c.h.s8.bf16 %v919
        %v2256 = vunpack.c.h.s8.bf16 %v920
        %v2257 = vunpack.c.h.s8.bf16 %v921
        %v2258 = vunpack.c.h.s8.bf16 %v922
        %v2259 = vunpack.c.l.s8.bf16 %v923
        %v2260 = vunpack.c.l.s8.bf16 %v924
        %v2261 = vunpack.c.l.s8.bf16 %v925
        %v2262 = vunpack.c.l.s8.bf16 %v926
        %v2263 = vunpack.c.l.s8.bf16 %v927
        %v2264 = vunpack.c.l.s8.bf16 %v928
        %v2265 = vunpack.c.l.s8.bf16 %v929
        %v2266 = vunpack.c.l.s8.bf16 %v930
        %v2267 = vunpack.c.h.s8.bf16 %v923
        %v2268 = vunpack.c.h.s8.bf16 %v924
        %v2269 = vunpack.c.h.s8.bf16 %v925
        %v2270 = vunpack.c.h.s8.bf16 %v926
        %v2271 = vunpack.c.h.s8.bf16 %v927
        %v2272 = vunpack.c.h.s8.bf16 %v928
        %v2273 = vunpack.c.h.s8.bf16 %v929
        %v2274 = vunpack.c.h.s8.bf16 %v930
        %v2275 = vunpack.c.l.s8.bf16 %v931
        %v2276 = vunpack.c.l.s8.bf16 %v932
        %v2277 = vunpack.c.l.s8.bf16 %v933
        %v2278 = vunpack.c.l.s8.bf16 %v934
        %v2279 = vunpack.c.l.s8.bf16 %v935
        %v2280 = vunpack.c.l.s8.bf16 %v936
        %v2281 = vunpack.c.l.s8.bf16 %v937
        %v2282 = vunpack.c.l.s8.bf16 %v938
        %v2283 = vunpack.c.h.s8.bf16 %v931
        %v2284 = vunpack.c.h.s8.bf16 %v932
        %v2285 = vunpack.c.h.s8.bf16 %v933
        %v2286 = vunpack.c.h.s8.bf16 %v934
        %v2287 = vunpack.c.h.s8.bf16 %v935
        %v2288 = vunpack.c.h.s8.bf16 %v936
        %v2289 = vunpack.c.h.s8.bf16 %v937
        %v2290 = vunpack.c.h.s8.bf16 %v938
        %v2291 = vunpack.c.l.s8.bf16 %v939
        %v2292 = vunpack.c.l.s8.bf16 %v940
        %v2293 = vunpack.c.l.s8.bf16 %v941
        %v2294 = vunpack.c.l.s8.bf16 %v942
        %v2295 = vunpack.c.l.s8.bf16 %v943
        %v2296 = vunpack.c.l.s8.bf16 %v944
        %v2297 = vunpack.c.l.s8.bf16 %v945
        %v2298 = vunpack.c.l.s8.bf16 %v946
        %v2299 = vunpack.c.h.s8.bf16 %v939
        %v2300 = vunpack.c.h.s8.bf16 %v940
        %v2301 = vunpack.c.h.s8.bf16 %v941
        %v2302 = vunpack.c.h.s8.bf16 %v942
        %v2303 = vunpack.c.h.s8.bf16 %v943
        %v2304 = vunpack.c.h.s8.bf16 %v944
        %v2305 = vunpack.c.h.s8.bf16 %v945
        %v2306 = vunpack.c.h.s8.bf16 %v946
        %v2307 = vunpack.c.l.s8.bf16 %v947
        %v2308 = vunpack.c.l.s8.bf16 %v948
        %v2309 = vunpack.c.l.s8.bf16 %v949
        %v2310 = vunpack.c.l.s8.bf16 %v950
        %v2311 = vunpack.c.l.s8.bf16 %v951
        %v2312 = vunpack.c.l.s8.bf16 %v952
        %v2313 = vunpack.c.l.s8.bf16 %v953
        %v2314 = vunpack.c.l.s8.bf16 %v954
        %v2315 = vunpack.c.h.s8.bf16 %v947
        %v2316 = vunpack.c.h.s8.bf16 %v948
        %v2317 = vunpack.c.h.s8.bf16 %v949
        %v2318 = vunpack.c.h.s8.bf16 %v950
        %v2319 = vunpack.c.h.s8.bf16 %v951
        %v2320 = vunpack.c.h.s8.bf16 %v952
        %v2321 = vunpack.c.h.s8.bf16 %v953
        %v2322 = vunpack.c.h.s8.bf16 %v954
        %v2323 = vunpack.c.l.s8.bf16 %v955
        %v2324 = vunpack.c.l.s8.bf16 %v956
        %v2325 = vunpack.c.l.s8.bf16 %v957
        %v2326 = vunpack.c.l.s8.bf16 %v958
        %v2327 = vunpack.c.l.s8.bf16 %v959
        %v2328 = vunpack.c.l.s8.bf16 %v960
        %v2329 = vunpack.c.l.s8.bf16 %v961
        %v2330 = vunpack.c.l.s8.bf16 %v962
        %v2331 = vunpack.c.h.s8.bf16 %v955
        %v2332 = vunpack.c.h.s8.bf16 %v956
        %v2333 = vunpack.c.h.s8.bf16 %v957
        %v2334 = vunpack.c.h.s8.bf16 %v958
        %v2335 = vunpack.c.h.s8.bf16 %v959
        %v2336 = vunpack.c.h.s8.bf16 %v960
        %v2337 = vunpack.c.h.s8.bf16 %v961
        %v2338 = vunpack.c.h.s8.bf16 %v962
        %v2339 = vunpack.c.l.s8.bf16 %v963
        %v2340 = vunpack.c.l.s8.bf16 %v964
        %v2341 = vunpack.c.l.s8.bf16 %v965
        %v2342 = vunpack.c.l.s8.bf16 %v966
        %v2343 = vunpack.c.l.s8.bf16 %v967
        %v2344 = vunpack.c.l.s8.bf16 %v968
        %v2345 = vunpack.c.l.s8.bf16 %v969
        %v2346 = vunpack.c.l.s8.bf16 %v970
        %v2347 = vunpack.c.h.s8.bf16 %v963
        %v2348 = vunpack.c.h.s8.bf16 %v964
        %v2349 = vunpack.c.h.s8.bf16 %v965
        %v2350 = vunpack.c.h.s8.bf16 %v966
        %v2351 = vunpack.c.h.s8.bf16 %v967
        %v2352 = vunpack.c.h.s8.bf16 %v968
        %v2353 = vunpack.c.h.s8.bf16 %v969
        %v2354 = vunpack.c.h.s8.bf16 %v970
        %v2355 = vunpack.c.l.s8.bf16 %v971
        %v2356 = vunpack.c.l.s8.bf16 %v972
        %v2357 = vunpack.c.l.s8.bf16 %v973
        %v2358 = vunpack.c.l.s8.bf16 %v974
        %v2359 = vunpack.c.l.s8.bf16 %v975
        %v2360 = vunpack.c.l.s8.bf16 %v976
        %v2361 = vunpack.c.l.s8.bf16 %v977
        %v2362 = vunpack.c.l.s8.bf16 %v978
        %v2363 = vunpack.c.h.s8.bf16 %v971
        %v2364 = vunpack.c.h.s8.bf16 %v972
        %v2365 = vunpack.c.h.s8.bf16 %v973
        %v2366 = vunpack.c.h.s8.bf16 %v974
        %v2367 = vunpack.c.h.s8.bf16 %v975
        %v2368 = vunpack.c.h.s8.bf16 %v976
        %v2369 = vunpack.c.h.s8.bf16 %v977
        %v2370 = vunpack.c.h.s8.bf16 %v978
        %v2371 = vunpack.c.l.s8.bf16 %v979
        %v2372 = vunpack.c.l.s8.bf16 %v980
        %v2373 = vunpack.c.l.s8.bf16 %v981
        %v2374 = vunpack.c.l.s8.bf16 %v982
        %v2375 = vunpack.c.l.s8.bf16 %v983
        %v2376 = vunpack.c.l.s8.bf16 %v984
        %v2377 = vunpack.c.l.s8.bf16 %v985
        %v2378 = vunpack.c.l.s8.bf16 %v986
        %v2379 = vunpack.c.h.s8.bf16 %v979
        %v2380 = vunpack.c.h.s8.bf16 %v980
        %v2381 = vunpack.c.h.s8.bf16 %v981
        %v2382 = vunpack.c.h.s8.bf16 %v982
        %v2383 = vunpack.c.h.s8.bf16 %v983
        %v2384 = vunpack.c.h.s8.bf16 %v984
        %v2385 = vunpack.c.h.s8.bf16 %v985
        %v2386 = vunpack.c.h.s8.bf16 %v986
        %v2387 = vunpack.c.l.s8.bf16 %v987
        %v2388 = vunpack.c.l.s8.bf16 %v988
        %v2389 = vunpack.c.l.s8.bf16 %v989
        %v2390 = vunpack.c.l.s8.bf16 %v990
        %v2391 = vunpack.c.l.s8.bf16 %v991
        %v2392 = vunpack.c.l.s8.bf16 %v992
        %v2393 = vunpack.c.l.s8.bf16 %v993
        %v2394 = vunpack.c.l.s8.bf16 %v994
        %v2395 = vunpack.c.h.s8.bf16 %v987
        %v2396 = vunpack.c.h.s8.bf16 %v988
        %v2397 = vunpack.c.h.s8.bf16 %v989
        %v2398 = vunpack.c.h.s8.bf16 %v990
        %v2399 = vunpack.c.h.s8.bf16 %v991
        %v2400 = vunpack.c.h.s8.bf16 %v992
        %v2401 = vunpack.c.h.s8.bf16 %v993
        %v2402 = vunpack.c.h.s8.bf16 %v994
        %v2403 = vunpack.c.l.s8.bf16 %v995
        %v2404 = vunpack.c.l.s8.bf16 %v996
        %v2405 = vunpack.c.l.s8.bf16 %v997
        %v2406 = vunpack.c.l.s8.bf16 %v998
        %v2407 = vunpack.c.l.s8.bf16 %v999
        %v2408 = vunpack.c.l.s8.bf16 %v1000
        %v2409 = vunpack.c.l.s8.bf16 %v1001
        %v2410 = vunpack.c.l.s8.bf16 %v1002
        %v2411 = vunpack.c.h.s8.bf16 %v995
        %v2412 = vunpack.c.h.s8.bf16 %v996
        %v2413 = vunpack.c.h.s8.bf16 %v997
        %v2414 = vunpack.c.h.s8.bf16 %v998
        %v2415 = vunpack.c.h.s8.bf16 %v999
        %v2416 = vunpack.c.h.s8.bf16 %v1000
        %v2417 = vunpack.c.h.s8.bf16 %v1001
        %v2418 = vunpack.c.h.s8.bf16 %v1002
        %v2419 = vunpack.c.l.s8.bf16 %v1003
        %v2420 = vunpack.c.l.s8.bf16 %v1004
        %v2421 = vunpack.c.l.s8.bf16 %v1005
        %v2422 = vunpack.c.l.s8.bf16 %v1006
        %v2423 = vunpack.c.l.s8.bf16 %v1007
        %v2424 = vunpack.c.l.s8.bf16 %v1008
        %v2425 = vunpack.c.l.s8.bf16 %v1009
        %v2426 = vunpack.c.l.s8.bf16 %v1010
        %v2427 = vunpack.c.h.s8.bf16 %v1003
        %v2428 = vunpack.c.h.s8.bf16 %v1004
        %v2429 = vunpack.c.h.s8.bf16 %v1005
        %v2430 = vunpack.c.h.s8.bf16 %v1006
        %v2431 = vunpack.c.h.s8.bf16 %v1007
        %v2432 = vunpack.c.h.s8.bf16 %v1008
        %v2433 = vunpack.c.h.s8.bf16 %v1009
        %v2434 = vunpack.c.h.s8.bf16 %v1010
        %v2435 = vunpack.c.l.s8.bf16 %v1011
        %v2436 = vunpack.c.l.s8.bf16 %v1012
        %v2437 = vunpack.c.l.s8.bf16 %v1013
        %v2438 = vunpack.c.l.s8.bf16 %v1014
        %v2439 = vunpack.c.l.s8.bf16 %v1015
        %v2440 = vunpack.c.l.s8.bf16 %v1016
        %v2441 = vunpack.c.l.s8.bf16 %v1017
        %v2442 = vunpack.c.l.s8.bf16 %v1018
        %v2443 = vunpack.c.h.s8.bf16 %v1011
        %v2444 = vunpack.c.h.s8.bf16 %v1012
        %v2445 = vunpack.c.h.s8.bf16 %v1013
        %v2446 = vunpack.c.h.s8.bf16 %v1014
        %v2447 = vunpack.c.h.s8.bf16 %v1015
        %v2448 = vunpack.c.h.s8.bf16 %v1016
        %v2449 = vunpack.c.h.s8.bf16 %v1017
        %v2450 = vunpack.c.h.s8.bf16 %v1018
        %v2451 = vunpack.c.l.s8.bf16 %v1019
        %v2452 = vunpack.c.l.s8.bf16 %v1020
        %v2453 = vunpack.c.l.s8.bf16 %v1021
        %v2454 = vunpack.c.l.s8.bf16 %v1022
        %v2455 = vunpack.c.l.s8.bf16 %v1023
        %v2456 = vunpack.c.l.s8.bf16 %v1024
        %v2457 = vunpack.c.l.s8.bf16 %v1025
        %v2458 = vunpack.c.l.s8.bf16 %v1026
        %v2459 = vunpack.c.h.s8.bf16 %v1019
        %v2460 = vunpack.c.h.s8.bf16 %v1020
        %v2461 = vunpack.c.h.s8.bf16 %v1021
        %v2462 = vunpack.c.h.s8.bf16 %v1022
        %v2463 = vunpack.c.h.s8.bf16 %v1023
        %v2464 = vunpack.c.h.s8.bf16 %v1024
        %v2465 = vunpack.c.h.s8.bf16 %v1025
        %v2466 = vunpack.c.h.s8.bf16 %v1026
        %v2467 = vunpack.c.l.s8.bf16 %v1027
        %v2468 = vunpack.c.l.s8.bf16 %v1028
        %v2469 = vunpack.c.l.s8.bf16 %v1029
        %v2470 = vunpack.c.l.s8.bf16 %v1030
        %v2471 = vunpack.c.l.s8.bf16 %v1031
        %v2472 = vunpack.c.l.s8.bf16 %v1032
        %v2473 = vunpack.c.l.s8.bf16 %v1033
        %v2474 = vunpack.c.l.s8.bf16 %v1034
        %v2475 = vunpack.c.h.s8.bf16 %v1027
        %v2476 = vunpack.c.h.s8.bf16 %v1028
        %v2477 = vunpack.c.h.s8.bf16 %v1029
        %v2478 = vunpack.c.h.s8.bf16 %v1030
        %v2479 = vunpack.c.h.s8.bf16 %v1031
        %v2480 = vunpack.c.h.s8.bf16 %v1032
        %v2481 = vunpack.c.h.s8.bf16 %v1033
        %v2482 = vunpack.c.h.s8.bf16 %v1034
        %v2483 = vunpack.c.l.s8.bf16 %v1035
        %v2484 = vunpack.c.l.s8.bf16 %v1036
        %v2485 = vunpack.c.l.s8.bf16 %v1037
        %v2486 = vunpack.c.l.s8.bf16 %v1038
        %v2487 = vunpack.c.l.s8.bf16 %v1039
        %v2488 = vunpack.c.l.s8.bf16 %v1040
        %v2489 = vunpack.c.l.s8.bf16 %v1041
        %v2490 = vunpack.c.l.s8.bf16 %v1042
        %v2491 = vunpack.c.h.s8.bf16 %v1035
        %v2492 = vunpack.c.h.s8.bf16 %v1036
        %v2493 = vunpack.c.h.s8.bf16 %v1037
        %v2494 = vunpack.c.h.s8.bf16 %v1038
        %v2495 = vunpack.c.h.s8.bf16 %v1039
        %v2496 = vunpack.c.h.s8.bf16 %v1040
        %v2497 = vunpack.c.h.s8.bf16 %v1041
        %v2498 = vunpack.c.h.s8.bf16 %v1042
        %v2499 = vunpack.c.l.s8.bf16 %v1043
        %v2500 = vunpack.c.l.s8.bf16 %v1044
        %v2501 = vunpack.c.l.s8.bf16 %v1045
        %v2502 = vunpack.c.l.s8.bf16 %v1046
        %v2503 = vunpack.c.l.s8.bf16 %v1047
        %v2504 = vunpack.c.l.s8.bf16 %v1048
        %v2505 = vunpack.c.l.s8.bf16 %v1049
        %v2506 = vunpack.c.l.s8.bf16 %v1050
        %v2507 = vunpack.c.h.s8.bf16 %v1043
        %v2508 = vunpack.c.h.s8.bf16 %v1044
        %v2509 = vunpack.c.h.s8.bf16 %v1045
        %v2510 = vunpack.c.h.s8.bf16 %v1046
        %v2511 = vunpack.c.h.s8.bf16 %v1047
        %v2512 = vunpack.c.h.s8.bf16 %v1048
        %v2513 = vunpack.c.h.s8.bf16 %v1049
        %v2514 = vunpack.c.h.s8.bf16 %v1050
        %v2515 = vunpack.c.l.s8.bf16 %v1051
        %v2516 = vunpack.c.l.s8.bf16 %v1052
        %v2517 = vunpack.c.l.s8.bf16 %v1053
        %v2518 = vunpack.c.l.s8.bf16 %v1054
        %v2519 = vunpack.c.l.s8.bf16 %v1055
        %v2520 = vunpack.c.l.s8.bf16 %v1056
        %v2521 = vunpack.c.l.s8.bf16 %v1057
        %v2522 = vunpack.c.l.s8.bf16 %v1058
        %v2523 = vunpack.c.h.s8.bf16 %v1051
        %v2524 = vunpack.c.h.s8.bf16 %v1052
        %v2525 = vunpack.c.h.s8.bf16 %v1053
        %v2526 = vunpack.c.h.s8.bf16 %v1054
        %v2527 = vunpack.c.h.s8.bf16 %v1055
        %v2528 = vunpack.c.h.s8.bf16 %v1056
        %v2529 = vunpack.c.h.s8.bf16 %v1057
        %v2530 = vunpack.c.h.s8.bf16 %v1058
        %v2531 = vunpack.c.l.s8.bf16 %v1059
        %v2532 = vunpack.c.l.s8.bf16 %v1060
        %v2533 = vunpack.c.l.s8.bf16 %v1061
        %v2534 = vunpack.c.l.s8.bf16 %v1062
        %v2535 = vunpack.c.l.s8.bf16 %v1063
        %v2536 = vunpack.c.l.s8.bf16 %v1064
        %v2537 = vunpack.c.l.s8.bf16 %v1065
        %v2538 = vunpack.c.l.s8.bf16 %v1066
        %v2539 = vunpack.c.h.s8.bf16 %v1059
        %v2540 = vunpack.c.h.s8.bf16 %v1060
        %v2541 = vunpack.c.h.s8.bf16 %v1061
        %v2542 = vunpack.c.h.s8.bf16 %v1062
        %v2543 = vunpack.c.h.s8.bf16 %v1063
        %v2544 = vunpack.c.h.s8.bf16 %v1064
        %v2545 = vunpack.c.h.s8.bf16 %v1065
        %v2546 = vunpack.c.h.s8.bf16 %v1066
        %v2547 = vunpack.c.l.s8.bf16 %v1067
        %v2548 = vunpack.c.l.s8.bf16 %v1068
        %v2549 = vunpack.c.l.s8.bf16 %v1069
        %v2550 = vunpack.c.l.s8.bf16 %v1070
        %v2551 = vunpack.c.l.s8.bf16 %v1071
        %v2552 = vunpack.c.l.s8.bf16 %v1072
        %v2553 = vunpack.c.l.s8.bf16 %v1073
        %v2554 = vunpack.c.l.s8.bf16 %v1074
        %v2555 = vunpack.c.h.s8.bf16 %v1067
        %v2556 = vunpack.c.h.s8.bf16 %v1068
        %v2557 = vunpack.c.h.s8.bf16 %v1069
        %v2558 = vunpack.c.h.s8.bf16 %v1070
        %v2559 = vunpack.c.h.s8.bf16 %v1071
        %v2560 = vunpack.c.h.s8.bf16 %v1072
        %v2561 = vunpack.c.h.s8.bf16 %v1073
        %v2562 = vunpack.c.h.s8.bf16 %v1074
        %v2563 = vunpack.c.l.s8.bf16 %v1075
        %v2564 = vunpack.c.l.s8.bf16 %v1076
        %v2565 = vunpack.c.l.s8.bf16 %v1077
        %v2566 = vunpack.c.l.s8.bf16 %v1078
        %v2567 = vunpack.c.l.s8.bf16 %v1079
        %v2568 = vunpack.c.l.s8.bf16 %v1080
        %v2569 = vunpack.c.l.s8.bf16 %v1081
        %v2570 = vunpack.c.l.s8.bf16 %v1082
        %v2571 = vunpack.c.h.s8.bf16 %v1075
        %v2572 = vunpack.c.h.s8.bf16 %v1076
        %v2573 = vunpack.c.h.s8.bf16 %v1077
        %v2574 = vunpack.c.h.s8.bf16 %v1078
        %v2575 = vunpack.c.h.s8.bf16 %v1079
        %v2576 = vunpack.c.h.s8.bf16 %v1080
        %v2577 = vunpack.c.h.s8.bf16 %v1081
        %v2578 = vunpack.c.h.s8.bf16 %v1082
        %v2579 = vunpack.c.l.s8.bf16 %v1083
        %v2580 = vunpack.c.l.s8.bf16 %v1084
        %v2581 = vunpack.c.l.s8.bf16 %v1085
        %v2582 = vunpack.c.l.s8.bf16 %v1086
        %v2583 = vunpack.c.l.s8.bf16 %v1087
        %v2584 = vunpack.c.l.s8.bf16 %v1088
        %v2585 = vunpack.c.l.s8.bf16 %v1089
        %v2586 = vunpack.c.l.s8.bf16 %v1090
        %v2587 = vunpack.c.h.s8.bf16 %v1083
        %v2588 = vunpack.c.h.s8.bf16 %v1084
        %v2589 = vunpack.c.h.s8.bf16 %v1085
        %v2590 = vunpack.c.h.s8.bf16 %v1086
        %v2591 = vunpack.c.h.s8.bf16 %v1087
        %v2592 = vunpack.c.h.s8.bf16 %v1088
        %v2593 = vunpack.c.h.s8.bf16 %v1089
        %v2594 = vunpack.c.h.s8.bf16 %v1090
        %v2595 = vunpack.c.l.s8.bf16 %v1091
        %v2596 = vunpack.c.l.s8.bf16 %v1092
        %v2597 = vunpack.c.l.s8.bf16 %v1093
        %v2598 = vunpack.c.l.s8.bf16 %v1094
        %v2599 = vunpack.c.l.s8.bf16 %v1095
        %v2600 = vunpack.c.l.s8.bf16 %v1096
        %v2601 = vunpack.c.l.s8.bf16 %v1097
        %v2602 = vunpack.c.l.s8.bf16 %v1098
        %v2603 = vunpack.c.h.s8.bf16 %v1091
        %v2604 = vunpack.c.h.s8.bf16 %v1092
        %v2605 = vunpack.c.h.s8.bf16 %v1093
        %v2606 = vunpack.c.h.s8.bf16 %v1094
        %v2607 = vunpack.c.h.s8.bf16 %v1095
        %v2608 = vunpack.c.h.s8.bf16 %v1096
        %v2609 = vunpack.c.h.s8.bf16 %v1097
        %v2610 = vunpack.c.h.s8.bf16 %v1098
        %v2611 = vunpack.c.l.s8.bf16 %v1099
        %v2612 = vunpack.c.l.s8.bf16 %v1100
        %v2613 = vunpack.c.l.s8.bf16 %v1101
        %v2614 = vunpack.c.l.s8.bf16 %v1102
        %v2615 = vunpack.c.l.s8.bf16 %v1103
        %v2616 = vunpack.c.l.s8.bf16 %v1104
        %v2617 = vunpack.c.l.s8.bf16 %v1105
        %v2618 = vunpack.c.l.s8.bf16 %v1106
        %v2619 = vunpack.c.h.s8.bf16 %v1099
        %v2620 = vunpack.c.h.s8.bf16 %v1100
        %v2621 = vunpack.c.h.s8.bf16 %v1101
        %v2622 = vunpack.c.h.s8.bf16 %v1102
        %v2623 = vunpack.c.h.s8.bf16 %v1103
        %v2624 = vunpack.c.h.s8.bf16 %v1104
        %v2625 = vunpack.c.h.s8.bf16 %v1105
        %v2626 = vunpack.c.h.s8.bf16 %v1106
        %v2627 = vunpack.c.l.s8.bf16 %v1107
        %v2628 = vunpack.c.l.s8.bf16 %v1108
        %v2629 = vunpack.c.l.s8.bf16 %v1109
        %v2630 = vunpack.c.l.s8.bf16 %v1110
        %v2631 = vunpack.c.l.s8.bf16 %v1111
        %v2632 = vunpack.c.l.s8.bf16 %v1112
        %v2633 = vunpack.c.l.s8.bf16 %v1113
        %v2634 = vunpack.c.l.s8.bf16 %v1114
        %v2635 = vunpack.c.h.s8.bf16 %v1107
        %v2636 = vunpack.c.h.s8.bf16 %v1108
        %v2637 = vunpack.c.h.s8.bf16 %v1109
        %v2638 = vunpack.c.h.s8.bf16 %v1110
        %v2639 = vunpack.c.h.s8.bf16 %v1111
        %v2640 = vunpack.c.h.s8.bf16 %v1112
        %v2641 = vunpack.c.h.s8.bf16 %v1113
        %v2642 = vunpack.c.h.s8.bf16 %v1114
        %v2643 = vunpack.c.l.s8.bf16 %v1115
        %v2644 = vunpack.c.l.s8.bf16 %v1116
        %v2645 = vunpack.c.l.s8.bf16 %v1117
        %v2646 = vunpack.c.l.s8.bf16 %v1118
        %v2647 = vunpack.c.l.s8.bf16 %v1119
        %v2648 = vunpack.c.l.s8.bf16 %v1120
        %v2649 = vunpack.c.l.s8.bf16 %v1121
        %v2650 = vunpack.c.l.s8.bf16 %v1122
        %v2651 = vunpack.c.h.s8.bf16 %v1115
        %v2652 = vunpack.c.h.s8.bf16 %v1116
        %v2653 = vunpack.c.h.s8.bf16 %v1117
        %v2654 = vunpack.c.h.s8.bf16 %v1118
        %v2655 = vunpack.c.h.s8.bf16 %v1119
        %v2656 = vunpack.c.h.s8.bf16 %v1120
        %v2657 = vunpack.c.h.s8.bf16 %v1121
        %v2658 = vunpack.c.h.s8.bf16 %v1122
        %2659 = vmatprep.subr.bf16.mxu0 %v1124
        %2660 = vmatpush1.bf16.msra.mxu0 %v1123
        %2661 = vmatprep.subr.bf16.mxu0 %v1132
        %2662 = vmatpush1.bf16.msra.mxu0 %v1131
        %2663 = vmatprep.subr.bf16.mxu0 %v1140
        %2664 = vmatpush1.bf16.msra.mxu0 %v1139
        %2665 = vmatprep.subr.bf16.mxu0 %v1148
        %2666 = vmatpush1.bf16.msra.mxu0 %v1147
        %2667 = vmatprep.subr.bf16.mxu0 %v1156
        %2668 = vmatpush1.bf16.msra.mxu0 %v1155
        %2669 = vmatprep.subr.bf16.mxu0 %v1164
        %2670 = vmatpush1.bf16.msra.mxu0 %v1163
        %2671 = vmatprep.subr.bf16.mxu0 %v1172
        %2672 = vmatpush1.bf16.msra.mxu0 %v1171
        %2673 = vmatprep.subr.bf16.mxu0 %v1180
        %2674 = vmatpush1.bf16.msra.mxu0 %v1179
        %2675 = vmatprep.subr.bf16.mxu0 %v1188
        %2676 = vmatpush1.bf16.msra.mxu0 %v1187
        %2677 = vmatprep.subr.bf16.mxu0 %v1196
        %2678 = vmatpush1.bf16.msra.mxu0 %v1195
        %2679 = vmatprep.subr.bf16.mxu0 %v1204
        %2680 = vmatpush1.bf16.msra.mxu0 %v1203
        %2681 = vmatprep.subr.bf16.mxu0 %v1212
        %2682 = vmatpush1.bf16.msra.mxu0 %v1211
        %2683 = vmatprep.subr.bf16.mxu0 %v1220
        %2684 = vmatpush1.bf16.msra.mxu0 %v1219
        %2685 = vmatprep.subr.bf16.mxu0 %v1228
        %2686 = vmatpush1.bf16.msra.mxu0 %v1227
        %2687 = vmatprep.subr.bf16.mxu0 %v1236
        %2688 = vmatpush1.bf16.msra.mxu0 %v1235
        %2689 = vmatprep.subr.bf16.mxu0 %v1244
        %2690 = vmatpush1.bf16.msra.mxu0 %v1243
        %2691 = vmatprep.mubr.bf16.mxu0 %v332
        %2692 = vmatmul.mubr.bf16.gmra.mrb[0].mxu0 %v331
        %v2693 = vpop.f32.mrb[0].mxu0
        %v2694 = vadd.f32 0.0, %v2693
        %v2695 = vpop.f32.mrb[0].mxu0
        %v2696 = vadd.f32 0.0, %v2695
        %v2697 = vpop.f32.mrb[0].mxu0
        %v2698 = vpop.f32.mrb[0].mxu0
        %2699 = vdwg.mxu0
        %2700 = vmatprep.subr.bf16.mxu0 %v1252
        %2701 = vmatpush1.bf16.msra.mxu0 %v1251
        %2702 = vmatprep.subr.bf16.mxu0 %v1260
        %2703 = vmatpush1.bf16.msra.mxu0 %v1259
        %2704 = vmatprep.subr.bf16.mxu0 %v1268
        %2705 = vmatpush1.bf16.msra.mxu0 %v1267
        %2706 = vmatprep.subr.bf16.mxu0 %v1276
        %2707 = vmatpush1.bf16.msra.mxu0 %v1275
        %2708 = vmatprep.subr.bf16.mxu0 %v1284
        %2709 = vmatpush1.bf16.msra.mxu0 %v1283
        %2710 = vmatprep.subr.bf16.mxu0 %v1292
        %2711 = vmatpush1.bf16.msra.mxu0 %v1291
        %2712 = vmatprep.subr.bf16.mxu0 %v1300
        %2713 = vmatpush1.bf16.msra.mxu0 %v1299
        %2714 = vmatprep.subr.bf16.mxu0 %v1308
        %2715 = vmatpush1.bf16.msra.mxu0 %v1307
        %2716 = vmatprep.subr.bf16.mxu0 %v1316
        %2717 = vmatpush1.bf16.msra.mxu0 %v1315
        %2718 = vmatprep.subr.bf16.mxu0 %v1324
        %2719 = vmatpush1.bf16.msra.mxu0 %v1323
        %2720 = vmatprep.subr.bf16.mxu0 %v1332
        %2721 = vmatpush1.bf16.msra.mxu0 %v1331
        %2722 = vmatprep.subr.bf16.mxu0 %v1340
        %2723 = vmatpush1.bf16.msra.mxu0 %v1339
        %2724 = vmatprep.subr.bf16.mxu0 %v1348
        %2725 = vmatpush1.bf16.msra.mxu0 %v1347
        %2726 = vmatprep.subr.bf16.mxu0 %v1356
        %2727 = vmatpush1.bf16.msra.mxu0 %v1355
        %2728 = vmatprep.subr.bf16.mxu0 %v1364
        %2729 = vmatpush1.bf16.msra.mxu0 %v1363
        %2730 = vmatprep.subr.bf16.mxu0 %v1372
        %2731 = vmatpush1.bf16.msra.mxu0 %v1371
        %2732 = vmatprep.mubr.bf16.mxu0 %v334
        %2733 = vmatmul.mubr.bf16.gmra.mrb[0].mxu0 %v333
        %v2734 = vpop.f32.mrb[0].mxu0
        %v2735 = vadd.f32 %v2694, %v2734
        %v2736 = vpop.f32.mrb[0].mxu0
        %v2737 = vadd.f32 %v2696, %v2736
        %v2738 = vpop.f32.mrb[0].mxu0
        %v2739 = vpop.f32.mrb[0].mxu0
        %2740 = vdwg.mxu0
        %2741 = vmatprep.subr.bf16.mxu0 %v1380
        %2742 = vmatpush1.bf16.msra.mxu0 %v1379
        %2743 = vmatprep.subr.bf16.mxu0 %v1388
        %2744 = vmatpush1.bf16.msra.mxu0 %v1387
        %2745 = vmatprep.subr.bf16.mxu0 %v1396
        %2746 = vmatpush1.bf16.msra.mxu0 %v1395
        %2747 = vmatprep.subr.bf16.mxu0 %v1404
        %2748 = vmatpush1.bf16.msra.mxu0 %v1403
        %2749 = vmatprep.subr.bf16.mxu0 %v1412
        %2750 = vmatpush1.bf16.msra.mxu0 %v1411
        %2751 = vmatprep.subr.bf16.mxu0 %v1420
        %2752 = vmatpush1.bf16.msra.mxu0 %v1419
        %2753 = vmatprep.subr.bf16.mxu0 %v1428
        %2754 = vmatpush1.bf16.msra.mxu0 %v1427
        %2755 = vmatprep.subr.bf16.mxu0 %v1436
        %2756 = vmatpush1.bf16.msra.mxu0 %v1435
        %2757 = vmatprep.subr.bf16.mxu0 %v1444
        %2758 = vmatpush1.bf16.msra.mxu0 %v1443
        %2759 = vmatprep.subr.bf16.mxu0 %v1452
        %2760 = vmatpush1.bf16.msra.mxu0 %v1451
        %2761 = vmatprep.subr.bf16.mxu0 %v1460
        %2762 = vmatpush1.bf16.msra.mxu0 %v1459
        %2763 = vmatprep.subr.bf16.mxu0 %v1468
        %2764 = vmatpush1.bf16.msra.mxu0 %v1467
        %2765 = vmatprep.subr.bf16.mxu0 %v1476
        %2766 = vmatpush1.bf16.msra.mxu0 %v1475
        %2767 = vmatprep.subr.bf16.mxu0 %v1484
        %2768 = vmatpush1.bf16.msra.mxu0 %v1483
        %2769 = vmatprep.subr.bf16.mxu0 %v1492
        %2770 = vmatpush1.bf16.msra.mxu0 %v1491
        %2771 = vmatprep.subr.bf16.mxu0 %v1500
        %2772 = vmatpush1.bf16.msra.mxu0 %v1499
        %2773 = vmatprep.mubr.bf16.mxu0 %v336
        %2774 = vmatmul.mubr.bf16.gmra.mrb[0].mxu0 %v335
        %v2775 = vpop.f32.mrb[0].mxu0
        %v2776 = vadd.f32 %v2735, %v2775
        %v2777 = vpop.f32.mrb[0].mxu0
        %v2778 = vadd.f32 %v2737, %v2777
        %v2779 = vpop.f32.mrb[0].mxu0
        %v2780 = vpop.f32.mrb[0].mxu0
        %2781 = vdwg.mxu0
        %2782 = vmatprep.subr.bf16.mxu0 %v1508
        %2783 = vmatpush1.bf16.msra.mxu0 %v1507
        %2784 = vmatprep.subr.bf16.mxu0 %v1516
        %2785 = vmatpush1.bf16.msra.mxu0 %v1515
        %2786 = vmatprep.subr.bf16.mxu0 %v1524
        %2787 = vmatpush1.bf16.msra.mxu0 %v1523
        %2788 = vmatprep.subr.bf16.mxu0 %v1532
        %2789 = vmatpush1.bf16.msra.mxu0 %v1531
        %2790 = vmatprep.subr.bf16.mxu0 %v1540
        %2791 = vmatpush1.bf16.msra.mxu0 %v1539
        %2792 = vmatprep.subr.bf16.mxu0 %v1548
        %2793 = vmatpush1.bf16.msra.mxu0 %v1547
        %2794 = vmatprep.subr.bf16.mxu0 %v1556
        %2795 = vmatpush1.bf16.msra.mxu0 %v1555
        %2796 = vmatprep.subr.bf16.mxu0 %v1564
        %2797 = vmatpush1.bf16.msra.mxu0 %v1563
        %2798 = vmatprep.subr.bf16.mxu0 %v1572
        %2799 = vmatpush1.bf16.msra.mxu0 %v1571
        %2800 = vmatprep.subr.bf16.mxu0 %v1580
        %2801 = vmatpush1.bf16.msra.mxu0 %v1579
        %2802 = vmatprep.subr.bf16.mxu0 %v1588
        %2803 = vmatpush1.bf16.msra.mxu0 %v1587
        %2804 = vmatprep.subr.bf16.mxu0 %v1596
        %2805 = vmatpush1.bf16.msra.mxu0 %v1595
        %2806 = vmatprep.subr.bf16.mxu0 %v1604
        %2807 = vmatpush1.bf16.msra.mxu0 %v1603
        %2808 = vmatprep.subr.bf16.mxu0 %v1612
        %2809 = vmatpush1.bf16.msra.mxu0 %v1611
        %2810 = vmatprep.subr.bf16.mxu0 %v1620
        %2811 = vmatpush1.bf16.msra.mxu0 %v1619
        %2812 = vmatprep.subr.bf16.mxu0 %v1628
        %2813 = vmatpush1.bf16.msra.mxu0 %v1627
        %2814 = vmatprep.mubr.bf16.mxu0 %v338
        %2815 = vmatmul.mubr.bf16.gmra.mrb[0].mxu0 %v337
        %v2816 = vpop.f32.mrb[0].mxu0
        %v2817 = vadd.f32 %v2776, %v2816
        %v2818 = vpop.f32.mrb[0].mxu0
        %v2819 = vadd.f32 %v2778, %v2818
        %v2820 = vpop.f32.mrb[0].mxu0
        %v2821 = vpop.f32.mrb[0].mxu0
        %2822 = vdwg.mxu0
        %2823 = vmatprep.subr.bf16.mxu0 %v1636
        %2824 = vmatpush1.bf16.msra.mxu0 %v1635
        %2825 = vmatprep.subr.bf16.mxu0 %v1644
        %2826 = vmatpush1.bf16.msra.mxu0 %v1643
        %2827 = vmatprep.subr.bf16.mxu0 %v1652
        %2828 = vmatpush1.bf16.msra.mxu0 %v1651
        %2829 = vmatprep.subr.bf16.mxu0 %v1660
        %2830 = vmatpush1.bf16.msra.mxu0 %v1659
        %2831 = vmatprep.subr.bf16.mxu0 %v1668
        %2832 = vmatpush1.bf16.msra.mxu0 %v1667
        %2833 = vmatprep.subr.bf16.mxu0 %v1676
        %2834 = vmatpush1.bf16.msra.mxu0 %v1675
        %2835 = vmatprep.subr.bf16.mxu0 %v1684
        %2836 = vmatpush1.bf16.msra.mxu0 %v1683
        %2837 = vmatprep.subr.bf16.mxu0 %v1692
        %2838 = vmatpush1.bf16.msra.mxu0 %v1691
        %2839 = vmatprep.subr.bf16.mxu0 %v1700
        %2840 = vmatpush1.bf16.msra.mxu0 %v1699
        %2841 = vmatprep.subr.bf16.mxu0 %v1708
        %2842 = vmatpush1.bf16.msra.mxu0 %v1707
        %2843 = vmatprep.subr.bf16.mxu0 %v1716
        %2844 = vmatpush1.bf16.msra.mxu0 %v1715
        %2845 = vmatprep.subr.bf16.mxu0 %v1724
        %2846 = vmatpush1.bf16.msra.mxu0 %v1723
        %2847 = vmatprep.subr.bf16.mxu0 %v1732
        %2848 = vmatpush1.bf16.msra.mxu0 %v1731
        %2849 = vmatprep.subr.bf16.mxu0 %v1740
        %2850 = vmatpush1.bf16.msra.mxu0 %v1739
        %2851 = vmatprep.subr.bf16.mxu0 %v1748
        %2852 = vmatpush1.bf16.msra.mxu0 %v1747
        %2853 = vmatprep.subr.bf16.mxu0 %v1756
        %2854 = vmatpush1.bf16.msra.mxu0 %v1755
        %2855 = vmatprep.mubr.bf16.mxu0 %v340
        %2856 = vmatmul.mubr.bf16.gmra.mrb[0].mxu0 %v339
        %v2857 = vpop.f32.mrb[0].mxu0
        %v2858 = vadd.f32 %v2817, %v2857
        %v2859 = vpop.f32.mrb[0].mxu0
        %v2860 = vadd.f32 %v2819, %v2859
        %v2861 = vpop.f32.mrb[0].mxu0
        %v2862 = vpop.f32.mrb[0].mxu0
        %2863 = vdwg.mxu0
        %2864 = vmatprep.subr.bf16.mxu0 %v1764
        %2865 = vmatpush1.bf16.msra.mxu0 %v1763
        %2866 = vmatprep.subr.bf16.mxu0 %v1772
        %2867 = vmatpush1.bf16.msra.mxu0 %v1771
        %2868 = vmatprep.subr.bf16.mxu0 %v1780
        %2869 = vmatpush1.bf16.msra.mxu0 %v1779
        %2870 = vmatprep.subr.bf16.mxu0 %v1788
        %2871 = vmatpush1.bf16.msra.mxu0 %v1787
        %2872 = vmatprep.subr.bf16.mxu0 %v1796
        %2873 = vmatpush1.bf16.msra.mxu0 %v1795
        %2874 = vmatprep.subr.bf16.mxu0 %v1804
        %2875 = vmatpush1.bf16.msra.mxu0 %v1803
        %2876 = vmatprep.subr.bf16.mxu0 %v1812
        %2877 = vmatpush1.bf16.msra.mxu0 %v1811
        %2878 = vmatprep.subr.bf16.mxu0 %v1820
        %2879 = vmatpush1.bf16.msra.mxu0 %v1819
        %2880 = vmatprep.subr.bf16.mxu0 %v1828
        %2881 = vmatpush1.bf16.msra.mxu0 %v1827
        %2882 = vmatprep.subr.bf16.mxu0 %v1836
        %2883 = vmatpush1.bf16.msra.mxu0 %v1835
        %2884 = vmatprep.subr.bf16.mxu0 %v1844
        %2885 = vmatpush1.bf16.msra.mxu0 %v1843
        %2886 = vmatprep.subr.bf16.mxu0 %v1852
        %2887 = vmatpush1.bf16.msra.mxu0 %v1851
        %2888 = vmatprep.subr.bf16.mxu0 %v1860
        %2889 = vmatpush1.bf16.msra.mxu0 %v1859
        %2890 = vmatprep.subr.bf16.mxu0 %v1868
        %2891 = vmatpush1.bf16.msra.mxu0 %v1867
        %2892 = vmatprep.subr.bf16.mxu0 %v1876
        %2893 = vmatpush1.bf16.msra.mxu0 %v1875
        %2894 = vmatprep.subr.bf16.mxu0 %v1884
        %2895 = vmatpush1.bf16.msra.mxu0 %v1883
        %2896 = vmatprep.mubr.bf16.mxu0 %v342
        %2897 = vmatmul.mubr.bf16.gmra.mrb[0].mxu0 %v341
        %v2898 = vpop.f32.mrb[0].mxu0
        %v2899 = vadd.f32 %v2858, %v2898
        %v2900 = vpop.f32.mrb[0].mxu0
        %v2901 = vadd.f32 %v2860, %v2900
        %v2902 = vpop.f32.mrb[0].mxu0
        %v2903 = vpop.f32.mrb[0].mxu0
        %2904 = vdwg.mxu0
        %2905 = vmatprep.subr.bf16.mxu0 %v1892
        %2906 = vmatpush1.bf16.msra.mxu0 %v1891
        %2907 = vmatprep.subr.bf16.mxu0 %v1900
        %2908 = vmatpush1.bf16.msra.mxu0 %v1899
        %2909 = vmatprep.subr.bf16.mxu0 %v1908
        %2910 = vmatpush1.bf16.msra.mxu0 %v1907
        %2911 = vmatprep.subr.bf16.mxu0 %v1916
        %2912 = vmatpush1.bf16.msra.mxu0 %v1915
        %2913 = vmatprep.subr.bf16.mxu0 %v1924
        %2914 = vmatpush1.bf16.msra.mxu0 %v1923
        %2915 = vmatprep.subr.bf16.mxu0 %v1932
        %2916 = vmatpush1.bf16.msra.mxu0 %v1931
        %2917 = vmatprep.subr.bf16.mxu0 %v1940
        %2918 = vmatpush1.bf16.msra.mxu0 %v1939
        %2919 = vmatprep.subr.bf16.mxu0 %v1948
        %2920 = vmatpush1.bf16.msra.mxu0 %v1947
        %2921 = vmatprep.subr.bf16.mxu0 %v1956
        %2922 = vmatpush1.bf16.msra.mxu0 %v1955
        %2923 = vmatprep.subr.bf16.mxu0 %v1964
        %2924 = vmatpush1.bf16.msra.mxu0 %v1963
        %2925 = vmatprep.subr.bf16.mxu0 %v1972
        %2926 = vmatpush1.bf16.msra.mxu0 %v1971
        %2927 = vmatprep.subr.bf16.mxu0 %v1980
        %2928 = vmatpush1.bf16.msra.mxu0 %v1979
        %2929 = vmatprep.subr.bf16.mxu0 %v1988
        %2930 = vmatpush1.bf16.msra.mxu0 %v1987
        %2931 = vmatprep.subr.bf16.mxu0 %v1996
        %2932 = vmatpush1.bf16.msra.mxu0 %v1995
        %2933 = vmatprep.subr.bf16.mxu0 %v2004
        %2934 = vmatpush1.bf16.msra.mxu0 %v2003
        %2935 = vmatprep.subr.bf16.mxu0 %v2012
        %2936 = vmatpush1.bf16.msra.mxu0 %v2011
        %2937 = vmatprep.mubr.bf16.mxu0 %v344
        %2938 = vmatmul.mubr.bf16.gmra.mrb[0].mxu0 %v343
        %v2939 = vpop.f32.mrb[0].mxu0
        %v2940 = vadd.f32 %v2899, %v2939
        %v2941 = vpop.f32.mrb[0].mxu0
        %v2942 = vadd.f32 %v2901, %v2941
        %v2943 = vpop.f32.mrb[0].mxu0
        %v2944 = vpop.f32.mrb[0].mxu0
        %2945 = vdwg.mxu0
        %2946 = vmatprep.subr.bf16.mxu0 %v2020
        %2947 = vmatpush1.bf16.msra.mxu0 %v2019
        %2948 = vmatprep.subr.bf16.mxu0 %v2028
        %2949 = vmatpush1.bf16.msra.mxu0 %v2027
        %2950 = vmatprep.subr.bf16.mxu0 %v2036
        %2951 = vmatpush1.bf16.msra.mxu0 %v2035
        %2952 = vmatprep.subr.bf16.mxu0 %v2044
        %2953 = vmatpush1.bf16.msra.mxu0 %v2043
        %2954 = vmatprep.subr.bf16.mxu0 %v2052
        %2955 = vmatpush1.bf16.msra.mxu0 %v2051
        %2956 = vmatprep.subr.bf16.mxu0 %v2060
        %2957 = vmatpush1.bf16.msra.mxu0 %v2059
        %2958 = vmatprep.subr.bf16.mxu0 %v2068
        %2959 = vmatpush1.bf16.msra.mxu0 %v2067
        %2960 = vmatprep.subr.bf16.mxu0 %v2076
        %2961 = vmatpush1.bf16.msra.mxu0 %v2075
        %2962 = vmatprep.subr.bf16.mxu0 %v2084
        %2963 = vmatpush1.bf16.msra.mxu0 %v2083
        %2964 = vmatprep.subr.bf16.mxu0 %v2092
        %2965 = vmatpush1.bf16.msra.mxu0 %v2091
        %2966 = vmatprep.subr.bf16.mxu0 %v2100
        %2967 = vmatpush1.bf16.msra.mxu0 %v2099
        %2968 = vmatprep.subr.bf16.mxu0 %v2108
        %2969 = vmatpush1.bf16.msra.mxu0 %v2107
        %2970 = vmatprep.subr.bf16.mxu0 %v2116
        %2971 = vmatpush1.bf16.msra.mxu0 %v2115
        %2972 = vmatprep.subr.bf16.mxu0 %v2124
        %2973 = vmatpush1.bf16.msra.mxu0 %v2123
        %2974 = vmatprep.subr.bf16.mxu0 %v2132
        %2975 = vmatpush1.bf16.msra.mxu0 %v2131
        %2976 = vmatprep.subr.bf16.mxu0 %v2140
        %2977 = vmatpush1.bf16.msra.mxu0 %v2139
        %2978 = vmatprep.mubr.bf16.mxu0 %v346
        %2979 = vmatmul.mubr.bf16.gmra.mrb[0].mxu0 %v345
        %v2980 = vpop.f32.mrb[0].mxu0
        %v2981 = vadd.f32 %v2940, %v2980
        %v2982 = vpop.f32.mrb[0].mxu0
        %v2983 = vadd.f32 %v2942, %v2982
        %v2984 = vpop.f32.mrb[0].mxu0
        %v2985 = vpop.f32.mrb[0].mxu0
        %2986 = vdwg.mxu0
        %2987 = vmatprep.subr.bf16.mxu0 %v2148
        %2988 = vmatpush1.bf16.msra.mxu0 %v2147
        %2989 = vmatprep.subr.bf16.mxu0 %v2156
        %2990 = vmatpush1.bf16.msra.mxu0 %v2155
        %2991 = vmatprep.subr.bf16.mxu0 %v2164
        %2992 = vmatpush1.bf16.msra.mxu0 %v2163
        %2993 = vmatprep.subr.bf16.mxu0 %v2172
        %2994 = vmatpush1.bf16.msra.mxu0 %v2171
        %2995 = vmatprep.subr.bf16.mxu0 %v2180
        %2996 = vmatpush1.bf16.msra.mxu0 %v2179
        %2997 = vmatprep.subr.bf16.mxu0 %v2188
        %2998 = vmatpush1.bf16.msra.mxu0 %v2187
        %2999 = vmatprep.subr.bf16.mxu0 %v2196
        %3000 = vmatpush1.bf16.msra.mxu0 %v2195
        %3001 = vmatprep.subr.bf16.mxu0 %v2204
        %3002 = vmatpush1.bf16.msra.mxu0 %v2203
        %3003 = vmatprep.subr.bf16.mxu0 %v2212
        %3004 = vmatpush1.bf16.msra.mxu0 %v2211
        %3005 = vmatprep.subr.bf16.mxu0 %v2220
        %3006 = vmatpush1.bf16.msra.mxu0 %v2219
        %3007 = vmatprep.subr.bf16.mxu0 %v2228
        %3008 = vmatpush1.bf16.msra.mxu0 %v2227
        %3009 = vmatprep.subr.bf16.mxu0 %v2236
        %3010 = vmatpush1.bf16.msra.mxu0 %v2235
        %3011 = vmatprep.subr.bf16.mxu0 %v2244
        %3012 = vmatpush1.bf16.msra.mxu0 %v2243
        %3013 = vmatprep.subr.bf16.mxu0 %v2252
        %3014 = vmatpush1.bf16.msra.mxu0 %v2251
        %3015 = vmatprep.subr.bf16.mxu0 %v2260
        %3016 = vmatpush1.bf16.msra.mxu0 %v2259
        %3017 = vmatprep.subr.bf16.mxu0 %v2268
        %3018 = vmatpush1.bf16.msra.mxu0 %v2267
        %3019 = vmatprep.mubr.bf16.mxu0 %v348
        %3020 = vmatmul.mubr.bf16.gmra.mrb[0].mxu0 %v347
        %v3021 = vpop.f32.mrb[0].mxu0
        %v3022 = vadd.f32 %v2981, %v3021
        %v3023 = vpop.f32.mrb[0].mxu0
        %v3024 = vadd.f32 %v2983, %v3023
        %v3025 = vpop.f32.mrb[0].mxu0
        %v3026 = vpop.f32.mrb[0].mxu0
        %3027 = vdwg.mxu0
        %3028 = vmatprep.subr.bf16.mxu0 %v2276
        %3029 = vmatpush1.bf16.msra.mxu0 %v2275
        %3030 = vmatprep.subr.bf16.mxu0 %v2284
        %3031 = vmatpush1.bf16.msra.mxu0 %v2283
        %3032 = vmatprep.subr.bf16.mxu0 %v2292
        %3033 = vmatpush1.bf16.msra.mxu0 %v2291
        %3034 = vmatprep.subr.bf16.mxu0 %v2300
        %3035 = vmatpush1.bf16.msra.mxu0 %v2299
        %3036 = vmatprep.subr.bf16.mxu0 %v2308
        %3037 = vmatpush1.bf16.msra.mxu0 %v2307
        %3038 = vmatprep.subr.bf16.mxu0 %v2316
        %3039 = vmatpush1.bf16.msra.mxu0 %v2315
        %3040 = vmatprep.subr.bf16.mxu0 %v2324
        %3041 = vmatpush1.bf16.msra.mxu0 %v2323
        %3042 = vmatprep.subr.bf16.mxu0 %v2332
        %3043 = vmatpush1.bf16.msra.mxu0 %v2331
        %3044 = vmatprep.subr.bf16.mxu0 %v2340
        %3045 = vmatpush1.bf16.msra.mxu0 %v2339
        %3046 = vmatprep.subr.bf16.mxu0 %v2348
        %3047 = vmatpush1.bf16.msra.mxu0 %v2347
        %3048 = vmatprep.subr.bf16.mxu0 %v2356
        %3049 = vmatpush1.bf16.msra.mxu0 %v2355
        %3050 = vmatprep.subr.bf16.mxu0 %v2364
        %3051 = vmatpush1.bf16.msra.mxu0 %v2363
        %3052 = vmatprep.subr.bf16.mxu0 %v2372
        %3053 = vmatpush1.bf16.msra.mxu0 %v2371
        %3054 = vmatprep.subr.bf16.mxu0 %v2380
        %3055 = vmatpush1.bf16.msra.mxu0 %v2379
        %3056 = vmatprep.subr.bf16.mxu0 %v2388
        %3057 = vmatpush1.bf16.msra.mxu0 %v2387
        %3058 = vmatprep.subr.bf16.mxu0 %v2396
        %3059 = vmatpush1.bf16.msra.mxu0 %v2395
        %3060 = vmatprep.mubr.bf16.mxu0 %v350
        %3061 = vmatmul.mubr.bf16.gmra.mrb[0].mxu0 %v349
        %v3062 = vpop.f32.mrb[0].mxu0
        %v3063 = vadd.f32 %v3022, %v3062
        %v3064 = vpop.f32.mrb[0].mxu0
        %v3065 = vadd.f32 %v3024, %v3064
        %v3066 = vpop.f32.mrb[0].mxu0
        %v3067 = vpop.f32.mrb[0].mxu0
        %3068 = vdwg.mxu0
        %3069 = vmatprep.subr.bf16.mxu0 %v2404
        %3070 = vmatpush1.bf16.msra.mxu0 %v2403
        %3071 = vmatprep.subr.bf16.mxu0 %v2412
        %3072 = vmatpush1.bf16.msra.mxu0 %v2411
        %3073 = vmatprep.subr.bf16.mxu0 %v2420
        %3074 = vmatpush1.bf16.msra.mxu0 %v2419
        %3075 = vmatprep.subr.bf16.mxu0 %v2428
        %3076 = vmatpush1.bf16.msra.mxu0 %v2427
        %3077 = vmatprep.subr.bf16.mxu0 %v2436
        %3078 = vmatpush1.bf16.msra.mxu0 %v2435
        %3079 = vmatprep.subr.bf16.mxu0 %v2444
        %3080 = vmatpush1.bf16.msra.mxu0 %v2443
        %3081 = vmatprep.subr.bf16.mxu0 %v2452
        %3082 = vmatpush1.bf16.msra.mxu0 %v2451
        %3083 = vmatprep.subr.bf16.mxu0 %v2460
        %3084 = vmatpush1.bf16.msra.mxu0 %v2459
        %3085 = vmatprep.subr.bf16.mxu0 %v2468
        %3086 = vmatpush1.bf16.msra.mxu0 %v2467
        %3087 = vmatprep.subr.bf16.mxu0 %v2476
        %3088 = vmatpush1.bf16.msra.mxu0 %v2475
        %3089 = vmatprep.subr.bf16.mxu0 %v2484
        %3090 = vmatpush1.bf16.msra.mxu0 %v2483
        %3091 = vmatprep.subr.bf16.mxu0 %v2492
        %3092 = vmatpush1.bf16.msra.mxu0 %v2491
        %3093 = vmatprep.subr.bf16.mxu0 %v2500
        %3094 = vmatpush1.bf16.msra.mxu0 %v2499
        %3095 = vmatprep.subr.bf16.mxu0 %v2508
        %3096 = vmatpush1.bf16.msra.mxu0 %v2507
        %3097 = vmatprep.subr.bf16.mxu0 %v2516
        %3098 = vmatpush1.bf16.msra.mxu0 %v2515
        %3099 = vmatprep.subr.bf16.mxu0 %v2524
        %3100 = vmatpush1.bf16.msra.mxu0 %v2523
        %3101 = vmatprep.mubr.bf16.mxu0 %v352
        %3102 = vmatmul.mubr.bf16.gmra.mrb[0].mxu0 %v351
        %v3103 = vpop.f32.mrb[0].mxu0
        %v3104 = vadd.f32 %v3063, %v3103
        %v3105 = vpop.f32.mrb[0].mxu0
        %v3106 = vadd.f32 %v3065, %v3105
        %v3107 = vpop.f32.mrb[0].mxu0
        %v3108 = vpop.f32.mrb[0].mxu0
        %3109 = vdwg.mxu0
        %3110 = vmatprep.subr.bf16.mxu0 %v2532
        %3111 = vmatpush1.bf16.msra.mxu0 %v2531
        %3112 = vmatprep.subr.bf16.mxu0 %v2540
        %3113 = vmatpush1.bf16.msra.mxu0 %v2539
        %3114 = vmatprep.subr.bf16.mxu0 %v2548
        %3115 = vmatpush1.bf16.msra.mxu0 %v2547
        %3116 = vmatprep.subr.bf16.mxu0 %v2556
        %3117 = vmatpush1.bf16.msra.mxu0 %v2555
        %3118 = vmatprep.subr.bf16.mxu0 %v2564
        %3119 = vmatpush1.bf16.msra.mxu0 %v2563
        %3120 = vmatprep.subr.bf16.mxu0 %v2572
        %3121 = vmatpush1.bf16.msra.mxu0 %v2571
        %3122 = vmatprep.subr.bf16.mxu0 %v2580
        %3123 = vmatpush1.bf16.msra.mxu0 %v2579
        %3124 = vmatprep.subr.bf16.mxu0 %v2588
        %3125 = vmatpush1.bf16.msra.mxu0 %v2587
        %3126 = vmatprep.subr.bf16.mxu0 %v2596
        %3127 = vmatpush1.bf16.msra.mxu0 %v2595
        %3128 = vmatprep.subr.bf16.mxu0 %v2604
        %3129 = vmatpush1.bf16.msra.mxu0 %v2603
        %3130 = vmatprep.subr.bf16.mxu0 %v2612
        %3131 = vmatpush1.bf16.msra.mxu0 %v2611
        %3132 = vmatprep.subr.bf16.mxu0 %v2620
        %3133 = vmatpush1.bf16.msra.mxu0 %v2619
        %3134 = vmatprep.subr.bf16.mxu0 %v2628
        %3135 = vmatpush1.bf16.msra.mxu0 %v2627
        %3136 = vmatprep.subr.bf16.mxu0 %v2636
        %3137 = vmatpush1.bf16.msra.mxu0 %v2635
        %3138 = vmatprep.subr.bf16.mxu0 %v2644
        %3139 = vmatpush1.bf16.msra.mxu0 %v2643
        %3140 = vmatprep.subr.bf16.mxu0 %v2652
        %3141 = vmatpush1.bf16.msra.mxu0 %v2651
        %3142 = vmatprep.mubr.bf16.mxu0 %v354
        %3143 = vmatmul.mubr.bf16.gmra.mrb[0].mxu0 %v353
        %v3144 = vpop.f32.mrb[0].mxu0
        %v3145 = vadd.f32 %v3104, %v3144
        %v3146 = vpop.f32.mrb[0].mxu0
        %v3147 = vadd.f32 %v3106, %v3146
        %v3148 = vpop.f32.mrb[0].mxu0
        %v3149 = vpop.f32.mrb[0].mxu0
        %3150 = vdwg.mxu0
        %3151 = vmatprep.subr.bf16.mxu0 %v1126
        %3152 = vmatpush1.bf16.msra.mxu0 %v1125
        %3153 = vmatprep.subr.bf16.mxu0 %v1134
        %3154 = vmatpush1.bf16.msra.mxu0 %v1133
        %3155 = vmatprep.subr.bf16.mxu0 %v1142
        %3156 = vmatpush1.bf16.msra.mxu0 %v1141
        %3157 = vmatprep.subr.bf16.mxu0 %v1150
        %3158 = vmatpush1.bf16.msra.mxu0 %v1149
        %3159 = vmatprep.subr.bf16.mxu0 %v1158
        %3160 = vmatpush1.bf16.msra.mxu0 %v1157
        %3161 = vmatprep.subr.bf16.mxu0 %v1166
        %3162 = vmatpush1.bf16.msra.mxu0 %v1165
        %3163 = vmatprep.subr.bf16.mxu0 %v1174
        %3164 = vmatpush1.bf16.msra.mxu0 %v1173
        %3165 = vmatprep.subr.bf16.mxu0 %v1182
        %3166 = vmatpush1.bf16.msra.mxu0 %v1181
        %3167 = vmatprep.subr.bf16.mxu0 %v1190
        %3168 = vmatpush1.bf16.msra.mxu0 %v1189
        %3169 = vmatprep.subr.bf16.mxu0 %v1198
        %3170 = vmatpush1.bf16.msra.mxu0 %v1197
        %3171 = vmatprep.subr.bf16.mxu0 %v1206
        %3172 = vmatpush1.bf16.msra.mxu0 %v1205
        %3173 = vmatprep.subr.bf16.mxu0 %v1214
        %3174 = vmatpush1.bf16.msra.mxu0 %v1213
        %3175 = vmatprep.subr.bf16.mxu0 %v1222
        %3176 = vmatpush1.bf16.msra.mxu0 %v1221
        %3177 = vmatprep.subr.bf16.mxu0 %v1230
        %3178 = vmatpush1.bf16.msra.mxu0 %v1229
        %3179 = vmatprep.subr.bf16.mxu0 %v1238
        %3180 = vmatpush1.bf16.msra.mxu0 %v1237
        %3181 = vmatprep.subr.bf16.mxu0 %v1246
        %3182 = vmatpush1.bf16.msra.mxu0 %v1245
        %3183 = vmatprep.mubr.bf16.mxu0 %v332
        %3184 = vmatmul.mubr.bf16.gmra.mrb[0].mxu0 %v331
        %v3185 = vpop.f32.mrb[0].mxu0
        %v3186 = vadd.f32 0.0, %v3185
        %v3187 = vpop.f32.mrb[0].mxu0
        %v3188 = vadd.f32 0.0, %v3187
        %v3189 = vpop.f32.mrb[0].mxu0
        %v3190 = vpop.f32.mrb[0].mxu0
        %3191 = vdwg.mxu0
        %3192 = vmatprep.subr.bf16.mxu0 %v1254
        %3193 = vmatpush1.bf16.msra.mxu0 %v1253
        %3194 = vmatprep.subr.bf16.mxu0 %v1262
        %3195 = vmatpush1.bf16.msra.mxu0 %v1261
        %3196 = vmatprep.subr.bf16.mxu0 %v1270
        %3197 = vmatpush1.bf16.msra.mxu0 %v1269
        %3198 = vmatprep.subr.bf16.mxu0 %v1278
        %3199 = vmatpush1.bf16.msra.mxu0 %v1277
        %3200 = vmatprep.subr.bf16.mxu0 %v1286
        %3201 = vmatpush1.bf16.msra.mxu0 %v1285
        %3202 = vmatprep.subr.bf16.mxu0 %v1294
        %3203 = vmatpush1.bf16.msra.mxu0 %v1293
        %3204 = vmatprep.subr.bf16.mxu0 %v1302
        %3205 = vmatpush1.bf16.msra.mxu0 %v1301
        %3206 = vmatprep.subr.bf16.mxu0 %v1310
        %3207 = vmatpush1.bf16.msra.mxu0 %v1309
        %3208 = vmatprep.subr.bf16.mxu0 %v1318
        %3209 = vmatpush1.bf16.msra.mxu0 %v1317
        %3210 = vmatprep.subr.bf16.mxu0 %v1326
        %3211 = vmatpush1.bf16.msra.mxu0 %v1325
        %3212 = vmatprep.subr.bf16.mxu0 %v1334
        %3213 = vmatpush1.bf16.msra.mxu0 %v1333
        %3214 = vmatprep.subr.bf16.mxu0 %v1342
        %3215 = vmatpush1.bf16.msra.mxu0 %v1341
        %3216 = vmatprep.subr.bf16.mxu0 %v1350
        %3217 = vmatpush1.bf16.msra.mxu0 %v1349
        %3218 = vmatprep.subr.bf16.mxu0 %v1358
        %3219 = vmatpush1.bf16.msra.mxu0 %v1357
        %3220 = vmatprep.subr.bf16.mxu0 %v1366
        %3221 = vmatpush1.bf16.msra.mxu0 %v1365
        %3222 = vmatprep.subr.bf16.mxu0 %v1374
        %3223 = vmatpush1.bf16.msra.mxu0 %v1373
        %3224 = vmatprep.mubr.bf16.mxu0 %v334
        %3225 = vmatmul.mubr.bf16.gmra.mrb[0].mxu0 %v333
        %v3226 = vpop.f32.mrb[0].mxu0
        %v3227 = vadd.f32 %v3186, %v3226
        %v3228 = vpop.f32.mrb[0].mxu0
        %v3229 = vadd.f32 %v3188, %v3228
        %v3230 = vpop.f32.mrb[0].mxu0
        %v3231 = vpop.f32.mrb[0].mxu0
        %3232 = vdwg.mxu0
        %3233 = vmatprep.subr.bf16.mxu0 %v1382
        %3234 = vmatpush1.bf16.msra.mxu0 %v1381
        %3235 = vmatprep.subr.bf16.mxu0 %v1390
        %3236 = vmatpush1.bf16.msra.mxu0 %v1389
        %3237 = vmatprep.subr.bf16.mxu0 %v1398
        %3238 = vmatpush1.bf16.msra.mxu0 %v1397
        %3239 = vmatprep.subr.bf16.mxu0 %v1406
        %3240 = vmatpush1.bf16.msra.mxu0 %v1405
        %3241 = vmatprep.subr.bf16.mxu0 %v1414
        %3242 = vmatpush1.bf16.msra.mxu0 %v1413
        %3243 = vmatprep.subr.bf16.mxu0 %v1422
        %3244 = vmatpush1.bf16.msra.mxu0 %v1421
        %3245 = vmatprep.subr.bf16.mxu0 %v1430
        %3246 = vmatpush1.bf16.msra.mxu0 %v1429
        %3247 = vmatprep.subr.bf16.mxu0 %v1438
        %3248 = vmatpush1.bf16.msra.mxu0 %v1437
        %3249 = vmatprep.subr.bf16.mxu0 %v1446
        %3250 = vmatpush1.bf16.msra.mxu0 %v1445
        %3251 = vmatprep.subr.bf16.mxu0 %v1454
        %3252 = vmatpush1.bf16.msra.mxu0 %v1453
        %3253 = vmatprep.subr.bf16.mxu0 %v1462
        %3254 = vmatpush1.bf16.msra.mxu0 %v1461
        %3255 = vmatprep.subr.bf16.mxu0 %v1470
        %3256 = vmatpush1.bf16.msra.mxu0 %v1469
        %3257 = vmatprep.subr.bf16.mxu0 %v1478
        %3258 = vmatpush1.bf16.msra.mxu0 %v1477
        %3259 = vmatprep.subr.bf16.mxu0 %v1486
        %3260 = vmatpush1.bf16.msra.mxu0 %v1485
        %3261 = vmatprep.subr.bf16.mxu0 %v1494
        %3262 = vmatpush1.bf16.msra.mxu0 %v1493
        %3263 = vmatprep.subr.bf16.mxu0 %v1502
        %3264 = vmatpush1.bf16.msra.mxu0 %v1501
        %3265 = vmatprep.mubr.bf16.mxu0 %v336
        %3266 = vmatmul.mubr.bf16.gmra.mrb[0].mxu0 %v335
        %v3267 = vpop.f32.mrb[0].mxu0
        %v3268 = vadd.f32 %v3227, %v3267
        %v3269 = vpop.f32.mrb[0].mxu0
        %v3270 = vadd.f32 %v3229, %v3269
        %v3271 = vpop.f32.mrb[0].mxu0
        %v3272 = vpop.f32.mrb[0].mxu0
        %3273 = vdwg.mxu0
        %3274 = vmatprep.subr.bf16.mxu0 %v1510
        %3275 = vmatpush1.bf16.msra.mxu0 %v1509
        %3276 = vmatprep.subr.bf16.mxu0 %v1518
        %3277 = vmatpush1.bf16.msra.mxu0 %v1517
        %3278 = vmatprep.subr.bf16.mxu0 %v1526
        %3279 = vmatpush1.bf16.msra.mxu0 %v1525
        %3280 = vmatprep.subr.bf16.mxu0 %v1534
        %3281 = vmatpush1.bf16.msra.mxu0 %v1533
        %3282 = vmatprep.subr.bf16.mxu0 %v1542
        %3283 = vmatpush1.bf16.msra.mxu0 %v1541
        %3284 = vmatprep.subr.bf16.mxu0 %v1550
        %3285 = vmatpush1.bf16.msra.mxu0 %v1549
        %3286 = vmatprep.subr.bf16.mxu0 %v1558
        %3287 = vmatpush1.bf16.msra.mxu0 %v1557
        %3288 = vmatprep.subr.bf16.mxu0 %v1566
        %3289 = vmatpush1.bf16.msra.mxu0 %v1565
        %3290 = vmatprep.subr.bf16.mxu0 %v1574
        %3291 = vmatpush1.bf16.msra.mxu0 %v1573
        %3292 = vmatprep.subr.bf16.mxu0 %v1582
        %3293 = vmatpush1.bf16.msra.mxu0 %v1581
        %3294 = vmatprep.subr.bf16.mxu0 %v1590
        %3295 = vmatpush1.bf16.msra.mxu0 %v1589
        %3296 = vmatprep.subr.bf16.mxu0 %v1598
        %3297 = vmatpush1.bf16.msra.mxu0 %v1597
        %3298 = vmatprep.subr.bf16.mxu0 %v1606
        %3299 = vmatpush1.bf16.msra.mxu0 %v1605
        %3300 = vmatprep.subr.bf16.mxu0 %v1614
        %3301 = vmatpush1.bf16.msra.mxu0 %v1613
        %3302 = vmatprep.subr.bf16.mxu0 %v1622
        %3303 = vmatpush1.bf16.msra.mxu0 %v1621
        %3304 = vmatprep.subr.bf16.mxu0 %v1630
        %3305 = vmatpush1.bf16.msra.mxu0 %v1629
        %3306 = vmatprep.mubr.bf16.mxu0 %v338
        %3307 = vmatmul.mubr.bf16.gmra.mrb[0].mxu0 %v337
        %v3308 = vpop.f32.mrb[0].mxu0
        %v3309 = vadd.f32 %v3268, %v3308
        %v3310 = vpop.f32.mrb[0].mxu0
        %v3311 = vadd.f32 %v3270, %v3310
        %v3312 = vpop.f32.mrb[0].mxu0
        %v3313 = vpop.f32.mrb[0].mxu0
        %3314 = vdwg.mxu0
        %3315 = vmatprep.subr.bf16.mxu0 %v1638
        %3316 = vmatpush1.bf16.msra.mxu0 %v1637
        %3317 = vmatprep.subr.bf16.mxu0 %v1646
        %3318 = vmatpush1.bf16.msra.mxu0 %v1645
        %3319 = vmatprep.subr.bf16.mxu0 %v1654
        %3320 = vmatpush1.bf16.msra.mxu0 %v1653
        %3321 = vmatprep.subr.bf16.mxu0 %v1662
        %3322 = vmatpush1.bf16.msra.mxu0 %v1661
        %3323 = vmatprep.subr.bf16.mxu0 %v1670
        %3324 = vmatpush1.bf16.msra.mxu0 %v1669
        %3325 = vmatprep.subr.bf16.mxu0 %v1678
        %3326 = vmatpush1.bf16.msra.mxu0 %v1677
        %3327 = vmatprep.subr.bf16.mxu0 %v1686
        %3328 = vmatpush1.bf16.msra.mxu0 %v1685
        %3329 = vmatprep.subr.bf16.mxu0 %v1694
        %3330 = vmatpush1.bf16.msra.mxu0 %v1693
        %3331 = vmatprep.subr.bf16.mxu0 %v1702
        %3332 = vmatpush1.bf16.msra.mxu0 %v1701
        %3333 = vmatprep.subr.bf16.mxu0 %v1710
        %3334 = vmatpush1.bf16.msra.mxu0 %v1709
        %3335 = vmatprep.subr.bf16.mxu0 %v1718
        %3336 = vmatpush1.bf16.msra.mxu0 %v1717
        %3337 = vmatprep.subr.bf16.mxu0 %v1726
        %3338 = vmatpush1.bf16.msra.mxu0 %v1725
        %3339 = vmatprep.subr.bf16.mxu0 %v1734
        %3340 = vmatpush1.bf16.msra.mxu0 %v1733
        %3341 = vmatprep.subr.bf16.mxu0 %v1742
        %3342 = vmatpush1.bf16.msra.mxu0 %v1741
        %3343 = vmatprep.subr.bf16.mxu0 %v1750
        %3344 = vmatpush1.bf16.msra.mxu0 %v1749
        %3345 = vmatprep.subr.bf16.mxu0 %v1758
        %3346 = vmatpush1.bf16.msra.mxu0 %v1757
        %3347 = vmatprep.mubr.bf16.mxu0 %v340
        %3348 = vmatmul.mubr.bf16.gmra.mrb[0].mxu0 %v339
        %v3349 = vpop.f32.mrb[0].mxu0
        %v3350 = vadd.f32 %v3309, %v3349
        %v3351 = vpop.f32.mrb[0].mxu0
        %v3352 = vadd.f32 %v3311, %v3351
        %v3353 = vpop.f32.mrb[0].mxu0
        %v3354 = vpop.f32.mrb[0].mxu0
        %3355 = vdwg.mxu0
        %3356 = vmatprep.subr.bf16.mxu0 %v1766
        %3357 = vmatpush1.bf16.msra.mxu0 %v1765
        %3358 = vmatprep.subr.bf16.mxu0 %v1774
        %3359 = vmatpush1.bf16.msra.mxu0 %v1773
        %3360 = vmatprep.subr.bf16.mxu0 %v1782
        %3361 = vmatpush1.bf16.msra.mxu0 %v1781
        %3362 = vmatprep.subr.bf16.mxu0 %v1790
        %3363 = vmatpush1.bf16.msra.mxu0 %v1789
        %3364 = vmatprep.subr.bf16.mxu0 %v1798
        %3365 = vmatpush1.bf16.msra.mxu0 %v1797
        %3366 = vmatprep.subr.bf16.mxu0 %v1806
        %3367 = vmatpush1.bf16.msra.mxu0 %v1805
        %3368 = vmatprep.subr.bf16.mxu0 %v1814
        %3369 = vmatpush1.bf16.msra.mxu0 %v1813
        %3370 = vmatprep.subr.bf16.mxu0 %v1822
        %3371 = vmatpush1.bf16.msra.mxu0 %v1821
        %3372 = vmatprep.subr.bf16.mxu0 %v1830
        %3373 = vmatpush1.bf16.msra.mxu0 %v1829
        %3374 = vmatprep.subr.bf16.mxu0 %v1838
        %3375 = vmatpush1.bf16.msra.mxu0 %v1837
        %3376 = vmatprep.subr.bf16.mxu0 %v1846
        %3377 = vmatpush1.bf16.msra.mxu0 %v1845
        %3378 = vmatprep.subr.bf16.mxu0 %v1854
        %3379 = vmatpush1.bf16.msra.mxu0 %v1853
        %3380 = vmatprep.subr.bf16.mxu0 %v1862
        %3381 = vmatpush1.bf16.msra.mxu0 %v1861
        %3382 = vmatprep.subr.bf16.mxu0 %v1870
        %3383 = vmatpush1.bf16.msra.mxu0 %v1869
        %3384 = vmatprep.subr.bf16.mxu0 %v1878
        %3385 = vmatpush1.bf16.msra.mxu0 %v1877
        %3386 = vmatprep.subr.bf16.mxu0 %v1886
        %3387 = vmatpush1.bf16.msra.mxu0 %v1885
        %3388 = vmatprep.mubr.bf16.mxu0 %v342
        %3389 = vmatmul.mubr.bf16.gmra.mrb[0].mxu0 %v341
        %v3390 = vpop.f32.mrb[0].mxu0
        %v3391 = vadd.f32 %v3350, %v3390
        %v3392 = vpop.f32.mrb[0].mxu0
        %v3393 = vadd.f32 %v3352, %v3392
        %v3394 = vpop.f32.mrb[0].mxu0
        %v3395 = vpop.f32.mrb[0].mxu0
        %3396 = vdwg.mxu0
        %3397 = vmatprep.subr.bf16.mxu0 %v1894
        %3398 = vmatpush1.bf16.msra.mxu0 %v1893
        %3399 = vmatprep.subr.bf16.mxu0 %v1902
        %3400 = vmatpush1.bf16.msra.mxu0 %v1901
        %3401 = vmatprep.subr.bf16.mxu0 %v1910
        %3402 = vmatpush1.bf16.msra.mxu0 %v1909
        %3403 = vmatprep.subr.bf16.mxu0 %v1918
        %3404 = vmatpush1.bf16.msra.mxu0 %v1917
        %3405 = vmatprep.subr.bf16.mxu0 %v1926
        %3406 = vmatpush1.bf16.msra.mxu0 %v1925
        %3407 = vmatprep.subr.bf16.mxu0 %v1934
        %3408 = vmatpush1.bf16.msra.mxu0 %v1933
        %3409 = vmatprep.subr.bf16.mxu0 %v1942
        %3410 = vmatpush1.bf16.msra.mxu0 %v1941
        %3411 = vmatprep.subr.bf16.mxu0 %v1950
        %3412 = vmatpush1.bf16.msra.mxu0 %v1949
        %3413 = vmatprep.subr.bf16.mxu0 %v1958
        %3414 = vmatpush1.bf16.msra.mxu0 %v1957
        %3415 = vmatprep.subr.bf16.mxu0 %v1966
        %3416 = vmatpush1.bf16.msra.mxu0 %v1965
        %3417 = vmatprep.subr.bf16.mxu0 %v1974
        %3418 = vmatpush1.bf16.msra.mxu0 %v1973
        %3419 = vmatprep.subr.bf16.mxu0 %v1982
        %3420 = vmatpush1.bf16.msra.mxu0 %v1981
        %3421 = vmatprep.subr.bf16.mxu0 %v1990
        %3422 = vmatpush1.bf16.msra.mxu0 %v1989
        %3423 = vmatprep.subr.bf16.mxu0 %v1998
        %3424 = vmatpush1.bf16.msra.mxu0 %v1997
        %3425 = vmatprep.subr.bf16.mxu0 %v2006
        %3426 = vmatpush1.bf16.msra.mxu0 %v2005
        %3427 = vmatprep.subr.bf16.mxu0 %v2014
        %3428 = vmatpush1.bf16.msra.mxu0 %v2013
        %3429 = vmatprep.mubr.bf16.mxu0 %v344
        %3430 = vmatmul.mubr.bf16.gmra.mrb[0].mxu0 %v343
        %v3431 = vpop.f32.mrb[0].mxu0
        %v3432 = vadd.f32 %v3391, %v3431
        %v3433 = vpop.f32.mrb[0].mxu0
        %v3434 = vadd.f32 %v3393, %v3433
        %v3435 = vpop.f32.mrb[0].mxu0
        %v3436 = vpop.f32.mrb[0].mxu0
        %3437 = vdwg.mxu0
        %3438 = vmatprep.subr.bf16.mxu0 %v2022
        %3439 = vmatpush1.bf16.msra.mxu0 %v2021
        %3440 = vmatprep.subr.bf16.mxu0 %v2030
        %3441 = vmatpush1.bf16.msra.mxu0 %v2029
        %3442 = vmatprep.subr.bf16.mxu0 %v2038
        %3443 = vmatpush1.bf16.msra.mxu0 %v2037
        %3444 = vmatprep.subr.bf16.mxu0 %v2046
        %3445 = vmatpush1.bf16.msra.mxu0 %v2045
        %3446 = vmatprep.subr.bf16.mxu0 %v2054
        %3447 = vmatpush1.bf16.msra.mxu0 %v2053
        %3448 = vmatprep.subr.bf16.mxu0 %v2062
        %3449 = vmatpush1.bf16.msra.mxu0 %v2061
        %3450 = vmatprep.subr.bf16.mxu0 %v2070
        %3451 = vmatpush1.bf16.msra.mxu0 %v2069
        %3452 = vmatprep.subr.bf16.mxu0 %v2078
        %3453 = vmatpush1.bf16.msra.mxu0 %v2077
        %3454 = vmatprep.subr.bf16.mxu0 %v2086
        %3455 = vmatpush1.bf16.msra.mxu0 %v2085
        %3456 = vmatprep.subr.bf16.mxu0 %v2094
        %3457 = vmatpush1.bf16.msra.mxu0 %v2093
        %3458 = vmatprep.subr.bf16.mxu0 %v2102
        %3459 = vmatpush1.bf16.msra.mxu0 %v2101
        %3460 = vmatprep.subr.bf16.mxu0 %v2110
        %3461 = vmatpush1.bf16.msra.mxu0 %v2109
        %3462 = vmatprep.subr.bf16.mxu0 %v2118
        %3463 = vmatpush1.bf16.msra.mxu0 %v2117
        %3464 = vmatprep.subr.bf16.mxu0 %v2126
        %3465 = vmatpush1.bf16.msra.mxu0 %v2125
        %3466 = vmatprep.subr.bf16.mxu0 %v2134
        %3467 = vmatpush1.bf16.msra.mxu0 %v2133
        %3468 = vmatprep.subr.bf16.mxu0 %v2142
        %3469 = vmatpush1.bf16.msra.mxu0 %v2141
        %3470 = vmatprep.mubr.bf16.mxu0 %v346
        %3471 = vmatmul.mubr.bf16.gmra.mrb[0].mxu0 %v345
        %v3472 = vpop.f32.mrb[0].mxu0
        %v3473 = vadd.f32 %v3432, %v3472
        %v3474 = vpop.f32.mrb[0].mxu0
        %v3475 = vadd.f32 %v3434, %v3474
        %v3476 = vpop.f32.mrb[0].mxu0
        %v3477 = vpop.f32.mrb[0].mxu0
        %3478 = vdwg.mxu0
        %3479 = vmatprep.subr.bf16.mxu0 %v2150
        %3480 = vmatpush1.bf16.msra.mxu0 %v2149
        %3481 = vmatprep.subr.bf16.mxu0 %v2158
        %3482 = vmatpush1.bf16.msra.mxu0 %v2157
        %3483 = vmatprep.subr.bf16.mxu0 %v2166
        %3484 = vmatpush1.bf16.msra.mxu0 %v2165
        %3485 = vmatprep.subr.bf16.mxu0 %v2174
        %3486 = vmatpush1.bf16.msra.mxu0 %v2173
        %3487 = vmatprep.subr.bf16.mxu0 %v2182
        %3488 = vmatpush1.bf16.msra.mxu0 %v2181
        %3489 = vmatprep.subr.bf16.mxu0 %v2190
        %3490 = vmatpush1.bf16.msra.mxu0 %v2189
        %3491 = vmatprep.subr.bf16.mxu0 %v2198
        %3492 = vmatpush1.bf16.msra.mxu0 %v2197
        %3493 = vmatprep.subr.bf16.mxu0 %v2206
        %3494 = vmatpush1.bf16.msra.mxu0 %v2205
        %3495 = vmatprep.subr.bf16.mxu0 %v2214
        %3496 = vmatpush1.bf16.msra.mxu0 %v2213
        %3497 = vmatprep.subr.bf16.mxu0 %v2222
        %3498 = vmatpush1.bf16.msra.mxu0 %v2221
        %3499 = vmatprep.subr.bf16.mxu0 %v2230
        %3500 = vmatpush1.bf16.msra.mxu0 %v2229
        %3501 = vmatprep.subr.bf16.mxu0 %v2238
        %3502 = vmatpush1.bf16.msra.mxu0 %v2237
        %3503 = vmatprep.subr.bf16.mxu0 %v2246
        %3504 = vmatpush1.bf16.msra.mxu0 %v2245
        %3505 = vmatprep.subr.bf16.mxu0 %v2254
        %3506 = vmatpush1.bf16.msra.mxu0 %v2253
        %3507 = vmatprep.subr.bf16.mxu0 %v2262
        %3508 = vmatpush1.bf16.msra.mxu0 %v2261
        %3509 = vmatprep.subr.bf16.mxu0 %v2270
        %3510 = vmatpush1.bf16.msra.mxu0 %v2269
        %3511 = vmatprep.mubr.bf16.mxu0 %v348
        %3512 = vmatmul.mubr.bf16.gmra.mrb[0].mxu0 %v347
        %v3513 = vpop.f32.mrb[0].mxu0
        %v3514 = vadd.f32 %v3473, %v3513
        %v3515 = vpop.f32.mrb[0].mxu0
        %v3516 = vadd.f32 %v3475, %v3515
        %v3517 = vpop.f32.mrb[0].mxu0
        %v3518 = vpop.f32.mrb[0].mxu0
        %3519 = vdwg.mxu0
        %3520 = vmatprep.subr.bf16.mxu0 %v2278
        %3521 = vmatpush1.bf16.msra.mxu0 %v2277
        %3522 = vmatprep.subr.bf16.mxu0 %v2286
        %3523 = vmatpush1.bf16.msra.mxu0 %v2285
        %3524 = vmatprep.subr.bf16.mxu0 %v2294
        %3525 = vmatpush1.bf16.msra.mxu0 %v2293
        %3526 = vmatprep.subr.bf16.mxu0 %v2302
        %3527 = vmatpush1.bf16.msra.mxu0 %v2301
        %3528 = vmatprep.subr.bf16.mxu0 %v2310
        %3529 = vmatpush1.bf16.msra.mxu0 %v2309
        %3530 = vmatprep.subr.bf16.mxu0 %v2318
        %3531 = vmatpush1.bf16.msra.mxu0 %v2317
        %3532 = vmatprep.subr.bf16.mxu0 %v2326
        %3533 = vmatpush1.bf16.msra.mxu0 %v2325
        %3534 = vmatprep.subr.bf16.mxu0 %v2334
        %3535 = vmatpush1.bf16.msra.mxu0 %v2333
        %3536 = vmatprep.subr.bf16.mxu0 %v2342
        %3537 = vmatpush1.bf16.msra.mxu0 %v2341
        %3538 = vmatprep.subr.bf16.mxu0 %v2350
        %3539 = vmatpush1.bf16.msra.mxu0 %v2349
        %3540 = vmatprep.subr.bf16.mxu0 %v2358
        %3541 = vmatpush1.bf16.msra.mxu0 %v2357
        %3542 = vmatprep.subr.bf16.mxu0 %v2366
        %3543 = vmatpush1.bf16.msra.mxu0 %v2365
        %3544 = vmatprep.subr.bf16.mxu0 %v2374
        %3545 = vmatpush1.bf16.msra.mxu0 %v2373
        %3546 = vmatprep.subr.bf16.mxu0 %v2382
        %3547 = vmatpush1.bf16.msra.mxu0 %v2381
        %3548 = vmatprep.subr.bf16.mxu0 %v2390
        %3549 = vmatpush1.bf16.msra.mxu0 %v2389
        %3550 = vmatprep.subr.bf16.mxu0 %v2398
        %3551 = vmatpush1.bf16.msra.mxu0 %v2397
        %3552 = vmatprep.mubr.bf16.mxu0 %v350
        %3553 = vmatmul.mubr.bf16.gmra.mrb[0].mxu0 %v349
        %v3554 = vpop.f32.mrb[0].mxu0
        %v3555 = vadd.f32 %v3514, %v3554
        %v3556 = vpop.f32.mrb[0].mxu0
        %v3557 = vadd.f32 %v3516, %v3556
        %v3558 = vpop.f32.mrb[0].mxu0
        %v3559 = vpop.f32.mrb[0].mxu0
        %3560 = vdwg.mxu0
        %3561 = vmatprep.subr.bf16.mxu0 %v2406
        %3562 = vmatpush1.bf16.msra.mxu0 %v2405
        %3563 = vmatprep.subr.bf16.mxu0 %v2414
        %3564 = vmatpush1.bf16.msra.mxu0 %v2413
        %3565 = vmatprep.subr.bf16.mxu0 %v2422
        %3566 = vmatpush1.bf16.msra.mxu0 %v2421
        %3567 = vmatprep.subr.bf16.mxu0 %v2430
        %3568 = vmatpush1.bf16.msra.mxu0 %v2429
        %3569 = vmatprep.subr.bf16.mxu0 %v2438
        %3570 = vmatpush1.bf16.msra.mxu0 %v2437
        %3571 = vmatprep.subr.bf16.mxu0 %v2446
        %3572 = vmatpush1.bf16.msra.mxu0 %v2445
        %3573 = vmatprep.subr.bf16.mxu0 %v2454
        %3574 = vmatpush1.bf16.msra.mxu0 %v2453
        %3575 = vmatprep.subr.bf16.mxu0 %v2462
        %3576 = vmatpush1.bf16.msra.mxu0 %v2461
        %3577 = vmatprep.subr.bf16.mxu0 %v2470
        %3578 = vmatpush1.bf16.msra.mxu0 %v2469
        %3579 = vmatprep.subr.bf16.mxu0 %v2478
        %3580 = vmatpush1.bf16.msra.mxu0 %v2477
        %3581 = vmatprep.subr.bf16.mxu0 %v2486
        %3582 = vmatpush1.bf16.msra.mxu0 %v2485
        %3583 = vmatprep.subr.bf16.mxu0 %v2494
        %3584 = vmatpush1.bf16.msra.mxu0 %v2493
        %3585 = vmatprep.subr.bf16.mxu0 %v2502
        %3586 = vmatpush1.bf16.msra.mxu0 %v2501
        %3587 = vmatprep.subr.bf16.mxu0 %v2510
        %3588 = vmatpush1.bf16.msra.mxu0 %v2509
        %3589 = vmatprep.subr.bf16.mxu0 %v2518
        %3590 = vmatpush1.bf16.msra.mxu0 %v2517
        %3591 = vmatprep.subr.bf16.mxu0 %v2526
        %3592 = vmatpush1.bf16.msra.mxu0 %v2525
        %3593 = vmatprep.mubr.bf16.mxu0 %v352
        %3594 = vmatmul.mubr.bf16.gmra.mrb[0].mxu0 %v351
        %v3595 = vpop.f32.mrb[0].mxu0
        %v3596 = vadd.f32 %v3555, %v3595
        %v3597 = vpop.f32.mrb[0].mxu0
        %v3598 = vadd.f32 %v3557, %v3597
        %v3599 = vpop.f32.mrb[0].mxu0
        %v3600 = vpop.f32.mrb[0].mxu0
        %3601 = vdwg.mxu0
        %3602 = vmatprep.subr.bf16.mxu0 %v2534
        %3603 = vmatpush1.bf16.msra.mxu0 %v2533
        %3604 = vmatprep.subr.bf16.mxu0 %v2542
        %3605 = vmatpush1.bf16.msra.mxu0 %v2541
        %3606 = vmatprep.subr.bf16.mxu0 %v2550
        %3607 = vmatpush1.bf16.msra.mxu0 %v2549
        %3608 = vmatprep.subr.bf16.mxu0 %v2558
        %3609 = vmatpush1.bf16.msra.mxu0 %v2557
        %3610 = vmatprep.subr.bf16.mxu0 %v2566
        %3611 = vmatpush1.bf16.msra.mxu0 %v2565
        %3612 = vmatprep.subr.bf16.mxu0 %v2574
        %3613 = vmatpush1.bf16.msra.mxu0 %v2573
        %3614 = vmatprep.subr.bf16.mxu0 %v2582
        %3615 = vmatpush1.bf16.msra.mxu0 %v2581
        %3616 = vmatprep.subr.bf16.mxu0 %v2590
        %3617 = vmatpush1.bf16.msra.mxu0 %v2589
        %3618 = vmatprep.subr.bf16.mxu0 %v2598
        %3619 = vmatpush1.bf16.msra.mxu0 %v2597
        %3620 = vmatprep.subr.bf16.mxu0 %v2606
        %3621 = vmatpush1.bf16.msra.mxu0 %v2605
        %3622 = vmatprep.subr.bf16.mxu0 %v2614
        %3623 = vmatpush1.bf16.msra.mxu0 %v2613
        %3624 = vmatprep.subr.bf16.mxu0 %v2622
        %3625 = vmatpush1.bf16.msra.mxu0 %v2621
        %3626 = vmatprep.subr.bf16.mxu0 %v2630
        %3627 = vmatpush1.bf16.msra.mxu0 %v2629
        %3628 = vmatprep.subr.bf16.mxu0 %v2638
        %3629 = vmatpush1.bf16.msra.mxu0 %v2637
        %3630 = vmatprep.subr.bf16.mxu0 %v2646
        %3631 = vmatpush1.bf16.msra.mxu0 %v2645
        %3632 = vmatprep.subr.bf16.mxu0 %v2654
        %3633 = vmatpush1.bf16.msra.mxu0 %v2653
        %3634 = vmatprep.mubr.bf16.mxu0 %v354
        %3635 = vmatmul.mubr.bf16.gmra.mrb[0].mxu0 %v353
        %v3636 = vpop.f32.mrb[0].mxu0
        %v3637 = vadd.f32 %v3596, %v3636
        %v3638 = vpop.f32.mrb[0].mxu0
        %v3639 = vadd.f32 %v3598, %v3638
        %v3640 = vpop.f32.mrb[0].mxu0
        %v3641 = vpop.f32.mrb[0].mxu0
        %3642 = vdwg.mxu0
        %3643 = vmatprep.subr.bf16.mxu0 %v1128
        %3644 = vmatpush1.bf16.msra.mxu0 %v1127
        %3645 = vmatprep.subr.bf16.mxu0 %v1136
        %3646 = vmatpush1.bf16.msra.mxu0 %v1135
        %3647 = vmatprep.subr.bf16.mxu0 %v1144
        %3648 = vmatpush1.bf16.msra.mxu0 %v1143
        %3649 = vmatprep.subr.bf16.mxu0 %v1152
        %3650 = vmatpush1.bf16.msra.mxu0 %v1151
        %3651 = vmatprep.subr.bf16.mxu0 %v1160
        %3652 = vmatpush1.bf16.msra.mxu0 %v1159
        %3653 = vmatprep.subr.bf16.mxu0 %v1168
        %3654 = vmatpush1.bf16.msra.mxu0 %v1167
        %3655 = vmatprep.subr.bf16.mxu0 %v1176
        %3656 = vmatpush1.bf16.msra.mxu0 %v1175
        %3657 = vmatprep.subr.bf16.mxu0 %v1184
        %3658 = vmatpush1.bf16.msra.mxu0 %v1183
        %3659 = vmatprep.subr.bf16.mxu0 %v1192
        %3660 = vmatpush1.bf16.msra.mxu0 %v1191
        %3661 = vmatprep.subr.bf16.mxu0 %v1200
        %3662 = vmatpush1.bf16.msra.mxu0 %v1199
        %3663 = vmatprep.subr.bf16.mxu0 %v1208
        %3664 = vmatpush1.bf16.msra.mxu0 %v1207
        %3665 = vmatprep.subr.bf16.mxu0 %v1216
        %3666 = vmatpush1.bf16.msra.mxu0 %v1215
        %3667 = vmatprep.subr.bf16.mxu0 %v1224
        %3668 = vmatpush1.bf16.msra.mxu0 %v1223
        %3669 = vmatprep.subr.bf16.mxu0 %v1232
        %3670 = vmatpush1.bf16.msra.mxu0 %v1231
        %3671 = vmatprep.subr.bf16.mxu0 %v1240
        %3672 = vmatpush1.bf16.msra.mxu0 %v1239
        %3673 = vmatprep.subr.bf16.mxu0 %v1248
        %3674 = vmatpush1.bf16.msra.mxu0 %v1247
        %3675 = vmatprep.mubr.bf16.mxu0 %v332
        %3676 = vmatmul.mubr.bf16.gmra.mrb[0].mxu0 %v331
        %v3677 = vpop.f32.mrb[0].mxu0
        %v3678 = vadd.f32 0.0, %v3677
        %v3679 = vpop.f32.mrb[0].mxu0
        %v3680 = vadd.f32 0.0, %v3679
        %v3681 = vpop.f32.mrb[0].mxu0
        %v3682 = vpop.f32.mrb[0].mxu0
        %3683 = vdwg.mxu0
        %3684 = vmatprep.subr.bf16.mxu0 %v1256
        %3685 = vmatpush1.bf16.msra.mxu0 %v1255
        %3686 = vmatprep.subr.bf16.mxu0 %v1264
        %3687 = vmatpush1.bf16.msra.mxu0 %v1263
        %3688 = vmatprep.subr.bf16.mxu0 %v1272
        %3689 = vmatpush1.bf16.msra.mxu0 %v1271
        %3690 = vmatprep.subr.bf16.mxu0 %v1280
        %3691 = vmatpush1.bf16.msra.mxu0 %v1279
        %3692 = vmatprep.subr.bf16.mxu0 %v1288
        %3693 = vmatpush1.bf16.msra.mxu0 %v1287
        %3694 = vmatprep.subr.bf16.mxu0 %v1296
        %3695 = vmatpush1.bf16.msra.mxu0 %v1295
        %3696 = vmatprep.subr.bf16.mxu0 %v1304
        %3697 = vmatpush1.bf16.msra.mxu0 %v1303
        %3698 = vmatprep.subr.bf16.mxu0 %v1312
        %3699 = vmatpush1.bf16.msra.mxu0 %v1311
        %3700 = vmatprep.subr.bf16.mxu0 %v1320
        %3701 = vmatpush1.bf16.msra.mxu0 %v1319
        %3702 = vmatprep.subr.bf16.mxu0 %v1328
        %3703 = vmatpush1.bf16.msra.mxu0 %v1327
        %3704 = vmatprep.subr.bf16.mxu0 %v1336
        %3705 = vmatpush1.bf16.msra.mxu0 %v1335
        %3706 = vmatprep.subr.bf16.mxu0 %v1344
        %3707 = vmatpush1.bf16.msra.mxu0 %v1343
        %3708 = vmatprep.subr.bf16.mxu0 %v1352
        %3709 = vmatpush1.bf16.msra.mxu0 %v1351
        %3710 = vmatprep.subr.bf16.mxu0 %v1360
        %3711 = vmatpush1.bf16.msra.mxu0 %v1359
        %3712 = vmatprep.subr.bf16.mxu0 %v1368
        %3713 = vmatpush1.bf16.msra.mxu0 %v1367
        %3714 = vmatprep.subr.bf16.mxu0 %v1376
        %3715 = vmatpush1.bf16.msra.mxu0 %v1375
        %3716 = vmatprep.mubr.bf16.mxu0 %v334
        %3717 = vmatmul.mubr.bf16.gmra.mrb[0].mxu0 %v333
        %v3718 = vpop.f32.mrb[0].mxu0
        %v3719 = vadd.f32 %v3678, %v3718
        %v3720 = vpop.f32.mrb[0].mxu0
        %v3721 = vadd.f32 %v3680, %v3720
        %v3722 = vpop.f32.mrb[0].mxu0
        %v3723 = vpop.f32.mrb[0].mxu0
        %3724 = vdwg.mxu0
        %3725 = vmatprep.subr.bf16.mxu0 %v1384
        %3726 = vmatpush1.bf16.msra.mxu0 %v1383
        %3727 = vmatprep.subr.bf16.mxu0 %v1392
        %3728 = vmatpush1.bf16.msra.mxu0 %v1391
        %3729 = vmatprep.subr.bf16.mxu0 %v1400
        %3730 = vmatpush1.bf16.msra.mxu0 %v1399
        %3731 = vmatprep.subr.bf16.mxu0 %v1408
        %3732 = vmatpush1.bf16.msra.mxu0 %v1407
        %3733 = vmatprep.subr.bf16.mxu0 %v1416
        %3734 = vmatpush1.bf16.msra.mxu0 %v1415
        %3735 = vmatprep.subr.bf16.mxu0 %v1424
        %3736 = vmatpush1.bf16.msra.mxu0 %v1423
        %3737 = vmatprep.subr.bf16.mxu0 %v1432
        %3738 = vmatpush1.bf16.msra.mxu0 %v1431
        %3739 = vmatprep.subr.bf16.mxu0 %v1440
        %3740 = vmatpush1.bf16.msra.mxu0 %v1439
        %3741 = vmatprep.subr.bf16.mxu0 %v1448
        %3742 = vmatpush1.bf16.msra.mxu0 %v1447
        %3743 = vmatprep.subr.bf16.mxu0 %v1456
        %3744 = vmatpush1.bf16.msra.mxu0 %v1455
        %3745 = vmatprep.subr.bf16.mxu0 %v1464
        %3746 = vmatpush1.bf16.msra.mxu0 %v1463
        %3747 = vmatprep.subr.bf16.mxu0 %v1472
        %3748 = vmatpush1.bf16.msra.mxu0 %v1471
        %3749 = vmatprep.subr.bf16.mxu0 %v1480
        %3750 = vmatpush1.bf16.msra.mxu0 %v1479
        %3751 = vmatprep.subr.bf16.mxu0 %v1488
        %3752 = vmatpush1.bf16.msra.mxu0 %v1487
        %3753 = vmatprep.subr.bf16.mxu0 %v1496
        %3754 = vmatpush1.bf16.msra.mxu0 %v1495
        %3755 = vmatprep.subr.bf16.mxu0 %v1504
        %3756 = vmatpush1.bf16.msra.mxu0 %v1503
        %3757 = vmatprep.mubr.bf16.mxu0 %v336
        %3758 = vmatmul.mubr.bf16.gmra.mrb[0].mxu0 %v335
        %v3759 = vpop.f32.mrb[0].mxu0
        %v3760 = vadd.f32 %v3719, %v3759
        %v3761 = vpop.f32.mrb[0].mxu0
        %v3762 = vadd.f32 %v3721, %v3761
        %v3763 = vpop.f32.mrb[0].mxu0
        %v3764 = vpop.f32.mrb[0].mxu0
        %3765 = vdwg.mxu0
        %3766 = vmatprep.subr.bf16.mxu0 %v1512
        %3767 = vmatpush1.bf16.msra.mxu0 %v1511
        %3768 = vmatprep.subr.bf16.mxu0 %v1520
        %3769 = vmatpush1.bf16.msra.mxu0 %v1519
        %3770 = vmatprep.subr.bf16.mxu0 %v1528
        %3771 = vmatpush1.bf16.msra.mxu0 %v1527
        %3772 = vmatprep.subr.bf16.mxu0 %v1536
        %3773 = vmatpush1.bf16.msra.mxu0 %v1535
        %3774 = vmatprep.subr.bf16.mxu0 %v1544
        %3775 = vmatpush1.bf16.msra.mxu0 %v1543
        %3776 = vmatprep.subr.bf16.mxu0 %v1552
        %3777 = vmatpush1.bf16.msra.mxu0 %v1551
        %3778 = vmatprep.subr.bf16.mxu0 %v1560
        %3779 = vmatpush1.bf16.msra.mxu0 %v1559
        %3780 = vmatprep.subr.bf16.mxu0 %v1568
        %3781 = vmatpush1.bf16.msra.mxu0 %v1567
        %3782 = vmatprep.subr.bf16.mxu0 %v1576
        %3783 = vmatpush1.bf16.msra.mxu0 %v1575
        %3784 = vmatprep.subr.bf16.mxu0 %v1584
        %3785 = vmatpush1.bf16.msra.mxu0 %v1583
        %3786 = vmatprep.subr.bf16.mxu0 %v1592
        %3787 = vmatpush1.bf16.msra.mxu0 %v1591
        %3788 = vmatprep.subr.bf16.mxu0 %v1600
        %3789 = vmatpush1.bf16.msra.mxu0 %v1599
        %3790 = vmatprep.subr.bf16.mxu0 %v1608
        %3791 = vmatpush1.bf16.msra.mxu0 %v1607
        %3792 = vmatprep.subr.bf16.mxu0 %v1616
        %3793 = vmatpush1.bf16.msra.mxu0 %v1615
        %3794 = vmatprep.subr.bf16.mxu0 %v1624
        %3795 = vmatpush1.bf16.msra.mxu0 %v1623
        %3796 = vmatprep.subr.bf16.mxu0 %v1632
        %3797 = vmatpush1.bf16.msra.mxu0 %v1631
        %3798 = vmatprep.mubr.bf16.mxu0 %v338
        %3799 = vmatmul.mubr.bf16.gmra.mrb[0].mxu0 %v337
        %v3800 = vpop.f32.mrb[0].mxu0
        %v3801 = vadd.f32 %v3760, %v3800
        %v3802 = vpop.f32.mrb[0].mxu0
        %v3803 = vadd.f32 %v3762, %v3802
        %v3804 = vpop.f32.mrb[0].mxu0
        %v3805 = vpop.f32.mrb[0].mxu0
        %3806 = vdwg.mxu0
        %3807 = vmatprep.subr.bf16.mxu0 %v1640
        %3808 = vmatpush1.bf16.msra.mxu0 %v1639
        %3809 = vmatprep.subr.bf16.mxu0 %v1648
        %3810 = vmatpush1.bf16.msra.mxu0 %v1647
        %3811 = vmatprep.subr.bf16.mxu0 %v1656
        %3812 = vmatpush1.bf16.msra.mxu0 %v1655
        %3813 = vmatprep.subr.bf16.mxu0 %v1664
        %3814 = vmatpush1.bf16.msra.mxu0 %v1663
        %3815 = vmatprep.subr.bf16.mxu0 %v1672
        %3816 = vmatpush1.bf16.msra.mxu0 %v1671
        %3817 = vmatprep.subr.bf16.mxu0 %v1680
        %3818 = vmatpush1.bf16.msra.mxu0 %v1679
        %3819 = vmatprep.subr.bf16.mxu0 %v1688
        %3820 = vmatpush1.bf16.msra.mxu0 %v1687
        %3821 = vmatprep.subr.bf16.mxu0 %v1696
        %3822 = vmatpush1.bf16.msra.mxu0 %v1695
        %3823 = vmatprep.subr.bf16.mxu0 %v1704
        %3824 = vmatpush1.bf16.msra.mxu0 %v1703
        %3825 = vmatprep.subr.bf16.mxu0 %v1712
        %3826 = vmatpush1.bf16.msra.mxu0 %v1711
        %3827 = vmatprep.subr.bf16.mxu0 %v1720
        %3828 = vmatpush1.bf16.msra.mxu0 %v1719
        %3829 = vmatprep.subr.bf16.mxu0 %v1728
        %3830 = vmatpush1.bf16.msra.mxu0 %v1727
        %3831 = vmatprep.subr.bf16.mxu0 %v1736
        %3832 = vmatpush1.bf16.msra.mxu0 %v1735
        %3833 = vmatprep.subr.bf16.mxu0 %v1744
        %3834 = vmatpush1.bf16.msra.mxu0 %v1743
        %3835 = vmatprep.subr.bf16.mxu0 %v1752
        %3836 = vmatpush1.bf16.msra.mxu0 %v1751
        %3837 = vmatprep.subr.bf16.mxu0 %v1760
        %3838 = vmatpush1.bf16.msra.mxu0 %v1759
        %3839 = vmatprep.mubr.bf16.mxu0 %v340
        %3840 = vmatmul.mubr.bf16.gmra.mrb[0].mxu0 %v339
        %v3841 = vpop.f32.mrb[0].mxu0
        %v3842 = vadd.f32 %v3801, %v3841
        %v3843 = vpop.f32.mrb[0].mxu0
        %v3844 = vadd.f32 %v3803, %v3843
        %v3845 = vpop.f32.mrb[0].mxu0
        %v3846 = vpop.f32.mrb[0].mxu0
        %3847 = vdwg.mxu0
        %3848 = vmatprep.subr.bf16.mxu0 %v1768
        %3849 = vmatpush1.bf16.msra.mxu0 %v1767
        %3850 = vmatprep.subr.bf16.mxu0 %v1776
        %3851 = vmatpush1.bf16.msra.mxu0 %v1775
        %3852 = vmatprep.subr.bf16.mxu0 %v1784
        %3853 = vmatpush1.bf16.msra.mxu0 %v1783
        %3854 = vmatprep.subr.bf16.mxu0 %v1792
        %3855 = vmatpush1.bf16.msra.mxu0 %v1791
        %3856 = vmatprep.subr.bf16.mxu0 %v1800
        %3857 = vmatpush1.bf16.msra.mxu0 %v1799
        %3858 = vmatprep.subr.bf16.mxu0 %v1808
        %3859 = vmatpush1.bf16.msra.mxu0 %v1807
        %3860 = vmatprep.subr.bf16.mxu0 %v1816
        %3861 = vmatpush1.bf16.msra.mxu0 %v1815
        %3862 = vmatprep.subr.bf16.mxu0 %v1824
        %3863 = vmatpush1.bf16.msra.mxu0 %v1823
        %3864 = vmatprep.subr.bf16.mxu0 %v1832
        %3865 = vmatpush1.bf16.msra.mxu0 %v1831
        %3866 = vmatprep.subr.bf16.mxu0 %v1840
        %3867 = vmatpush1.bf16.msra.mxu0 %v1839
        %3868 = vmatprep.subr.bf16.mxu0 %v1848
        %3869 = vmatpush1.bf16.msra.mxu0 %v1847
        %3870 = vmatprep.subr.bf16.mxu0 %v1856
        %3871 = vmatpush1.bf16.msra.mxu0 %v1855
        %3872 = vmatprep.subr.bf16.mxu0 %v1864
        %3873 = vmatpush1.bf16.msra.mxu0 %v1863
        %3874 = vmatprep.subr.bf16.mxu0 %v1872
        %3875 = vmatpush1.bf16.msra.mxu0 %v1871
        %3876 = vmatprep.subr.bf16.mxu0 %v1880
        %3877 = vmatpush1.bf16.msra.mxu0 %v1879
        %3878 = vmatprep.subr.bf16.mxu0 %v1888
        %3879 = vmatpush1.bf16.msra.mxu0 %v1887
        %3880 = vmatprep.mubr.bf16.mxu0 %v342
        %3881 = vmatmul.mubr.bf16.gmra.mrb[0].mxu0 %v341
        %v3882 = vpop.f32.mrb[0].mxu0
        %v3883 = vadd.f32 %v3842, %v3882
        %v3884 = vpop.f32.mrb[0].mxu0
        %v3885 = vadd.f32 %v3844, %v3884
        %v3886 = vpop.f32.mrb[0].mxu0
        %v3887 = vpop.f32.mrb[0].mxu0
        %3888 = vdwg.mxu0
        %3889 = vmatprep.subr.bf16.mxu0 %v1896
        %3890 = vmatpush1.bf16.msra.mxu0 %v1895
        %3891 = vmatprep.subr.bf16.mxu0 %v1904
        %3892 = vmatpush1.bf16.msra.mxu0 %v1903
        %3893 = vmatprep.subr.bf16.mxu0 %v1912
        %3894 = vmatpush1.bf16.msra.mxu0 %v1911
        %3895 = vmatprep.subr.bf16.mxu0 %v1920
        %3896 = vmatpush1.bf16.msra.mxu0 %v1919
        %3897 = vmatprep.subr.bf16.mxu0 %v1928
        %3898 = vmatpush1.bf16.msra.mxu0 %v1927
        %3899 = vmatprep.subr.bf16.mxu0 %v1936
        %3900 = vmatpush1.bf16.msra.mxu0 %v1935
        %3901 = vmatprep.subr.bf16.mxu0 %v1944
        %3902 = vmatpush1.bf16.msra.mxu0 %v1943
        %3903 = vmatprep.subr.bf16.mxu0 %v1952
        %3904 = vmatpush1.bf16.msra.mxu0 %v1951
        %3905 = vmatprep.subr.bf16.mxu0 %v1960
        %3906 = vmatpush1.bf16.msra.mxu0 %v1959
        %3907 = vmatprep.subr.bf16.mxu0 %v1968
        %3908 = vmatpush1.bf16.msra.mxu0 %v1967
        %3909 = vmatprep.subr.bf16.mxu0 %v1976
        %3910 = vmatpush1.bf16.msra.mxu0 %v1975
        %3911 = vmatprep.subr.bf16.mxu0 %v1984
        %3912 = vmatpush1.bf16.msra.mxu0 %v1983
        %3913 = vmatprep.subr.bf16.mxu0 %v1992
        %3914 = vmatpush1.bf16.msra.mxu0 %v1991
        %3915 = vmatprep.subr.bf16.mxu0 %v2000
        %3916 = vmatpush1.bf16.msra.mxu0 %v1999
        %3917 = vmatprep.subr.bf16.mxu0 %v2008
        %3918 = vmatpush1.bf16.msra.mxu0 %v2007
        %3919 = vmatprep.subr.bf16.mxu0 %v2016
        %3920 = vmatpush1.bf16.msra.mxu0 %v2015
        %3921 = vmatprep.mubr.bf16.mxu0 %v344
        %3922 = vmatmul.mubr.bf16.gmra.mrb[0].mxu0 %v343
        %v3923 = vpop.f32.mrb[0].mxu0
        %v3924 = vadd.f32 %v3883, %v3923
        %v3925 = vpop.f32.mrb[0].mxu0
        %v3926 = vadd.f32 %v3885, %v3925
        %v3927 = vpop.f32.mrb[0].mxu0
        %v3928 = vpop.f32.mrb[0].mxu0
        %3929 = vdwg.mxu0
        %3930 = vmatprep.subr.bf16.mxu0 %v2024
        %3931 = vmatpush1.bf16.msra.mxu0 %v2023
        %3932 = vmatprep.subr.bf16.mxu0 %v2032
        %3933 = vmatpush1.bf16.msra.mxu0 %v2031
        %3934 = vmatprep.subr.bf16.mxu0 %v2040
        %3935 = vmatpush1.bf16.msra.mxu0 %v2039
        %3936 = vmatprep.subr.bf16.mxu0 %v2048
        %3937 = vmatpush1.bf16.msra.mxu0 %v2047
        %3938 = vmatprep.subr.bf16.mxu0 %v2056
        %3939 = vmatpush1.bf16.msra.mxu0 %v2055
        %3940 = vmatprep.subr.bf16.mxu0 %v2064
        %3941 = vmatpush1.bf16.msra.mxu0 %v2063
        %3942 = vmatprep.subr.bf16.mxu0 %v2072
        %3943 = vmatpush1.bf16.msra.mxu0 %v2071
        %3944 = vmatprep.subr.bf16.mxu0 %v2080
        %3945 = vmatpush1.bf16.msra.mxu0 %v2079
        %3946 = vmatprep.subr.bf16.mxu0 %v2088
        %3947 = vmatpush1.bf16.msra.mxu0 %v2087
        %3948 = vmatprep.subr.bf16.mxu0 %v2096
        %3949 = vmatpush1.bf16.msra.mxu0 %v2095
        %3950 = vmatprep.subr.bf16.mxu0 %v2104
        %3951 = vmatpush1.bf16.msra.mxu0 %v2103
        %3952 = vmatprep.subr.bf16.mxu0 %v2112
        %3953 = vmatpush1.bf16.msra.mxu0 %v2111
        %3954 = vmatprep.subr.bf16.mxu0 %v2120
        %3955 = vmatpush1.bf16.msra.mxu0 %v2119
        %3956 = vmatprep.subr.bf16.mxu0 %v2128
        %3957 = vmatpush1.bf16.msra.mxu0 %v2127
        %3958 = vmatprep.subr.bf16.mxu0 %v2136
        %3959 = vmatpush1.bf16.msra.mxu0 %v2135
        %3960 = vmatprep.subr.bf16.mxu0 %v2144
        %3961 = vmatpush1.bf16.msra.mxu0 %v2143
        %3962 = vmatprep.mubr.bf16.mxu0 %v346
        %3963 = vmatmul.mubr.bf16.gmra.mrb[0].mxu0 %v345
        %v3964 = vpop.f32.mrb[0].mxu0
        %v3965 = vadd.f32 %v3924, %v3964
        %v3966 = vpop.f32.mrb[0].mxu0
        %v3967 = vadd.f32 %v3926, %v3966
        %v3968 = vpop.f32.mrb[0].mxu0
        %v3969 = vpop.f32.mrb[0].mxu0
        %3970 = vdwg.mxu0
        %3971 = vmatprep.subr.bf16.mxu0 %v2152
        %3972 = vmatpush1.bf16.msra.mxu0 %v2151
        %3973 = vmatprep.subr.bf16.mxu0 %v2160
        %3974 = vmatpush1.bf16.msra.mxu0 %v2159
        %3975 = vmatprep.subr.bf16.mxu0 %v2168
        %3976 = vmatpush1.bf16.msra.mxu0 %v2167
        %3977 = vmatprep.subr.bf16.mxu0 %v2176
        %3978 = vmatpush1.bf16.msra.mxu0 %v2175
        %3979 = vmatprep.subr.bf16.mxu0 %v2184
        %3980 = vmatpush1.bf16.msra.mxu0 %v2183
        %3981 = vmatprep.subr.bf16.mxu0 %v2192
        %3982 = vmatpush1.bf16.msra.mxu0 %v2191
        %3983 = vmatprep.subr.bf16.mxu0 %v2200
        %3984 = vmatpush1.bf16.msra.mxu0 %v2199
        %3985 = vmatprep.subr.bf16.mxu0 %v2208
        %3986 = vmatpush1.bf16.msra.mxu0 %v2207
        %3987 = vmatprep.subr.bf16.mxu0 %v2216
        %3988 = vmatpush1.bf16.msra.mxu0 %v2215
        %3989 = vmatprep.subr.bf16.mxu0 %v2224
        %3990 = vmatpush1.bf16.msra.mxu0 %v2223
        %3991 = vmatprep.subr.bf16.mxu0 %v2232
        %3992 = vmatpush1.bf16.msra.mxu0 %v2231
        %3993 = vmatprep.subr.bf16.mxu0 %v2240
        %3994 = vmatpush1.bf16.msra.mxu0 %v2239
        %3995 = vmatprep.subr.bf16.mxu0 %v2248
        %3996 = vmatpush1.bf16.msra.mxu0 %v2247
        %3997 = vmatprep.subr.bf16.mxu0 %v2256
        %3998 = vmatpush1.bf16.msra.mxu0 %v2255
        %3999 = vmatprep.subr.bf16.mxu0 %v2264
        %4000 = vmatpush1.bf16.msra.mxu0 %v2263
        %4001 = vmatprep.subr.bf16.mxu0 %v2272
        %4002 = vmatpush1.bf16.msra.mxu0 %v2271
        %4003 = vmatprep.mubr.bf16.mxu0 %v348
        %4004 = vmatmul.mubr.bf16.gmra.mrb[0].mxu0 %v347
        %v4005 = vpop.f32.mrb[0].mxu0
        %v4006 = vadd.f32 %v3965, %v4005
        %v4007 = vpop.f32.mrb[0].mxu0
        %v4008 = vadd.f32 %v3967, %v4007
        %v4009 = vpop.f32.mrb[0].mxu0
        %v4010 = vpop.f32.mrb[0].mxu0
        %4011 = vdwg.mxu0
        %4012 = vmatprep.subr.bf16.mxu0 %v2280
        %4013 = vmatpush1.bf16.msra.mxu0 %v2279
        %4014 = vmatprep.subr.bf16.mxu0 %v2288
        %4015 = vmatpush1.bf16.msra.mxu0 %v2287
        %4016 = vmatprep.subr.bf16.mxu0 %v2296
        %4017 = vmatpush1.bf16.msra.mxu0 %v2295
        %4018 = vmatprep.subr.bf16.mxu0 %v2304
        %4019 = vmatpush1.bf16.msra.mxu0 %v2303
        %4020 = vmatprep.subr.bf16.mxu0 %v2312
        %4021 = vmatpush1.bf16.msra.mxu0 %v2311
        %4022 = vmatprep.subr.bf16.mxu0 %v2320
        %4023 = vmatpush1.bf16.msra.mxu0 %v2319
        %4024 = vmatprep.subr.bf16.mxu0 %v2328
        %4025 = vmatpush1.bf16.msra.mxu0 %v2327
        %4026 = vmatprep.subr.bf16.mxu0 %v2336
        %4027 = vmatpush1.bf16.msra.mxu0 %v2335
        %4028 = vmatprep.subr.bf16.mxu0 %v2344
        %4029 = vmatpush1.bf16.msra.mxu0 %v2343
        %4030 = vmatprep.subr.bf16.mxu0 %v2352
        %4031 = vmatpush1.bf16.msra.mxu0 %v2351
        %4032 = vmatprep.subr.bf16.mxu0 %v2360
        %4033 = vmatpush1.bf16.msra.mxu0 %v2359
        %4034 = vmatprep.subr.bf16.mxu0 %v2368
        %4035 = vmatpush1.bf16.msra.mxu0 %v2367
        %4036 = vmatprep.subr.bf16.mxu0 %v2376
        %4037 = vmatpush1.bf16.msra.mxu0 %v2375
        %4038 = vmatprep.subr.bf16.mxu0 %v2384
        %4039 = vmatpush1.bf16.msra.mxu0 %v2383
        %4040 = vmatprep.subr.bf16.mxu0 %v2392
        %4041 = vmatpush1.bf16.msra.mxu0 %v2391
        %4042 = vmatprep.subr.bf16.mxu0 %v2400
        %4043 = vmatpush1.bf16.msra.mxu0 %v2399
        %4044 = vmatprep.mubr.bf16.mxu0 %v350
        %4045 = vmatmul.mubr.bf16.gmra.mrb[0].mxu0 %v349
        %v4046 = vpop.f32.mrb[0].mxu0
        %v4047 = vadd.f32 %v4006, %v4046
        %v4048 = vpop.f32.mrb[0].mxu0
        %v4049 = vadd.f32 %v4008, %v4048
        %v4050 = vpop.f32.mrb[0].mxu0
        %v4051 = vpop.f32.mrb[0].mxu0
        %4052 = vdwg.mxu0
        %4053 = vmatprep.subr.bf16.mxu0 %v2408
        %4054 = vmatpush1.bf16.msra.mxu0 %v2407
        %4055 = vmatprep.subr.bf16.mxu0 %v2416
        %4056 = vmatpush1.bf16.msra.mxu0 %v2415
        %4057 = vmatprep.subr.bf16.mxu0 %v2424
        %4058 = vmatpush1.bf16.msra.mxu0 %v2423
        %4059 = vmatprep.subr.bf16.mxu0 %v2432
        %4060 = vmatpush1.bf16.msra.mxu0 %v2431
        %4061 = vmatprep.subr.bf16.mxu0 %v2440
        %4062 = vmatpush1.bf16.msra.mxu0 %v2439
        %4063 = vmatprep.subr.bf16.mxu0 %v2448
        %4064 = vmatpush1.bf16.msra.mxu0 %v2447
        %4065 = vmatprep.subr.bf16.mxu0 %v2456
        %4066 = vmatpush1.bf16.msra.mxu0 %v2455
        %4067 = vmatprep.subr.bf16.mxu0 %v2464
        %4068 = vmatpush1.bf16.msra.mxu0 %v2463
        %4069 = vmatprep.subr.bf16.mxu0 %v2472
        %4070 = vmatpush1.bf16.msra.mxu0 %v2471
        %4071 = vmatprep.subr.bf16.mxu0 %v2480
        %4072 = vmatpush1.bf16.msra.mxu0 %v2479
        %4073 = vmatprep.subr.bf16.mxu0 %v2488
        %4074 = vmatpush1.bf16.msra.mxu0 %v2487
        %4075 = vmatprep.subr.bf16.mxu0 %v2496
        %4076 = vmatpush1.bf16.msra.mxu0 %v2495
        %4077 = vmatprep.subr.bf16.mxu0 %v2504
        %4078 = vmatpush1.bf16.msra.mxu0 %v2503
        %4079 = vmatprep.subr.bf16.mxu0 %v2512
        %4080 = vmatpush1.bf16.msra.mxu0 %v2511
        %4081 = vmatprep.subr.bf16.mxu0 %v2520
        %4082 = vmatpush1.bf16.msra.mxu0 %v2519
        %4083 = vmatprep.subr.bf16.mxu0 %v2528
        %4084 = vmatpush1.bf16.msra.mxu0 %v2527
        %4085 = vmatprep.mubr.bf16.mxu0 %v352
        %4086 = vmatmul.mubr.bf16.gmra.mrb[0].mxu0 %v351
        %v4087 = vpop.f32.mrb[0].mxu0
        %v4088 = vadd.f32 %v4047, %v4087
        %v4089 = vpop.f32.mrb[0].mxu0
        %v4090 = vadd.f32 %v4049, %v4089
        %v4091 = vpop.f32.mrb[0].mxu0
        %v4092 = vpop.f32.mrb[0].mxu0
        %4093 = vdwg.mxu0
        %4094 = vmatprep.subr.bf16.mxu0 %v2536
        %4095 = vmatpush1.bf16.msra.mxu0 %v2535
        %4096 = vmatprep.subr.bf16.mxu0 %v2544
        %4097 = vmatpush1.bf16.msra.mxu0 %v2543
        %4098 = vmatprep.subr.bf16.mxu0 %v2552
        %4099 = vmatpush1.bf16.msra.mxu0 %v2551
        %4100 = vmatprep.subr.bf16.mxu0 %v2560
        %4101 = vmatpush1.bf16.msra.mxu0 %v2559
        %4102 = vmatprep.subr.bf16.mxu0 %v2568
        %4103 = vmatpush1.bf16.msra.mxu0 %v2567
        %4104 = vmatprep.subr.bf16.mxu0 %v2576
        %4105 = vmatpush1.bf16.msra.mxu0 %v2575
        %4106 = vmatprep.subr.bf16.mxu0 %v2584
        %4107 = vmatpush1.bf16.msra.mxu0 %v2583
        %4108 = vmatprep.subr.bf16.mxu0 %v2592
        %4109 = vmatpush1.bf16.msra.mxu0 %v2591
        %4110 = vmatprep.subr.bf16.mxu0 %v2600
        %4111 = vmatpush1.bf16.msra.mxu0 %v2599
        %4112 = vmatprep.subr.bf16.mxu0 %v2608
        %4113 = vmatpush1.bf16.msra.mxu0 %v2607
        %4114 = vmatprep.subr.bf16.mxu0 %v2616
        %4115 = vmatpush1.bf16.msra.mxu0 %v2615
        %4116 = vmatprep.subr.bf16.mxu0 %v2624
        %4117 = vmatpush1.bf16.msra.mxu0 %v2623
        %4118 = vmatprep.subr.bf16.mxu0 %v2632
        %4119 = vmatpush1.bf16.msra.mxu0 %v2631
        %4120 = vmatprep.subr.bf16.mxu0 %v2640
        %4121 = vmatpush1.bf16.msra.mxu0 %v2639
        %4122 = vmatprep.subr.bf16.mxu0 %v2648
        %4123 = vmatpush1.bf16.msra.mxu0 %v2647
        %4124 = vmatprep.subr.bf16.mxu0 %v2656
        %4125 = vmatpush1.bf16.msra.mxu0 %v2655
        %4126 = vmatprep.mubr.bf16.mxu0 %v354
        %4127 = vmatmul.mubr.bf16.gmra.mrb[0].mxu0 %v353
        %v4128 = vpop.f32.mrb[0].mxu0
        %v4129 = vadd.f32 %v4088, %v4128
        %v4130 = vpop.f32.mrb[0].mxu0
        %v4131 = vadd.f32 %v4090, %v4130
        %v4132 = vpop.f32.mrb[0].mxu0
        %v4133 = vpop.f32.mrb[0].mxu0
        %4134 = vdwg.mxu0
        %4135 = vmatprep.subr.bf16.mxu0 %v1130
        %4136 = vmatpush1.bf16.msra.mxu0 %v1129
        %4137 = vmatprep.subr.bf16.mxu0 %v1138
        %4138 = vmatpush1.bf16.msra.mxu0 %v1137
        %4139 = vmatprep.subr.bf16.mxu0 %v1146
        %4140 = vmatpush1.bf16.msra.mxu0 %v1145
        %4141 = vmatprep.subr.bf16.mxu0 %v1154
        %4142 = vmatpush1.bf16.msra.mxu0 %v1153
        %4143 = vmatprep.subr.bf16.mxu0 %v1162
        %4144 = vmatpush1.bf16.msra.mxu0 %v1161
        %4145 = vmatprep.subr.bf16.mxu0 %v1170
        %4146 = vmatpush1.bf16.msra.mxu0 %v1169
        %4147 = vmatprep.subr.bf16.mxu0 %v1178
        %4148 = vmatpush1.bf16.msra.mxu0 %v1177
        %4149 = vmatprep.subr.bf16.mxu0 %v1186
        %4150 = vmatpush1.bf16.msra.mxu0 %v1185
        %4151 = vmatprep.subr.bf16.mxu0 %v1194
        %4152 = vmatpush1.bf16.msra.mxu0 %v1193
        %4153 = vmatprep.subr.bf16.mxu0 %v1202
        %4154 = vmatpush1.bf16.msra.mxu0 %v1201
        %4155 = vmatprep.subr.bf16.mxu0 %v1210
        %4156 = vmatpush1.bf16.msra.mxu0 %v1209
        %4157 = vmatprep.subr.bf16.mxu0 %v1218
        %4158 = vmatpush1.bf16.msra.mxu0 %v1217
        %4159 = vmatprep.subr.bf16.mxu0 %v1226
        %4160 = vmatpush1.bf16.msra.mxu0 %v1225
        %4161 = vmatprep.subr.bf16.mxu0 %v1234
        %4162 = vmatpush1.bf16.msra.mxu0 %v1233
        %4163 = vmatprep.subr.bf16.mxu0 %v1242
        %4164 = vmatpush1.bf16.msra.mxu0 %v1241
        %4165 = vmatprep.subr.bf16.mxu0 %v1250
        %4166 = vmatpush1.bf16.msra.mxu0 %v1249
        %4167 = vmatprep.mubr.bf16.mxu0 %v332
        %4168 = vmatmul.mubr.bf16.gmra.mrb[0].mxu0 %v331
        %v4169 = vpop.f32.mrb[0].mxu0
        %v4170 = vadd.f32 0.0, %v4169
        %v4171 = vpop.f32.mrb[0].mxu0
        %v4172 = vadd.f32 0.0, %v4171
        %v4173 = vpop.f32.mrb[0].mxu0
        %v4174 = vpop.f32.mrb[0].mxu0
        %4175 = vdwg.mxu0
        %4176 = vmatprep.subr.bf16.mxu0 %v1258
        %4177 = vmatpush1.bf16.msra.mxu0 %v1257
        %4178 = vmatprep.subr.bf16.mxu0 %v1266
        %4179 = vmatpush1.bf16.msra.mxu0 %v1265
        %4180 = vmatprep.subr.bf16.mxu0 %v1274
        %4181 = vmatpush1.bf16.msra.mxu0 %v1273
        %4182 = vmatprep.subr.bf16.mxu0 %v1282
        %4183 = vmatpush1.bf16.msra.mxu0 %v1281
        %4184 = vmatprep.subr.bf16.mxu0 %v1290
        %4185 = vmatpush1.bf16.msra.mxu0 %v1289
        %4186 = vmatprep.subr.bf16.mxu0 %v1298
        %4187 = vmatpush1.bf16.msra.mxu0 %v1297
        %4188 = vmatprep.subr.bf16.mxu0 %v1306
        %4189 = vmatpush1.bf16.msra.mxu0 %v1305
        %4190 = vmatprep.subr.bf16.mxu0 %v1314
        %4191 = vmatpush1.bf16.msra.mxu0 %v1313
        %4192 = vmatprep.subr.bf16.mxu0 %v1322
        %4193 = vmatpush1.bf16.msra.mxu0 %v1321
        %4194 = vmatprep.subr.bf16.mxu0 %v1330
        %4195 = vmatpush1.bf16.msra.mxu0 %v1329
        %4196 = vmatprep.subr.bf16.mxu0 %v1338
        %4197 = vmatpush1.bf16.msra.mxu0 %v1337
        %4198 = vmatprep.subr.bf16.mxu0 %v1346
        %4199 = vmatpush1.bf16.msra.mxu0 %v1345
        %4200 = vmatprep.subr.bf16.mxu0 %v1354
        %4201 = vmatpush1.bf16.msra.mxu0 %v1353
        %4202 = vmatprep.subr.bf16.mxu0 %v1362
        %4203 = vmatpush1.bf16.msra.mxu0 %v1361
        %4204 = vmatprep.subr.bf16.mxu0 %v1370
        %4205 = vmatpush1.bf16.msra.mxu0 %v1369
        %4206 = vmatprep.subr.bf16.mxu0 %v1378
        %4207 = vmatpush1.bf16.msra.mxu0 %v1377
        %4208 = vmatprep.mubr.bf16.mxu0 %v334
        %4209 = vmatmul.mubr.bf16.gmra.mrb[0].mxu0 %v333
        %v4210 = vpop.f32.mrb[0].mxu0
        %v4211 = vadd.f32 %v4170, %v4210
        %v4212 = vpop.f32.mrb[0].mxu0
        %v4213 = vadd.f32 %v4172, %v4212
        %v4214 = vpop.f32.mrb[0].mxu0
        %v4215 = vpop.f32.mrb[0].mxu0
        %4216 = vdwg.mxu0
        %4217 = vmatprep.subr.bf16.mxu0 %v1386
        %4218 = vmatpush1.bf16.msra.mxu0 %v1385
        %4219 = vmatprep.subr.bf16.mxu0 %v1394
        %4220 = vmatpush1.bf16.msra.mxu0 %v1393
        %4221 = vmatprep.subr.bf16.mxu0 %v1402
        %4222 = vmatpush1.bf16.msra.mxu0 %v1401
        %4223 = vmatprep.subr.bf16.mxu0 %v1410
        %4224 = vmatpush1.bf16.msra.mxu0 %v1409
        %4225 = vmatprep.subr.bf16.mxu0 %v1418
        %4226 = vmatpush1.bf16.msra.mxu0 %v1417
        %4227 = vmatprep.subr.bf16.mxu0 %v1426
        %4228 = vmatpush1.bf16.msra.mxu0 %v1425
        %4229 = vmatprep.subr.bf16.mxu0 %v1434
        %4230 = vmatpush1.bf16.msra.mxu0 %v1433
        %4231 = vmatprep.subr.bf16.mxu0 %v1442
        %4232 = vmatpush1.bf16.msra.mxu0 %v1441
        %4233 = vmatprep.subr.bf16.mxu0 %v1450
        %4234 = vmatpush1.bf16.msra.mxu0 %v1449
        %4235 = vmatprep.subr.bf16.mxu0 %v1458
        %4236 = vmatpush1.bf16.msra.mxu0 %v1457
        %4237 = vmatprep.subr.bf16.mxu0 %v1466
        %4238 = vmatpush1.bf16.msra.mxu0 %v1465
        %4239 = vmatprep.subr.bf16.mxu0 %v1474
        %4240 = vmatpush1.bf16.msra.mxu0 %v1473
        %4241 = vmatprep.subr.bf16.mxu0 %v1482
        %4242 = vmatpush1.bf16.msra.mxu0 %v1481
        %4243 = vmatprep.subr.bf16.mxu0 %v1490
        %4244 = vmatpush1.bf16.msra.mxu0 %v1489
        %4245 = vmatprep.subr.bf16.mxu0 %v1498
        %4246 = vmatpush1.bf16.msra.mxu0 %v1497
        %4247 = vmatprep.subr.bf16.mxu0 %v1506
        %4248 = vmatpush1.bf16.msra.mxu0 %v1505
        %4249 = vmatprep.mubr.bf16.mxu0 %v336
        %4250 = vmatmul.mubr.bf16.gmra.mrb[0].mxu0 %v335
        %v4251 = vpop.f32.mrb[0].mxu0
        %v4252 = vadd.f32 %v4211, %v4251
        %v4253 = vpop.f32.mrb[0].mxu0
        %v4254 = vadd.f32 %v4213, %v4253
        %v4255 = vpop.f32.mrb[0].mxu0
        %v4256 = vpop.f32.mrb[0].mxu0
        %4257 = vdwg.mxu0
        %4258 = vmatprep.subr.bf16.mxu0 %v1514
        %4259 = vmatpush1.bf16.msra.mxu0 %v1513
        %4260 = vmatprep.subr.bf16.mxu0 %v1522
        %4261 = vmatpush1.bf16.msra.mxu0 %v1521
        %4262 = vmatprep.subr.bf16.mxu0 %v1530
        %4263 = vmatpush1.bf16.msra.mxu0 %v1529
        %4264 = vmatprep.subr.bf16.mxu0 %v1538
        %4265 = vmatpush1.bf16.msra.mxu0 %v1537
        %4266 = vmatprep.subr.bf16.mxu0 %v1546
        %4267 = vmatpush1.bf16.msra.mxu0 %v1545
        %4268 = vmatprep.subr.bf16.mxu0 %v1554
        %4269 = vmatpush1.bf16.msra.mxu0 %v1553
        %4270 = vmatprep.subr.bf16.mxu0 %v1562
        %4271 = vmatpush1.bf16.msra.mxu0 %v1561
        %4272 = vmatprep.subr.bf16.mxu0 %v1570
        %4273 = vmatpush1.bf16.msra.mxu0 %v1569
        %4274 = vmatprep.subr.bf16.mxu0 %v1578
        %4275 = vmatpush1.bf16.msra.mxu0 %v1577
        %4276 = vmatprep.subr.bf16.mxu0 %v1586
        %4277 = vmatpush1.bf16.msra.mxu0 %v1585
        %4278 = vmatprep.subr.bf16.mxu0 %v1594
        %4279 = vmatpush1.bf16.msra.mxu0 %v1593
        %4280 = vmatprep.subr.bf16.mxu0 %v1602
        %4281 = vmatpush1.bf16.msra.mxu0 %v1601
        %4282 = vmatprep.subr.bf16.mxu0 %v1610
        %4283 = vmatpush1.bf16.msra.mxu0 %v1609
        %4284 = vmatprep.subr.bf16.mxu0 %v1618
        %4285 = vmatpush1.bf16.msra.mxu0 %v1617
        %4286 = vmatprep.subr.bf16.mxu0 %v1626
        %4287 = vmatpush1.bf16.msra.mxu0 %v1625
        %4288 = vmatprep.subr.bf16.mxu0 %v1634
        %4289 = vmatpush1.bf16.msra.mxu0 %v1633
        %4290 = vmatprep.mubr.bf16.mxu0 %v338
        %4291 = vmatmul.mubr.bf16.gmra.mrb[0].mxu0 %v337
        %v4292 = vpop.f32.mrb[0].mxu0
        %v4293 = vadd.f32 %v4252, %v4292
        %v4294 = vpop.f32.mrb[0].mxu0
        %v4295 = vadd.f32 %v4254, %v4294
        %v4296 = vpop.f32.mrb[0].mxu0
        %v4297 = vpop.f32.mrb[0].mxu0
        %4298 = vdwg.mxu0
        %4299 = vmatprep.subr.bf16.mxu0 %v1642
        %4300 = vmatpush1.bf16.msra.mxu0 %v1641
        %4301 = vmatprep.subr.bf16.mxu0 %v1650
        %4302 = vmatpush1.bf16.msra.mxu0 %v1649
        %4303 = vmatprep.subr.bf16.mxu0 %v1658
        %4304 = vmatpush1.bf16.msra.mxu0 %v1657
        %4305 = vmatprep.subr.bf16.mxu0 %v1666
        %4306 = vmatpush1.bf16.msra.mxu0 %v1665
        %4307 = vmatprep.subr.bf16.mxu0 %v1674
        %4308 = vmatpush1.bf16.msra.mxu0 %v1673
        %4309 = vmatprep.subr.bf16.mxu0 %v1682
        %4310 = vmatpush1.bf16.msra.mxu0 %v1681
        %4311 = vmatprep.subr.bf16.mxu0 %v1690
        %4312 = vmatpush1.bf16.msra.mxu0 %v1689
        %4313 = vmatprep.subr.bf16.mxu0 %v1698
        %4314 = vmatpush1.bf16.msra.mxu0 %v1697
        %4315 = vmatprep.subr.bf16.mxu0 %v1706
        %4316 = vmatpush1.bf16.msra.mxu0 %v1705
        %4317 = vmatprep.subr.bf16.mxu0 %v1714
        %4318 = vmatpush1.bf16.msra.mxu0 %v1713
        %4319 = vmatprep.subr.bf16.mxu0 %v1722
        %4320 = vmatpush1.bf16.msra.mxu0 %v1721
        %4321 = vmatprep.subr.bf16.mxu0 %v1730
        %4322 = vmatpush1.bf16.msra.mxu0 %v1729
        %4323 = vmatprep.subr.bf16.mxu0 %v1738
        %4324 = vmatpush1.bf16.msra.mxu0 %v1737
        %4325 = vmatprep.subr.bf16.mxu0 %v1746
        %4326 = vmatpush1.bf16.msra.mxu0 %v1745
        %4327 = vmatprep.subr.bf16.mxu0 %v1754
        %4328 = vmatpush1.bf16.msra.mxu0 %v1753
        %4329 = vmatprep.subr.bf16.mxu0 %v1762
        %4330 = vmatpush1.bf16.msra.mxu0 %v1761
        %4331 = vmatprep.mubr.bf16.mxu0 %v340
        %4332 = vmatmul.mubr.bf16.gmra.mrb[0].mxu0 %v339
        %v4333 = vpop.f32.mrb[0].mxu0
        %v4334 = vadd.f32 %v4293, %v4333
        %v4335 = vpop.f32.mrb[0].mxu0
        %v4336 = vadd.f32 %v4295, %v4335
        %v4337 = vpop.f32.mrb[0].mxu0
        %v4338 = vpop.f32.mrb[0].mxu0
        %4339 = vdwg.mxu0
        %4340 = vmatprep.subr.bf16.mxu0 %v1770
        %4341 = vmatpush1.bf16.msra.mxu0 %v1769
        %4342 = vmatprep.subr.bf16.mxu0 %v1778
        %4343 = vmatpush1.bf16.msra.mxu0 %v1777
        %4344 = vmatprep.subr.bf16.mxu0 %v1786
        %4345 = vmatpush1.bf16.msra.mxu0 %v1785
        %4346 = vmatprep.subr.bf16.mxu0 %v1794
        %4347 = vmatpush1.bf16.msra.mxu0 %v1793
        %4348 = vmatprep.subr.bf16.mxu0 %v1802
        %4349 = vmatpush1.bf16.msra.mxu0 %v1801
        %4350 = vmatprep.subr.bf16.mxu0 %v1810
        %4351 = vmatpush1.bf16.msra.mxu0 %v1809
        %4352 = vmatprep.subr.bf16.mxu0 %v1818
        %4353 = vmatpush1.bf16.msra.mxu0 %v1817
        %4354 = vmatprep.subr.bf16.mxu0 %v1826
        %4355 = vmatpush1.bf16.msra.mxu0 %v1825
        %4356 = vmatprep.subr.bf16.mxu0 %v1834
        %4357 = vmatpush1.bf16.msra.mxu0 %v1833
        %4358 = vmatprep.subr.bf16.mxu0 %v1842
        %4359 = vmatpush1.bf16.msra.mxu0 %v1841
        %4360 = vmatprep.subr.bf16.mxu0 %v1850
        %4361 = vmatpush1.bf16.msra.mxu0 %v1849
        %4362 = vmatprep.subr.bf16.mxu0 %v1858
        %4363 = vmatpush1.bf16.msra.mxu0 %v1857
        %4364 = vmatprep.subr.bf16.mxu0 %v1866
        %4365 = vmatpush1.bf16.msra.mxu0 %v1865
        %4366 = vmatprep.subr.bf16.mxu0 %v1874
        %4367 = vmatpush1.bf16.msra.mxu0 %v1873
        %4368 = vmatprep.subr.bf16.mxu0 %v1882
        %4369 = vmatpush1.bf16.msra.mxu0 %v1881
        %4370 = vmatprep.subr.bf16.mxu0 %v1890
        %4371 = vmatpush1.bf16.msra.mxu0 %v1889
        %4372 = vmatprep.mubr.bf16.mxu0 %v342
        %4373 = vmatmul.mubr.bf16.gmra.mrb[0].mxu0 %v341
        %v4374 = vpop.f32.mrb[0].mxu0
        %v4375 = vadd.f32 %v4334, %v4374
        %v4376 = vpop.f32.mrb[0].mxu0
        %v4377 = vadd.f32 %v4336, %v4376
        %v4378 = vpop.f32.mrb[0].mxu0
        %v4379 = vpop.f32.mrb[0].mxu0
        %4380 = vdwg.mxu0
        %4381 = vmatprep.subr.bf16.mxu0 %v1898
        %4382 = vmatpush1.bf16.msra.mxu0 %v1897
        %4383 = vmatprep.subr.bf16.mxu0 %v1906
        %4384 = vmatpush1.bf16.msra.mxu0 %v1905
        %4385 = vmatprep.subr.bf16.mxu0 %v1914
        %4386 = vmatpush1.bf16.msra.mxu0 %v1913
        %4387 = vmatprep.subr.bf16.mxu0 %v1922
        %4388 = vmatpush1.bf16.msra.mxu0 %v1921
        %4389 = vmatprep.subr.bf16.mxu0 %v1930
        %4390 = vmatpush1.bf16.msra.mxu0 %v1929
        %4391 = vmatprep.subr.bf16.mxu0 %v1938
        %4392 = vmatpush1.bf16.msra.mxu0 %v1937
        %4393 = vmatprep.subr.bf16.mxu0 %v1946
        %4394 = vmatpush1.bf16.msra.mxu0 %v1945
        %4395 = vmatprep.subr.bf16.mxu0 %v1954
        %4396 = vmatpush1.bf16.msra.mxu0 %v1953
        %4397 = vmatprep.subr.bf16.mxu0 %v1962
        %4398 = vmatpush1.bf16.msra.mxu0 %v1961
        %4399 = vmatprep.subr.bf16.mxu0 %v1970
        %4400 = vmatpush1.bf16.msra.mxu0 %v1969
        %4401 = vmatprep.subr.bf16.mxu0 %v1978
        %4402 = vmatpush1.bf16.msra.mxu0 %v1977
        %4403 = vmatprep.subr.bf16.mxu0 %v1986
        %4404 = vmatpush1.bf16.msra.mxu0 %v1985
        %4405 = vmatprep.subr.bf16.mxu0 %v1994
        %4406 = vmatpush1.bf16.msra.mxu0 %v1993
        %4407 = vmatprep.subr.bf16.mxu0 %v2002
        %4408 = vmatpush1.bf16.msra.mxu0 %v2001
        %4409 = vmatprep.subr.bf16.mxu0 %v2010
        %4410 = vmatpush1.bf16.msra.mxu0 %v2009
        %4411 = vmatprep.subr.bf16.mxu0 %v2018
        %4412 = vmatpush1.bf16.msra.mxu0 %v2017
        %4413 = vmatprep.mubr.bf16.mxu0 %v344
        %4414 = vmatmul.mubr.bf16.gmra.mrb[0].mxu0 %v343
        %v4415 = vpop.f32.mrb[0].mxu0
        %v4416 = vadd.f32 %v4375, %v4415
        %v4417 = vpop.f32.mrb[0].mxu0
        %v4418 = vadd.f32 %v4377, %v4417
        %v4419 = vpop.f32.mrb[0].mxu0
        %v4420 = vpop.f32.mrb[0].mxu0
        %4421 = vdwg.mxu0
        %4422 = vmatprep.subr.bf16.mxu0 %v2026
        %4423 = vmatpush1.bf16.msra.mxu0 %v2025
        %4424 = vmatprep.subr.bf16.mxu0 %v2034
        %4425 = vmatpush1.bf16.msra.mxu0 %v2033
        %4426 = vmatprep.subr.bf16.mxu0 %v2042
        %4427 = vmatpush1.bf16.msra.mxu0 %v2041
        %4428 = vmatprep.subr.bf16.mxu0 %v2050
        %4429 = vmatpush1.bf16.msra.mxu0 %v2049
        %4430 = vmatprep.subr.bf16.mxu0 %v2058
        %4431 = vmatpush1.bf16.msra.mxu0 %v2057
        %4432 = vmatprep.subr.bf16.mxu0 %v2066
        %4433 = vmatpush1.bf16.msra.mxu0 %v2065
        %4434 = vmatprep.subr.bf16.mxu0 %v2074
        %4435 = vmatpush1.bf16.msra.mxu0 %v2073
        %4436 = vmatprep.subr.bf16.mxu0 %v2082
        %4437 = vmatpush1.bf16.msra.mxu0 %v2081
        %4438 = vmatprep.subr.bf16.mxu0 %v2090
        %4439 = vmatpush1.bf16.msra.mxu0 %v2089
        %4440 = vmatprep.subr.bf16.mxu0 %v2098
        %4441 = vmatpush1.bf16.msra.mxu0 %v2097
        %4442 = vmatprep.subr.bf16.mxu0 %v2106
        %4443 = vmatpush1.bf16.msra.mxu0 %v2105
        %4444 = vmatprep.subr.bf16.mxu0 %v2114
        %4445 = vmatpush1.bf16.msra.mxu0 %v2113
        %4446 = vmatprep.subr.bf16.mxu0 %v2122
        %4447 = vmatpush1.bf16.msra.mxu0 %v2121
        %4448 = vmatprep.subr.bf16.mxu0 %v2130
        %4449 = vmatpush1.bf16.msra.mxu0 %v2129
        %4450 = vmatprep.subr.bf16.mxu0 %v2138
        %4451 = vmatpush1.bf16.msra.mxu0 %v2137
        %4452 = vmatprep.subr.bf16.mxu0 %v2146
        %4453 = vmatpush1.bf16.msra.mxu0 %v2145
        %4454 = vmatprep.mubr.bf16.mxu0 %v346
        %4455 = vmatmul.mubr.bf16.gmra.mrb[0].mxu0 %v345
        %v4456 = vpop.f32.mrb[0].mxu0
        %v4457 = vadd.f32 %v4416, %v4456
        %v4458 = vpop.f32.mrb[0].mxu0
        %v4459 = vadd.f32 %v4418, %v4458
        %v4460 = vpop.f32.mrb[0].mxu0
        %v4461 = vpop.f32.mrb[0].mxu0
        %4462 = vdwg.mxu0
        %4463 = vmatprep.subr.bf16.mxu0 %v2154
        %4464 = vmatpush1.bf16.msra.mxu0 %v2153
        %4465 = vmatprep.subr.bf16.mxu0 %v2162
        %4466 = vmatpush1.bf16.msra.mxu0 %v2161
        %4467 = vmatprep.subr.bf16.mxu0 %v2170
        %4468 = vmatpush1.bf16.msra.mxu0 %v2169
        %4469 = vmatprep.subr.bf16.mxu0 %v2178
        %4470 = vmatpush1.bf16.msra.mxu0 %v2177
        %4471 = vmatprep.subr.bf16.mxu0 %v2186
        %4472 = vmatpush1.bf16.msra.mxu0 %v2185
        %4473 = vmatprep.subr.bf16.mxu0 %v2194
        %4474 = vmatpush1.bf16.msra.mxu0 %v2193
        %4475 = vmatprep.subr.bf16.mxu0 %v2202
        %4476 = vmatpush1.bf16.msra.mxu0 %v2201
        %4477 = vmatprep.subr.bf16.mxu0 %v2210
        %4478 = vmatpush1.bf16.msra.mxu0 %v2209
        %4479 = vmatprep.subr.bf16.mxu0 %v2218
        %4480 = vmatpush1.bf16.msra.mxu0 %v2217
        %4481 = vmatprep.subr.bf16.mxu0 %v2226
        %4482 = vmatpush1.bf16.msra.mxu0 %v2225
        %4483 = vmatprep.subr.bf16.mxu0 %v2234
        %4484 = vmatpush1.bf16.msra.mxu0 %v2233
        %4485 = vmatprep.subr.bf16.mxu0 %v2242
        %4486 = vmatpush1.bf16.msra.mxu0 %v2241
        %4487 = vmatprep.subr.bf16.mxu0 %v2250
        %4488 = vmatpush1.bf16.msra.mxu0 %v2249
        %4489 = vmatprep.subr.bf16.mxu0 %v2258
        %4490 = vmatpush1.bf16.msra.mxu0 %v2257
        %4491 = vmatprep.subr.bf16.mxu0 %v2266
        %4492 = vmatpush1.bf16.msra.mxu0 %v2265
        %4493 = vmatprep.subr.bf16.mxu0 %v2274
        %4494 = vmatpush1.bf16.msra.mxu0 %v2273
        %4495 = vmatprep.mubr.bf16.mxu0 %v348
        %4496 = vmatmul.mubr.bf16.gmra.mrb[0].mxu0 %v347
        %v4497 = vpop.f32.mrb[0].mxu0
        %v4498 = vadd.f32 %v4457, %v4497
        %v4499 = vpop.f32.mrb[0].mxu0
        %v4500 = vadd.f32 %v4459, %v4499
        %v4501 = vpop.f32.mrb[0].mxu0
        %v4502 = vpop.f32.mrb[0].mxu0
        %4503 = vdwg.mxu0
        %4504 = vmatprep.subr.bf16.mxu0 %v2282
        %4505 = vmatpush1.bf16.msra.mxu0 %v2281
        %4506 = vmatprep.subr.bf16.mxu0 %v2290
        %4507 = vmatpush1.bf16.msra.mxu0 %v2289
        %4508 = vmatprep.subr.bf16.mxu0 %v2298
        %4509 = vmatpush1.bf16.msra.mxu0 %v2297
        %4510 = vmatprep.subr.bf16.mxu0 %v2306
        %4511 = vmatpush1.bf16.msra.mxu0 %v2305
        %4512 = vmatprep.subr.bf16.mxu0 %v2314
        %4513 = vmatpush1.bf16.msra.mxu0 %v2313
        %4514 = vmatprep.subr.bf16.mxu0 %v2322
        %4515 = vmatpush1.bf16.msra.mxu0 %v2321
        %4516 = vmatprep.subr.bf16.mxu0 %v2330
        %4517 = vmatpush1.bf16.msra.mxu0 %v2329
        %4518 = vmatprep.subr.bf16.mxu0 %v2338
        %4519 = vmatpush1.bf16.msra.mxu0 %v2337
        %4520 = vmatprep.subr.bf16.mxu0 %v2346
        %4521 = vmatpush1.bf16.msra.mxu0 %v2345
        %4522 = vmatprep.subr.bf16.mxu0 %v2354
        %4523 = vmatpush1.bf16.msra.mxu0 %v2353
        %4524 = vmatprep.subr.bf16.mxu0 %v2362
        %4525 = vmatpush1.bf16.msra.mxu0 %v2361
        %4526 = vmatprep.subr.bf16.mxu0 %v2370
        %4527 = vmatpush1.bf16.msra.mxu0 %v2369
        %4528 = vmatprep.subr.bf16.mxu0 %v2378
        %4529 = vmatpush1.bf16.msra.mxu0 %v2377
        %4530 = vmatprep.subr.bf16.mxu0 %v2386
        %4531 = vmatpush1.bf16.msra.mxu0 %v2385
        %4532 = vmatprep.subr.bf16.mxu0 %v2394
        %4533 = vmatpush1.bf16.msra.mxu0 %v2393
        %4534 = vmatprep.subr.bf16.mxu0 %v2402
        %4535 = vmatpush1.bf16.msra.mxu0 %v2401
        %4536 = vmatprep.mubr.bf16.mxu0 %v350
        %4537 = vmatmul.mubr.bf16.gmra.mrb[0].mxu0 %v349
        %v4538 = vpop.f32.mrb[0].mxu0
        %v4539 = vadd.f32 %v4498, %v4538
        %v4540 = vpop.f32.mrb[0].mxu0
        %v4541 = vadd.f32 %v4500, %v4540
        %v4542 = vpop.f32.mrb[0].mxu0
        %v4543 = vpop.f32.mrb[0].mxu0
        %4544 = vdwg.mxu0
        %4545 = vmatprep.subr.bf16.mxu0 %v2410
        %4546 = vmatpush1.bf16.msra.mxu0 %v2409
        %4547 = vmatprep.subr.bf16.mxu0 %v2418
        %4548 = vmatpush1.bf16.msra.mxu0 %v2417
        %4549 = vmatprep.subr.bf16.mxu0 %v2426
        %4550 = vmatpush1.bf16.msra.mxu0 %v2425
        %4551 = vmatprep.subr.bf16.mxu0 %v2434
        %4552 = vmatpush1.bf16.msra.mxu0 %v2433
        %4553 = vmatprep.subr.bf16.mxu0 %v2442
        %4554 = vmatpush1.bf16.msra.mxu0 %v2441
        %4555 = vmatprep.subr.bf16.mxu0 %v2450
        %4556 = vmatpush1.bf16.msra.mxu0 %v2449
        %4557 = vmatprep.subr.bf16.mxu0 %v2458
        %4558 = vmatpush1.bf16.msra.mxu0 %v2457
        %4559 = vmatprep.subr.bf16.mxu0 %v2466
        %4560 = vmatpush1.bf16.msra.mxu0 %v2465
        %4561 = vmatprep.subr.bf16.mxu0 %v2474
        %4562 = vmatpush1.bf16.msra.mxu0 %v2473
        %4563 = vmatprep.subr.bf16.mxu0 %v2482
        %4564 = vmatpush1.bf16.msra.mxu0 %v2481
        %4565 = vmatprep.subr.bf16.mxu0 %v2490
        %4566 = vmatpush1.bf16.msra.mxu0 %v2489
        %4567 = vmatprep.subr.bf16.mxu0 %v2498
        %4568 = vmatpush1.bf16.msra.mxu0 %v2497
        %4569 = vmatprep.subr.bf16.mxu0 %v2506
        %4570 = vmatpush1.bf16.msra.mxu0 %v2505
        %4571 = vmatprep.subr.bf16.mxu0 %v2514
        %4572 = vmatpush1.bf16.msra.mxu0 %v2513
        %4573 = vmatprep.subr.bf16.mxu0 %v2522
        %4574 = vmatpush1.bf16.msra.mxu0 %v2521
        %4575 = vmatprep.subr.bf16.mxu0 %v2530
        %4576 = vmatpush1.bf16.msra.mxu0 %v2529
        %4577 = vmatprep.mubr.bf16.mxu0 %v352
        %4578 = vmatmul.mubr.bf16.gmra.mrb[0].mxu0 %v351
        %v4579 = vpop.f32.mrb[0].mxu0
        %v4580 = vadd.f32 %v4539, %v4579
        %v4581 = vpop.f32.mrb[0].mxu0
        %v4582 = vadd.f32 %v4541, %v4581
        %v4583 = vpop.f32.mrb[0].mxu0
        %v4584 = vpop.f32.mrb[0].mxu0
        %4585 = vdwg.mxu0
        %4586 = vmatprep.subr.bf16.mxu0 %v2538
        %4587 = vmatpush1.bf16.msra.mxu0 %v2537
        %4588 = vmatprep.subr.bf16.mxu0 %v2546
        %4589 = vmatpush1.bf16.msra.mxu0 %v2545
        %4590 = vmatprep.subr.bf16.mxu0 %v2554
        %4591 = vmatpush1.bf16.msra.mxu0 %v2553
        %4592 = vmatprep.subr.bf16.mxu0 %v2562
        %4593 = vmatpush1.bf16.msra.mxu0 %v2561
        %4594 = vmatprep.subr.bf16.mxu0 %v2570
        %4595 = vmatpush1.bf16.msra.mxu0 %v2569
        %4596 = vmatprep.subr.bf16.mxu0 %v2578
        %4597 = vmatpush1.bf16.msra.mxu0 %v2577
        %4598 = vmatprep.subr.bf16.mxu0 %v2586
        %4599 = vmatpush1.bf16.msra.mxu0 %v2585
        %4600 = vmatprep.subr.bf16.mxu0 %v2594
        %4601 = vmatpush1.bf16.msra.mxu0 %v2593
        %4602 = vmatprep.subr.bf16.mxu0 %v2602
        %4603 = vmatpush1.bf16.msra.mxu0 %v2601
        %4604 = vmatprep.subr.bf16.mxu0 %v2610
        %4605 = vmatpush1.bf16.msra.mxu0 %v2609
        %4606 = vmatprep.subr.bf16.mxu0 %v2618
        %4607 = vmatpush1.bf16.msra.mxu0 %v2617
        %4608 = vmatprep.subr.bf16.mxu0 %v2626
        %4609 = vmatpush1.bf16.msra.mxu0 %v2625
        %4610 = vmatprep.subr.bf16.mxu0 %v2634
        %4611 = vmatpush1.bf16.msra.mxu0 %v2633
        %4612 = vmatprep.subr.bf16.mxu0 %v2642
        %4613 = vmatpush1.bf16.msra.mxu0 %v2641
        %4614 = vmatprep.subr.bf16.mxu0 %v2650
        %4615 = vmatpush1.bf16.msra.mxu0 %v2649
        %4616 = vmatprep.subr.bf16.mxu0 %v2658
        %4617 = vmatpush1.bf16.msra.mxu0 %v2657
        %4618 = vmatprep.mubr.bf16.mxu0 %v354
        %4619 = vmatmul.mubr.bf16.gmra.mrb[0].mxu0 %v353
        %v4620 = vpop.f32.mrb[0].mxu0
        %v4621 = vadd.f32 %v4580, %v4620
        %v4622 = vpop.f32.mrb[0].mxu0
        %v4623 = vadd.f32 %v4582, %v4622
        %v4624 = vpop.f32.mrb[0].mxu0
        %v4625 = vpop.f32.mrb[0].mxu0
        %4626 = vdwg.mxu0
        %v4627 = vld [vmem:[%s255] sm:$0xff]
        %v4629 = vlaneseq
        %v4630 = vshrl.u32 %v4629, 7
        %v4631 = vsub.s32 0, %v4630
        %v4632 = vrot.slane %v4627, %v4631
        %v4633 = vlaneseq
        %v4634 = vshrl.u32 %v4633, 7
        %v4635 = vsub.s32 1, %v4634
        %v4636 = vrot.slane %v4627, %v4635
        %v4637 = vlaneseq
        %v4638 = vshrl.u32 %v4637, 7
        %v4639 = vsub.s32 2, %v4638
        %v4640 = vrot.slane %v4627, %v4639
        %v4641 = vlaneseq
        %v4642 = vshrl.u32 %v4641, 7
        %v4643 = vsub.s32 3, %v4642
        %v4644 = vrot.slane %v4627, %v4643
        %v4645 = vlaneseq
        %v4646 = vshrl.u32 %v4645, 7
        %v4647 = vsub.s32 4, %v4646
        %v4648 = vrot.slane %v4627, %v4647
        %v4649 = vlaneseq
        %v4650 = vshrl.u32 %v4649, 7
        %v4651 = vsub.s32 5, %v4650
        %v4652 = vrot.slane %v4627, %v4651
        %v4653 = vlaneseq
        %v4654 = vshrl.u32 %v4653, 7
        %v4655 = vsub.s32 6, %v4654
        %v4656 = vrot.slane %v4627, %v4655
        %v4657 = vlaneseq
        %v4658 = vshrl.u32 %v4657, 7
        %v4659 = vsub.s32 7, %v4658
        %v4660 = vrot.slane %v4627, %v4659
        %v4669 = vmul.f32 %v3145, %v4632
        %v4670 = vmul.f32 %v3147, %v4636
        %v4671 = vmul.f32 %v3637, %v4640
        %v4672 = vmul.f32 %v3639, %v4644
        %v4673 = vmul.f32 %v4129, %v4648
        %v4674 = vmul.f32 %v4131, %v4652
        %v4675 = vmul.f32 %v4621, %v4656
        %v4676 = vmul.f32 %v4623, %v4660
        %v4677 = vld [vmem:[%s264] sm:$0xff]
        %v4679 = vlaneseq
        %v4680 = vshrl.u32 %v4679, 7
        %v4681 = vsub.s32 0, %v4680
        %v4682 = vrot.slane %v4677, %v4681
        %v4683 = vlaneseq
        %v4684 = vshrl.u32 %v4683, 7
        %v4685 = vsub.s32 1, %v4684
        %v4686 = vrot.slane %v4677, %v4685
        %v4687 = vlaneseq
        %v4688 = vshrl.u32 %v4687, 7
        %v4689 = vsub.s32 2, %v4688
        %v4690 = vrot.slane %v4677, %v4689
        %v4691 = vlaneseq
        %v4692 = vshrl.u32 %v4691, 7
        %v4693 = vsub.s32 3, %v4692
        %v4694 = vrot.slane %v4677, %v4693
        %v4695 = vlaneseq
        %v4696 = vshrl.u32 %v4695, 7
        %v4697 = vsub.s32 4, %v4696
        %v4698 = vrot.slane %v4677, %v4697
        %v4699 = vlaneseq
        %v4700 = vshrl.u32 %v4699, 7
        %v4701 = vsub.s32 5, %v4700
        %v4702 = vrot.slane %v4677, %v4701
        %v4703 = vlaneseq
        %v4704 = vshrl.u32 %v4703, 7
        %v4705 = vsub.s32 6, %v4704
        %v4706 = vrot.slane %v4677, %v4705
        %v4707 = vlaneseq
        %v4708 = vshrl.u32 %v4707, 7
        %v4709 = vsub.s32 7, %v4708
        %v4710 = vrot.slane %v4677, %v4709
        %v4719 = vadd.f32 %v4669, %v4682
        %v4720 = vadd.f32 %v4670, %v4686
        %v4721 = vadd.f32 %v4671, %v4690
        %v4722 = vadd.f32 %v4672, %v4694
        %v4723 = vadd.f32 %v4673, %v4698
        %v4724 = vadd.f32 %v4674, %v4702
        %v4725 = vadd.f32 %v4675, %v4706
        %v4726 = vadd.f32 %v4676, %v4710
        %v4727 = vmax.f32 %v4719, 0.0
        %v4728 = vmax.f32 %v4720, 0.0
        %v4729 = vmax.f32 %v4721, 0.0
        %v4730 = vmax.f32 %v4722, 0.0
        %v4731 = vmax.f32 %v4723, 0.0
        %v4732 = vmax.f32 %v4724, 0.0
        %v4733 = vmax.f32 %v4725, 0.0
        %v4734 = vmax.f32 %v4726, 0.0
        %v4735 = vpack.c.bf16 %v4727, %v4727
        %v4736 = vpack.c.bf16 %v4728, %v4728
        %v4737 = vpack.c.bf16 %v4729, %v4729
        %v4738 = vpack.c.bf16 %v4730, %v4730
        %v4739 = vpack.c.bf16 %v4731, %v4731
        %v4740 = vpack.c.bf16 %v4732, %v4732
        %v4741 = vpack.c.bf16 %v4733, %v4733
        %v4742 = vpack.c.bf16 %v4734, %v4734
        %v4751 = vunpack.c.l.b16 %v4735
        %v4752 = vunpack.c.l.b16 %v4736
        %v4753 = vunpack.c.l.b16 %v4737
        %v4754 = vunpack.c.l.b16 %v4738
        %v4755 = vunpack.c.l.b16 %v4739
        %v4756 = vunpack.c.l.b16 %v4740
        %v4757 = vunpack.c.l.b16 %v4741
        %v4758 = vunpack.c.l.b16 %v4742
        %v4759 = vpack.c.b16 %v4752, %v4751
        %v4760 = vpack.c.b16 %v4754, %v4753
        %v4761 = vpack.c.b16 %v4756, %v4755
        %v4762 = vpack.c.b16 %v4758, %v4757
        %4767 = vst [vmem:[%s305] sm:$0xff] %v4759
        %4768 = vst [vmem:[%s305 + $0x8] sm:$0xff] %v4760
        %4769 = vst [vmem:[%s305 + $0x10] sm:$0xff] %v4761
        %4770 = vst [vmem:[%s305 + $0x18] sm:$0xff] %v4762
        %s4771 = smul.u32 8, %s22
        %p4772 = scmp.lt.s32.totalorder %s4771, 15
        %s4773 = scalar_select %p4772, %s4771, 15
        %s4774 = smul.addr %s4773, 4
        %s4775 = scalar_lea.vmem %s4, %s4774
        // Predicated region
        $region53: #{neural_net_forward.2} parent=35 // pred_check
          %p4776 = pneg %p139
        $region54: #{neural_net_forward.2} parent=35 // pred_check_branch
          %4778 = sbr.rel (%p4776) target = $region56
        $region55: #{neural_net_forward.2} parent=35 // pred_region
          %s4779 = smul.u32 8, %s22
        $region56: #{neural_net_forward.2} parent=35 // pred_fallthru
          _
      $region36: #{neural_net_forward.2} parent=5 // pred_fallthru
        _
      %p4780 = scmp.le.s32.totalorder 2, %s17
      // Predicated region
      $region57: #{neural_net_forward.2} parent=5 // pred_check
        %p4781 = pneg %p4780
      $region58: #{neural_net_forward.2} parent=5 // pred_check_branch
        %4783 = sbr.rel (%p4781) target = $region60
      $region59: #{neural_net_forward.2} parent=5 // pred_region
        %s4784 = ssub.s32 %s17, 2
        // Predicated region
        $region61: #{neural_net_forward.2} parent=59 // pred_check
          %p4785 = pneg %p145
        $region62: #{neural_net_forward.2} parent=59 // pred_check_branch
          %4787 = sbr.rel (%p4785) target = $region64
        $region63: #{neural_net_forward.2} parent=59 // pred_region
          %s4788 = smul.u32 8, %s23
          %p4789 = scmp.lt.s32.totalorder %s4788, 15
          %s4790 = scalar_select %p4789, %s4788, 15
          %s4791 = smul.addr %s4790, 4
          %s4792 = scalar_lea.vmem %s4, %s4791
        $region64: #{neural_net_forward.2} parent=59 // pred_fallthru
          _
      $region60: #{neural_net_forward.2} parent=5 // pred_fallthru
        _
    $region6: #{neural_net_forward.2} parent=1 // loop_footer
      %s21 = sadd.s32 1, %s17
    $region7: #{neural_net_forward.2} parent=1 // loop_footer_branch
      %16 = sbr.rel target = $region3
    $region8: #{neural_net_forward.2} parent=1 // loop_exit
      _
    %4793 = vsyncpa [#allocation3], 1
    %s4794 = scalar_lea.sflag [#allocation3], 1
    %4795 = vsyncpa %s4794, 1
    %4796 = vsyncpa [#allocation5], 1
    %s4797 = scalar_lea.sflag [#allocation5], 1
    %4798 = vsyncpa %s4797, 1
    %4799 = vsyncpa [#allocation8], 1
    %s4800 = scalar_lea.sflag [#allocation8], 1
    %4801 = vsyncpa %s4800, 1

</llo_original>
